<compile_context>
chip_gen: v6e
topology: v6e:2x2x1
jax: 0.10.0
libtpu: 0.0.40
codegen_flags: <defaults>
</compile_context>

<pallas_src>
import math
import numpy as np
import jax
import jax.numpy as jnp
from jax.experimental import pallas as pl
from jax.experimental.pallas import tpu as pltpu

# ----- model hyper-parameters (nn.TransformerEncoderLayer defaults:
#       dim_feedforward=2048, relu activation, post-norm, eps=1e-5) -----
INPUT_DIM   = 7          # or_dim / input_dim
HIDDEN      = 32         # hidden_space
NUM_HEADS   = 4
HEAD_DIM    = HIDDEN // NUM_HEADS
NUM_LAYERS  = 2
NUM_OUTPUTS = 1
FFN_DIM     = 2048       # PyTorch default dim_feedforward
LN_EPS      = 1e-5
NEG_INF     = -1e30
OUT_PAD     = 128        # lane-dense output width; wrapper slices column 0


def _layer_norm(x, w, b):
    mean = jnp.mean(x, axis=-1, keepdims=True)
    var = jnp.mean(jnp.square(x - mean), axis=-1, keepdims=True)
    return (x - mean) * jax.lax.rsqrt(var + LN_EPS) * w + b


def _seg_ids(shape, dim, seg, nseg):
    """Equivalent of broadcasted_iota(...)[dim] // seg, built only from iota +
    compares + adds (no vector integer division -> trivially lowerable)."""
    it = jax.lax.broadcasted_iota(jnp.int32, shape, dim)
    sid = jnp.zeros(shape, jnp.int32)
    for s in range(1, nseg):
        sid = sid + (it >= s * seg).astype(jnp.int32)
    return sid


def _ts_transformer_kernel(
    x_ref,                                  # (R, INPUT_DIM) f32, R = TB*S
    wtr_ref, btr_ref,                       # (D, H) f32, (1, H) f32
    wqkv_ref, bqkv_ref,                     # (L, H, 3H) bf16, (L, 1, 3H) f32
    wo_ref, bo_ref,                         # (L, H, H) bf16, (L, 1, H) f32
    l1w_ref, l1b_ref,                       # (L, H, F) bf16, (L, 1, F) f32
    l2w_ref, l2b_ref,                       # (L, H, F) bf16 (natural / transposed layout), (L, 1, H) f32
    n1w_ref, n1b_ref, n2w_ref, n2b_ref,     # (L, 1, H) f32 each
    wout_ref, bout_ref,                     # (H, OUT_PAD) f32, (1, OUT_PAD) f32
    out_ref,                                # (TB, OUT_PAD) f32
):
    f32 = jnp.float32
    bf16 = jnp.bfloat16

    R = x_ref.shape[0]
    TB = out_ref.shape[0]
    S = R // TB
    NHR = NUM_HEADS * R

    # ---- constant masks generated in-kernel (no HBM constant DMA) ----
    # head-block 0/1 mask for the stacked K/V rows: 1 iff head(row) == head(col)
    hmask = (_seg_ids((NHR, HIDDEN), 0, R, NUM_HEADS)
             == _seg_ids((NHR, HIDDEN), 1, HEAD_DIM, NUM_HEADS)).astype(f32)
    # vertical tiling matrix: rep[r, j] = 1 iff (r % R) == j
    rep = ((jax.lax.broadcasted_iota(jnp.int32, (NHR, R), 0)
            - R * _seg_ids((NHR, R), 0, R, NUM_HEADS))
           == jax.lax.broadcasted_iota(jnp.int32, (NHR, R), 1)).astype(f32)
    # additive batch-separation mask (0 within batch element, -1e30 across)
    qb = _seg_ids((R, NHR), 0, S, TB)
    kb = (_seg_ids((R, NHR), 1, S, NUM_HEADS * TB)
          - TB * _seg_ids((R, NHR), 1, R, NUM_HEADS))
    bmask = jnp.where(qb == kb, 0.0, NEG_INF).astype(f32)
    # last-sequence-position row selector
    sel = (jax.lax.broadcasted_iota(jnp.int32, (TB, R), 1)
           == jax.lax.broadcasted_iota(jnp.int32, (TB, R), 0) * S + (S - 1)
           ).astype(f32)

    scale = 1.0 / math.sqrt(HEAD_DIM)

    # transform_layer: Linear(input_dim -> hidden_space) on the whole flattened tile
    h = jnp.dot(x_ref[...], wtr_ref[...], preferred_element_type=f32) + btr_ref[...]

    for l in range(NUM_LAYERS):
        # ---------------- fused multi-head self-attention ----------------
        qkv = (jnp.dot(h.astype(bf16), wqkv_ref[l], preferred_element_type=f32)
               + bqkv_ref[l])                                           # (R, 3H)
        q = qkv[:, :HIDDEN]
        k = qkv[:, HIDDEN:2 * HIDDEN]
        v = qkv[:, 2 * HIDDEN:]

        # Stack K/V per head along sublanes: row (hh*R + j) keeps only head hh's
        # feature columns of key/value j (0/1 matmul + head-block mask).
        k_stack = jnp.dot(rep, k, preferred_element_type=f32) * hmask   # (NHR, H)
        v_stack = jnp.dot(rep, v, preferred_element_type=f32) * hmask   # (NHR, H)

        # One score matmul for all heads and all batch elements in the tile.
        scores = jax.lax.dot_general(
            q * scale, k_stack, (((1,), (1,)), ((), ())),
            preferred_element_type=f32) + bmask                          # (R, NHR)

        # One softmax slab.  TODO(synk): a single per-row max (instead of a
        # per-head max) is a mild stability relaxation; exact at these scales.
        p = jnp.exp(scores - jnp.max(scores, axis=-1, keepdims=True))    # (R, NHR)
        # p @ hmask gives the per-head denominator already broadcast over the
        # hidden columns of the corresponding head.
        denom = jnp.dot(p, hmask, preferred_element_type=f32)            # (R, H)
        attn = jnp.dot(p, v_stack, preferred_element_type=f32)           # (R, H)
        attn = attn * pl.reciprocal(denom, approx=True)                  # EUP slot
        attn = (jnp.dot(attn.astype(bf16), wo_ref[l], preferred_element_type=f32)
                + bo_ref[l])

        h = _layer_norm(h + attn, n1w_ref[l], n1b_ref[l])

        # ---------------- feed-forward block ----------------
        ff = (jnp.dot(h.astype(bf16), l1w_ref[l], preferred_element_type=f32)
              + l1b_ref[l])
        ff = jnp.maximum(ff, 0.0)                                        # relu
        # l2w kept as (H, F): lane-dense layout, contract over F (ff @ W^T).
        ff = (jax.lax.dot_general(ff.astype(bf16), l2w_ref[l],
                                  (((1,), (1,)), ((), ())),
                                  preferred_element_type=f32)
              + l2b_ref[l])

        h = _layer_norm(h + ff, n2w_ref[l], n2b_ref[l])

    # select last sequence position per batch element, then output head into a
    # lane-dense 128-wide slab (wrapper slices the single prediction column).
    last = jnp.dot(sel, h, preferred_element_type=f32)                   # (TB, H)
    out_ref[...] = (jnp.dot(last, wout_ref[...], preferred_element_type=f32)
                    + bout_ref[...])


def _padded_bytes(shape, dtype):
    """Tiled/padded HBM footprint: minor dim -> 128, second-minor -> 8 (f32) / 16 (bf16)."""
    isz = jnp.dtype(dtype).itemsize
    lane = -(-shape[-1] // 128) * 128
    sub_mult = 8 * (4 // isz)
    sub = -(-shape[-2] // sub_mult) * sub_mult
    rest = int(np.prod(shape[:-2], dtype=np.int64)) if len(shape) > 2 else 1
    return int(rest * sub * lane * isz)


def ts_transformer_forward(x, params, *, batch_tile=None):
    """batch_tile=None -> whole batch in one grid step (right choice for small
    batches).  On v7x, only pass batch_tile=B//2 ('parallel' sharding across
    the two TensorCores) when the per-tile row count TB*S is >= ~128."""
    B, S, D = x.shape
    assert D == INPUT_DIM
    TB = B if batch_tile is None else batch_tile
    assert B % TB == 0, "batch_tile must divide batch"
    num_tiles = B // TB
    # (8,128) block rule: tiled (non-full) second-minor dims must be 8-aligned.
    assert num_tiles == 1 or (TB % 8 == 0 and (TB * S) % 8 == 0), \
        "choose batch_tile so TB and TB*S are multiples of 8, or batch_tile=None"
    R = TB * S
    NHR = NUM_HEADS * R

    f32, bf16 = jnp.float32, jnp.bfloat16

    # lane-padded output head weights (zero columns past NUM_OUTPUTS)
    wout_pad = jnp.zeros((HIDDEN, OUT_PAD), f32).at[:, :NUM_OUTPUTS].set(params["wout"])
    bout_pad = jnp.zeros((1, OUT_PAD), f32).at[:, :NUM_OUTPUTS].set(params["bout"])

    # heavy matmul weights in bf16 (halves the dominant HBM->VMEM DMA);
    # biases / LayerNorm / tiny wtr & wout stay f32.
    weights = (
        params["wtr"].astype(f32),  params["btr"].astype(f32),
        params["wqkv"].astype(bf16), params["bqkv"].astype(f32),
        params["wo"].astype(bf16),   params["bo"].astype(f32),
        params["l1w"].astype(bf16),  params["l1b"].astype(f32),
        params["l2wt"].astype(bf16), params["l2b"].astype(f32),
        params["n1w"].astype(f32),   params["n1b"].astype(f32),
        params["n2w"].astype(f32),   params["n2b"].astype(f32),
        wout_pad, bout_pad,
    )

    x_flat = x.reshape(B * S, D).astype(f32)

    # ---- advisory cost estimate (padded HBM footprint) ----
    flops_layer = (2 * R * HIDDEN * 3 * HIDDEN        # fused QKV projection
                   + 2 * 2 * NHR * R * HIDDEN         # rep-tiling of K and V
                   + 2 * R * NHR * HIDDEN             # scores
                   + 2 * R * NHR * HIDDEN             # per-head denominators
                   + 2 * R * NHR * HIDDEN             # attention @ V
                   + 2 * R * HIDDEN * HIDDEN          # out projection
                   + 4 * R * HIDDEN * FFN_DIM)        # FFN
    flops = num_tiles * (2 * R * INPUT_DIM * HIDDEN + NUM_LAYERS * flops_layer
                         + 2 * TB * R * HIDDEN + 2 * TB * HIDDEN * OUT_PAD)
    transcendentals = num_tiles * NUM_LAYERS * (R * NHR + R * HIDDEN + 2 * R)
    bytes_accessed = (num_tiles * _padded_bytes((R, D), f32)
                      + sum(_padded_bytes(w.shape, w.dtype) for w in weights)
                      + num_tiles * _padded_bytes((TB, OUT_PAD), f32))

    semantics = ("parallel",) if num_tiles > 1 else ("arbitrary",)

    def _call(use_buffered):
        extra = {"pipeline_mode": pl.Buffered(1)} if use_buffered else {}

        def full_spec(a):
            nd = a.ndim
            return pl.BlockSpec(tuple(a.shape), lambda i, _nd=nd: (0,) * _nd, **extra)

        in_specs = [pl.BlockSpec((R, D), lambda i: (i, 0))]
        in_specs += [full_spec(a) for a in weights]
        out_spec = pl.BlockSpec((TB, OUT_PAD), lambda i: (i, 0))

        return pl.pallas_call(
            _ts_transformer_kernel,
            out_shape=jax.ShapeDtypeStruct((B, OUT_PAD), jnp.float32),
            grid=(num_tiles,),
            in_specs=in_specs,
            out_specs=out_spec,
            compiler_params=pltpu.CompilerParams(dimension_semantics=semantics),
            cost_estimate=pl.CostEstimate(flops=int(flops),
                                          transcendentals=int(transcendentals),
                                          bytes_accessed=int(bytes_accessed)),
        )(x_flat, *weights)

    try:
        out_pad = _call(True)       # single-buffer the grid-invariant weights
    except Exception:               # fallback if Buffered(1) is unsupported
        out_pad = _call(False)

    return out_pad[:, :NUM_OUTPUTS]


def init_params(key):
    """Deterministic PyTorch-style (uniform +-1/sqrt(fan_in)) init."""
    keys = jax.random.split(key, 64)
    idx = [0]

    def nxt():
        k = keys[idx[0]]
        idx[0] += 1
        return k

    def lin(out_f, in_f):
        bound = 1.0 / math.sqrt(in_f)
        w = jax.random.uniform(nxt(), (out_f, in_f), jnp.float32, -bound, bound)
        b = jax.random.uniform(nxt(), (out_f,), jnp.float32, -bound, bound)
        return w, b

    wtr, btr = lin(HIDDEN, INPUT_DIM)
    wqkv, bqkv, wo, bo = [], [], [], []
    l1w, l1b, l2wt, l2b = [], [], [], []
    n1w, n1b, n2w, n2b = [], [], [], []
    for _ in range(NUM_LAYERS):
        w, b = lin(3 * HIDDEN, HIDDEN)                 # PyTorch in_proj: rows [q; k; v]
        wqkv.append(w.T)                               # (H, 3H), columns [q | k | v]
        bqkv.append(b.reshape(1, 3 * HIDDEN))
        w, b = lin(HIDDEN, HIDDEN);  wo.append(w.T);   bo.append(b.reshape(1, HIDDEN))
        w, b = lin(FFN_DIM, HIDDEN); l1w.append(w.T);  l1b.append(b.reshape(1, FFN_DIM))
        w, b = lin(HIDDEN, FFN_DIM); l2wt.append(w)    # keep natural (H, F) layout
        l2b.append(b.reshape(1, HIDDEN))
        n1w.append(jnp.ones((1, HIDDEN), jnp.float32))
        n1b.append(jnp.zeros((1, HIDDEN), jnp.float32))
        n2w.append(jnp.ones((1, HIDDEN), jnp.float32))
        n2b.append(jnp.zeros((1, HIDDEN), jnp.float32))
    wout, bout = lin(NUM_OUTPUTS, HIDDEN)

    stk = lambda xs: jnp.stack(xs, axis=0)
    return {
        "wtr": wtr.T, "btr": btr.reshape(1, HIDDEN),
        "wqkv": stk(wqkv), "bqkv": stk(bqkv),
        "wo": stk(wo), "bo": stk(bo),
        "l1w": stk(l1w), "l1b": stk(l1b),
        "l2wt": stk(l2wt), "l2b": stk(l2b),
        "n1w": stk(n1w), "n1b": stk(n1b),
        "n2w": stk(n2w), "n2b": stk(n2b),
        "wout": wout.T, "bout": bout.reshape(1, NUM_OUTPUTS),
    }


def ts_transformer_reference(x, params):
    """Pure-JAX f32 reference mirroring nn.TransformerEncoder (post-norm, relu, eval)."""
    B, S, D = x.shape
    h = x @ params["wtr"] + params["btr"]                                 # (B, S, H)
    scale = 1.0 / math.sqrt(HEAD_DIM)
    for l in range(NUM_LAYERS):
        qkv = h @ params["wqkv"][l] + params["bqkv"][l]                   # (B, S, 3H)
        q = qkv[..., :HIDDEN].reshape(B, S, NUM_HEADS, HEAD_DIM)
        k = qkv[..., HIDDEN:2 * HIDDEN].reshape(B, S, NUM_HEADS, HEAD_DIM)
        v = qkv[..., 2 * HIDDEN:].reshape(B, S, NUM_HEADS, HEAD_DIM)
        sc = jnp.einsum("bqhd,bkhd->bhqk", q, k) * scale
        p = jax.nn.softmax(sc, axis=-1)
        a = jnp.einsum("bhqk,bkhd->bqhd", p, v).reshape(B, S, HIDDEN)
        a = a @ params["wo"][l] + params["bo"][l]
        h = _layer_norm(h + a, params["n1w"][l], params["n1b"][l])
        ff = jnp.maximum(h @ params["l1w"][l] + params["l1b"][l], 0.0)
        ff = jnp.einsum("bsf,hf->bsh", ff, params["l2wt"][l]) + params["l2b"][l]
        h = _layer_norm(h + ff, params["n2w"][l], params["n2b"][l])
    last = h[:, -1, :]                                                    # x[-1], seq-first
    return last @ params["wout"] + params["bout"]


if __name__ == "__main__":
    key = jax.random.PRNGKey(0)
    kx, kp = jax.random.split(key)

    B, S = 4, 5                    # batch=4, seq=n_in=5, features=or_dim=7
    x = jax.random.normal(kx, (B, S, INPUT_DIM), jnp.float32)
    params = init_params(kp)

    out = jax.block_until_ready(ts_transformer_forward(x, params))
    assert out.shape == (B, NUM_OUTPUTS)

    ref = jax.block_until_ready(ts_transformer_reference(x, params))
    # bf16 weight quantization in the kernel vs f32 reference -> 2e-2 tolerance.
    np.testing.assert_allclose(np.asarray(out), np.asarray(ref), rtol=2e-2, atol=2e-2)

    print("KERNEL_OK")
</pallas_src>

<mosaic_0001>
module attributes {stable_mosaic.version = 11 : i64} {
  func.func @_ts_transformer_kernel(%arg0: i32, %arg1: memref<20x7xf32, #tpu.memory_space<vmem>>, %arg2: memref<7x32xf32, #tpu.memory_space<vmem>>, %arg3: memref<1x32xf32, #tpu.memory_space<vmem>>, %arg4: memref<2x32x96xbf16, #tpu.memory_space<vmem>>, %arg5: memref<2x1x96xf32, #tpu.memory_space<vmem>>, %arg6: memref<2x32x32xbf16, #tpu.memory_space<vmem>>, %arg7: memref<2x1x32xf32, #tpu.memory_space<vmem>>, %arg8: memref<2x32x2048xbf16, #tpu.memory_space<vmem>>, %arg9: memref<2x1x2048xf32, #tpu.memory_space<vmem>>, %arg10: memref<2x32x2048xbf16, #tpu.memory_space<vmem>>, %arg11: memref<2x1x32xf32, #tpu.memory_space<vmem>>, %arg12: memref<2x1x32xf32, #tpu.memory_space<vmem>>, %arg13: memref<2x1x32xf32, #tpu.memory_space<vmem>>, %arg14: memref<2x1x32xf32, #tpu.memory_space<vmem>>, %arg15: memref<2x1x32xf32, #tpu.memory_space<vmem>>, %arg16: memref<32x128xf32, #tpu.memory_space<vmem>>, %arg17: memref<1x128xf32, #tpu.memory_space<vmem>>, %arg18: memref<4x128xf32, #tpu.memory_space<vmem>>) attributes {dimension_semantics = [#tpu.dimension_semantics<arbitrary>], iteration_bounds = array<i64: 1>, scalar_prefetch = 0 : i64, scratch_operands = 0 : i64, tpu.core_type = #tpu.core_type<tc>, window_params = [{transform_indices = @transform_0, window_bounds = array<i64: 20, 7>}, {pipeline_mode = #tpu.pipeline_mode<synchronous>, transform_indices = @transform_1, window_bounds = array<i64: 7, 32>}, {pipeline_mode = #tpu.pipeline_mode<synchronous>, transform_indices = @transform_2, window_bounds = array<i64: 1, 32>}, {pipeline_mode = #tpu.pipeline_mode<synchronous>, transform_indices = @transform_3, window_bounds = array<i64: 2, 32, 96>}, {pipeline_mode = #tpu.pipeline_mode<synchronous>, transform_indices = @transform_4, window_bounds = array<i64: 2, 1, 96>}, {pipeline_mode = #tpu.pipeline_mode<synchronous>, transform_indices = @transform_5, window_bounds = array<i64: 2, 32, 32>}, {pipeline_mode = #tpu.pipeline_mode<synchronous>, transform_indices = @transform_6, window_bounds = array<i64: 2, 1, 32>}, {pipeline_mode = #tpu.pipeline_mode<synchronous>, transform_indices = @transform_7, window_bounds = array<i64: 2, 32, 2048>}, {pipeline_mode = #tpu.pipeline_mode<synchronous>, transform_indices = @transform_8, window_bounds = array<i64: 2, 1, 2048>}, {pipeline_mode = #tpu.pipeline_mode<synchronous>, transform_indices = @transform_9, window_bounds = array<i64: 2, 32, 2048>}, {pipeline_mode = #tpu.pipeline_mode<synchronous>, transform_indices = @transform_10, window_bounds = array<i64: 2, 1, 32>}, {pipeline_mode = #tpu.pipeline_mode<synchronous>, transform_indices = @transform_11, window_bounds = array<i64: 2, 1, 32>}, {pipeline_mode = #tpu.pipeline_mode<synchronous>, transform_indices = @transform_12, window_bounds = array<i64: 2, 1, 32>}, {pipeline_mode = #tpu.pipeline_mode<synchronous>, transform_indices = @transform_13, window_bounds = array<i64: 2, 1, 32>}, {pipeline_mode = #tpu.pipeline_mode<synchronous>, transform_indices = @transform_14, window_bounds = array<i64: 2, 1, 32>}, {pipeline_mode = #tpu.pipeline_mode<synchronous>, transform_indices = @transform_15, window_bounds = array<i64: 32, 128>}, {pipeline_mode = #tpu.pipeline_mode<synchronous>, transform_indices = @transform_16, window_bounds = array<i64: 1, 128>}, {transform_indices = @transform_17, window_bounds = array<i64: 4, 128>}]} {
    %0 = tpu.iota {dimensions = array<i32: 0>} : vector<80x32xi32>
    %c0_i32 = arith.constant 0 : i32
    %1 = vector.broadcast %c0_i32 : i32 to vector<80x32xi32>
    %c20_i32 = arith.constant 20 : i32
    %2 = vector.broadcast %c20_i32 : i32 to vector<80x32xi32>
    %3 = arith.cmpi sge, %0, %2 : vector<80x32xi32>
    %4 = arith.extui %3 : vector<80x32xi1> to vector<80x32xi32>
    %5 = arith.addi %1, %4 : vector<80x32xi32>
    %c40_i32 = arith.constant 40 : i32
    %6 = vector.broadcast %c40_i32 : i32 to vector<80x32xi32>
    %7 = arith.cmpi sge, %0, %6 : vector<80x32xi32>
    %8 = arith.extui %7 : vector<80x32xi1> to vector<80x32xi32>
    %9 = arith.addi %5, %8 : vector<80x32xi32>
    %c60_i32 = arith.constant 60 : i32
    %10 = vector.broadcast %c60_i32 : i32 to vector<80x32xi32>
    %11 = arith.cmpi sge, %0, %10 : vector<80x32xi32>
    %12 = arith.extui %11 : vector<80x32xi1> to vector<80x32xi32>
    %13 = arith.addi %9, %12 : vector<80x32xi32>
    %14 = tpu.iota {dimensions = array<i32: 1>} : vector<80x32xi32>
    %c0_i32_0 = arith.constant 0 : i32
    %15 = vector.broadcast %c0_i32_0 : i32 to vector<80x32xi32>
    %c8_i32 = arith.constant 8 : i32
    %16 = vector.broadcast %c8_i32 : i32 to vector<80x32xi32>
    %17 = arith.cmpi sge, %14, %16 : vector<80x32xi32>
    %18 = arith.extui %17 : vector<80x32xi1> to vector<80x32xi32>
    %19 = arith.addi %15, %18 : vector<80x32xi32>
    %c16_i32 = arith.constant 16 : i32
    %20 = vector.broadcast %c16_i32 : i32 to vector<80x32xi32>
    %21 = arith.cmpi sge, %14, %20 : vector<80x32xi32>
    %22 = arith.extui %21 : vector<80x32xi1> to vector<80x32xi32>
    %23 = arith.addi %19, %22 : vector<80x32xi32>
    %c24_i32 = arith.constant 24 : i32
    %24 = vector.broadcast %c24_i32 : i32 to vector<80x32xi32>
    %25 = arith.cmpi sge, %14, %24 : vector<80x32xi32>
    %26 = arith.extui %25 : vector<80x32xi1> to vector<80x32xi32>
    %27 = arith.addi %23, %26 : vector<80x32xi32>
    %28 = arith.cmpi eq, %13, %27 : vector<80x32xi32>
    %29 = arith.extui %28 : vector<80x32xi1> to vector<80x32xi32>
    %30 = arith.sitofp %29 : vector<80x32xi32> to vector<80x32xf32>
    %31 = tpu.iota {dimensions = array<i32: 0>} : vector<80x20xi32>
    %32 = tpu.iota {dimensions = array<i32: 0>} : vector<80x20xi32>
    %c0_i32_1 = arith.constant 0 : i32
    %33 = vector.broadcast %c0_i32_1 : i32 to vector<80x20xi32>
    %c20_i32_2 = arith.constant 20 : i32
    %34 = vector.broadcast %c20_i32_2 : i32 to vector<80x20xi32>
    %35 = arith.cmpi sge, %32, %34 : vector<80x20xi32>
    %36 = arith.extui %35 : vector<80x20xi1> to vector<80x20xi32>
    %37 = arith.addi %33, %36 : vector<80x20xi32>
    %c40_i32_3 = arith.constant 40 : i32
    %38 = vector.broadcast %c40_i32_3 : i32 to vector<80x20xi32>
    %39 = arith.cmpi sge, %32, %38 : vector<80x20xi32>
    %40 = arith.extui %39 : vector<80x20xi1> to vector<80x20xi32>
    %41 = arith.addi %37, %40 : vector<80x20xi32>
    %c60_i32_4 = arith.constant 60 : i32
    %42 = vector.broadcast %c60_i32_4 : i32 to vector<80x20xi32>
    %43 = arith.cmpi sge, %32, %42 : vector<80x20xi32>
    %44 = arith.extui %43 : vector<80x20xi1> to vector<80x20xi32>
    %45 = arith.addi %41, %44 : vector<80x20xi32>
    %c20_i32_5 = arith.constant 20 : i32
    %46 = vector.broadcast %c20_i32_5 : i32 to vector<80x20xi32>
    %47 = arith.muli %46, %45 : vector<80x20xi32>
    %48 = arith.subi %31, %47 : vector<80x20xi32>
    %49 = tpu.iota {dimensions = array<i32: 1>} : vector<80x20xi32>
    %50 = arith.cmpi eq, %48, %49 : vector<80x20xi32>
    %51 = arith.extui %50 : vector<80x20xi1> to vector<80x20xi32>
    %52 = arith.sitofp %51 : vector<80x20xi32> to vector<80x20xf32>
    %53 = tpu.iota {dimensions = array<i32: 0>} : vector<20x80xi32>
    %c0_i32_6 = arith.constant 0 : i32
    %54 = vector.broadcast %c0_i32_6 : i32 to vector<20x80xi32>
    %c5_i32 = arith.constant 5 : i32
    %55 = vector.broadcast %c5_i32 : i32 to vector<20x80xi32>
    %56 = arith.cmpi sge, %53, %55 : vector<20x80xi32>
    %57 = arith.extui %56 : vector<20x80xi1> to vector<20x80xi32>
    %58 = arith.addi %54, %57 : vector<20x80xi32>
    %c10_i32 = arith.constant 10 : i32
    %59 = vector.broadcast %c10_i32 : i32 to vector<20x80xi32>
    %60 = arith.cmpi sge, %53, %59 : vector<20x80xi32>
    %61 = arith.extui %60 : vector<20x80xi1> to vector<20x80xi32>
    %62 = arith.addi %58, %61 : vector<20x80xi32>
    %c15_i32 = arith.constant 15 : i32
    %63 = vector.broadcast %c15_i32 : i32 to vector<20x80xi32>
    %64 = arith.cmpi sge, %53, %63 : vector<20x80xi32>
    %65 = arith.extui %64 : vector<20x80xi1> to vector<20x80xi32>
    %66 = arith.addi %62, %65 : vector<20x80xi32>
    %67 = tpu.iota {dimensions = array<i32: 1>} : vector<20x80xi32>
    %c0_i32_7 = arith.constant 0 : i32
    %68 = vector.broadcast %c0_i32_7 : i32 to vector<20x80xi32>
    %c5_i32_8 = arith.constant 5 : i32
    %69 = vector.broadcast %c5_i32_8 : i32 to vector<20x80xi32>
    %70 = arith.cmpi sge, %67, %69 : vector<20x80xi32>
    %71 = arith.extui %70 : vector<20x80xi1> to vector<20x80xi32>
    %72 = arith.addi %68, %71 : vector<20x80xi32>
    %c10_i32_9 = arith.constant 10 : i32
    %73 = vector.broadcast %c10_i32_9 : i32 to vector<20x80xi32>
    %74 = arith.cmpi sge, %67, %73 : vector<20x80xi32>
    %75 = arith.extui %74 : vector<20x80xi1> to vector<20x80xi32>
    %76 = arith.addi %72, %75 : vector<20x80xi32>
    %c15_i32_10 = arith.constant 15 : i32
    %77 = vector.broadcast %c15_i32_10 : i32 to vector<20x80xi32>
    %78 = arith.cmpi sge, %67, %77 : vector<20x80xi32>
    %79 = arith.extui %78 : vector<20x80xi1> to vector<20x80xi32>
    %80 = arith.addi %76, %79 : vector<20x80xi32>
    %c20_i32_11 = arith.constant 20 : i32
    %81 = vector.broadcast %c20_i32_11 : i32 to vector<20x80xi32>
    %82 = arith.cmpi sge, %67, %81 : vector<20x80xi32>
    %83 = arith.extui %82 : vector<20x80xi1> to vector<20x80xi32>
    %84 = arith.addi %80, %83 : vector<20x80xi32>
    %c25_i32 = arith.constant 25 : i32
    %85 = vector.broadcast %c25_i32 : i32 to vector<20x80xi32>
    %86 = arith.cmpi sge, %67, %85 : vector<20x80xi32>
    %87 = arith.extui %86 : vector<20x80xi1> to vector<20x80xi32>
    %88 = arith.addi %84, %87 : vector<20x80xi32>
    %c30_i32 = arith.constant 30 : i32
    %89 = vector.broadcast %c30_i32 : i32 to vector<20x80xi32>
    %90 = arith.cmpi sge, %67, %89 : vector<20x80xi32>
    %91 = arith.extui %90 : vector<20x80xi1> to vector<20x80xi32>
    %92 = arith.addi %88, %91 : vector<20x80xi32>
    %c35_i32 = arith.constant 35 : i32
    %93 = vector.broadcast %c35_i32 : i32 to vector<20x80xi32>
    %94 = arith.cmpi sge, %67, %93 : vector<20x80xi32>
    %95 = arith.extui %94 : vector<20x80xi1> to vector<20x80xi32>
    %96 = arith.addi %92, %95 : vector<20x80xi32>
    %c40_i32_12 = arith.constant 40 : i32
    %97 = vector.broadcast %c40_i32_12 : i32 to vector<20x80xi32>
    %98 = arith.cmpi sge, %67, %97 : vector<20x80xi32>
    %99 = arith.extui %98 : vector<20x80xi1> to vector<20x80xi32>
    %100 = arith.addi %96, %99 : vector<20x80xi32>
    %c45_i32 = arith.constant 45 : i32
    %101 = vector.broadcast %c45_i32 : i32 to vector<20x80xi32>
    %102 = arith.cmpi sge, %67, %101 : vector<20x80xi32>
    %103 = arith.extui %102 : vector<20x80xi1> to vector<20x80xi32>
    %104 = arith.addi %100, %103 : vector<20x80xi32>
    %c50_i32 = arith.constant 50 : i32
    %105 = vector.broadcast %c50_i32 : i32 to vector<20x80xi32>
    %106 = arith.cmpi sge, %67, %105 : vector<20x80xi32>
    %107 = arith.extui %106 : vector<20x80xi1> to vector<20x80xi32>
    %108 = arith.addi %104, %107 : vector<20x80xi32>
    %c55_i32 = arith.constant 55 : i32
    %109 = vector.broadcast %c55_i32 : i32 to vector<20x80xi32>
    %110 = arith.cmpi sge, %67, %109 : vector<20x80xi32>
    %111 = arith.extui %110 : vector<20x80xi1> to vector<20x80xi32>
    %112 = arith.addi %108, %111 : vector<20x80xi32>
    %c60_i32_13 = arith.constant 60 : i32
    %113 = vector.broadcast %c60_i32_13 : i32 to vector<20x80xi32>
    %114 = arith.cmpi sge, %67, %113 : vector<20x80xi32>
    %115 = arith.extui %114 : vector<20x80xi1> to vector<20x80xi32>
    %116 = arith.addi %112, %115 : vector<20x80xi32>
    %c65_i32 = arith.constant 65 : i32
    %117 = vector.broadcast %c65_i32 : i32 to vector<20x80xi32>
    %118 = arith.cmpi sge, %67, %117 : vector<20x80xi32>
    %119 = arith.extui %118 : vector<20x80xi1> to vector<20x80xi32>
    %120 = arith.addi %116, %119 : vector<20x80xi32>
    %c70_i32 = arith.constant 70 : i32
    %121 = vector.broadcast %c70_i32 : i32 to vector<20x80xi32>
    %122 = arith.cmpi sge, %67, %121 : vector<20x80xi32>
    %123 = arith.extui %122 : vector<20x80xi1> to vector<20x80xi32>
    %124 = arith.addi %120, %123 : vector<20x80xi32>
    %c75_i32 = arith.constant 75 : i32
    %125 = vector.broadcast %c75_i32 : i32 to vector<20x80xi32>
    %126 = arith.cmpi sge, %67, %125 : vector<20x80xi32>
    %127 = arith.extui %126 : vector<20x80xi1> to vector<20x80xi32>
    %128 = arith.addi %124, %127 : vector<20x80xi32>
    %129 = tpu.iota {dimensions = array<i32: 1>} : vector<20x80xi32>
    %c0_i32_14 = arith.constant 0 : i32
    %130 = vector.broadcast %c0_i32_14 : i32 to vector<20x80xi32>
    %c20_i32_15 = arith.constant 20 : i32
    %131 = vector.broadcast %c20_i32_15 : i32 to vector<20x80xi32>
    %132 = arith.cmpi sge, %129, %131 : vector<20x80xi32>
    %133 = arith.extui %132 : vector<20x80xi1> to vector<20x80xi32>
    %134 = arith.addi %130, %133 : vector<20x80xi32>
    %c40_i32_16 = arith.constant 40 : i32
    %135 = vector.broadcast %c40_i32_16 : i32 to vector<20x80xi32>
    %136 = arith.cmpi sge, %129, %135 : vector<20x80xi32>
    %137 = arith.extui %136 : vector<20x80xi1> to vector<20x80xi32>
    %138 = arith.addi %134, %137 : vector<20x80xi32>
    %c60_i32_17 = arith.constant 60 : i32
    %139 = vector.broadcast %c60_i32_17 : i32 to vector<20x80xi32>
    %140 = arith.cmpi sge, %129, %139 : vector<20x80xi32>
    %141 = arith.extui %140 : vector<20x80xi1> to vector<20x80xi32>
    %142 = arith.addi %138, %141 : vector<20x80xi32>
    %c4_i32 = arith.constant 4 : i32
    %143 = vector.broadcast %c4_i32 : i32 to vector<20x80xi32>
    %144 = arith.muli %143, %142 : vector<20x80xi32>
    %145 = arith.subi %128, %144 : vector<20x80xi32>
    %146 = arith.cmpi eq, %66, %145 : vector<20x80xi32>
    %cst = arith.constant 0.000000e+00 : f32
    %cst_18 = arith.constant -1.000000e+30 : f32
    %147 = vector.broadcast %cst : f32 to vector<20x80xf32>
    %148 = vector.broadcast %cst_18 : f32 to vector<20x80xf32>
    %149 = arith.select %146, %147, %148 : vector<20x80xi1>, vector<20x80xf32>
    %150 = tpu.iota {dimensions = array<i32: 1>} : vector<4x20xi32>
    %151 = tpu.iota {dimensions = array<i32: 0>} : vector<4x20xi32>
    %c5_i32_19 = arith.constant 5 : i32
    %152 = vector.broadcast %c5_i32_19 : i32 to vector<4x20xi32>
    %153 = arith.muli %151, %152 : vector<4x20xi32>
    %c4_i32_20 = arith.constant 4 : i32
    %154 = vector.broadcast %c4_i32_20 : i32 to vector<4x20xi32>
    %155 = arith.addi %153, %154 : vector<4x20xi32>
    %156 = arith.cmpi eq, %150, %155 : vector<4x20xi32>
    %157 = arith.extui %156 : vector<4x20xi1> to vector<4x20xi32>
    %158 = arith.sitofp %157 : vector<4x20xi32> to vector<4x20xf32>
    %c0 = arith.constant 0 : index
    %c0_21 = arith.constant 0 : index
    %159 = vector.load %arg1[%c0, %c0_21] : memref<20x7xf32, #tpu.memory_space<vmem>>, vector<20x7xf32>
    %c0_22 = arith.constant 0 : index
    %c0_23 = arith.constant 0 : index
    %160 = vector.load %arg2[%c0_22, %c0_23] : memref<7x32xf32, #tpu.memory_space<vmem>>, vector<7x32xf32>
    %cst_24 = arith.constant dense<0.000000e+00> : vector<20x32xf32>
    %161 = tpu.matmul %159, %160, %cst_24 {dimension_numbers = #tpu.dot_dimension_numbers<[1], [0], [0], [1], [0, 0, 1, 1], [], []>} : vector<20x7xf32>, vector<7x32xf32>, vector<20x32xf32> -> vector<20x32xf32>
    %c0_25 = arith.constant 0 : index
    %c0_26 = arith.constant 0 : index
    %162 = vector.load %arg3[%c0_25, %c0_26] : memref<1x32xf32, #tpu.memory_space<vmem>>, vector<1x32xf32>
    %163 = vector.broadcast %162 : vector<1x32xf32> to vector<20x32xf32>
    %164 = arith.addf %161, %163 : vector<20x32xf32>
    %165 = arith.truncf %164 : vector<20x32xf32> to vector<20x32xbf16>
    %c0_27 = arith.constant 0 : index
    %c0_28 = arith.constant 0 : index
    %c0_29 = arith.constant 0 : index
    %166 = vector.load %arg4[%c0_27, %c0_28, %c0_29] : memref<2x32x96xbf16, #tpu.memory_space<vmem>>, vector<1x32x96xbf16>
    %167 = vector.shape_cast %166 : vector<1x32x96xbf16> to vector<32x96xbf16>
    %cst_30 = arith.constant dense<0.000000e+00> : vector<20x96xf32>
    %168 = tpu.matmul %165, %167, %cst_30 {dimension_numbers = #tpu.dot_dimension_numbers<[1], [0], [0], [1], [0, 0, 1, 1], [], []>} : vector<20x32xbf16>, vector<32x96xbf16>, vector<20x96xf32> -> vector<20x96xf32>
    %c0_31 = arith.constant 0 : index
    %c0_32 = arith.constant 0 : index
    %c0_33 = arith.constant 0 : index
    %169 = vector.load %arg5[%c0_31, %c0_32, %c0_33] : memref<2x1x96xf32, #tpu.memory_space<vmem>>, vector<1x1x96xf32>
    %170 = vector.shape_cast %169 : vector<1x1x96xf32> to vector<1x96xf32>
    %171 = vector.broadcast %170 : vector<1x96xf32> to vector<20x96xf32>
    %172 = arith.addf %168, %171 : vector<20x96xf32>
    %173 = vector.extract_strided_slice %172 {offsets = [0, 0], sizes = [20, 32], strides = [1, 1]} : vector<20x96xf32> to vector<20x32xf32>
    %174 = vector.extract_strided_slice %172 {offsets = [0, 32], sizes = [20, 32], strides = [1, 1]} : vector<20x96xf32> to vector<20x32xf32>
    %175 = vector.extract_strided_slice %172 {offsets = [0, 64], sizes = [20, 32], strides = [1, 1]} : vector<20x96xf32> to vector<20x32xf32>
    %cst_34 = arith.constant dense<0.000000e+00> : vector<80x32xf32>
    %176 = tpu.matmul %52, %174, %cst_34 {dimension_numbers = #tpu.dot_dimension_numbers<[1], [0], [0], [1], [0, 0, 1, 1], [], []>} : vector<80x20xf32>, vector<20x32xf32>, vector<80x32xf32> -> vector<80x32xf32>
    %177 = arith.mulf %176, %30 : vector<80x32xf32>
    %cst_35 = arith.constant dense<0.000000e+00> : vector<80x32xf32>
    %178 = tpu.matmul %52, %175, %cst_35 {dimension_numbers = #tpu.dot_dimension_numbers<[1], [0], [0], [1], [0, 0, 1, 1], [], []>} : vector<80x20xf32>, vector<20x32xf32>, vector<80x32xf32> -> vector<80x32xf32>
    %179 = arith.mulf %178, %30 : vector<80x32xf32>
    %cst_36 = arith.constant 0.353553385 : f32
    %180 = vector.broadcast %cst_36 : f32 to vector<20x32xf32>
    %181 = arith.mulf %173, %180 : vector<20x32xf32>
    %cst_37 = arith.constant dense<0.000000e+00> : vector<20x80xf32>
    %182 = tpu.matmul %181, %177, %cst_37 {dimension_numbers = #tpu.dot_dimension_numbers<[1], [1], [0], [0], [0, 0, 1, 0], [], []>} : vector<20x32xf32>, vector<80x32xf32>, vector<20x80xf32> -> vector<20x80xf32>
    %183 = arith.addf %182, %149 : vector<20x80xf32>
    %cst_38 = arith.constant dense<0xFF800000> : vector<20xf32>
    %184 = vector.multi_reduction <maximumf>, %183, %cst_38 [1] : vector<20x80xf32> to vector<20xf32>
    %185 = vector.shape_cast %184 : vector<20xf32> to vector<20x1xf32>
    %186 = vector.broadcast %185 : vector<20x1xf32> to vector<20x80xf32>
    %187 = arith.subf %183, %186 : vector<20x80xf32>
    %188 = math.exp %187 : vector<20x80xf32>
    %cst_39 = arith.constant dense<0.000000e+00> : vector<20x32xf32>
    %189 = tpu.matmul %188, %30, %cst_39 {dimension_numbers = #tpu.dot_dimension_numbers<[1], [0], [0], [1], [0, 0, 1, 1], [], []>} : vector<20x80xf32>, vector<80x32xf32>, vector<20x32xf32> -> vector<20x32xf32>
    %cst_40 = arith.constant dense<0.000000e+00> : vector<20x32xf32>
    %190 = tpu.matmul %188, %179, %cst_40 {dimension_numbers = #tpu.dot_dimension_numbers<[1], [0], [0], [1], [0, 0, 1, 1], [], []>} : vector<20x80xf32>, vector<80x32xf32>, vector<20x32xf32> -> vector<20x32xf32>
    %191 = tpu.reciprocal %189 {approx = true} : vector<20x32xf32> -> vector<20x32xf32>
    %192 = arith.mulf %190, %191 : vector<20x32xf32>
    %193 = arith.truncf %192 : vector<20x32xf32> to vector<20x32xbf16>
    %c0_41 = arith.constant 0 : index
    %c0_42 = arith.constant 0 : index
    %c0_43 = arith.constant 0 : index
    %194 = vector.load %arg6[%c0_41, %c0_42, %c0_43] : memref<2x32x32xbf16, #tpu.memory_space<vmem>>, vector<1x32x32xbf16>
    %195 = vector.shape_cast %194 : vector<1x32x32xbf16> to vector<32x32xbf16>
    %cst_44 = arith.constant dense<0.000000e+00> : vector<20x32xf32>
    %196 = tpu.matmul %193, %195, %cst_44 {dimension_numbers = #tpu.dot_dimension_numbers<[1], [0], [0], [1], [0, 0, 1, 1], [], []>} : vector<20x32xbf16>, vector<32x32xbf16>, vector<20x32xf32> -> vector<20x32xf32>
    %c0_45 = arith.constant 0 : index
    %c0_46 = arith.constant 0 : index
    %c0_47 = arith.constant 0 : index
    %197 = vector.load %arg7[%c0_45, %c0_46, %c0_47] : memref<2x1x32xf32, #tpu.memory_space<vmem>>, vector<1x1x32xf32>
    %198 = vector.shape_cast %197 : vector<1x1x32xf32> to vector<1x32xf32>
    %199 = vector.broadcast %198 : vector<1x32xf32> to vector<20x32xf32>
    %200 = arith.addf %196, %199 : vector<20x32xf32>
    %201 = arith.addf %164, %200 : vector<20x32xf32>
    %c0_48 = arith.constant 0 : index
    %c0_49 = arith.constant 0 : index
    %c0_50 = arith.constant 0 : index
    %202 = vector.load %arg12[%c0_48, %c0_49, %c0_50] : memref<2x1x32xf32, #tpu.memory_space<vmem>>, vector<1x1x32xf32>
    %203 = vector.shape_cast %202 : vector<1x1x32xf32> to vector<1x32xf32>
    %c0_51 = arith.constant 0 : index
    %c0_52 = arith.constant 0 : index
    %c0_53 = arith.constant 0 : index
    %204 = vector.load %arg13[%c0_51, %c0_52, %c0_53] : memref<2x1x32xf32, #tpu.memory_space<vmem>>, vector<1x1x32xf32>
    %205 = vector.shape_cast %204 : vector<1x1x32xf32> to vector<1x32xf32>
    %cst_54 = arith.constant dense<0.000000e+00> : vector<20xf32>
    %206 = vector.multi_reduction <add>, %201, %cst_54 [1] : vector<20x32xf32> to vector<20xf32>
    %207 = vector.shape_cast %206 : vector<20xf32> to vector<20x1xf32>
    %cst_55 = arith.constant 3.200000e+01 : f32
    %208 = vector.broadcast %cst_55 : f32 to vector<20x1xf32>
    %209 = arith.divf %207, %208 : vector<20x1xf32>
    %210 = vector.broadcast %209 : vector<20x1xf32> to vector<20x32xf32>
    %211 = arith.subf %201, %210 : vector<20x32xf32>
    %212 = arith.mulf %211, %211 : vector<20x32xf32>
    %cst_56 = arith.constant dense<0.000000e+00> : vector<20xf32>
    %213 = vector.multi_reduction <add>, %212, %cst_56 [1] : vector<20x32xf32> to vector<20xf32>
    %214 = vector.shape_cast %213 : vector<20xf32> to vector<20x1xf32>
    %cst_57 = arith.constant 3.200000e+01 : f32
    %215 = vector.broadcast %cst_57 : f32 to vector<20x1xf32>
    %216 = arith.divf %214, %215 : vector<20x1xf32>
    %217 = vector.broadcast %209 : vector<20x1xf32> to vector<20x32xf32>
    %218 = arith.subf %201, %217 : vector<20x32xf32>
    %cst_58 = arith.constant 9.99999974E-6 : f32
    %219 = vector.broadcast %cst_58 : f32 to vector<20x1xf32>
    %220 = arith.addf %216, %219 : vector<20x1xf32>
    %221 = math.rsqrt %220 : vector<20x1xf32>
    %222 = vector.broadcast %221 : vector<20x1xf32> to vector<20x32xf32>
    %223 = arith.mulf %218, %222 : vector<20x32xf32>
    %224 = vector.broadcast %203 : vector<1x32xf32> to vector<20x32xf32>
    %225 = arith.mulf %223, %224 : vector<20x32xf32>
    %226 = vector.broadcast %205 : vector<1x32xf32> to vector<20x32xf32>
    %227 = arith.addf %225, %226 : vector<20x32xf32>
    %228 = arith.truncf %227 : vector<20x32xf32> to vector<20x32xbf16>
    %c0_59 = arith.constant 0 : index
    %c0_60 = arith.constant 0 : index
    %c0_61 = arith.constant 0 : index
    %229 = vector.load %arg8[%c0_59, %c0_60, %c0_61] : memref<2x32x2048xbf16, #tpu.memory_space<vmem>>, vector<1x32x2048xbf16>
    %230 = vector.shape_cast %229 : vector<1x32x2048xbf16> to vector<32x2048xbf16>
    %cst_62 = arith.constant dense<0.000000e+00> : vector<20x2048xf32>
    %231 = tpu.matmul %228, %230, %cst_62 {dimension_numbers = #tpu.dot_dimension_numbers<[1], [0], [0], [1], [0, 0, 1, 1], [], []>} : vector<20x32xbf16>, vector<32x2048xbf16>, vector<20x2048xf32> -> vector<20x2048xf32>
    %c0_63 = arith.constant 0 : index
    %c0_64 = arith.constant 0 : index
    %c0_65 = arith.constant 0 : index
    %232 = vector.load %arg9[%c0_63, %c0_64, %c0_65] : memref<2x1x2048xf32, #tpu.memory_space<vmem>>, vector<1x1x2048xf32>
    %233 = vector.shape_cast %232 : vector<1x1x2048xf32> to vector<1x2048xf32>
    %234 = vector.broadcast %233 : vector<1x2048xf32> to vector<20x2048xf32>
    %235 = arith.addf %231, %234 : vector<20x2048xf32>
    %cst_66 = arith.constant 0.000000e+00 : f32
    %236 = vector.broadcast %cst_66 : f32 to vector<20x2048xf32>
    %237 = arith.maximumf %235, %236 : vector<20x2048xf32>
    %238 = arith.truncf %237 : vector<20x2048xf32> to vector<20x2048xbf16>
    %c0_67 = arith.constant 0 : index
    %c0_68 = arith.constant 0 : index
    %c0_69 = arith.constant 0 : index
    %239 = vector.load %arg10[%c0_67, %c0_68, %c0_69] : memref<2x32x2048xbf16, #tpu.memory_space<vmem>>, vector<1x32x2048xbf16>
    %240 = vector.shape_cast %239 : vector<1x32x2048xbf16> to vector<32x2048xbf16>
    %cst_70 = arith.constant dense<0.000000e+00> : vector<20x32xf32>
    %241 = tpu.matmul %238, %240, %cst_70 {dimension_numbers = #tpu.dot_dimension_numbers<[1], [1], [0], [0], [0, 0, 1, 0], [], []>} : vector<20x2048xbf16>, vector<32x2048xbf16>, vector<20x32xf32> -> vector<20x32xf32>
    %c0_71 = arith.constant 0 : index
    %c0_72 = arith.constant 0 : index
    %c0_73 = arith.constant 0 : index
    %242 = vector.load %arg11[%c0_71, %c0_72, %c0_73] : memref<2x1x32xf32, #tpu.memory_space<vmem>>, vector<1x1x32xf32>
    %243 = vector.shape_cast %242 : vector<1x1x32xf32> to vector<1x32xf32>
    %244 = vector.broadcast %243 : vector<1x32xf32> to vector<20x32xf32>
    %245 = arith.addf %241, %244 : vector<20x32xf32>
    %246 = arith.addf %227, %245 : vector<20x32xf32>
    %c0_74 = arith.constant 0 : index
    %c0_75 = arith.constant 0 : index
    %c0_76 = arith.constant 0 : index
    %247 = vector.load %arg14[%c0_74, %c0_75, %c0_76] : memref<2x1x32xf32, #tpu.memory_space<vmem>>, vector<1x1x32xf32>
    %248 = vector.shape_cast %247 : vector<1x1x32xf32> to vector<1x32xf32>
    %c0_77 = arith.constant 0 : index
    %c0_78 = arith.constant 0 : index
    %c0_79 = arith.constant 0 : index
    %249 = vector.load %arg15[%c0_77, %c0_78, %c0_79] : memref<2x1x32xf32, #tpu.memory_space<vmem>>, vector<1x1x32xf32>
    %250 = vector.shape_cast %249 : vector<1x1x32xf32> to vector<1x32xf32>
    %cst_80 = arith.constant dense<0.000000e+00> : vector<20xf32>
    %251 = vector.multi_reduction <add>, %246, %cst_80 [1] : vector<20x32xf32> to vector<20xf32>
    %252 = vector.shape_cast %251 : vector<20xf32> to vector<20x1xf32>
    %cst_81 = arith.constant 3.200000e+01 : f32
    %253 = vector.broadcast %cst_81 : f32 to vector<20x1xf32>
    %254 = arith.divf %252, %253 : vector<20x1xf32>
    %255 = vector.broadcast %254 : vector<20x1xf32> to vector<20x32xf32>
    %256 = arith.subf %246, %255 : vector<20x32xf32>
    %257 = arith.mulf %256, %256 : vector<20x32xf32>
    %cst_82 = arith.constant dense<0.000000e+00> : vector<20xf32>
    %258 = vector.multi_reduction <add>, %257, %cst_82 [1] : vector<20x32xf32> to vector<20xf32>
    %259 = vector.shape_cast %258 : vector<20xf32> to vector<20x1xf32>
    %cst_83 = arith.constant 3.200000e+01 : f32
    %260 = vector.broadcast %cst_83 : f32 to vector<20x1xf32>
    %261 = arith.divf %259, %260 : vector<20x1xf32>
    %262 = vector.broadcast %254 : vector<20x1xf32> to vector<20x32xf32>
    %263 = arith.subf %246, %262 : vector<20x32xf32>
    %cst_84 = arith.constant 9.99999974E-6 : f32
    %264 = vector.broadcast %cst_84 : f32 to vector<20x1xf32>
    %265 = arith.addf %261, %264 : vector<20x1xf32>
    %266 = math.rsqrt %265 : vector<20x1xf32>
    %267 = vector.broadcast %266 : vector<20x1xf32> to vector<20x32xf32>
    %268 = arith.mulf %263, %267 : vector<20x32xf32>
    %269 = vector.broadcast %248 : vector<1x32xf32> to vector<20x32xf32>
    %270 = arith.mulf %268, %269 : vector<20x32xf32>
    %271 = vector.broadcast %250 : vector<1x32xf32> to vector<20x32xf32>
    %272 = arith.addf %270, %271 : vector<20x32xf32>
    %273 = arith.truncf %272 : vector<20x32xf32> to vector<20x32xbf16>
    %c1 = arith.constant 1 : index
    %c0_85 = arith.constant 0 : index
    %c0_86 = arith.constant 0 : index
    %274 = vector.load %arg4[%c1, %c0_85, %c0_86] : memref<2x32x96xbf16, #tpu.memory_space<vmem>>, vector<1x32x96xbf16>
    %275 = vector.shape_cast %274 : vector<1x32x96xbf16> to vector<32x96xbf16>
    %cst_87 = arith.constant dense<0.000000e+00> : vector<20x96xf32>
    %276 = tpu.matmul %273, %275, %cst_87 {dimension_numbers = #tpu.dot_dimension_numbers<[1], [0], [0], [1], [0, 0, 1, 1], [], []>} : vector<20x32xbf16>, vector<32x96xbf16>, vector<20x96xf32> -> vector<20x96xf32>
    %c1_88 = arith.constant 1 : index
    %c0_89 = arith.constant 0 : index
    %c0_90 = arith.constant 0 : index
    %277 = vector.load %arg5[%c1_88, %c0_89, %c0_90] : memref<2x1x96xf32, #tpu.memory_space<vmem>>, vector<1x1x96xf32>
    %278 = vector.shape_cast %277 : vector<1x1x96xf32> to vector<1x96xf32>
    %279 = vector.broadcast %278 : vector<1x96xf32> to vector<20x96xf32>
    %280 = arith.addf %276, %279 : vector<20x96xf32>
    %281 = vector.extract_strided_slice %280 {offsets = [0, 0], sizes = [20, 32], strides = [1, 1]} : vector<20x96xf32> to vector<20x32xf32>
    %282 = vector.extract_strided_slice %280 {offsets = [0, 32], sizes = [20, 32], strides = [1, 1]} : vector<20x96xf32> to vector<20x32xf32>
    %283 = vector.extract_strided_slice %280 {offsets = [0, 64], sizes = [20, 32], strides = [1, 1]} : vector<20x96xf32> to vector<20x32xf32>
    %cst_91 = arith.constant dense<0.000000e+00> : vector<80x32xf32>
    %284 = tpu.matmul %52, %282, %cst_91 {dimension_numbers = #tpu.dot_dimension_numbers<[1], [0], [0], [1], [0, 0, 1, 1], [], []>} : vector<80x20xf32>, vector<20x32xf32>, vector<80x32xf32> -> vector<80x32xf32>
    %285 = arith.mulf %284, %30 : vector<80x32xf32>
    %cst_92 = arith.constant dense<0.000000e+00> : vector<80x32xf32>
    %286 = tpu.matmul %52, %283, %cst_92 {dimension_numbers = #tpu.dot_dimension_numbers<[1], [0], [0], [1], [0, 0, 1, 1], [], []>} : vector<80x20xf32>, vector<20x32xf32>, vector<80x32xf32> -> vector<80x32xf32>
    %287 = arith.mulf %286, %30 : vector<80x32xf32>
    %cst_93 = arith.constant 0.353553385 : f32
    %288 = vector.broadcast %cst_93 : f32 to vector<20x32xf32>
    %289 = arith.mulf %281, %288 : vector<20x32xf32>
    %cst_94 = arith.constant dense<0.000000e+00> : vector<20x80xf32>
    %290 = tpu.matmul %289, %285, %cst_94 {dimension_numbers = #tpu.dot_dimension_numbers<[1], [1], [0], [0], [0, 0, 1, 0], [], []>} : vector<20x32xf32>, vector<80x32xf32>, vector<20x80xf32> -> vector<20x80xf32>
    %291 = arith.addf %290, %149 : vector<20x80xf32>
    %cst_95 = arith.constant dense<0xFF800000> : vector<20xf32>
    %292 = vector.multi_reduction <maximumf>, %291, %cst_95 [1] : vector<20x80xf32> to vector<20xf32>
    %293 = vector.shape_cast %292 : vector<20xf32> to vector<20x1xf32>
    %294 = vector.broadcast %293 : vector<20x1xf32> to vector<20x80xf32>
    %295 = arith.subf %291, %294 : vector<20x80xf32>
    %296 = math.exp %295 : vector<20x80xf32>
    %cst_96 = arith.constant dense<0.000000e+00> : vector<20x32xf32>
    %297 = tpu.matmul %296, %30, %cst_96 {dimension_numbers = #tpu.dot_dimension_numbers<[1], [0], [0], [1], [0, 0, 1, 1], [], []>} : vector<20x80xf32>, vector<80x32xf32>, vector<20x32xf32> -> vector<20x32xf32>
    %cst_97 = arith.constant dense<0.000000e+00> : vector<20x32xf32>
    %298 = tpu.matmul %296, %287, %cst_97 {dimension_numbers = #tpu.dot_dimension_numbers<[1], [0], [0], [1], [0, 0, 1, 1], [], []>} : vector<20x80xf32>, vector<80x32xf32>, vector<20x32xf32> -> vector<20x32xf32>
    %299 = tpu.reciprocal %297 {approx = true} : vector<20x32xf32> -> vector<20x32xf32>
    %300 = arith.mulf %298, %299 : vector<20x32xf32>
    %301 = arith.truncf %300 : vector<20x32xf32> to vector<20x32xbf16>
    %c1_98 = arith.constant 1 : index
    %c0_99 = arith.constant 0 : index
    %c0_100 = arith.constant 0 : index
    %302 = vector.load %arg6[%c1_98, %c0_99, %c0_100] : memref<2x32x32xbf16, #tpu.memory_space<vmem>>, vector<1x32x32xbf16>
    %303 = vector.shape_cast %302 : vector<1x32x32xbf16> to vector<32x32xbf16>
    %cst_101 = arith.constant dense<0.000000e+00> : vector<20x32xf32>
    %304 = tpu.matmul %301, %303, %cst_101 {dimension_numbers = #tpu.dot_dimension_numbers<[1], [0], [0], [1], [0, 0, 1, 1], [], []>} : vector<20x32xbf16>, vector<32x32xbf16>, vector<20x32xf32> -> vector<20x32xf32>
    %c1_102 = arith.constant 1 : index
    %c0_103 = arith.constant 0 : index
    %c0_104 = arith.constant 0 : index
    %305 = vector.load %arg7[%c1_102, %c0_103, %c0_104] : memref<2x1x32xf32, #tpu.memory_space<vmem>>, vector<1x1x32xf32>
    %306 = vector.shape_cast %305 : vector<1x1x32xf32> to vector<1x32xf32>
    %307 = vector.broadcast %306 : vector<1x32xf32> to vector<20x32xf32>
    %308 = arith.addf %304, %307 : vector<20x32xf32>
    %309 = arith.addf %272, %308 : vector<20x32xf32>
    %c1_105 = arith.constant 1 : index
    %c0_106 = arith.constant 0 : index
    %c0_107 = arith.constant 0 : index
    %310 = vector.load %arg12[%c1_105, %c0_106, %c0_107] : memref<2x1x32xf32, #tpu.memory_space<vmem>>, vector<1x1x32xf32>
    %311 = vector.shape_cast %310 : vector<1x1x32xf32> to vector<1x32xf32>
    %c1_108 = arith.constant 1 : index
    %c0_109 = arith.constant 0 : index
    %c0_110 = arith.constant 0 : index
    %312 = vector.load %arg13[%c1_108, %c0_109, %c0_110] : memref<2x1x32xf32, #tpu.memory_space<vmem>>, vector<1x1x32xf32>
    %313 = vector.shape_cast %312 : vector<1x1x32xf32> to vector<1x32xf32>
    %cst_111 = arith.constant dense<0.000000e+00> : vector<20xf32>
    %314 = vector.multi_reduction <add>, %309, %cst_111 [1] : vector<20x32xf32> to vector<20xf32>
    %315 = vector.shape_cast %314 : vector<20xf32> to vector<20x1xf32>
    %cst_112 = arith.constant 3.200000e+01 : f32
    %316 = vector.broadcast %cst_112 : f32 to vector<20x1xf32>
    %317 = arith.divf %315, %316 : vector<20x1xf32>
    %318 = vector.broadcast %317 : vector<20x1xf32> to vector<20x32xf32>
    %319 = arith.subf %309, %318 : vector<20x32xf32>
    %320 = arith.mulf %319, %319 : vector<20x32xf32>
    %cst_113 = arith.constant dense<0.000000e+00> : vector<20xf32>
    %321 = vector.multi_reduction <add>, %320, %cst_113 [1] : vector<20x32xf32> to vector<20xf32>
    %322 = vector.shape_cast %321 : vector<20xf32> to vector<20x1xf32>
    %cst_114 = arith.constant 3.200000e+01 : f32
    %323 = vector.broadcast %cst_114 : f32 to vector<20x1xf32>
    %324 = arith.divf %322, %323 : vector<20x1xf32>
    %325 = vector.broadcast %317 : vector<20x1xf32> to vector<20x32xf32>
    %326 = arith.subf %309, %325 : vector<20x32xf32>
    %cst_115 = arith.constant 9.99999974E-6 : f32
    %327 = vector.broadcast %cst_115 : f32 to vector<20x1xf32>
    %328 = arith.addf %324, %327 : vector<20x1xf32>
    %329 = math.rsqrt %328 : vector<20x1xf32>
    %330 = vector.broadcast %329 : vector<20x1xf32> to vector<20x32xf32>
    %331 = arith.mulf %326, %330 : vector<20x32xf32>
    %332 = vector.broadcast %311 : vector<1x32xf32> to vector<20x32xf32>
    %333 = arith.mulf %331, %332 : vector<20x32xf32>
    %334 = vector.broadcast %313 : vector<1x32xf32> to vector<20x32xf32>
    %335 = arith.addf %333, %334 : vector<20x32xf32>
    %336 = arith.truncf %335 : vector<20x32xf32> to vector<20x32xbf16>
    %c1_116 = arith.constant 1 : index
    %c0_117 = arith.constant 0 : index
    %c0_118 = arith.constant 0 : index
    %337 = vector.load %arg8[%c1_116, %c0_117, %c0_118] : memref<2x32x2048xbf16, #tpu.memory_space<vmem>>, vector<1x32x2048xbf16>
    %338 = vector.shape_cast %337 : vector<1x32x2048xbf16> to vector<32x2048xbf16>
    %cst_119 = arith.constant dense<0.000000e+00> : vector<20x2048xf32>
    %339 = tpu.matmul %336, %338, %cst_119 {dimension_numbers = #tpu.dot_dimension_numbers<[1], [0], [0], [1], [0, 0, 1, 1], [], []>} : vector<20x32xbf16>, vector<32x2048xbf16>, vector<20x2048xf32> -> vector<20x2048xf32>
    %c1_120 = arith.constant 1 : index
    %c0_121 = arith.constant 0 : index
    %c0_122 = arith.constant 0 : index
    %340 = vector.load %arg9[%c1_120, %c0_121, %c0_122] : memref<2x1x2048xf32, #tpu.memory_space<vmem>>, vector<1x1x2048xf32>
    %341 = vector.shape_cast %340 : vector<1x1x2048xf32> to vector<1x2048xf32>
    %342 = vector.broadcast %341 : vector<1x2048xf32> to vector<20x2048xf32>
    %343 = arith.addf %339, %342 : vector<20x2048xf32>
    %cst_123 = arith.constant 0.000000e+00 : f32
    %344 = vector.broadcast %cst_123 : f32 to vector<20x2048xf32>
    %345 = arith.maximumf %343, %344 : vector<20x2048xf32>
    %346 = arith.truncf %345 : vector<20x2048xf32> to vector<20x2048xbf16>
    %c1_124 = arith.constant 1 : index
    %c0_125 = arith.constant 0 : index
    %c0_126 = arith.constant 0 : index
    %347 = vector.load %arg10[%c1_124, %c0_125, %c0_126] : memref<2x32x2048xbf16, #tpu.memory_space<vmem>>, vector<1x32x2048xbf16>
    %348 = vector.shape_cast %347 : vector<1x32x2048xbf16> to vector<32x2048xbf16>
    %cst_127 = arith.constant dense<0.000000e+00> : vector<20x32xf32>
    %349 = tpu.matmul %346, %348, %cst_127 {dimension_numbers = #tpu.dot_dimension_numbers<[1], [1], [0], [0], [0, 0, 1, 0], [], []>} : vector<20x2048xbf16>, vector<32x2048xbf16>, vector<20x32xf32> -> vector<20x32xf32>
    %c1_128 = arith.constant 1 : index
    %c0_129 = arith.constant 0 : index
    %c0_130 = arith.constant 0 : index
    %350 = vector.load %arg11[%c1_128, %c0_129, %c0_130] : memref<2x1x32xf32, #tpu.memory_space<vmem>>, vector<1x1x32xf32>
    %351 = vector.shape_cast %350 : vector<1x1x32xf32> to vector<1x32xf32>
    %352 = vector.broadcast %351 : vector<1x32xf32> to vector<20x32xf32>
    %353 = arith.addf %349, %352 : vector<20x32xf32>
    %354 = arith.addf %335, %353 : vector<20x32xf32>
    %c1_131 = arith.constant 1 : index
    %c0_132 = arith.constant 0 : index
    %c0_133 = arith.constant 0 : index
    %355 = vector.load %arg14[%c1_131, %c0_132, %c0_133] : memref<2x1x32xf32, #tpu.memory_space<vmem>>, vector<1x1x32xf32>
    %356 = vector.shape_cast %355 : vector<1x1x32xf32> to vector<1x32xf32>
    %c1_134 = arith.constant 1 : index
    %c0_135 = arith.constant 0 : index
    %c0_136 = arith.constant 0 : index
    %357 = vector.load %arg15[%c1_134, %c0_135, %c0_136] : memref<2x1x32xf32, #tpu.memory_space<vmem>>, vector<1x1x32xf32>
    %358 = vector.shape_cast %357 : vector<1x1x32xf32> to vector<1x32xf32>
    %cst_137 = arith.constant dense<0.000000e+00> : vector<20xf32>
    %359 = vector.multi_reduction <add>, %354, %cst_137 [1] : vector<20x32xf32> to vector<20xf32>
    %360 = vector.shape_cast %359 : vector<20xf32> to vector<20x1xf32>
    %cst_138 = arith.constant 3.200000e+01 : f32
    %361 = vector.broadcast %cst_138 : f32 to vector<20x1xf32>
    %362 = arith.divf %360, %361 : vector<20x1xf32>
    %363 = vector.broadcast %362 : vector<20x1xf32> to vector<20x32xf32>
    %364 = arith.subf %354, %363 : vector<20x32xf32>
    %365 = arith.mulf %364, %364 : vector<20x32xf32>
    %cst_139 = arith.constant dense<0.000000e+00> : vector<20xf32>
    %366 = vector.multi_reduction <add>, %365, %cst_139 [1] : vector<20x32xf32> to vector<20xf32>
    %367 = vector.shape_cast %366 : vector<20xf32> to vector<20x1xf32>
    %cst_140 = arith.constant 3.200000e+01 : f32
    %368 = vector.broadcast %cst_140 : f32 to vector<20x1xf32>
    %369 = arith.divf %367, %368 : vector<20x1xf32>
    %370 = vector.broadcast %362 : vector<20x1xf32> to vector<20x32xf32>
    %371 = arith.subf %354, %370 : vector<20x32xf32>
    %cst_141 = arith.constant 9.99999974E-6 : f32
    %372 = vector.broadcast %cst_141 : f32 to vector<20x1xf32>
    %373 = arith.addf %369, %372 : vector<20x1xf32>
    %374 = math.rsqrt %373 : vector<20x1xf32>
    %375 = vector.broadcast %374 : vector<20x1xf32> to vector<20x32xf32>
    %376 = arith.mulf %371, %375 : vector<20x32xf32>
    %377 = vector.broadcast %356 : vector<1x32xf32> to vector<20x32xf32>
    %378 = arith.mulf %376, %377 : vector<20x32xf32>
    %379 = vector.broadcast %358 : vector<1x32xf32> to vector<20x32xf32>
    %380 = arith.addf %378, %379 : vector<20x32xf32>
    %cst_142 = arith.constant dense<0.000000e+00> : vector<4x32xf32>
    %381 = tpu.matmul %158, %380, %cst_142 {dimension_numbers = #tpu.dot_dimension_numbers<[1], [0], [0], [1], [0, 0, 1, 1], [], []>} : vector<4x20xf32>, vector<20x32xf32>, vector<4x32xf32> -> vector<4x32xf32>
    %c0_143 = arith.constant 0 : index
    %c0_144 = arith.constant 0 : index
    %382 = vector.load %arg16[%c0_143, %c0_144] : memref<32x128xf32, #tpu.memory_space<vmem>>, vector<32x128xf32>
    %cst_145 = arith.constant dense<0.000000e+00> : vector<4x128xf32>
    %383 = tpu.matmul %381, %382, %cst_145 {dimension_numbers = #tpu.dot_dimension_numbers<[1], [0], [0], [1], [0, 0, 1, 1], [], []>} : vector<4x32xf32>, vector<32x128xf32>, vector<4x128xf32> -> vector<4x128xf32>
    %c0_146 = arith.constant 0 : index
    %c0_147 = arith.constant 0 : index
    %384 = vector.load %arg17[%c0_146, %c0_147] : memref<1x128xf32, #tpu.memory_space<vmem>>, vector<1x128xf32>
    %385 = vector.broadcast %384 : vector<1x128xf32> to vector<4x128xf32>
    %386 = arith.addf %383, %385 : vector<4x128xf32>
    %c0_148 = arith.constant 0 : index
    %c0_149 = arith.constant 0 : index
    %387 = vector.load %arg18[%c0_148, %c0_149] : memref<4x128xf32, #tpu.memory_space<vmem>>, vector<4x128xf32>
    tpu.vector_store %arg18[%c0_148, %c0_149], %386 {strides = array<i32>} : memref<4x128xf32, #tpu.memory_space<vmem>>, vector<4x128xf32>,
    return
  }
  func.func @transform_0(%arg0: i32) -> (i32, i32) {
    %c0_i32 = arith.constant 0 : i32
    %c0_i32_0 = arith.constant 0 : i32
    return %arg0, %c0_i32 : i32, i32
  }
  func.func @transform_1(%arg0: i32) -> (i32, i32) {
    %c0_i32 = arith.constant 0 : i32
    %c0_i32_0 = arith.constant 0 : i32
    %c0_i32_1 = arith.constant 0 : i32
    return %c0_i32, %c0_i32_0 : i32, i32
  }
  func.func @transform_2(%arg0: i32) -> (i32, i32) {
    %c0_i32 = arith.constant 0 : i32
    %c0_i32_0 = arith.constant 0 : i32
    %c0_i32_1 = arith.constant 0 : i32
    return %c0_i32, %c0_i32_0 : i32, i32
  }
  func.func @transform_3(%arg0: i32) -> (i32, i32, i32) {
    %c0_i32 = arith.constant 0 : i32
    %c0_i32_0 = arith.constant 0 : i32
    %c0_i32_1 = arith.constant 0 : i32
    %c0_i32_2 = arith.constant 0 : i32
    return %c0_i32, %c0_i32_0, %c0_i32_1 : i32, i32, i32
  }
  func.func @transform_4(%arg0: i32) -> (i32, i32, i32) {
    %c0_i32 = arith.constant 0 : i32
    %c0_i32_0 = arith.constant 0 : i32
    %c0_i32_1 = arith.constant 0 : i32
    %c0_i32_2 = arith.constant 0 : i32
    return %c0_i32, %c0_i32_0, %c0_i32_1 : i32, i32, i32
  }
  func.func @transform_5(%arg0: i32) -> (i32, i32, i32) {
    %c0_i32 = arith.constant 0 : i32
    %c0_i32_0 = arith.constant 0 : i32
    %c0_i32_1 = arith.constant 0 : i32
    %c0_i32_2 = arith.constant 0 : i32
    return %c0_i32, %c0_i32_0, %c0_i32_1 : i32, i32, i32
  }
  func.func @transform_6(%arg0: i32) -> (i32, i32, i32) {
    %c0_i32 = arith.constant 0 : i32
    %c0_i32_0 = arith.constant 0 : i32
    %c0_i32_1 = arith.constant 0 : i32
    %c0_i32_2 = arith.constant 0 : i32
    return %c0_i32, %c0_i32_0, %c0_i32_1 : i32, i32, i32
  }
  func.func @transform_7(%arg0: i32) -> (i32, i32, i32) {
    %c0_i32 = arith.constant 0 : i32
    %c0_i32_0 = arith.constant 0 : i32
    %c0_i32_1 = arith.constant 0 : i32
    %c0_i32_2 = arith.constant 0 : i32
    return %c0_i32, %c0_i32_0, %c0_i32_1 : i32, i32, i32
  }
  func.func @transform_8(%arg0: i32) -> (i32, i32, i32) {
    %c0_i32 = arith.constant 0 : i32
    %c0_i32_0 = arith.constant 0 : i32
    %c0_i32_1 = arith.constant 0 : i32
    %c0_i32_2 = arith.constant 0 : i32
    return %c0_i32, %c0_i32_0, %c0_i32_1 : i32, i32, i32
  }
  func.func @transform_9(%arg0: i32) -> (i32, i32, i32) {
    %c0_i32 = arith.constant 0 : i32
    %c0_i32_0 = arith.constant 0 : i32
    %c0_i32_1 = arith.constant 0 : i32
    %c0_i32_2 = arith.constant 0 : i32
    return %c0_i32, %c0_i32_0, %c0_i32_1 : i32, i32, i32
  }
  func.func @transform_10(%arg0: i32) -> (i32, i32, i32) {
    %c0_i32 = arith.constant 0 : i32
    %c0_i32_0 = arith.constant 0 : i32
    %c0_i32_1 = arith.constant 0 : i32
    %c0_i32_2 = arith.constant 0 : i32
    return %c0_i32, %c0_i32_0, %c0_i32_1 : i32, i32, i32
  }
  func.func @transform_11(%arg0: i32) -> (i32, i32, i32) {
    %c0_i32 = arith.constant 0 : i32
    %c0_i32_0 = arith.constant 0 : i32
    %c0_i32_1 = arith.constant 0 : i32
    %c0_i32_2 = arith.constant 0 : i32
    return %c0_i32, %c0_i32_0, %c0_i32_1 : i32, i32, i32
  }
  func.func @transform_12(%arg0: i32) -> (i32, i32, i32) {
    %c0_i32 = arith.constant 0 : i32
    %c0_i32_0 = arith.constant 0 : i32
    %c0_i32_1 = arith.constant 0 : i32
    %c0_i32_2 = arith.constant 0 : i32
    return %c0_i32, %c0_i32_0, %c0_i32_1 : i32, i32, i32
  }
  func.func @transform_13(%arg0: i32) -> (i32, i32, i32) {
    %c0_i32 = arith.constant 0 : i32
    %c0_i32_0 = arith.constant 0 : i32
    %c0_i32_1 = arith.constant 0 : i32
    %c0_i32_2 = arith.constant 0 : i32
    return %c0_i32, %c0_i32_0, %c0_i32_1 : i32, i32, i32
  }
  func.func @transform_14(%arg0: i32) -> (i32, i32, i32) {
    %c0_i32 = arith.constant 0 : i32
    %c0_i32_0 = arith.constant 0 : i32
    %c0_i32_1 = arith.constant 0 : i32
    %c0_i32_2 = arith.constant 0 : i32
    return %c0_i32, %c0_i32_0, %c0_i32_1 : i32, i32, i32
  }
  func.func @transform_15(%arg0: i32) -> (i32, i32) {
    %c0_i32 = arith.constant 0 : i32
    %c0_i32_0 = arith.constant 0 : i32
    %c0_i32_1 = arith.constant 0 : i32
    return %c0_i32, %c0_i32_0 : i32, i32
  }
  func.func @transform_16(%arg0: i32) -> (i32, i32) {
    %c0_i32 = arith.constant 0 : i32
    %c0_i32_0 = arith.constant 0 : i32
    %c0_i32_1 = arith.constant 0 : i32
    return %c0_i32, %c0_i32_0 : i32, i32
  }
  func.func @transform_17(%arg0: i32) -> (i32, i32) {
    %c0_i32 = arith.constant 0 : i32
    %c0_i32_0 = arith.constant 0 : i32
    return %arg0, %c0_i32 : i32, i32
  }
}

module attributes {stable_mosaic.version = 11 : i64} {
  func.func @_ts_transformer_kernel(%arg0: i32, %arg1: memref<20x7xf32, #tpu.memory_space<vmem>>, %arg2: memref<7x32xf32, #tpu.memory_space<vmem>>, %arg3: memref<1x32xf32, #tpu.memory_space<vmem>>, %arg4: memref<2x32x96xbf16, #tpu.memory_space<vmem>>, %arg5: memref<2x1x96xf32, #tpu.memory_space<vmem>>, %arg6: memref<2x32x32xbf16, #tpu.memory_space<vmem>>, %arg7: memref<2x1x32xf32, #tpu.memory_space<vmem>>, %arg8: memref<2x32x2048xbf16, #tpu.memory_space<vmem>>, %arg9: memref<2x1x2048xf32, #tpu.memory_space<vmem>>, %arg10: memref<2x32x2048xbf16, #tpu.memory_space<vmem>>, %arg11: memref<2x1x32xf32, #tpu.memory_space<vmem>>, %arg12: memref<2x1x32xf32, #tpu.memory_space<vmem>>, %arg13: memref<2x1x32xf32, #tpu.memory_space<vmem>>, %arg14: memref<2x1x32xf32, #tpu.memory_space<vmem>>, %arg15: memref<2x1x32xf32, #tpu.memory_space<vmem>>, %arg16: memref<32x128xf32, #tpu.memory_space<vmem>>, %arg17: memref<1x128xf32, #tpu.memory_space<vmem>>, %arg18: memref<4x128xf32, #tpu.memory_space<vmem>>) attributes {dimension_semantics = [#tpu.dimension_semantics<arbitrary>], iteration_bounds = array<i64: 1>, scalar_prefetch = 0 : i64, scratch_operands = 0 : i64, tpu.core_type = #tpu.core_type<tc>, window_params = [{transform_indices = @transform_0, window_bounds = array<i64: 20, 7>}, {pipeline_mode = #tpu.pipeline_mode<synchronous>, transform_indices = @transform_1, window_bounds = array<i64: 7, 32>}, {pipeline_mode = #tpu.pipeline_mode<synchronous>, transform_indices = @transform_2, window_bounds = array<i64: 1, 32>}, {pipeline_mode = #tpu.pipeline_mode<synchronous>, transform_indices = @transform_3, window_bounds = array<i64: 2, 32, 96>}, {pipeline_mode = #tpu.pipeline_mode<synchronous>, transform_indices = @transform_4, window_bounds = array<i64: 2, 1, 96>}, {pipeline_mode = #tpu.pipeline_mode<synchronous>, transform_indices = @transform_5, window_bounds = array<i64: 2, 32, 32>}, {pipeline_mode = #tpu.pipeline_mode<synchronous>, transform_indices = @transform_6, window_bounds = array<i64: 2, 1, 32>}, {pipeline_mode = #tpu.pipeline_mode<synchronous>, transform_indices = @transform_7, window_bounds = array<i64: 2, 32, 2048>}, {pipeline_mode = #tpu.pipeline_mode<synchronous>, transform_indices = @transform_8, window_bounds = array<i64: 2, 1, 2048>}, {pipeline_mode = #tpu.pipeline_mode<synchronous>, transform_indices = @transform_9, window_bounds = array<i64: 2, 32, 2048>}, {pipeline_mode = #tpu.pipeline_mode<synchronous>, transform_indices = @transform_10, window_bounds = array<i64: 2, 1, 32>}, {pipeline_mode = #tpu.pipeline_mode<synchronous>, transform_indices = @transform_11, window_bounds = array<i64: 2, 1, 32>}, {pipeline_mode = #tpu.pipeline_mode<synchronous>, transform_indices = @transform_12, window_bounds = array<i64: 2, 1, 32>}, {pipeline_mode = #tpu.pipeline_mode<synchronous>, transform_indices = @transform_13, window_bounds = array<i64: 2, 1, 32>}, {pipeline_mode = #tpu.pipeline_mode<synchronous>, transform_indices = @transform_14, window_bounds = array<i64: 2, 1, 32>}, {pipeline_mode = #tpu.pipeline_mode<synchronous>, transform_indices = @transform_15, window_bounds = array<i64: 32, 128>}, {pipeline_mode = #tpu.pipeline_mode<synchronous>, transform_indices = @transform_16, window_bounds = array<i64: 1, 128>}, {transform_indices = @transform_17, window_bounds = array<i64: 4, 128>}]} {
    %0 = tpu.iota {dimensions = array<i32: 0>} : vector<80x32xi32>
    %c0_i32 = arith.constant 0 : i32
    %1 = vector.broadcast %c0_i32 : i32 to vector<80x32xi32>
    %c20_i32 = arith.constant 20 : i32
    %2 = vector.broadcast %c20_i32 : i32 to vector<80x32xi32>
    %3 = arith.cmpi sge, %0, %2 : vector<80x32xi32>
    %4 = arith.extui %3 : vector<80x32xi1> to vector<80x32xi32>
    %5 = arith.addi %1, %4 : vector<80x32xi32>
    %c40_i32 = arith.constant 40 : i32
    %6 = vector.broadcast %c40_i32 : i32 to vector<80x32xi32>
    %7 = arith.cmpi sge, %0, %6 : vector<80x32xi32>
    %8 = arith.extui %7 : vector<80x32xi1> to vector<80x32xi32>
    %9 = arith.addi %5, %8 : vector<80x32xi32>
    %c60_i32 = arith.constant 60 : i32
    %10 = vector.broadcast %c60_i32 : i32 to vector<80x32xi32>
    %11 = arith.cmpi sge, %0, %10 : vector<80x32xi32>
    %12 = arith.extui %11 : vector<80x32xi1> to vector<80x32xi32>
    %13 = arith.addi %9, %12 : vector<80x32xi32>
    %14 = tpu.iota {dimensions = array<i32: 1>} : vector<80x32xi32>
    %c0_i32_0 = arith.constant 0 : i32
    %15 = vector.broadcast %c0_i32_0 : i32 to vector<80x32xi32>
    %c8_i32 = arith.constant 8 : i32
    %16 = vector.broadcast %c8_i32 : i32 to vector<80x32xi32>
    %17 = arith.cmpi sge, %14, %16 : vector<80x32xi32>
    %18 = arith.extui %17 : vector<80x32xi1> to vector<80x32xi32>
    %19 = arith.addi %15, %18 : vector<80x32xi32>
    %c16_i32 = arith.constant 16 : i32
    %20 = vector.broadcast %c16_i32 : i32 to vector<80x32xi32>
    %21 = arith.cmpi sge, %14, %20 : vector<80x32xi32>
    %22 = arith.extui %21 : vector<80x32xi1> to vector<80x32xi32>
    %23 = arith.addi %19, %22 : vector<80x32xi32>
    %c24_i32 = arith.constant 24 : i32
    %24 = vector.broadcast %c24_i32 : i32 to vector<80x32xi32>
    %25 = arith.cmpi sge, %14, %24 : vector<80x32xi32>
    %26 = arith.extui %25 : vector<80x32xi1> to vector<80x32xi32>
    %27 = arith.addi %23, %26 : vector<80x32xi32>
    %28 = arith.cmpi eq, %13, %27 : vector<80x32xi32>
    %29 = arith.extui %28 : vector<80x32xi1> to vector<80x32xi32>
    %30 = arith.sitofp %29 : vector<80x32xi32> to vector<80x32xf32>
    %31 = tpu.iota {dimensions = array<i32: 0>} : vector<80x20xi32>
    %32 = tpu.iota {dimensions = array<i32: 0>} : vector<80x20xi32>
    %c0_i32_1 = arith.constant 0 : i32
    %33 = vector.broadcast %c0_i32_1 : i32 to vector<80x20xi32>
    %c20_i32_2 = arith.constant 20 : i32
    %34 = vector.broadcast %c20_i32_2 : i32 to vector<80x20xi32>
    %35 = arith.cmpi sge, %32, %34 : vector<80x20xi32>
    %36 = arith.extui %35 : vector<80x20xi1> to vector<80x20xi32>
    %37 = arith.addi %33, %36 : vector<80x20xi32>
    %c40_i32_3 = arith.constant 40 : i32
    %38 = vector.broadcast %c40_i32_3 : i32 to vector<80x20xi32>
    %39 = arith.cmpi sge, %32, %38 : vector<80x20xi32>
    %40 = arith.extui %39 : vector<80x20xi1> to vector<80x20xi32>
    %41 = arith.addi %37, %40 : vector<80x20xi32>
    %c60_i32_4 = arith.constant 60 : i32
    %42 = vector.broadcast %c60_i32_4 : i32 to vector<80x20xi32>
    %43 = arith.cmpi sge, %32, %42 : vector<80x20xi32>
    %44 = arith.extui %43 : vector<80x20xi1> to vector<80x20xi32>
    %45 = arith.addi %41, %44 : vector<80x20xi32>
    %c20_i32_5 = arith.constant 20 : i32
    %46 = vector.broadcast %c20_i32_5 : i32 to vector<80x20xi32>
    %47 = arith.muli %46, %45 : vector<80x20xi32>
    %48 = arith.subi %31, %47 : vector<80x20xi32>
    %49 = tpu.iota {dimensions = array<i32: 1>} : vector<80x20xi32>
    %50 = arith.cmpi eq, %48, %49 : vector<80x20xi32>
    %51 = arith.extui %50 : vector<80x20xi1> to vector<80x20xi32>
    %52 = arith.sitofp %51 : vector<80x20xi32> to vector<80x20xf32>
    %53 = tpu.iota {dimensions = array<i32: 0>} : vector<20x80xi32>
    %c0_i32_6 = arith.constant 0 : i32
    %54 = vector.broadcast %c0_i32_6 : i32 to vector<20x80xi32>
    %c5_i32 = arith.constant 5 : i32
    %55 = vector.broadcast %c5_i32 : i32 to vector<20x80xi32>
    %56 = arith.cmpi sge, %53, %55 : vector<20x80xi32>
    %57 = arith.extui %56 : vector<20x80xi1> to vector<20x80xi32>
    %58 = arith.addi %54, %57 : vector<20x80xi32>
    %c10_i32 = arith.constant 10 : i32
    %59 = vector.broadcast %c10_i32 : i32 to vector<20x80xi32>
    %60 = arith.cmpi sge, %53, %59 : vector<20x80xi32>
    %61 = arith.extui %60 : vector<20x80xi1> to vector<20x80xi32>
    %62 = arith.addi %58, %61 : vector<20x80xi32>
    %c15_i32 = arith.constant 15 : i32
    %63 = vector.broadcast %c15_i32 : i32 to vector<20x80xi32>
    %64 = arith.cmpi sge, %53, %63 : vector<20x80xi32>
    %65 = arith.extui %64 : vector<20x80xi1> to vector<20x80xi32>
    %66 = arith.addi %62, %65 : vector<20x80xi32>
    %67 = tpu.iota {dimensions = array<i32: 1>} : vector<20x80xi32>
    %c0_i32_7 = arith.constant 0 : i32
    %68 = vector.broadcast %c0_i32_7 : i32 to vector<20x80xi32>
    %c5_i32_8 = arith.constant 5 : i32
    %69 = vector.broadcast %c5_i32_8 : i32 to vector<20x80xi32>
    %70 = arith.cmpi sge, %67, %69 : vector<20x80xi32>
    %71 = arith.extui %70 : vector<20x80xi1> to vector<20x80xi32>
    %72 = arith.addi %68, %71 : vector<20x80xi32>
    %c10_i32_9 = arith.constant 10 : i32
    %73 = vector.broadcast %c10_i32_9 : i32 to vector<20x80xi32>
    %74 = arith.cmpi sge, %67, %73 : vector<20x80xi32>
    %75 = arith.extui %74 : vector<20x80xi1> to vector<20x80xi32>
    %76 = arith.addi %72, %75 : vector<20x80xi32>
    %c15_i32_10 = arith.constant 15 : i32
    %77 = vector.broadcast %c15_i32_10 : i32 to vector<20x80xi32>
    %78 = arith.cmpi sge, %67, %77 : vector<20x80xi32>
    %79 = arith.extui %78 : vector<20x80xi1> to vector<20x80xi32>
    %80 = arith.addi %76, %79 : vector<20x80xi32>
    %c20_i32_11 = arith.constant 20 : i32
    %81 = vector.broadcast %c20_i32_11 : i32 to vector<20x80xi32>
    %82 = arith.cmpi sge, %67, %81 : vector<20x80xi32>
    %83 = arith.extui %82 : vector<20x80xi1> to vector<20x80xi32>
    %84 = arith.addi %80, %83 : vector<20x80xi32>
    %c25_i32 = arith.constant 25 : i32
    %85 = vector.broadcast %c25_i32 : i32 to vector<20x80xi32>
    %86 = arith.cmpi sge, %67, %85 : vector<20x80xi32>
    %87 = arith.extui %86 : vector<20x80xi1> to vector<20x80xi32>
    %88 = arith.addi %84, %87 : vector<20x80xi32>
    %c30_i32 = arith.constant 30 : i32
    %89 = vector.broadcast %c30_i32 : i32 to vector<20x80xi32>
    %90 = arith.cmpi sge, %67, %89 : vector<20x80xi32>
    %91 = arith.extui %90 : vector<20x80xi1> to vector<20x80xi32>
    %92 = arith.addi %88, %91 : vector<20x80xi32>
    %c35_i32 = arith.constant 35 : i32
    %93 = vector.broadcast %c35_i32 : i32 to vector<20x80xi32>
    %94 = arith.cmpi sge, %67, %93 : vector<20x80xi32>
    %95 = arith.extui %94 : vector<20x80xi1> to vector<20x80xi32>
    %96 = arith.addi %92, %95 : vector<20x80xi32>
    %c40_i32_12 = arith.constant 40 : i32
    %97 = vector.broadcast %c40_i32_12 : i32 to vector<20x80xi32>
    %98 = arith.cmpi sge, %67, %97 : vector<20x80xi32>
    %99 = arith.extui %98 : vector<20x80xi1> to vector<20x80xi32>
    %100 = arith.addi %96, %99 : vector<20x80xi32>
    %c45_i32 = arith.constant 45 : i32
    %101 = vector.broadcast %c45_i32 : i32 to vector<20x80xi32>
    %102 = arith.cmpi sge, %67, %101 : vector<20x80xi32>
    %103 = arith.extui %102 : vector<20x80xi1> to vector<20x80xi32>
    %104 = arith.addi %100, %103 : vector<20x80xi32>
    %c50_i32 = arith.constant 50 : i32
    %105 = vector.broadcast %c50_i32 : i32 to vector<20x80xi32>
    %106 = arith.cmpi sge, %67, %105 : vector<20x80xi32>
    %107 = arith.extui %106 : vector<20x80xi1> to vector<20x80xi32>
    %108 = arith.addi %104, %107 : vector<20x80xi32>
    %c55_i32 = arith.constant 55 : i32
    %109 = vector.broadcast %c55_i32 : i32 to vector<20x80xi32>
    %110 = arith.cmpi sge, %67, %109 : vector<20x80xi32>
    %111 = arith.extui %110 : vector<20x80xi1> to vector<20x80xi32>
    %112 = arith.addi %108, %111 : vector<20x80xi32>
    %c60_i32_13 = arith.constant 60 : i32
    %113 = vector.broadcast %c60_i32_13 : i32 to vector<20x80xi32>
    %114 = arith.cmpi sge, %67, %113 : vector<20x80xi32>
    %115 = arith.extui %114 : vector<20x80xi1> to vector<20x80xi32>
    %116 = arith.addi %112, %115 : vector<20x80xi32>
    %c65_i32 = arith.constant 65 : i32
    %117 = vector.broadcast %c65_i32 : i32 to vector<20x80xi32>
    %118 = arith.cmpi sge, %67, %117 : vector<20x80xi32>
    %119 = arith.extui %118 : vector<20x80xi1> to vector<20x80xi32>
    %120 = arith.addi %116, %119 : vector<20x80xi32>
    %c70_i32 = arith.constant 70 : i32
    %121 = vector.broadcast %c70_i32 : i32 to vector<20x80xi32>
    %122 = arith.cmpi sge, %67, %121 : vector<20x80xi32>
    %123 = arith.extui %122 : vector<20x80xi1> to vector<20x80xi32>
    %124 = arith.addi %120, %123 : vector<20x80xi32>
    %c75_i32 = arith.constant 75 : i32
    %125 = vector.broadcast %c75_i32 : i32 to vector<20x80xi32>
    %126 = arith.cmpi sge, %67, %125 : vector<20x80xi32>
    %127 = arith.extui %126 : vector<20x80xi1> to vector<20x80xi32>
    %128 = arith.addi %124, %127 : vector<20x80xi32>
    %129 = tpu.iota {dimensions = array<i32: 1>} : vector<20x80xi32>
    %c0_i32_14 = arith.constant 0 : i32
    %130 = vector.broadcast %c0_i32_14 : i32 to vector<20x80xi32>
    %c20_i32_15 = arith.constant 20 : i32
    %131 = vector.broadcast %c20_i32_15 : i32 to vector<20x80xi32>
    %132 = arith.cmpi sge, %129, %131 : vector<20x80xi32>
    %133 = arith.extui %132 : vector<20x80xi1> to vector<20x80xi32>
    %134 = arith.addi %130, %133 : vector<20x80xi32>
    %c40_i32_16 = arith.constant 40 : i32
    %135 = vector.broadcast %c40_i32_16 : i32 to vector<20x80xi32>
    %136 = arith.cmpi sge, %129, %135 : vector<20x80xi32>
    %137 = arith.extui %136 : vector<20x80xi1> to vector<20x80xi32>
    %138 = arith.addi %134, %137 : vector<20x80xi32>
    %c60_i32_17 = arith.constant 60 : i32
    %139 = vector.broadcast %c60_i32_17 : i32 to vector<20x80xi32>
    %140 = arith.cmpi sge, %129, %139 : vector<20x80xi32>
    %141 = arith.extui %140 : vector<20x80xi1> to vector<20x80xi32>
    %142 = arith.addi %138, %141 : vector<20x80xi32>
    %c4_i32 = arith.constant 4 : i32
    %143 = vector.broadcast %c4_i32 : i32 to vector<20x80xi32>
    %144 = arith.muli %143, %142 : vector<20x80xi32>
    %145 = arith.subi %128, %144 : vector<20x80xi32>
    %146 = arith.cmpi eq, %66, %145 : vector<20x80xi32>
    %cst = arith.constant 0.000000e+00 : f32
    %cst_18 = arith.constant -1.000000e+30 : f32
    %147 = vector.broadcast %cst : f32 to vector<20x80xf32>
    %148 = vector.broadcast %cst_18 : f32 to vector<20x80xf32>
    %149 = arith.select %146, %147, %148 : vector<20x80xi1>, vector<20x80xf32>
    %150 = tpu.iota {dimensions = array<i32: 1>} : vector<4x20xi32>
    %151 = tpu.iota {dimensions = array<i32: 0>} : vector<4x20xi32>
    %c5_i32_19 = arith.constant 5 : i32
    %152 = vector.broadcast %c5_i32_19 : i32 to vector<4x20xi32>
    %153 = arith.muli %151, %152 : vector<4x20xi32>
    %c4_i32_20 = arith.constant 4 : i32
    %154 = vector.broadcast %c4_i32_20 : i32 to vector<4x20xi32>
    %155 = arith.addi %153, %154 : vector<4x20xi32>
    %156 = arith.cmpi eq, %150, %155 : vector<4x20xi32>
    %157 = arith.extui %156 : vector<4x20xi1> to vector<4x20xi32>
    %158 = arith.sitofp %157 : vector<4x20xi32> to vector<4x20xf32>
    %c0 = arith.constant 0 : index
    %c0_21 = arith.constant 0 : index
    %159 = vector.load %arg1[%c0, %c0_21] : memref<20x7xf32, #tpu.memory_space<vmem>>, vector<20x7xf32>
    %c0_22 = arith.constant 0 : index
    %c0_23 = arith.constant 0 : index
    %160 = vector.load %arg2[%c0_22, %c0_23] : memref<7x32xf32, #tpu.memory_space<vmem>>, vector<7x32xf32>
    %cst_24 = arith.constant dense<0.000000e+00> : vector<20x32xf32>
    %161 = tpu.matmul %159, %160, %cst_24 {dimension_numbers = #tpu.dot_dimension_numbers<[1], [0], [0], [1], [0, 0, 1, 1], [], []>} : vector<20x7xf32>, vector<7x32xf32>, vector<20x32xf32> -> vector<20x32xf32>
    %c0_25 = arith.constant 0 : index
    %c0_26 = arith.constant 0 : index
    %162 = vector.load %arg3[%c0_25, %c0_26] : memref<1x32xf32, #tpu.memory_space<vmem>>, vector<1x32xf32>
    %163 = vector.broadcast %162 : vector<1x32xf32> to vector<20x32xf32>
    %164 = arith.addf %161, %163 : vector<20x32xf32>
    %165 = arith.truncf %164 : vector<20x32xf32> to vector<20x32xbf16>
    %c0_27 = arith.constant 0 : index
    %c0_28 = arith.constant 0 : index
    %c0_29 = arith.constant 0 : index
    %166 = vector.load %arg4[%c0_27, %c0_28, %c0_29] : memref<2x32x96xbf16, #tpu.memory_space<vmem>>, vector<1x32x96xbf16>
    %167 = vector.shape_cast %166 : vector<1x32x96xbf16> to vector<32x96xbf16>
    %cst_30 = arith.constant dense<0.000000e+00> : vector<20x96xf32>
    %168 = tpu.matmul %165, %167, %cst_30 {dimension_numbers = #tpu.dot_dimension_numbers<[1], [0], [0], [1], [0, 0, 1, 1], [], []>} : vector<20x32xbf16>, vector<32x96xbf16>, vector<20x96xf32> -> vector<20x96xf32>
    %c0_31 = arith.constant 0 : index
    %c0_32 = arith.constant 0 : index
    %c0_33 = arith.constant 0 : index
    %169 = vector.load %arg5[%c0_31, %c0_32, %c0_33] : memref<2x1x96xf32, #tpu.memory_space<vmem>>, vector<1x1x96xf32>
    %170 = vector.shape_cast %169 : vector<1x1x96xf32> to vector<1x96xf32>
    %171 = vector.broadcast %170 : vector<1x96xf32> to vector<20x96xf32>
    %172 = arith.addf %168, %171 : vector<20x96xf32>
    %173 = vector.extract_strided_slice %172 {offsets = [0, 0], sizes = [20, 32], strides = [1, 1]} : vector<20x96xf32> to vector<20x32xf32>
    %174 = vector.extract_strided_slice %172 {offsets = [0, 32], sizes = [20, 32], strides = [1, 1]} : vector<20x96xf32> to vector<20x32xf32>
    %175 = vector.extract_strided_slice %172 {offsets = [0, 64], sizes = [20, 32], strides = [1, 1]} : vector<20x96xf32> to vector<20x32xf32>
    %cst_34 = arith.constant dense<0.000000e+00> : vector<80x32xf32>
    %176 = tpu.matmul %52, %174, %cst_34 {dimension_numbers = #tpu.dot_dimension_numbers<[1], [0], [0], [1], [0, 0, 1, 1], [], []>} : vector<80x20xf32>, vector<20x32xf32>, vector<80x32xf32> -> vector<80x32xf32>
    %177 = arith.mulf %176, %30 : vector<80x32xf32>
    %cst_35 = arith.constant dense<0.000000e+00> : vector<80x32xf32>
    %178 = tpu.matmul %52, %175, %cst_35 {dimension_numbers = #tpu.dot_dimension_numbers<[1], [0], [0], [1], [0, 0, 1, 1], [], []>} : vector<80x20xf32>, vector<20x32xf32>, vector<80x32xf32> -> vector<80x32xf32>
    %179 = arith.mulf %178, %30 : vector<80x32xf32>
    %cst_36 = arith.constant 0.353553385 : f32
    %180 = vector.broadcast %cst_36 : f32 to vector<20x32xf32>
    %181 = arith.mulf %173, %180 : vector<20x32xf32>
    %cst_37 = arith.constant dense<0.000000e+00> : vector<20x80xf32>
    %182 = tpu.matmul %181, %177, %cst_37 {dimension_numbers = #tpu.dot_dimension_numbers<[1], [1], [0], [0], [0, 0, 1, 0], [], []>} : vector<20x32xf32>, vector<80x32xf32>, vector<20x80xf32> -> vector<20x80xf32>
    %183 = arith.addf %182, %149 : vector<20x80xf32>
    %cst_38 = arith.constant dense<0xFF800000> : vector<20xf32>
    %184 = vector.multi_reduction <maximumf>, %183, %cst_38 [1] : vector<20x80xf32> to vector<20xf32>
    %185 = vector.shape_cast %184 : vector<20xf32> to vector<20x1xf32>
    %186 = vector.broadcast %185 : vector<20x1xf32> to vector<20x80xf32>
    %187 = arith.subf %183, %186 : vector<20x80xf32>
    %188 = math.exp %187 : vector<20x80xf32>
    %cst_39 = arith.constant dense<0.000000e+00> : vector<20x32xf32>
    %189 = tpu.matmul %188, %30, %cst_39 {dimension_numbers = #tpu.dot_dimension_numbers<[1], [0], [0], [1], [0, 0, 1, 1], [], []>} : vector<20x80xf32>, vector<80x32xf32>, vector<20x32xf32> -> vector<20x32xf32>
    %cst_40 = arith.constant dense<0.000000e+00> : vector<20x32xf32>
    %190 = tpu.matmul %188, %179, %cst_40 {dimension_numbers = #tpu.dot_dimension_numbers<[1], [0], [0], [1], [0, 0, 1, 1], [], []>} : vector<20x80xf32>, vector<80x32xf32>, vector<20x32xf32> -> vector<20x32xf32>
    %191 = tpu.reciprocal %189 {approx = true} : vector<20x32xf32> -> vector<20x32xf32>
    %192 = arith.mulf %190, %191 : vector<20x32xf32>
    %193 = arith.truncf %192 : vector<20x32xf32> to vector<20x32xbf16>
    %c0_41 = arith.constant 0 : index
    %c0_42 = arith.constant 0 : index
    %c0_43 = arith.constant 0 : index
    %194 = vector.load %arg6[%c0_41, %c0_42, %c0_43] : memref<2x32x32xbf16, #tpu.memory_space<vmem>>, vector<1x32x32xbf16>
    %195 = vector.shape_cast %194 : vector<1x32x32xbf16> to vector<32x32xbf16>
    %cst_44 = arith.constant dense<0.000000e+00> : vector<20x32xf32>
    %196 = tpu.matmul %193, %195, %cst_44 {dimension_numbers = #tpu.dot_dimension_numbers<[1], [0], [0], [1], [0, 0, 1, 1], [], []>} : vector<20x32xbf16>, vector<32x32xbf16>, vector<20x32xf32> -> vector<20x32xf32>
    %c0_45 = arith.constant 0 : index
    %c0_46 = arith.constant 0 : index
    %c0_47 = arith.constant 0 : index
    %197 = vector.load %arg7[%c0_45, %c0_46, %c0_47] : memref<2x1x32xf32, #tpu.memory_space<vmem>>, vector<1x1x32xf32>
    %198 = vector.shape_cast %197 : vector<1x1x32xf32> to vector<1x32xf32>
    %199 = vector.broadcast %198 : vector<1x32xf32> to vector<20x32xf32>
    %200 = arith.addf %196, %199 : vector<20x32xf32>
    %201 = arith.addf %164, %200 : vector<20x32xf32>
    %c0_48 = arith.constant 0 : index
    %c0_49 = arith.constant 0 : index
    %c0_50 = arith.constant 0 : index
    %202 = vector.load %arg12[%c0_48, %c0_49, %c0_50] : memref<2x1x32xf32, #tpu.memory_space<vmem>>, vector<1x1x32xf32>
    %203 = vector.shape_cast %202 : vector<1x1x32xf32> to vector<1x32xf32>
    %c0_51 = arith.constant 0 : index
    %c0_52 = arith.constant 0 : index
    %c0_53 = arith.constant 0 : index
    %204 = vector.load %arg13[%c0_51, %c0_52, %c0_53] : memref<2x1x32xf32, #tpu.memory_space<vmem>>, vector<1x1x32xf32>
    %205 = vector.shape_cast %204 : vector<1x1x32xf32> to vector<1x32xf32>
    %cst_54 = arith.constant dense<0.000000e+00> : vector<20xf32>
    %206 = vector.multi_reduction <add>, %201, %cst_54 [1] : vector<20x32xf32> to vector<20xf32>
    %207 = vector.shape_cast %206 : vector<20xf32> to vector<20x1xf32>
    %cst_55 = arith.constant 3.200000e+01 : f32
    %208 = vector.broadcast %cst_55 : f32 to vector<20x1xf32>
    %209 = arith.divf %207, %208 : vector<20x1xf32>
    %210 = vector.broadcast %209 : vector<20x1xf32> to vector<20x32xf32>
    %211 = arith.subf %201, %210 : vector<20x32xf32>
    %212 = arith.mulf %211, %211 : vector<20x32xf32>
    %cst_56 = arith.constant dense<0.000000e+00> : vector<20xf32>
    %213 = vector.multi_reduction <add>, %212, %cst_56 [1] : vector<20x32xf32> to vector<20xf32>
    %214 = vector.shape_cast %213 : vector<20xf32> to vector<20x1xf32>
    %cst_57 = arith.constant 3.200000e+01 : f32
    %215 = vector.broadcast %cst_57 : f32 to vector<20x1xf32>
    %216 = arith.divf %214, %215 : vector<20x1xf32>
    %217 = vector.broadcast %209 : vector<20x1xf32> to vector<20x32xf32>
    %218 = arith.subf %201, %217 : vector<20x32xf32>
    %cst_58 = arith.constant 9.99999974E-6 : f32
    %219 = vector.broadcast %cst_58 : f32 to vector<20x1xf32>
    %220 = arith.addf %216, %219 : vector<20x1xf32>
    %221 = math.rsqrt %220 : vector<20x1xf32>
    %222 = vector.broadcast %221 : vector<20x1xf32> to vector<20x32xf32>
    %223 = arith.mulf %218, %222 : vector<20x32xf32>
    %224 = vector.broadcast %203 : vector<1x32xf32> to vector<20x32xf32>
    %225 = arith.mulf %223, %224 : vector<20x32xf32>
    %226 = vector.broadcast %205 : vector<1x32xf32> to vector<20x32xf32>
    %227 = arith.addf %225, %226 : vector<20x32xf32>
    %228 = arith.truncf %227 : vector<20x32xf32> to vector<20x32xbf16>
    %c0_59 = arith.constant 0 : index
    %c0_60 = arith.constant 0 : index
    %c0_61 = arith.constant 0 : index
    %229 = vector.load %arg8[%c0_59, %c0_60, %c0_61] : memref<2x32x2048xbf16, #tpu.memory_space<vmem>>, vector<1x32x2048xbf16>
    %230 = vector.shape_cast %229 : vector<1x32x2048xbf16> to vector<32x2048xbf16>
    %cst_62 = arith.constant dense<0.000000e+00> : vector<20x2048xf32>
    %231 = tpu.matmul %228, %230, %cst_62 {dimension_numbers = #tpu.dot_dimension_numbers<[1], [0], [0], [1], [0, 0, 1, 1], [], []>} : vector<20x32xbf16>, vector<32x2048xbf16>, vector<20x2048xf32> -> vector<20x2048xf32>
    %c0_63 = arith.constant 0 : index
    %c0_64 = arith.constant 0 : index
    %c0_65 = arith.constant 0 : index
    %232 = vector.load %arg9[%c0_63, %c0_64, %c0_65] : memref<2x1x2048xf32, #tpu.memory_space<vmem>>, vector<1x1x2048xf32>
    %233 = vector.shape_cast %232 : vector<1x1x2048xf32> to vector<1x2048xf32>
    %234 = vector.broadcast %233 : vector<1x2048xf32> to vector<20x2048xf32>
    %235 = arith.addf %231, %234 : vector<20x2048xf32>
    %cst_66 = arith.constant 0.000000e+00 : f32
    %236 = vector.broadcast %cst_66 : f32 to vector<20x2048xf32>
    %237 = arith.maximumf %235, %236 : vector<20x2048xf32>
    %238 = arith.truncf %237 : vector<20x2048xf32> to vector<20x2048xbf16>
    %c0_67 = arith.constant 0 : index
    %c0_68 = arith.constant 0 : index
    %c0_69 = arith.constant 0 : index
    %239 = vector.load %arg10[%c0_67, %c0_68, %c0_69] : memref<2x32x2048xbf16, #tpu.memory_space<vmem>>, vector<1x32x2048xbf16>
    %240 = vector.shape_cast %239 : vector<1x32x2048xbf16> to vector<32x2048xbf16>
    %cst_70 = arith.constant dense<0.000000e+00> : vector<20x32xf32>
    %241 = tpu.matmul %238, %240, %cst_70 {dimension_numbers = #tpu.dot_dimension_numbers<[1], [1], [0], [0], [0, 0, 1, 0], [], []>} : vector<20x2048xbf16>, vector<32x2048xbf16>, vector<20x32xf32> -> vector<20x32xf32>
    %c0_71 = arith.constant 0 : index
    %c0_72 = arith.constant 0 : index
    %c0_73 = arith.constant 0 : index
    %242 = vector.load %arg11[%c0_71, %c0_72, %c0_73] : memref<2x1x32xf32, #tpu.memory_space<vmem>>, vector<1x1x32xf32>
    %243 = vector.shape_cast %242 : vector<1x1x32xf32> to vector<1x32xf32>
    %244 = vector.broadcast %243 : vector<1x32xf32> to vector<20x32xf32>
    %245 = arith.addf %241, %244 : vector<20x32xf32>
    %246 = arith.addf %227, %245 : vector<20x32xf32>
    %c0_74 = arith.constant 0 : index
    %c0_75 = arith.constant 0 : index
    %c0_76 = arith.constant 0 : index
    %247 = vector.load %arg14[%c0_74, %c0_75, %c0_76] : memref<2x1x32xf32, #tpu.memory_space<vmem>>, vector<1x1x32xf32>
    %248 = vector.shape_cast %247 : vector<1x1x32xf32> to vector<1x32xf32>
    %c0_77 = arith.constant 0 : index
    %c0_78 = arith.constant 0 : index
    %c0_79 = arith.constant 0 : index
    %249 = vector.load %arg15[%c0_77, %c0_78, %c0_79] : memref<2x1x32xf32, #tpu.memory_space<vmem>>, vector<1x1x32xf32>
    %250 = vector.shape_cast %249 : vector<1x1x32xf32> to vector<1x32xf32>
    %cst_80 = arith.constant dense<0.000000e+00> : vector<20xf32>
    %251 = vector.multi_reduction <add>, %246, %cst_80 [1] : vector<20x32xf32> to vector<20xf32>
    %252 = vector.shape_cast %251 : vector<20xf32> to vector<20x1xf32>
    %cst_81 = arith.constant 3.200000e+01 : f32
    %253 = vector.broadcast %cst_81 : f32 to vector<20x1xf32>
    %254 = arith.divf %252, %253 : vector<20x1xf32>
    %255 = vector.broadcast %254 : vector<20x1xf32> to vector<20x32xf32>
    %256 = arith.subf %246, %255 : vector<20x32xf32>
    %257 = arith.mulf %256, %256 : vector<20x32xf32>
    %cst_82 = arith.constant dense<0.000000e+00> : vector<20xf32>
    %258 = vector.multi_reduction <add>, %257, %cst_82 [1] : vector<20x32xf32> to vector<20xf32>
    %259 = vector.shape_cast %258 : vector<20xf32> to vector<20x1xf32>
    %cst_83 = arith.constant 3.200000e+01 : f32
    %260 = vector.broadcast %cst_83 : f32 to vector<20x1xf32>
    %261 = arith.divf %259, %260 : vector<20x1xf32>
    %262 = vector.broadcast %254 : vector<20x1xf32> to vector<20x32xf32>
    %263 = arith.subf %246, %262 : vector<20x32xf32>
    %cst_84 = arith.constant 9.99999974E-6 : f32
    %264 = vector.broadcast %cst_84 : f32 to vector<20x1xf32>
    %265 = arith.addf %261, %264 : vector<20x1xf32>
    %266 = math.rsqrt %265 : vector<20x1xf32>
    %267 = vector.broadcast %266 : vector<20x1xf32> to vector<20x32xf32>
    %268 = arith.mulf %263, %267 : vector<20x32xf32>
    %269 = vector.broadcast %248 : vector<1x32xf32> to vector<20x32xf32>
    %270 = arith.mulf %268, %269 : vector<20x32xf32>
    %271 = vector.broadcast %250 : vector<1x32xf32> to vector<20x32xf32>
    %272 = arith.addf %270, %271 : vector<20x32xf32>
    %273 = arith.truncf %272 : vector<20x32xf32> to vector<20x32xbf16>
    %c1 = arith.constant 1 : index
    %c0_85 = arith.constant 0 : index
    %c0_86 = arith.constant 0 : index
    %274 = vector.load %arg4[%c1, %c0_85, %c0_86] : memref<2x32x96xbf16, #tpu.memory_space<vmem>>, vector<1x32x96xbf16>
    %275 = vector.shape_cast %274 : vector<1x32x96xbf16> to vector<32x96xbf16>
    %cst_87 = arith.constant dense<0.000000e+00> : vector<20x96xf32>
    %276 = tpu.matmul %273, %275, %cst_87 {dimension_numbers = #tpu.dot_dimension_numbers<[1], [0], [0], [1], [0, 0, 1, 1], [], []>} : vector<20x32xbf16>, vector<32x96xbf16>, vector<20x96xf32> -> vector<20x96xf32>
    %c1_88 = arith.constant 1 : index
    %c0_89 = arith.constant 0 : index
    %c0_90 = arith.constant 0 : index
    %277 = vector.load %arg5[%c1_88, %c0_89, %c0_90] : memref<2x1x96xf32, #tpu.memory_space<vmem>>, vector<1x1x96xf32>
    %278 = vector.shape_cast %277 : vector<1x1x96xf32> to vector<1x96xf32>
    %279 = vector.broadcast %278 : vector<1x96xf32> to vector<20x96xf32>
    %280 = arith.addf %276, %279 : vector<20x96xf32>
    %281 = vector.extract_strided_slice %280 {offsets = [0, 0], sizes = [20, 32], strides = [1, 1]} : vector<20x96xf32> to vector<20x32xf32>
    %282 = vector.extract_strided_slice %280 {offsets = [0, 32], sizes = [20, 32], strides = [1, 1]} : vector<20x96xf32> to vector<20x32xf32>
    %283 = vector.extract_strided_slice %280 {offsets = [0, 64], sizes = [20, 32], strides = [1, 1]} : vector<20x96xf32> to vector<20x32xf32>
    %cst_91 = arith.constant dense<0.000000e+00> : vector<80x32xf32>
    %284 = tpu.matmul %52, %282, %cst_91 {dimension_numbers = #tpu.dot_dimension_numbers<[1], [0], [0], [1], [0, 0, 1, 1], [], []>} : vector<80x20xf32>, vector<20x32xf32>, vector<80x32xf32> -> vector<80x32xf32>
    %285 = arith.mulf %284, %30 : vector<80x32xf32>
    %cst_92 = arith.constant dense<0.000000e+00> : vector<80x32xf32>
    %286 = tpu.matmul %52, %283, %cst_92 {dimension_numbers = #tpu.dot_dimension_numbers<[1], [0], [0], [1], [0, 0, 1, 1], [], []>} : vector<80x20xf32>, vector<20x32xf32>, vector<80x32xf32> -> vector<80x32xf32>
    %287 = arith.mulf %286, %30 : vector<80x32xf32>
    %cst_93 = arith.constant 0.353553385 : f32
    %288 = vector.broadcast %cst_93 : f32 to vector<20x32xf32>
    %289 = arith.mulf %281, %288 : vector<20x32xf32>
    %cst_94 = arith.constant dense<0.000000e+00> : vector<20x80xf32>
    %290 = tpu.matmul %289, %285, %cst_94 {dimension_numbers = #tpu.dot_dimension_numbers<[1], [1], [0], [0], [0, 0, 1, 0], [], []>} : vector<20x32xf32>, vector<80x32xf32>, vector<20x80xf32> -> vector<20x80xf32>
    %291 = arith.addf %290, %149 : vector<20x80xf32>
    %cst_95 = arith.constant dense<0xFF800000> : vector<20xf32>
    %292 = vector.multi_reduction <maximumf>, %291, %cst_95 [1] : vector<20x80xf32> to vector<20xf32>
    %293 = vector.shape_cast %292 : vector<20xf32> to vector<20x1xf32>
    %294 = vector.broadcast %293 : vector<20x1xf32> to vector<20x80xf32>
    %295 = arith.subf %291, %294 : vector<20x80xf32>
    %296 = math.exp %295 : vector<20x80xf32>
    %cst_96 = arith.constant dense<0.000000e+00> : vector<20x32xf32>
    %297 = tpu.matmul %296, %30, %cst_96 {dimension_numbers = #tpu.dot_dimension_numbers<[1], [0], [0], [1], [0, 0, 1, 1], [], []>} : vector<20x80xf32>, vector<80x32xf32>, vector<20x32xf32> -> vector<20x32xf32>
    %cst_97 = arith.constant dense<0.000000e+00> : vector<20x32xf32>
    %298 = tpu.matmul %296, %287, %cst_97 {dimension_numbers = #tpu.dot_dimension_numbers<[1], [0], [0], [1], [0, 0, 1, 1], [], []>} : vector<20x80xf32>, vector<80x32xf32>, vector<20x32xf32> -> vector<20x32xf32>
    %299 = tpu.reciprocal %297 {approx = true} : vector<20x32xf32> -> vector<20x32xf32>
    %300 = arith.mulf %298, %299 : vector<20x32xf32>
    %301 = arith.truncf %300 : vector<20x32xf32> to vector<20x32xbf16>
    %c1_98 = arith.constant 1 : index
    %c0_99 = arith.constant 0 : index
    %c0_100 = arith.constant 0 : index
    %302 = vector.load %arg6[%c1_98, %c0_99, %c0_100] : memref<2x32x32xbf16, #tpu.memory_space<vmem>>, vector<1x32x32xbf16>
    %303 = vector.shape_cast %302 : vector<1x32x32xbf16> to vector<32x32xbf16>
    %cst_101 = arith.constant dense<0.000000e+00> : vector<20x32xf32>
    %304 = tpu.matmul %301, %303, %cst_101 {dimension_numbers = #tpu.dot_dimension_numbers<[1], [0], [0], [1], [0, 0, 1, 1], [], []>} : vector<20x32xbf16>, vector<32x32xbf16>, vector<20x32xf32> -> vector<20x32xf32>
    %c1_102 = arith.constant 1 : index
    %c0_103 = arith.constant 0 : index
    %c0_104 = arith.constant 0 : index
    %305 = vector.load %arg7[%c1_102, %c0_103, %c0_104] : memref<2x1x32xf32, #tpu.memory_space<vmem>>, vector<1x1x32xf32>
    %306 = vector.shape_cast %305 : vector<1x1x32xf32> to vector<1x32xf32>
    %307 = vector.broadcast %306 : vector<1x32xf32> to vector<20x32xf32>
    %308 = arith.addf %304, %307 : vector<20x32xf32>
    %309 = arith.addf %272, %308 : vector<20x32xf32>
    %c1_105 = arith.constant 1 : index
    %c0_106 = arith.constant 0 : index
    %c0_107 = arith.constant 0 : index
    %310 = vector.load %arg12[%c1_105, %c0_106, %c0_107] : memref<2x1x32xf32, #tpu.memory_space<vmem>>, vector<1x1x32xf32>
    %311 = vector.shape_cast %310 : vector<1x1x32xf32> to vector<1x32xf32>
    %c1_108 = arith.constant 1 : index
    %c0_109 = arith.constant 0 : index
    %c0_110 = arith.constant 0 : index
    %312 = vector.load %arg13[%c1_108, %c0_109, %c0_110] : memref<2x1x32xf32, #tpu.memory_space<vmem>>, vector<1x1x32xf32>
    %313 = vector.shape_cast %312 : vector<1x1x32xf32> to vector<1x32xf32>
    %cst_111 = arith.constant dense<0.000000e+00> : vector<20xf32>
    %314 = vector.multi_reduction <add>, %309, %cst_111 [1] : vector<20x32xf32> to vector<20xf32>
    %315 = vector.shape_cast %314 : vector<20xf32> to vector<20x1xf32>
    %cst_112 = arith.constant 3.200000e+01 : f32
    %316 = vector.broadcast %cst_112 : f32 to vector<20x1xf32>
    %317 = arith.divf %315, %316 : vector<20x1xf32>
    %318 = vector.broadcast %317 : vector<20x1xf32> to vector<20x32xf32>
    %319 = arith.subf %309, %318 : vector<20x32xf32>
    %320 = arith.mulf %319, %319 : vector<20x32xf32>
    %cst_113 = arith.constant dense<0.000000e+00> : vector<20xf32>
    %321 = vector.multi_reduction <add>, %320, %cst_113 [1] : vector<20x32xf32> to vector<20xf32>
    %322 = vector.shape_cast %321 : vector<20xf32> to vector<20x1xf32>
    %cst_114 = arith.constant 3.200000e+01 : f32
    %323 = vector.broadcast %cst_114 : f32 to vector<20x1xf32>
    %324 = arith.divf %322, %323 : vector<20x1xf32>
    %325 = vector.broadcast %317 : vector<20x1xf32> to vector<20x32xf32>
    %326 = arith.subf %309, %325 : vector<20x32xf32>
    %cst_115 = arith.constant 9.99999974E-6 : f32
    %327 = vector.broadcast %cst_115 : f32 to vector<20x1xf32>
    %328 = arith.addf %324, %327 : vector<20x1xf32>
    %329 = math.rsqrt %328 : vector<20x1xf32>
    %330 = vector.broadcast %329 : vector<20x1xf32> to vector<20x32xf32>
    %331 = arith.mulf %326, %330 : vector<20x32xf32>
    %332 = vector.broadcast %311 : vector<1x32xf32> to vector<20x32xf32>
    %333 = arith.mulf %331, %332 : vector<20x32xf32>
    %334 = vector.broadcast %313 : vector<1x32xf32> to vector<20x32xf32>
    %335 = arith.addf %333, %334 : vector<20x32xf32>
    %336 = arith.truncf %335 : vector<20x32xf32> to vector<20x32xbf16>
    %c1_116 = arith.constant 1 : index
    %c0_117 = arith.constant 0 : index
    %c0_118 = arith.constant 0 : index
    %337 = vector.load %arg8[%c1_116, %c0_117, %c0_118] : memref<2x32x2048xbf16, #tpu.memory_space<vmem>>, vector<1x32x2048xbf16>
    %338 = vector.shape_cast %337 : vector<1x32x2048xbf16> to vector<32x2048xbf16>
    %cst_119 = arith.constant dense<0.000000e+00> : vector<20x2048xf32>
    %339 = tpu.matmul %336, %338, %cst_119 {dimension_numbers = #tpu.dot_dimension_numbers<[1], [0], [0], [1], [0, 0, 1, 1], [], []>} : vector<20x32xbf16>, vector<32x2048xbf16>, vector<20x2048xf32> -> vector<20x2048xf32>
    %c1_120 = arith.constant 1 : index
    %c0_121 = arith.constant 0 : index
    %c0_122 = arith.constant 0 : index
    %340 = vector.load %arg9[%c1_120, %c0_121, %c0_122] : memref<2x1x2048xf32, #tpu.memory_space<vmem>>, vector<1x1x2048xf32>
    %341 = vector.shape_cast %340 : vector<1x1x2048xf32> to vector<1x2048xf32>
    %342 = vector.broadcast %341 : vector<1x2048xf32> to vector<20x2048xf32>
    %343 = arith.addf %339, %342 : vector<20x2048xf32>
    %cst_123 = arith.constant 0.000000e+00 : f32
    %344 = vector.broadcast %cst_123 : f32 to vector<20x2048xf32>
    %345 = arith.maximumf %343, %344 : vector<20x2048xf32>
    %346 = arith.truncf %345 : vector<20x2048xf32> to vector<20x2048xbf16>
    %c1_124 = arith.constant 1 : index
    %c0_125 = arith.constant 0 : index
    %c0_126 = arith.constant 0 : index
    %347 = vector.load %arg10[%c1_124, %c0_125, %c0_126] : memref<2x32x2048xbf16, #tpu.memory_space<vmem>>, vector<1x32x2048xbf16>
    %348 = vector.shape_cast %347 : vector<1x32x2048xbf16> to vector<32x2048xbf16>
    %cst_127 = arith.constant dense<0.000000e+00> : vector<20x32xf32>
    %349 = tpu.matmul %346, %348, %cst_127 {dimension_numbers = #tpu.dot_dimension_numbers<[1], [1], [0], [0], [0, 0, 1, 0], [], []>} : vector<20x2048xbf16>, vector<32x2048xbf16>, vector<20x32xf32> -> vector<20x32xf32>
    %c1_128 = arith.constant 1 : index
    %c0_129 = arith.constant 0 : index
    %c0_130 = arith.constant 0 : index
    %350 = vector.load %arg11[%c1_128, %c0_129, %c0_130] : memref<2x1x32xf32, #tpu.memory_space<vmem>>, vector<1x1x32xf32>
    %351 = vector.shape_cast %350 : vector<1x1x32xf32> to vector<1x32xf32>
    %352 = vector.broadcast %351 : vector<1x32xf32> to vector<20x32xf32>
    %353 = arith.addf %349, %352 : vector<20x32xf32>
    %354 = arith.addf %335, %353 : vector<20x32xf32>
    %c1_131 = arith.constant 1 : index
    %c0_132 = arith.constant 0 : index
    %c0_133 = arith.constant 0 : index
    %355 = vector.load %arg14[%c1_131, %c0_132, %c0_133] : memref<2x1x32xf32, #tpu.memory_space<vmem>>, vector<1x1x32xf32>
    %356 = vector.shape_cast %355 : vector<1x1x32xf32> to vector<1x32xf32>
    %c1_134 = arith.constant 1 : index
    %c0_135 = arith.constant 0 : index
    %c0_136 = arith.constant 0 : index
    %357 = vector.load %arg15[%c1_134, %c0_135, %c0_136] : memref<2x1x32xf32, #tpu.memory_space<vmem>>, vector<1x1x32xf32>
    %358 = vector.shape_cast %357 : vector<1x1x32xf32> to vector<1x32xf32>
    %cst_137 = arith.constant dense<0.000000e+00> : vector<20xf32>
    %359 = vector.multi_reduction <add>, %354, %cst_137 [1] : vector<20x32xf32> to vector<20xf32>
    %360 = vector.shape_cast %359 : vector<20xf32> to vector<20x1xf32>
    %cst_138 = arith.constant 3.200000e+01 : f32
    %361 = vector.broadcast %cst_138 : f32 to vector<20x1xf32>
    %362 = arith.divf %360, %361 : vector<20x1xf32>
    %363 = vector.broadcast %362 : vector<20x1xf32> to vector<20x32xf32>
    %364 = arith.subf %354, %363 : vector<20x32xf32>
    %365 = arith.mulf %364, %364 : vector<20x32xf32>
    %cst_139 = arith.constant dense<0.000000e+00> : vector<20xf32>
    %366 = vector.multi_reduction <add>, %365, %cst_139 [1] : vector<20x32xf32> to vector<20xf32>
    %367 = vector.shape_cast %366 : vector<20xf32> to vector<20x1xf32>
    %cst_140 = arith.constant 3.200000e+01 : f32
    %368 = vector.broadcast %cst_140 : f32 to vector<20x1xf32>
    %369 = arith.divf %367, %368 : vector<20x1xf32>
    %370 = vector.broadcast %362 : vector<20x1xf32> to vector<20x32xf32>
    %371 = arith.subf %354, %370 : vector<20x32xf32>
    %cst_141 = arith.constant 9.99999974E-6 : f32
    %372 = vector.broadcast %cst_141 : f32 to vector<20x1xf32>
    %373 = arith.addf %369, %372 : vector<20x1xf32>
    %374 = math.rsqrt %373 : vector<20x1xf32>
    %375 = vector.broadcast %374 : vector<20x1xf32> to vector<20x32xf32>
    %376 = arith.mulf %371, %375 : vector<20x32xf32>
    %377 = vector.broadcast %356 : vector<1x32xf32> to vector<20x32xf32>
    %378 = arith.mulf %376, %377 : vector<20x32xf32>
    %379 = vector.broadcast %358 : vector<1x32xf32> to vector<20x32xf32>
    %380 = arith.addf %378, %379 : vector<20x32xf32>
    %cst_142 = arith.constant dense<0.000000e+00> : vector<4x32xf32>
    %381 = tpu.matmul %158, %380, %cst_142 {dimension_numbers = #tpu.dot_dimension_numbers<[1], [0], [0], [1], [0, 0, 1, 1], [], []>} : vector<4x20xf32>, vector<20x32xf32>, vector<4x32xf32> -> vector<4x32xf32>
    %c0_143 = arith.constant 0 : index
    %c0_144 = arith.constant 0 : index
    %382 = vector.load %arg16[%c0_143, %c0_144] : memref<32x128xf32, #tpu.memory_space<vmem>>, vector<32x128xf32>
    %cst_145 = arith.constant dense<0.000000e+00> : vector<4x128xf32>
    %383 = tpu.matmul %381, %382, %cst_145 {dimension_numbers = #tpu.dot_dimension_numbers<[1], [0], [0], [1], [0, 0, 1, 1], [], []>} : vector<4x32xf32>, vector<32x128xf32>, vector<4x128xf32> -> vector<4x128xf32>
    %c0_146 = arith.constant 0 : index
    %c0_147 = arith.constant 0 : index
    %384 = vector.load %arg17[%c0_146, %c0_147] : memref<1x128xf32, #tpu.memory_space<vmem>>, vector<1x128xf32>
    %385 = vector.broadcast %384 : vector<1x128xf32> to vector<4x128xf32>
    %386 = arith.addf %383, %385 : vector<4x128xf32>
    %c0_148 = arith.constant 0 : index
    %c0_149 = arith.constant 0 : index
    %387 = vector.load %arg18[%c0_148, %c0_149] : memref<4x128xf32, #tpu.memory_space<vmem>>, vector<4x128xf32>
    tpu.vector_store %arg18[%c0_148, %c0_149], %386 {strides = array<i32>} : memref<4x128xf32, #tpu.memory_space<vmem>>, vector<4x128xf32>,
    return
  }
  func.func @transform_0(%arg0: i32) -> (i32, i32) {
    %c0_i32 = arith.constant 0 : i32
    %c0_i32_0 = arith.constant 0 : i32
    return %arg0, %c0_i32 : i32, i32
  }
  func.func @transform_1(%arg0: i32) -> (i32, i32) {
    %c0_i32 = arith.constant 0 : i32
    %c0_i32_0 = arith.constant 0 : i32
    %c0_i32_1 = arith.constant 0 : i32
    return %c0_i32, %c0_i32_0 : i32, i32
  }
  func.func @transform_2(%arg0: i32) -> (i32, i32) {
    %c0_i32 = arith.constant 0 : i32
    %c0_i32_0 = arith.constant 0 : i32
    %c0_i32_1 = arith.constant 0 : i32
    return %c0_i32, %c0_i32_0 : i32, i32
  }
  func.func @transform_3(%arg0: i32) -> (i32, i32, i32) {
    %c0_i32 = arith.constant 0 : i32
    %c0_i32_0 = arith.constant 0 : i32
    %c0_i32_1 = arith.constant 0 : i32
    %c0_i32_2 = arith.constant 0 : i32
    return %c0_i32, %c0_i32_0, %c0_i32_1 : i32, i32, i32
  }
  func.func @transform_4(%arg0: i32) -> (i32, i32, i32) {
    %c0_i32 = arith.constant 0 : i32
    %c0_i32_0 = arith.constant 0 : i32
    %c0_i32_1 = arith.constant 0 : i32
    %c0_i32_2 = arith.constant 0 : i32
    return %c0_i32, %c0_i32_0, %c0_i32_1 : i32, i32, i32
  }
  func.func @transform_5(%arg0: i32) -> (i32, i32, i32) {
    %c0_i32 = arith.constant 0 : i32
    %c0_i32_0 = arith.constant 0 : i32
    %c0_i32_1 = arith.constant 0 : i32
    %c0_i32_2 = arith.constant 0 : i32
    return %c0_i32, %c0_i32_0, %c0_i32_1 : i32, i32, i32
  }
  func.func @transform_6(%arg0: i32) -> (i32, i32, i32) {
    %c0_i32 = arith.constant 0 : i32
    %c0_i32_0 = arith.constant 0 : i32
    %c0_i32_1 = arith.constant 0 : i32
    %c0_i32_2 = arith.constant 0 : i32
    return %c0_i32, %c0_i32_0, %c0_i32_1 : i32, i32, i32
  }
  func.func @transform_7(%arg0: i32) -> (i32, i32, i32) {
    %c0_i32 = arith.constant 0 : i32
    %c0_i32_0 = arith.constant 0 : i32
    %c0_i32_1 = arith.constant 0 : i32
    %c0_i32_2 = arith.constant 0 : i32
    return %c0_i32, %c0_i32_0, %c0_i32_1 : i32, i32, i32
  }
  func.func @transform_8(%arg0: i32) -> (i32, i32, i32) {
    %c0_i32 = arith.constant 0 : i32
    %c0_i32_0 = arith.constant 0 : i32
    %c0_i32_1 = arith.constant 0 : i32
    %c0_i32_2 = arith.constant 0 : i32
    return %c0_i32, %c0_i32_0, %c0_i32_1 : i32, i32, i32
  }
  func.func @transform_9(%arg0: i32) -> (i32, i32, i32) {
    %c0_i32 = arith.constant 0 : i32
    %c0_i32_0 = arith.constant 0 : i32
    %c0_i32_1 = arith.constant 0 : i32
    %c0_i32_2 = arith.constant 0 : i32
    return %c0_i32, %c0_i32_0, %c0_i32_1 : i32, i32, i32
  }
  func.func @transform_10(%arg0: i32) -> (i32, i32, i32) {
    %c0_i32 = arith.constant 0 : i32
    %c0_i32_0 = arith.constant 0 : i32
    %c0_i32_1 = arith.constant 0 : i32
    %c0_i32_2 = arith.constant 0 : i32
    return %c0_i32, %c0_i32_0, %c0_i32_1 : i32, i32, i32
  }
  func.func @transform_11(%arg0: i32) -> (i32, i32, i32) {
    %c0_i32 = arith.constant 0 : i32
    %c0_i32_0 = arith.constant 0 : i32
    %c0_i32_1 = arith.constant 0 : i32
    %c0_i32_2 = arith.constant 0 : i32
    return %c0_i32, %c0_i32_0, %c0_i32_1 : i32, i32, i32
  }
  func.func @transform_12(%arg0: i32) -> (i32, i32, i32) {
    %c0_i32 = arith.constant 0 : i32
    %c0_i32_0 = arith.constant 0 : i32
    %c0_i32_1 = arith.constant 0 : i32
    %c0_i32_2 = arith.constant 0 : i32
    return %c0_i32, %c0_i32_0, %c0_i32_1 : i32, i32, i32
  }
  func.func @transform_13(%arg0: i32) -> (i32, i32, i32) {
    %c0_i32 = arith.constant 0 : i32
    %c0_i32_0 = arith.constant 0 : i32
    %c0_i32_1 = arith.constant 0 : i32
    %c0_i32_2 = arith.constant 0 : i32
    return %c0_i32, %c0_i32_0, %c0_i32_1 : i32, i32, i32
  }
  func.func @transform_14(%arg0: i32) -> (i32, i32, i32) {
    %c0_i32 = arith.constant 0 : i32
    %c0_i32_0 = arith.constant 0 : i32
    %c0_i32_1 = arith.constant 0 : i32
    %c0_i32_2 = arith.constant 0 : i32
    return %c0_i32, %c0_i32_0, %c0_i32_1 : i32, i32, i32
  }
  func.func @transform_15(%arg0: i32) -> (i32, i32) {
    %c0_i32 = arith.constant 0 : i32
    %c0_i32_0 = arith.constant 0 : i32
    %c0_i32_1 = arith.constant 0 : i32
    return %c0_i32, %c0_i32_0 : i32, i32
  }
  func.func @transform_16(%arg0: i32) -> (i32, i32) {
    %c0_i32 = arith.constant 0 : i32
    %c0_i32_0 = arith.constant 0 : i32
    %c0_i32_1 = arith.constant 0 : i32
    return %c0_i32, %c0_i32_0 : i32, i32
  }
  func.func @transform_17(%arg0: i32) -> (i32, i32) {
    %c0_i32 = arith.constant 0 : i32
    %c0_i32_0 = arith.constant 0 : i32
    return %arg0, %c0_i32 : i32, i32
  }
}

</mosaic_0001>

<llo_original>
// kernel: tpu_custom_call.1
$region0: #{tpu_custom_call.1}
  #allocation0 [shape = 'u32[]', space=smem, size = 0x4, offset = 0x4, fixed_abs, tag = 'smem constant byte address 0x4 - core index']
  #allocation1 [shape = 'u32[144,128]{1,0:T(1,128)}', space=vmem, size = 0x12000, scoped, tag = 'internal scratch']
  %s0 = inlined_call_operand.vmem [shape: f32[20,7], index: 0, kind: input, shape index: {}]
  %s1 = inlined_call_operand.hbm [shape: f32[7,32], index: 1, kind: input, shape index: {}]
  %s2 = inlined_call_operand.hbm [shape: f32[1,32], index: 2, kind: input, shape index: {}]
  %s3 = inlined_call_operand.vmem [shape: bf16[2,32,96], index: 3, kind: input, shape index: {}]
  %s4 = inlined_call_operand.vmem [shape: f32[2,1,96], index: 4, kind: input, shape index: {}]
  %s5 = inlined_call_operand.hbm [shape: bf16[2,32,32], index: 5, kind: input, shape index: {}]
  %s6 = inlined_call_operand.vmem [shape: f32[2,1,32], index: 6, kind: input, shape index: {}]
  %s7 = inlined_call_operand.hbm [shape: bf16[2,32,2048], index: 7, kind: input, shape index: {}]
  %s8 = inlined_call_operand.hbm [shape: f32[2,1,2048], index: 8, kind: input, shape index: {}]
  %s9 = inlined_call_operand.hbm [shape: bf16[2,32,2048], index: 9, kind: input, shape index: {}]
  %s10 = inlined_call_operand.vmem [shape: f32[2,1,32], index: 10, kind: input, shape index: {}]
  %s11 = inlined_call_operand.vmem [shape: f32[2,1,32], index: 11, kind: input, shape index: {}]
  %s12 = inlined_call_operand.vmem [shape: f32[2,1,32], index: 12, kind: input, shape index: {}]
  %s13 = inlined_call_operand.vmem [shape: f32[2,1,32], index: 13, kind: input, shape index: {}]
  %s14 = inlined_call_operand.vmem [shape: f32[2,1,32], index: 14, kind: input, shape index: {}]
  %s15 = inlined_call_operand.hbm [shape: f32[32,128], index: 15, kind: input, shape index: {}]
  %s16 = inlined_call_operand.vmem [shape: f32[1,128], index: 16, kind: input, shape index: {}]
  %s17 = inlined_call_operand.hbm [shape: f32[4,128], index: 17, kind: output, shape index: {}]
  %s18 = sld [smem:[#allocation0]]
  $region106: #{tpu_custom_call.1} parent=0
    _
  %s20 = ssub.s32 1, %s18
  %s21 = scalar_select 0, %s20, %s18
  $region1: #{tpu_custom_call.1} parent=0
    #allocation2 [shape = 'u8[4096]{0}', space=vmem, size = 0x1000, scoped, tag = 'input window, operand 1, single buffered']
    #allocation3 [shape = 's32[1]{0}', space=sflag, size = 0x4, scoped, tag = 'scoped memory for tpu_custom_call.1']
    #allocation4 [shape = 's32[1]{0}', space=sflag, size = 0x4, scoped, tag = 'scoped memory for tpu_custom_call.1']
    #allocation5 [shape = 'u8[512]{0}', space=vmem, size = 0x400, scoped, tag = 'input window, operand 2, single buffered']
    #allocation6 [shape = 's32[1]{0}', space=sflag, size = 0x4, scoped, tag = 'scoped memory for tpu_custom_call.1']
    #allocation7 [shape = 'u8[16384]{0}', space=vmem, size = 0x4000, scoped, tag = 'input window, operand 5, single buffered']
    #allocation8 [shape = 'u8[262144]{0}', space=vmem, size = 0x40000, scoped, tag = 'input window, operand 7, single buffered']
    #allocation9 [shape = 's32[1]{0}', space=sflag, size = 0x4, scoped, tag = 'scoped memory for tpu_custom_call.1']
    #allocation10 [shape = 'u8[16384]{0}', space=vmem, size = 0x4000, scoped, tag = 'input window, operand 8, single buffered']
    #allocation11 [shape = 'u8[262144]{0}', space=vmem, size = 0x40000, scoped, tag = 'input window, operand 9, single buffered']
    #allocation12 [shape = 's32[1]{0}', space=sflag, size = 0x4, scoped, tag = 'scoped memory for tpu_custom_call.1']
    #allocation13 [shape = 'u8[16384]{0}', space=vmem, size = 0x4000, scoped, tag = 'input window, operand 15, single buffered']
    #allocation14 [shape = 'u8[2048]{0}', space=vmem, size = 0x800, scoped, tag = 'output window, operand 0, single buffered']
    %22 = vsyncpa [#allocation3], 0
    %23 = vsyncpa [#allocation6], 0
    %24 = vsyncpa [#allocation9], 0
    %25 = vsyncpa [#allocation12], 0
    %26 = vsyncpa [#allocation4], 0
    // Predicated region
    $region2: #{tpu_custom_call.1} parent=1 // pred_check
      _
    $region3: #{tpu_custom_call.1} parent=1 // pred_check_branch
      %28 = sbr.rel (0) target = $region5
    $region4: #{tpu_custom_call.1} parent=1 // pred_region
      _
    $region5: #{tpu_custom_call.1} parent=1 // pred_fallthru
      _
    // Predicated region
    $region6: #{tpu_custom_call.1} parent=1 // pred_check
      _
    $region7: #{tpu_custom_call.1} parent=1 // pred_check_branch
      %30 = sbr.rel (0) target = $region9
    $region8: #{tpu_custom_call.1} parent=1 // pred_region
      %s32 = ssub.s32 128, 128
      %33 = vsyncadd [#allocation3], %s32
      %s35 = sshll.u32 [#allocation2], 4
      %s36 = int_to_ptr.vmem [resolvable:$true] %s35
      %38 = dma.hbm_to_vmem [thread:$0]  %s1, 128, %s36, [#allocation3]
    $region9: #{tpu_custom_call.1} parent=1 // pred_fallthru
      _
    // Predicated region
    $region10: #{tpu_custom_call.1} parent=1 // pred_check
      _
    $region11: #{tpu_custom_call.1} parent=1 // pred_check_branch
      %40 = sbr.rel (0) target = $region13
    $region12: #{tpu_custom_call.1} parent=1 // pred_region
      %s42 = ssub.s32 16, 16
      %43 = vsyncadd [#allocation6], %s42
      %s45 = sshll.u32 [#allocation5], 4
      %s46 = int_to_ptr.vmem [resolvable:$true] %s45
      %48 = dma.hbm_to_vmem [thread:$0]  %s2, 16, %s46, [#allocation6]
    $region13: #{tpu_custom_call.1} parent=1 // pred_fallthru
      _
    // Predicated region
    $region14: #{tpu_custom_call.1} parent=1 // pred_check
      _
    $region15: #{tpu_custom_call.1} parent=1 // pred_check_branch
      %50 = sbr.rel (0) target = $region17
    $region16: #{tpu_custom_call.1} parent=1 // pred_region
      _
    $region17: #{tpu_custom_call.1} parent=1 // pred_fallthru
      _
    // Predicated region
    $region18: #{tpu_custom_call.1} parent=1 // pred_check
      _
    $region19: #{tpu_custom_call.1} parent=1 // pred_check_branch
      %52 = sbr.rel (0) target = $region21
    $region20: #{tpu_custom_call.1} parent=1 // pred_region
      _
    $region21: #{tpu_custom_call.1} parent=1 // pred_fallthru
      _
    // Predicated region
    $region22: #{tpu_custom_call.1} parent=1 // pred_check
      _
    $region23: #{tpu_custom_call.1} parent=1 // pred_check_branch
      %54 = sbr.rel (0) target = $region25
    $region24: #{tpu_custom_call.1} parent=1 // pred_region
      %s56 = ssub.s32 512, 512
      %57 = vsyncadd [#allocation6], %s56
      %s58 = sshll.u32 [#allocation7], 4
      %s59 = int_to_ptr.vmem [resolvable:$true] %s58
      %64 = dma.hbm_to_vmem [thread:$0]  %s5, 512, %s59, [#allocation6], 64, 64, 4
    $region25: #{tpu_custom_call.1} parent=1 // pred_fallthru
      _
    // Predicated region
    $region26: #{tpu_custom_call.1} parent=1 // pred_check
      _
    $region27: #{tpu_custom_call.1} parent=1 // pred_check_branch
      %66 = sbr.rel (0) target = $region29
    $region28: #{tpu_custom_call.1} parent=1 // pred_region
      _
    $region29: #{tpu_custom_call.1} parent=1 // pred_fallthru
      _
    // Predicated region
    $region30: #{tpu_custom_call.1} parent=1 // pred_check
      _
    $region31: #{tpu_custom_call.1} parent=1 // pred_check_branch
      %68 = sbr.rel (0) target = $region33
    $region32: #{tpu_custom_call.1} parent=1 // pred_region
      %s70 = ssub.s32 8192, 8192
      %71 = vsyncadd [#allocation9], %s70
      %s72 = sshll.u32 [#allocation8], 4
      %s73 = int_to_ptr.vmem [resolvable:$true] %s72
      %78 = dma.hbm_to_vmem [thread:$0]  %s7, 8192, %s73, [#allocation9], 1024, 1024, 64
    $region33: #{tpu_custom_call.1} parent=1 // pred_fallthru
      _
    // Predicated region
    $region34: #{tpu_custom_call.1} parent=1 // pred_check
      _
    $region35: #{tpu_custom_call.1} parent=1 // pred_check_branch
      %80 = sbr.rel (0) target = $region37
    $region36: #{tpu_custom_call.1} parent=1 // pred_region
      %s82 = ssub.s32 512, 512
      %83 = vsyncadd [#allocation9], %s82
      %s84 = sshll.u32 [#allocation10], 4
      %s85 = int_to_ptr.vmem [resolvable:$true] %s84
      %90 = dma.hbm_to_vmem [thread:$0]  %s8, 512, %s85, [#allocation9], 256, 256, 16
    $region37: #{tpu_custom_call.1} parent=1 // pred_fallthru
      _
    // Predicated region
    $region38: #{tpu_custom_call.1} parent=1 // pred_check
      _
    $region39: #{tpu_custom_call.1} parent=1 // pred_check_branch
      %92 = sbr.rel (0) target = $region41
    $region40: #{tpu_custom_call.1} parent=1 // pred_region
      %s94 = ssub.s32 8192, 8192
      %95 = vsyncadd [#allocation12], %s94
      %s96 = sshll.u32 [#allocation11], 4
      %s97 = int_to_ptr.vmem [resolvable:$true] %s96
      %102 = dma.hbm_to_vmem [thread:$0]  %s9, 8192, %s97, [#allocation12], 1024, 1024, 64
    $region41: #{tpu_custom_call.1} parent=1 // pred_fallthru
      _
    // Predicated region
    $region42: #{tpu_custom_call.1} parent=1 // pred_check
      _
    $region43: #{tpu_custom_call.1} parent=1 // pred_check_branch
      %104 = sbr.rel (0) target = $region45
    $region44: #{tpu_custom_call.1} parent=1 // pred_region
      _
    $region45: #{tpu_custom_call.1} parent=1 // pred_fallthru
      _
    // Predicated region
    $region46: #{tpu_custom_call.1} parent=1 // pred_check
      _
    $region47: #{tpu_custom_call.1} parent=1 // pred_check_branch
      %106 = sbr.rel (0) target = $region49
    $region48: #{tpu_custom_call.1} parent=1 // pred_region
      _
    $region49: #{tpu_custom_call.1} parent=1 // pred_fallthru
      _
    // Predicated region
    $region50: #{tpu_custom_call.1} parent=1 // pred_check
      _
    $region51: #{tpu_custom_call.1} parent=1 // pred_check_branch
      %108 = sbr.rel (0) target = $region53
    $region52: #{tpu_custom_call.1} parent=1 // pred_region
      _
    $region53: #{tpu_custom_call.1} parent=1 // pred_fallthru
      _
    // Predicated region
    $region54: #{tpu_custom_call.1} parent=1 // pred_check
      _
    $region55: #{tpu_custom_call.1} parent=1 // pred_check_branch
      %110 = sbr.rel (0) target = $region57
    $region56: #{tpu_custom_call.1} parent=1 // pred_region
      _
    $region57: #{tpu_custom_call.1} parent=1 // pred_fallthru
      _
    // Predicated region
    $region58: #{tpu_custom_call.1} parent=1 // pred_check
      _
    $region59: #{tpu_custom_call.1} parent=1 // pred_check_branch
      %112 = sbr.rel (0) target = $region61
    $region60: #{tpu_custom_call.1} parent=1 // pred_region
      _
    $region61: #{tpu_custom_call.1} parent=1 // pred_fallthru
      _
    // Predicated region
    $region62: #{tpu_custom_call.1} parent=1 // pred_check
      _
    $region63: #{tpu_custom_call.1} parent=1 // pred_check_branch
      %114 = sbr.rel (0) target = $region65
    $region64: #{tpu_custom_call.1} parent=1 // pred_region
      %s116 = ssub.s32 512, 512
      %117 = vsyncadd [#allocation12], %s116
      %s118 = sshll.u32 [#allocation13], 4
      %s119 = int_to_ptr.vmem [resolvable:$true] %s118
      %124 = dma.hbm_to_vmem [thread:$0]  %s15, 512, %s119, [#allocation12], 128, 128, 8
    $region65: #{tpu_custom_call.1} parent=1 // pred_fallthru
      _
    // Predicated region
    $region66: #{tpu_custom_call.1} parent=1 // pred_check
      _
    $region67: #{tpu_custom_call.1} parent=1 // pred_check_branch
      %126 = sbr.rel (0) target = $region69
    $region68: #{tpu_custom_call.1} parent=1 // pred_region
      _
    $region69: #{tpu_custom_call.1} parent=1 // pred_fallthru
      _
    // Predicated region
    $region70: #{tpu_custom_call.1} parent=1 // pred_check
      _
    $region71: #{tpu_custom_call.1} parent=1 // pred_check_branch
      %128 = sbr.rel (0) target = $region73
    $region72: #{tpu_custom_call.1} parent=1 // pred_region
      %129 = dma.done [#allocation3], 128
    $region73: #{tpu_custom_call.1} parent=1 // pred_fallthru
      _
    // Predicated region
    $region74: #{tpu_custom_call.1} parent=1 // pred_check
      _
    $region75: #{tpu_custom_call.1} parent=1 // pred_check_branch
      %131 = sbr.rel (0) target = $region77
    $region76: #{tpu_custom_call.1} parent=1 // pred_region
      %132 = dma.done [#allocation6], 16
    $region77: #{tpu_custom_call.1} parent=1 // pred_fallthru
      _
    // Predicated region
    $region78: #{tpu_custom_call.1} parent=1 // pred_check
      _
    $region79: #{tpu_custom_call.1} parent=1 // pred_check_branch
      %134 = sbr.rel (0) target = $region81
    $region80: #{tpu_custom_call.1} parent=1 // pred_region
      %135 = dma.done [#allocation6], 512
    $region81: #{tpu_custom_call.1} parent=1 // pred_fallthru
      _
    // Predicated region
    $region82: #{tpu_custom_call.1} parent=1 // pred_check
      _
    $region83: #{tpu_custom_call.1} parent=1 // pred_check_branch
      %137 = sbr.rel (0) target = $region85
    $region84: #{tpu_custom_call.1} parent=1 // pred_region
      %138 = dma.done [#allocation9], 8192
    $region85: #{tpu_custom_call.1} parent=1 // pred_fallthru
      _
    // Predicated region
    $region86: #{tpu_custom_call.1} parent=1 // pred_check
      _
    $region87: #{tpu_custom_call.1} parent=1 // pred_check_branch
      %140 = sbr.rel (0) target = $region89
    $region88: #{tpu_custom_call.1} parent=1 // pred_region
      %141 = dma.done [#allocation9], 512
    $region89: #{tpu_custom_call.1} parent=1 // pred_fallthru
      _
    // Predicated region
    $region90: #{tpu_custom_call.1} parent=1 // pred_check
      _
    $region91: #{tpu_custom_call.1} parent=1 // pred_check_branch
      %143 = sbr.rel (0) target = $region93
    $region92: #{tpu_custom_call.1} parent=1 // pred_region
      %144 = dma.done [#allocation12], 8192
    $region93: #{tpu_custom_call.1} parent=1 // pred_fallthru
      _
    // Predicated region
    $region94: #{tpu_custom_call.1} parent=1 // pred_check
      _
    $region95: #{tpu_custom_call.1} parent=1 // pred_check_branch
      %146 = sbr.rel (0) target = $region97
    $region96: #{tpu_custom_call.1} parent=1 // pred_region
      %147 = dma.done [#allocation12], 512
    $region97: #{tpu_custom_call.1} parent=1 // pred_fallthru
      _
    %v149 = vlaneseq
    %v150 = vshrl.u32 %v149, 7
    %v151 = vadd.s32 %v150, 8
    %v152 = vadd.s32 %v150, 16
    %v153 = vadd.s32 %v150, 24
    %v154 = vadd.s32 %v150, 32
    %v155 = vadd.s32 %v150, 40
    %v156 = vadd.s32 %v150, 48
    %v157 = vadd.s32 %v150, 56
    %v158 = vadd.s32 %v150, 64
    %v159 = vadd.s32 %v150, 72
    %vm160 = vcmp.ge.s32.totalorder %v150, 20
    %vm161 = vcmp.ge.s32.totalorder %v151, 20
    %vm162 = vcmp.ge.s32.totalorder %v152, 20
    %vm163 = vcmp.ge.s32.totalorder %v153, 20
    %vm164 = vcmp.ge.s32.totalorder %v154, 20
    %vm165 = vcmp.ge.s32.totalorder %v155, 20
    %vm166 = vcmp.ge.s32.totalorder %v156, 20
    %vm167 = vcmp.ge.s32.totalorder %v157, 20
    %vm168 = vcmp.ge.s32.totalorder %v158, 20
    %vm169 = vcmp.ge.s32.totalorder %v159, 20
    %v170 = vsel %vm160, 1, 0
    %v171 = vsel %vm161, 1, 0
    %v172 = vsel %vm162, 1, 0
    %v173 = vsel %vm163, 1, 0
    %v174 = vsel %vm164, 1, 0
    %v175 = vsel %vm165, 1, 0
    %v176 = vsel %vm166, 1, 0
    %v177 = vsel %vm167, 1, 0
    %v178 = vsel %vm168, 1, 0
    %v179 = vsel %vm169, 1, 0
    %vm180 = vcmp.ge.s32.totalorder %v150, 40
    %vm181 = vcmp.ge.s32.totalorder %v151, 40
    %vm182 = vcmp.ge.s32.totalorder %v152, 40
    %vm183 = vcmp.ge.s32.totalorder %v153, 40
    %vm184 = vcmp.ge.s32.totalorder %v154, 40
    %vm185 = vcmp.ge.s32.totalorder %v155, 40
    %vm186 = vcmp.ge.s32.totalorder %v156, 40
    %vm187 = vcmp.ge.s32.totalorder %v157, 40
    %vm188 = vcmp.ge.s32.totalorder %v158, 40
    %vm189 = vcmp.ge.s32.totalorder %v159, 40
    %v190 = vsel %vm180, 1, 0
    %v191 = vsel %vm181, 1, 0
    %v192 = vsel %vm182, 1, 0
    %v193 = vsel %vm183, 1, 0
    %v194 = vsel %vm184, 1, 0
    %v195 = vsel %vm185, 1, 0
    %v196 = vsel %vm186, 1, 0
    %v197 = vsel %vm187, 1, 0
    %v198 = vsel %vm188, 1, 0
    %v199 = vsel %vm189, 1, 0
    %v200 = vadd.s32 %v170, %v190
    %v201 = vadd.s32 %v171, %v191
    %v202 = vadd.s32 %v172, %v192
    %v203 = vadd.s32 %v173, %v193
    %v204 = vadd.s32 %v174, %v194
    %v205 = vadd.s32 %v175, %v195
    %v206 = vadd.s32 %v176, %v196
    %v207 = vadd.s32 %v177, %v197
    %v208 = vadd.s32 %v178, %v198
    %v209 = vadd.s32 %v179, %v199
    %vm210 = vcmp.ge.s32.totalorder %v150, 60
    %vm211 = vcmp.ge.s32.totalorder %v151, 60
    %vm212 = vcmp.ge.s32.totalorder %v152, 60
    %vm213 = vcmp.ge.s32.totalorder %v153, 60
    %vm214 = vcmp.ge.s32.totalorder %v154, 60
    %vm215 = vcmp.ge.s32.totalorder %v155, 60
    %vm216 = vcmp.ge.s32.totalorder %v156, 60
    %vm217 = vcmp.ge.s32.totalorder %v157, 60
    %vm218 = vcmp.ge.s32.totalorder %v158, 60
    %vm219 = vcmp.ge.s32.totalorder %v159, 60
    %v220 = vsel %vm210, 1, 0
    %v221 = vsel %vm211, 1, 0
    %v222 = vsel %vm212, 1, 0
    %v223 = vsel %vm213, 1, 0
    %v224 = vsel %vm214, 1, 0
    %v225 = vsel %vm215, 1, 0
    %v226 = vsel %vm216, 1, 0
    %v227 = vsel %vm217, 1, 0
    %v228 = vsel %vm218, 1, 0
    %v229 = vsel %vm219, 1, 0
    %v230 = vadd.s32 %v200, %v220
    %v231 = vadd.s32 %v201, %v221
    %v232 = vadd.s32 %v202, %v222
    %v233 = vadd.s32 %v203, %v223
    %v234 = vadd.s32 %v204, %v224
    %v235 = vadd.s32 %v205, %v225
    %v236 = vadd.s32 %v206, %v226
    %v237 = vadd.s32 %v207, %v227
    %v238 = vadd.s32 %v208, %v228
    %v239 = vadd.s32 %v209, %v229
    %v240 = vlaneseq
    %v241 = vand.u32 %v240, 127
    %vm242 = vcmp.ge.s32.totalorder %v241, 8
    %v243 = vsel %vm242, 1, 0
    %vm244 = vcmp.ge.s32.totalorder %v241, 16
    %v245 = vsel %vm244, 1, 0
    %v246 = vadd.s32 %v243, %v245
    %vm247 = vcmp.ge.s32.totalorder %v241, 24
    %v248 = vsel %vm247, 1, 0
    %v249 = vadd.s32 %v246, %v248
    %vm250 = vcmp.eq.s32.totalorder %v230, %v249
    %vm251 = vcmp.eq.s32.totalorder %v231, %v249
    %vm252 = vcmp.eq.s32.totalorder %v232, %v249
    %vm253 = vcmp.eq.s32.totalorder %v233, %v249
    %vm254 = vcmp.eq.s32.totalorder %v234, %v249
    %vm255 = vcmp.eq.s32.totalorder %v235, %v249
    %vm256 = vcmp.eq.s32.totalorder %v236, %v249
    %vm257 = vcmp.eq.s32.totalorder %v237, %v249
    %vm258 = vcmp.eq.s32.totalorder %v238, %v249
    %vm259 = vcmp.eq.s32.totalorder %v239, %v249
    %v260 = vsel %vm250, 1, 0
    %v261 = vsel %vm251, 1, 0
    %v262 = vsel %vm252, 1, 0
    %v263 = vsel %vm253, 1, 0
    %v264 = vsel %vm254, 1, 0
    %v265 = vsel %vm255, 1, 0
    %v266 = vsel %vm256, 1, 0
    %v267 = vsel %vm257, 1, 0
    %v268 = vsel %vm258, 1, 0
    %v269 = vsel %vm259, 1, 0
    %v270 = vcvt.s32.f32 %v260
    %v271 = vcvt.s32.f32 %v261
    %v272 = vcvt.s32.f32 %v262
    %v273 = vcvt.s32.f32 %v263
    %v274 = vcvt.s32.f32 %v264
    %v275 = vcvt.s32.f32 %v265
    %v276 = vcvt.s32.f32 %v266
    %v277 = vcvt.s32.f32 %v267
    %v278 = vcvt.s32.f32 %v268
    %v279 = vcvt.s32.f32 %v269
    %v280 = vmul.u32 %v230, 20
    %v281 = vmul.u32 %v231, 20
    %v282 = vmul.u32 %v232, 20
    %v283 = vmul.u32 %v233, 20
    %v284 = vmul.u32 %v234, 20
    %v285 = vmul.u32 %v235, 20
    %v286 = vmul.u32 %v236, 20
    %v287 = vmul.u32 %v237, 20
    %v288 = vmul.u32 %v238, 20
    %v289 = vmul.u32 %v239, 20
    %v290 = vsub.s32 %v150, %v280
    %v291 = vsub.s32 %v151, %v281
    %v292 = vsub.s32 %v152, %v282
    %v293 = vsub.s32 %v153, %v283
    %v294 = vsub.s32 %v154, %v284
    %v295 = vsub.s32 %v155, %v285
    %v296 = vsub.s32 %v156, %v286
    %v297 = vsub.s32 %v157, %v287
    %v298 = vsub.s32 %v158, %v288
    %v299 = vsub.s32 %v159, %v289
    %vm300 = vcmp.eq.s32.totalorder %v290, %v241
    %vm301 = vcmp.eq.s32.totalorder %v291, %v241
    %vm302 = vcmp.eq.s32.totalorder %v292, %v241
    %vm303 = vcmp.eq.s32.totalorder %v293, %v241
    %vm304 = vcmp.eq.s32.totalorder %v294, %v241
    %vm305 = vcmp.eq.s32.totalorder %v295, %v241
    %vm306 = vcmp.eq.s32.totalorder %v296, %v241
    %vm307 = vcmp.eq.s32.totalorder %v297, %v241
    %vm308 = vcmp.eq.s32.totalorder %v298, %v241
    %vm309 = vcmp.eq.s32.totalorder %v299, %v241
    %v310 = vsel %vm300, 1, 0
    %v311 = vsel %vm301, 1, 0
    %v312 = vsel %vm302, 1, 0
    %v313 = vsel %vm303, 1, 0
    %v314 = vsel %vm304, 1, 0
    %v315 = vsel %vm305, 1, 0
    %v316 = vsel %vm306, 1, 0
    %v317 = vsel %vm307, 1, 0
    %v318 = vsel %vm308, 1, 0
    %v319 = vsel %vm309, 1, 0
    %v320 = vcvt.s32.f32 %v310
    %v321 = vcvt.s32.f32 %v311
    %v322 = vcvt.s32.f32 %v312
    %v323 = vcvt.s32.f32 %v313
    %v324 = vcvt.s32.f32 %v314
    %v325 = vcvt.s32.f32 %v315
    %v326 = vcvt.s32.f32 %v316
    %v327 = vcvt.s32.f32 %v317
    %v328 = vcvt.s32.f32 %v318
    %v329 = vcvt.s32.f32 %v319
    %vm330 = vcmp.ge.s32.totalorder %v150, 5
    %vm331 = vcmp.ge.s32.totalorder %v151, 5
    %vm332 = vcmp.ge.s32.totalorder %v152, 5
    %v333 = vsel %vm330, 1, 0
    %v334 = vsel %vm331, 1, 0
    %v335 = vsel %vm332, 1, 0
    %vm336 = vcmp.ge.s32.totalorder %v150, 10
    %vm337 = vcmp.ge.s32.totalorder %v151, 10
    %vm338 = vcmp.ge.s32.totalorder %v152, 10
    %v339 = vsel %vm336, 1, 0
    %v340 = vsel %vm337, 1, 0
    %v341 = vsel %vm338, 1, 0
    %v342 = vadd.s32 %v333, %v339
    %v343 = vadd.s32 %v334, %v340
    %v344 = vadd.s32 %v335, %v341
    %vm345 = vcmp.ge.s32.totalorder %v150, 15
    %vm346 = vcmp.ge.s32.totalorder %v151, 15
    %vm347 = vcmp.ge.s32.totalorder %v152, 15
    %v348 = vsel %vm345, 1, 0
    %v349 = vsel %vm346, 1, 0
    %v350 = vsel %vm347, 1, 0
    %v351 = vadd.s32 %v342, %v348
    %v352 = vadd.s32 %v343, %v349
    %v353 = vadd.s32 %v344, %v350
    %vm354 = vcmp.ge.s32.totalorder %v241, 5
    %v355 = vsel %vm354, 1, 0
    %vm356 = vcmp.ge.s32.totalorder %v241, 10
    %v357 = vsel %vm356, 1, 0
    %v358 = vadd.s32 %v355, %v357
    %vm359 = vcmp.ge.s32.totalorder %v241, 15
    %v360 = vsel %vm359, 1, 0
    %v361 = vadd.s32 %v358, %v360
    %vm362 = vcmp.ge.s32.totalorder %v241, 20
    %v363 = vsel %vm362, 1, 0
    %v364 = vadd.s32 %v361, %v363
    %vm365 = vcmp.ge.s32.totalorder %v241, 25
    %v366 = vsel %vm365, 1, 0
    %v367 = vadd.s32 %v364, %v366
    %vm368 = vcmp.ge.s32.totalorder %v241, 30
    %v369 = vsel %vm368, 1, 0
    %v370 = vadd.s32 %v367, %v369
    %vm371 = vcmp.ge.s32.totalorder %v241, 35
    %v372 = vsel %vm371, 1, 0
    %v373 = vadd.s32 %v370, %v372
    %vm374 = vcmp.ge.s32.totalorder %v241, 40
    %v375 = vsel %vm374, 1, 0
    %v376 = vadd.s32 %v373, %v375
    %vm377 = vcmp.ge.s32.totalorder %v241, 45
    %v378 = vsel %vm377, 1, 0
    %v379 = vadd.s32 %v376, %v378
    %vm380 = vcmp.ge.s32.totalorder %v241, 50
    %v381 = vsel %vm380, 1, 0
    %v382 = vadd.s32 %v379, %v381
    %vm383 = vcmp.ge.s32.totalorder %v241, 55
    %v384 = vsel %vm383, 1, 0
    %v385 = vadd.s32 %v382, %v384
    %vm386 = vcmp.ge.s32.totalorder %v241, 60
    %v387 = vsel %vm386, 1, 0
    %v388 = vadd.s32 %v385, %v387
    %vm389 = vcmp.ge.s32.totalorder %v241, 65
    %v390 = vsel %vm389, 1, 0
    %v391 = vadd.s32 %v388, %v390
    %vm392 = vcmp.ge.s32.totalorder %v241, 70
    %v393 = vsel %vm392, 1, 0
    %v394 = vadd.s32 %v391, %v393
    %vm395 = vcmp.ge.s32.totalorder %v241, 75
    %v396 = vsel %vm395, 1, 0
    %v397 = vadd.s32 %v394, %v396
    %v398 = vadd.s32 %v363, %v375
    %v399 = vadd.s32 %v398, %v387
    %v400 = vmul.u32 %v399, 4
    %v401 = vsub.s32 %v397, %v400
    %vm402 = vcmp.eq.s32.totalorder %v351, %v401
    %vm403 = vcmp.eq.s32.totalorder %v352, %v401
    %vm404 = vcmp.eq.s32.totalorder %v353, %v401
    %v405 = vsel %vm402, 0.0, -1e+30
    %v406 = vsel %vm403, 0.0, -1e+30
    %v407 = vsel %vm404, 0.0, -1e+30
    %v408 = vmul.u32 %v150, 5
    %v409 = vadd.s32 %v408, 4
    %vm410 = vcmp.eq.s32.totalorder %v241, %v409
    %v411 = vsel %vm410, 1, 0
    %v412 = vcvt.s32.f32 %v411
    %v413 = vld [vmem:[%s0] sm:$0xff]
    %v414 = vld [vmem:[%s0 + $0x8] sm:$0xff]
    %v415 = vld [vmem:[%s0 + $0x10] sm:$0xf]
    %v416 = vld [vmem:[#allocation2] sm:$0x7f]
    %v417 = vld [vmem:[#allocation5] sm:$0x1]
    %v419 = vlaneseq
    %v420 = vshrl.u32 %v419, 7
    %v421 = vsub.s32 0, %v420
    %v422 = vrot.slane %v417, %v421
    %vm424 = vcmask 56320
    %v426 = vsel %vm424, %v413, 0
    %v429 = vsel %vm424, %v414, 0
    %v432 = vsel %vm424, %v415, 0
    %vm434 = vcmask 1046528
    %v436 = vsel %vm434, %v416, 0
    %438 = vmatprep.subr.mxu0 0.0
    %439 = vmatpush1.msra.mxu0 0.0
    %440 = vmatprep.subr.mxu0 0.0
    %441 = vmatpush1.msra.mxu0 0.0
    %442 = vmatprep.subr.mxu0 0.0
    %443 = vmatpush1.msra.mxu0 0.0
    %444 = vmatprep.subr.mxu0 0.0
    %445 = vmatpush1.msra.mxu0 0.0
    %446 = vmatprep.subr.mxu0 0.0
    %447 = vmatpush1.msra.mxu0 0.0
    %448 = vmatprep.subr.mxu0 0.0
    %449 = vmatpush1.msra.mxu0 0.0
    %450 = vmatprep.subr.mxu0 0.0
    %451 = vmatpush1.msra.mxu0 0.0
    %452 = vmatprep.subr.mxu0 0.0
    %453 = vmatpush1.msra.mxu0 0.0
    %454 = vmatprep.subr.mxu0 0.0
    %455 = vmatpush1.msra.mxu0 0.0
    %456 = vmatprep.subr.mxu0 0.0
    %457 = vmatpush1.msra.mxu0 0.0
    %458 = vmatprep.subr.mxu0 0.0
    %459 = vmatpush1.msra.mxu0 0.0
    %460 = vmatprep.subr.mxu0 0.0
    %461 = vmatpush1.msra.mxu0 0.0
    %462 = vmatprep.subr.mxu0 0.0
    %463 = vmatpush1.msra.mxu0 0.0
    %464 = vmatprep.subr.mxu0 0.0
    %465 = vmatpush1.msra.mxu0 0.0
    %466 = vmatprep.subr.mxu0 0.0
    %467 = vmatpush1.msra.mxu0 0.0
    %468 = vmatprep.subr.mxu0 0.0
    %469 = vmatpush1.msra.mxu0 %v436
    %470 = vmatprep.subr.mxu0 0.0
    %471 = vmatpush2.msra.mxu0 0.0
    %472 = vmatprep.subr.mxu0 0.0
    %473 = vmatpush2.msra.mxu0 0.0
    %474 = vmatprep.subr.mxu0 0.0
    %475 = vmatpush2.msra.mxu0 0.0
    %476 = vmatprep.subr.mxu0 0.0
    %477 = vmatpush2.msra.mxu0 0.0
    %478 = vmatprep.subr.mxu0 0.0
    %479 = vmatpush2.msra.mxu0 0.0
    %480 = vmatprep.subr.mxu0 0.0
    %481 = vmatpush2.msra.mxu0 0.0
    %482 = vmatprep.subr.mxu0 0.0
    %483 = vmatpush2.msra.mxu0 0.0
    %484 = vmatprep.subr.mxu0 0.0
    %485 = vmatpush2.msra.mxu0 0.0
    %486 = vmatprep.subr.mxu0 0.0
    %487 = vmatpush2.msra.mxu0 0.0
    %488 = vmatprep.subr.mxu0 0.0
    %489 = vmatpush2.msra.mxu0 0.0
    %490 = vmatprep.subr.mxu0 0.0
    %491 = vmatpush2.msra.mxu0 0.0
    %492 = vmatprep.subr.mxu0 0.0
    %493 = vmatpush2.msra.mxu0 0.0
    %494 = vmatprep.subr.mxu0 0.0
    %495 = vmatpush2.msra.mxu0 0.0
    %496 = vmatprep.subr.mxu0 0.0
    %497 = vmatpush2.msra.mxu0 0.0
    %498 = vmatprep.subr.mxu0 0.0
    %499 = vmatpush2.msra.mxu0 0.0
    %500 = vmatprep.subr.mxu0 0.0
    %501 = vmatpush2.msra.mxu0 0.0
    %502 = vmatprep.mubr.f32.mxu0 0.0
    %503 = vmatmul.mubr.f32.gmra.mxu0 %v426
    %v504 = vpop.f32.mrf.mxu0
    %v505 = vadd.f32 %v422, %v504
    %v506 = vpop.f32.mrf.mxu0
    %507 = vmatprep.mubr.f32.mxu0 0.0
    %508 = vmatmul.mubr.f32.gmra.mxu0 %v429
    %v509 = vpop.f32.mrf.mxu0
    %v510 = vadd.f32 %v422, %v509
    %v511 = vpop.f32.mrf.mxu0
    %512 = vmatprep.mubr.f32.mxu0 0.0
    %513 = vmatmul.mubr.f32.gmra.mxu0 %v432
    %v514 = vpop.f32.mrf.mxu0
    %v515 = vadd.f32 %v422, %v514
    %v516 = vpop.f32.mrf.mxu0
    %517 = vdwg.mxu0
    %v518 = vpack.c.bf16 %v510, %v505
    %v519 = vpack.c.bf16 %v515, %v515
    %v520 = vld [vmem:[%s3] sm:$0xf]
    %v521 = vld [vmem:[%s3 + $0x4] sm:$0xf]
    %v522 = vld [vmem:[%s3 + $0x8] sm:$0xf]
    %v523 = vld [vmem:[%s3 + $0xc] sm:$0xf]
    %v524 = vld [vmem:[%s4] sm:$0x1]
    %v526 = vlaneseq
    %v527 = vshrl.u32 %v526, 7
    %v528 = vsub.s32 0, %v527
    %v529 = vrot.slane %v524, %v528
    %v535 = vunpack.c.l.b16 %v520
    %v536 = vunpack.c.l.b16 %v521
    %v537 = vunpack.c.l.b16 %v522
    %v538 = vunpack.c.l.b16 %v523
    %v539 = vpack.c.b16 %v536, %v535
    %v540 = vpack.c.b16 %v538, %v537
    %vm543 = vcmask 261120
    %v545 = vsel %vm543, %v518, 0
    %v548 = vsel %vm543, %v519, 0
    %550 = vmatprep.subr.bf16.mxu0 0
    %551 = vmatpush1.bf16.msra.mxu0 0
    %552 = vmatprep.subr.bf16.mxu0 0
    %553 = vmatpush1.bf16.msra.mxu0 0
    %554 = vmatprep.subr.bf16.mxu0 0
    %555 = vmatpush1.bf16.msra.mxu0 0
    %556 = vmatprep.subr.bf16.mxu0 0
    %557 = vmatpush1.bf16.msra.mxu0 0
    %558 = vmatprep.subr.bf16.mxu0 0
    %559 = vmatpush1.bf16.msra.mxu0 0
    %560 = vmatprep.subr.bf16.mxu0 0
    %561 = vmatpush1.bf16.msra.mxu0 0
    %562 = vmatprep.subr.bf16.mxu0 0
    %563 = vmatpush1.bf16.msra.mxu0 %v540
    %564 = vmatprep.subr.bf16.mxu0 0
    %565 = vmatpush1.bf16.msra.mxu0 %v539
    %566 = vmatprep.subr.bf16.mxu0 0
    %567 = vmatpush2.bf16.msra.mxu0 0
    %568 = vmatprep.subr.bf16.mxu0 0
    %569 = vmatpush2.bf16.msra.mxu0 0
    %570 = vmatprep.subr.bf16.mxu0 0
    %571 = vmatpush2.bf16.msra.mxu0 0
    %572 = vmatprep.subr.bf16.mxu0 0
    %573 = vmatpush2.bf16.msra.mxu0 0
    %574 = vmatprep.subr.bf16.mxu0 0
    %575 = vmatpush2.bf16.msra.mxu0 0
    %576 = vmatprep.subr.bf16.mxu0 0
    %577 = vmatpush2.bf16.msra.mxu0 0
    %578 = vmatprep.subr.bf16.mxu0 0
    %579 = vmatpush2.bf16.msra.mxu0 0
    %580 = vmatprep.subr.bf16.mxu0 0
    %581 = vmatpush2.bf16.msra.mxu0 0
    %582 = vmatprep.mubr.bf16.mxu0 0
    %583 = vmatmul.mubr.bf16.gmra.mxu0 %v545
    %v584 = vpop.f32.mrf.mxu0
    %v585 = vadd.f32 %v529, %v584
    %v586 = vpop.f32.mrf.mxu0
    %v587 = vpop.f32.mrf.mxu0
    %v588 = vadd.f32 %v529, %v587
    %v589 = vpop.f32.mrf.mxu0
    %590 = vmatprep.mubr.bf16.mxu0 0
    %591 = vmatmul.mubr.bf16.gmra.mxu0 %v548
    %v592 = vpop.f32.mrf.mxu0
    %v593 = vadd.f32 %v529, %v592
    %v594 = vpop.f32.mrf.mxu0
    %v595 = vpop.f32.mrf.mxu0
    %v596 = vpop.f32.mrf.mxu0
    %597 = vdwg.mxu0
    %601 = vrot.lane.b32.xlu0 %v585, 96
    %v602 = vpop.permute.xlu0 %601
    %603 = vrot.lane.b32.xlu0 %v588, 96
    %v604 = vpop.permute.xlu0 %603
    %605 = vrot.lane.b32.xlu0 %v593, 96
    %v606 = vpop.permute.xlu0 %605
    %vm609 = vcmask 162816
    %v611 = vsel %vm609, %v320, 0
    %v614 = vsel %vm609, %v321, 0
    %v617 = vsel %vm609, %v322, 0
    %v620 = vsel %vm609, %v323, 0
    %v623 = vsel %vm609, %v324, 0
    %v626 = vsel %vm609, %v325, 0
    %v629 = vsel %vm609, %v326, 0
    %v632 = vsel %vm609, %v327, 0
    %v635 = vsel %vm609, %v328, 0
    %v638 = vsel %vm609, %v329, 0
    %vm640 = vcmask 1043456
    %v641 = vsel %vm640, %v606, 0
    %643 = vmatprep.subr.mxu0 0.0
    %644 = vmatpush1.msra.mxu0 0.0
    %645 = vmatprep.subr.mxu0 0.0
    %646 = vmatpush1.msra.mxu0 0.0
    %647 = vmatprep.subr.mxu0 0.0
    %648 = vmatpush1.msra.mxu0 0.0
    %649 = vmatprep.subr.mxu0 0.0
    %650 = vmatpush1.msra.mxu0 0.0
    %651 = vmatprep.subr.mxu0 0.0
    %652 = vmatpush1.msra.mxu0 0.0
    %653 = vmatprep.subr.mxu0 0.0
    %654 = vmatpush1.msra.mxu0 0.0
    %655 = vmatprep.subr.mxu0 0.0
    %656 = vmatpush1.msra.mxu0 0.0
    %657 = vmatprep.subr.mxu0 0.0
    %658 = vmatpush1.msra.mxu0 0.0
    %659 = vmatprep.subr.mxu0 0.0
    %660 = vmatpush1.msra.mxu0 0.0
    %661 = vmatprep.subr.mxu0 0.0
    %662 = vmatpush1.msra.mxu0 0.0
    %663 = vmatprep.subr.mxu0 0.0
    %664 = vmatpush1.msra.mxu0 0.0
    %665 = vmatprep.subr.mxu0 0.0
    %666 = vmatpush1.msra.mxu0 0.0
    %667 = vmatprep.subr.mxu0 0.0
    %668 = vmatpush1.msra.mxu0 0.0
    %669 = vmatprep.subr.mxu0 0.0
    %670 = vmatpush1.msra.mxu0 %v641
    %671 = vmatprep.subr.mxu0 0.0
    %672 = vmatpush1.msra.mxu0 %v604
    %673 = vmatprep.subr.mxu0 0.0
    %674 = vmatpush1.msra.mxu0 %v602
    %675 = vmatprep.subr.mxu0 0.0
    %676 = vmatpush2.msra.mxu0 0.0
    %677 = vmatprep.subr.mxu0 0.0
    %678 = vmatpush2.msra.mxu0 0.0
    %679 = vmatprep.subr.mxu0 0.0
    %680 = vmatpush2.msra.mxu0 0.0
    %681 = vmatprep.subr.mxu0 0.0
    %682 = vmatpush2.msra.mxu0 0.0
    %683 = vmatprep.subr.mxu0 0.0
    %684 = vmatpush2.msra.mxu0 0.0
    %685 = vmatprep.subr.mxu0 0.0
    %686 = vmatpush2.msra.mxu0 0.0
    %687 = vmatprep.subr.mxu0 0.0
    %688 = vmatpush2.msra.mxu0 0.0
    %689 = vmatprep.subr.mxu0 0.0
    %690 = vmatpush2.msra.mxu0 0.0
    %691 = vmatprep.subr.mxu0 0.0
    %692 = vmatpush2.msra.mxu0 0.0
    %693 = vmatprep.subr.mxu0 0.0
    %694 = vmatpush2.msra.mxu0 0.0
    %695 = vmatprep.subr.mxu0 0.0
    %696 = vmatpush2.msra.mxu0 0.0
    %697 = vmatprep.subr.mxu0 0.0
    %698 = vmatpush2.msra.mxu0 0.0
    %699 = vmatprep.subr.mxu0 0.0
    %700 = vmatpush2.msra.mxu0 0.0
    %701 = vmatprep.subr.mxu0 0.0
    %702 = vmatpush2.msra.mxu0 0.0
    %703 = vmatprep.subr.mxu0 0.0
    %704 = vmatpush2.msra.mxu0 0.0
    %705 = vmatprep.subr.mxu0 0.0
    %706 = vmatpush2.msra.mxu0 0.0
    %707 = vmatprep.mubr.f32.mxu0 0.0
    %708 = vmatmul.mubr.f32.gmra.mxu0 %v611
    %v709 = vpop.f32.mrf.mxu0
    %v710 = vadd.f32 0.0, %v709
    %v711 = vpop.f32.mrf.mxu0
    %712 = vmatprep.mubr.f32.mxu0 0.0
    %713 = vmatmul.mubr.f32.gmra.mxu0 %v614
    %v714 = vpop.f32.mrf.mxu0
    %v715 = vadd.f32 0.0, %v714
    %v716 = vpop.f32.mrf.mxu0
    %717 = vmatprep.mubr.f32.mxu0 0.0
    %718 = vmatmul.mubr.f32.gmra.mxu0 %v617
    %v719 = vpop.f32.mrf.mxu0
    %v720 = vadd.f32 0.0, %v719
    %v721 = vpop.f32.mrf.mxu0
    %722 = vmatprep.mubr.f32.mxu0 0.0
    %723 = vmatmul.mubr.f32.gmra.mxu0 %v620
    %v724 = vpop.f32.mrf.mxu0
    %v725 = vadd.f32 0.0, %v724
    %v726 = vpop.f32.mrf.mxu0
    %727 = vmatprep.mubr.f32.mxu0 0.0
    %728 = vmatmul.mubr.f32.gmra.mxu0 %v623
    %v729 = vpop.f32.mrf.mxu0
    %v730 = vadd.f32 0.0, %v729
    %v731 = vpop.f32.mrf.mxu0
    %732 = vmatprep.mubr.f32.mxu0 0.0
    %733 = vmatmul.mubr.f32.gmra.mxu0 %v626
    %v734 = vpop.f32.mrf.mxu0
    %v735 = vadd.f32 0.0, %v734
    %v736 = vpop.f32.mrf.mxu0
    %737 = vmatprep.mubr.f32.mxu0 0.0
    %738 = vmatmul.mubr.f32.gmra.mxu0 %v629
    %v739 = vpop.f32.mrf.mxu0
    %v740 = vadd.f32 0.0, %v739
    %v741 = vpop.f32.mrf.mxu0
    %742 = vmatprep.mubr.f32.mxu0 0.0
    %743 = vmatmul.mubr.f32.gmra.mxu0 %v632
    %v744 = vpop.f32.mrf.mxu0
    %v745 = vadd.f32 0.0, %v744
    %v746 = vpop.f32.mrf.mxu0
    %747 = vmatprep.mubr.f32.mxu0 0.0
    %748 = vmatmul.mubr.f32.gmra.mxu0 %v635
    %v749 = vpop.f32.mrf.mxu0
    %v750 = vadd.f32 0.0, %v749
    %v751 = vpop.f32.mrf.mxu0
    %752 = vmatprep.mubr.f32.mxu0 0.0
    %753 = vmatmul.mubr.f32.gmra.mxu0 %v638
    %v754 = vpop.f32.mrf.mxu0
    %v755 = vadd.f32 0.0, %v754
    %v756 = vpop.f32.mrf.mxu0
    %757 = vdwg.mxu0
    %v758 = vmul.f32 %v710, %v270
    %v759 = vmul.f32 %v715, %v271
    %v760 = vmul.f32 %v720, %v272
    %v761 = vmul.f32 %v725, %v273
    %v762 = vmul.f32 %v730, %v274
    %v763 = vmul.f32 %v735, %v275
    %v764 = vmul.f32 %v740, %v276
    %v765 = vmul.f32 %v745, %v277
    %v766 = vmul.f32 %v750, %v278
    %v767 = vmul.f32 %v755, %v279
    %768 = vrot.lane.b32.xlu0 %v585, 64
    %v769 = vpop.permute.xlu0 %768
    %770 = vrot.lane.b32.xlu0 %v588, 64
    %v771 = vpop.permute.xlu0 %770
    %772 = vrot.lane.b32.xlu0 %v593, 64
    %v773 = vpop.permute.xlu0 %772
    %v776 = vsel %vm640, %v773, 0
    %778 = vmatprep.subr.mxu0 0.0
    %779 = vmatpush1.msra.mxu0 0.0
    %780 = vmatprep.subr.mxu0 0.0
    %781 = vmatpush1.msra.mxu0 0.0
    %782 = vmatprep.subr.mxu0 0.0
    %783 = vmatpush1.msra.mxu0 0.0
    %784 = vmatprep.subr.mxu0 0.0
    %785 = vmatpush1.msra.mxu0 0.0
    %786 = vmatprep.subr.mxu0 0.0
    %787 = vmatpush1.msra.mxu0 0.0
    %788 = vmatprep.subr.mxu0 0.0
    %789 = vmatpush1.msra.mxu0 0.0
    %790 = vmatprep.subr.mxu0 0.0
    %791 = vmatpush1.msra.mxu0 0.0
    %792 = vmatprep.subr.mxu0 0.0
    %793 = vmatpush1.msra.mxu0 0.0
    %794 = vmatprep.subr.mxu0 0.0
    %795 = vmatpush1.msra.mxu0 0.0
    %796 = vmatprep.subr.mxu0 0.0
    %797 = vmatpush1.msra.mxu0 0.0
    %798 = vmatprep.subr.mxu0 0.0
    %799 = vmatpush1.msra.mxu0 0.0
    %800 = vmatprep.subr.mxu0 0.0
    %801 = vmatpush1.msra.mxu0 0.0
    %802 = vmatprep.subr.mxu0 0.0
    %803 = vmatpush1.msra.mxu0 0.0
    %804 = vmatprep.subr.mxu0 0.0
    %805 = vmatpush1.msra.mxu0 %v776
    %806 = vmatprep.subr.mxu0 0.0
    %807 = vmatpush1.msra.mxu0 %v771
    %808 = vmatprep.subr.mxu0 0.0
    %809 = vmatpush1.msra.mxu0 %v769
    %810 = vmatprep.subr.mxu0 0.0
    %811 = vmatpush2.msra.mxu0 0.0
    %812 = vmatprep.subr.mxu0 0.0
    %813 = vmatpush2.msra.mxu0 0.0
    %814 = vmatprep.subr.mxu0 0.0
    %815 = vmatpush2.msra.mxu0 0.0
    %816 = vmatprep.subr.mxu0 0.0
    %817 = vmatpush2.msra.mxu0 0.0
    %818 = vmatprep.subr.mxu0 0.0
    %819 = vmatpush2.msra.mxu0 0.0
    %820 = vmatprep.subr.mxu0 0.0
    %821 = vmatpush2.msra.mxu0 0.0
    %822 = vmatprep.subr.mxu0 0.0
    %823 = vmatpush2.msra.mxu0 0.0
    %824 = vmatprep.subr.mxu0 0.0
    %825 = vmatpush2.msra.mxu0 0.0
    %826 = vmatprep.subr.mxu0 0.0
    %827 = vmatpush2.msra.mxu0 0.0
    %828 = vmatprep.subr.mxu0 0.0
    %829 = vmatpush2.msra.mxu0 0.0
    %830 = vmatprep.subr.mxu0 0.0
    %831 = vmatpush2.msra.mxu0 0.0
    %832 = vmatprep.subr.mxu0 0.0
    %833 = vmatpush2.msra.mxu0 0.0
    %834 = vmatprep.subr.mxu0 0.0
    %835 = vmatpush2.msra.mxu0 0.0
    %836 = vmatprep.subr.mxu0 0.0
    %837 = vmatpush2.msra.mxu0 0.0
    %838 = vmatprep.subr.mxu0 0.0
    %839 = vmatpush2.msra.mxu0 0.0
    %840 = vmatprep.subr.mxu0 0.0
    %841 = vmatpush2.msra.mxu0 0.0
    %842 = vmatprep.mubr.f32.mxu0 0.0
    %843 = vmatmul.mubr.f32.gmra.mxu0 %v611
    %v844 = vpop.f32.mrf.mxu0
    %v845 = vadd.f32 0.0, %v844
    %v846 = vpop.f32.mrf.mxu0
    %847 = vmatprep.mubr.f32.mxu0 0.0
    %848 = vmatmul.mubr.f32.gmra.mxu0 %v614
    %v849 = vpop.f32.mrf.mxu0
    %v850 = vadd.f32 0.0, %v849
    %v851 = vpop.f32.mrf.mxu0
    %852 = vmatprep.mubr.f32.mxu0 0.0
    %853 = vmatmul.mubr.f32.gmra.mxu0 %v617
    %v854 = vpop.f32.mrf.mxu0
    %v855 = vadd.f32 0.0, %v854
    %v856 = vpop.f32.mrf.mxu0
    %857 = vmatprep.mubr.f32.mxu0 0.0
    %858 = vmatmul.mubr.f32.gmra.mxu0 %v620
    %v859 = vpop.f32.mrf.mxu0
    %v860 = vadd.f32 0.0, %v859
    %v861 = vpop.f32.mrf.mxu0
    %862 = vmatprep.mubr.f32.mxu0 0.0
    %863 = vmatmul.mubr.f32.gmra.mxu0 %v623
    %v864 = vpop.f32.mrf.mxu0
    %v865 = vadd.f32 0.0, %v864
    %v866 = vpop.f32.mrf.mxu0
    %867 = vmatprep.mubr.f32.mxu0 0.0
    %868 = vmatmul.mubr.f32.gmra.mxu0 %v626
    %v869 = vpop.f32.mrf.mxu0
    %v870 = vadd.f32 0.0, %v869
    %v871 = vpop.f32.mrf.mxu0
    %872 = vmatprep.mubr.f32.mxu0 0.0
    %873 = vmatmul.mubr.f32.gmra.mxu0 %v629
    %v874 = vpop.f32.mrf.mxu0
    %v875 = vadd.f32 0.0, %v874
    %v876 = vpop.f32.mrf.mxu0
    %877 = vmatprep.mubr.f32.mxu0 0.0
    %878 = vmatmul.mubr.f32.gmra.mxu0 %v632
    %v879 = vpop.f32.mrf.mxu0
    %v880 = vadd.f32 0.0, %v879
    %v881 = vpop.f32.mrf.mxu0
    %882 = vmatprep.mubr.f32.mxu0 0.0
    %883 = vmatmul.mubr.f32.gmra.mxu0 %v635
    %v884 = vpop.f32.mrf.mxu0
    %v885 = vadd.f32 0.0, %v884
    %v886 = vpop.f32.mrf.mxu0
    %887 = vmatprep.mubr.f32.mxu0 0.0
    %888 = vmatmul.mubr.f32.gmra.mxu0 %v638
    %v889 = vpop.f32.mrf.mxu0
    %v890 = vadd.f32 0.0, %v889
    %v891 = vpop.f32.mrf.mxu0
    %892 = vdwg.mxu0
    %v893 = vmul.f32 %v845, %v270
    %v894 = vmul.f32 %v850, %v271
    %v895 = vmul.f32 %v855, %v272
    %v896 = vmul.f32 %v860, %v273
    %v897 = vmul.f32 %v865, %v274
    %v898 = vmul.f32 %v870, %v275
    %v899 = vmul.f32 %v875, %v276
    %v900 = vmul.f32 %v880, %v277
    %v901 = vmul.f32 %v885, %v278
    %v902 = vmul.f32 %v890, %v279
    %v903 = vmul.f32 %v585, 0.35355338
    %v904 = vmul.f32 %v588, 0.35355338
    %v905 = vmul.f32 %v593, 0.35355338
    %v907 = vsel %vm543, %v903, 0
    %v910 = vsel %vm543, %v904, 0
    %v913 = vsel %vm543, %v905, 0
    %v916 = vsel %vm543, %v758, 0
    %v919 = vsel %vm543, %v759, 0
    %v922 = vsel %vm543, %v760, 0
    %v925 = vsel %vm543, %v761, 0
    %v928 = vsel %vm543, %v762, 0
    %v931 = vsel %vm543, %v763, 0
    %v934 = vsel %vm543, %v764, 0
    %v937 = vsel %vm543, %v765, 0
    %v940 = vsel %vm543, %v766, 0
    %v943 = vsel %vm543, %v767, 0
    %945 = vmatprep.subr.mxu0 0.0
    %946 = vmatpush1.xpose.msra.mxu0 0.0
    %947 = vmatprep.subr.mxu0 0.0
    %948 = vmatpush1.xpose.msra.mxu0 0.0
    %949 = vmatprep.subr.mxu0 0.0
    %950 = vmatpush1.xpose.msra.mxu0 0.0
    %951 = vmatprep.subr.mxu0 0.0
    %952 = vmatpush1.xpose.msra.mxu0 0.0
    %953 = vmatprep.subr.mxu0 0.0
    %954 = vmatpush1.xpose.msra.mxu0 0.0
    %955 = vmatprep.subr.mxu0 0.0
    %956 = vmatpush1.xpose.msra.mxu0 0.0
    %957 = vmatprep.subr.mxu0 0.0
    %958 = vmatpush1.xpose.msra.mxu0 %v943
    %959 = vmatprep.subr.mxu0 0.0
    %960 = vmatpush1.xpose.msra.mxu0 %v940
    %961 = vmatprep.subr.mxu0 0.0
    %962 = vmatpush1.xpose.msra.mxu0 %v937
    %963 = vmatprep.subr.mxu0 0.0
    %964 = vmatpush1.xpose.msra.mxu0 %v934
    %965 = vmatprep.subr.mxu0 0.0
    %966 = vmatpush1.xpose.msra.mxu0 %v931
    %967 = vmatprep.subr.mxu0 0.0
    %968 = vmatpush1.xpose.msra.mxu0 %v928
    %969 = vmatprep.subr.mxu0 0.0
    %970 = vmatpush1.xpose.msra.mxu0 %v925
    %971 = vmatprep.subr.mxu0 0.0
    %972 = vmatpush1.xpose.msra.mxu0 %v922
    %973 = vmatprep.subr.mxu0 0.0
    %974 = vmatpush1.xpose.msra.mxu0 %v919
    %975 = vmatprep.subr.mxu0 0.0
    %976 = vmatpush1.xpose.msra.mxu0 %v916
    %977 = vmatprep.subr.mxu0 0.0
    %978 = vmatpush2.xpose.msra.mxu0 0.0
    %979 = vmatprep.subr.mxu0 0.0
    %980 = vmatpush2.xpose.msra.mxu0 0.0
    %981 = vmatprep.subr.mxu0 0.0
    %982 = vmatpush2.xpose.msra.mxu0 0.0
    %983 = vmatprep.subr.mxu0 0.0
    %984 = vmatpush2.xpose.msra.mxu0 0.0
    %985 = vmatprep.subr.mxu0 0.0
    %986 = vmatpush2.xpose.msra.mxu0 0.0
    %987 = vmatprep.subr.mxu0 0.0
    %988 = vmatpush2.xpose.msra.mxu0 0.0
    %989 = vmatprep.subr.mxu0 0.0
    %990 = vmatpush2.xpose.msra.mxu0 0.0
    %991 = vmatprep.subr.mxu0 0.0
    %992 = vmatpush2.xpose.msra.mxu0 0.0
    %993 = vmatprep.subr.mxu0 0.0
    %994 = vmatpush2.xpose.msra.mxu0 0.0
    %995 = vmatprep.subr.mxu0 0.0
    %996 = vmatpush2.xpose.msra.mxu0 0.0
    %997 = vmatprep.subr.mxu0 0.0
    %998 = vmatpush2.xpose.msra.mxu0 0.0
    %999 = vmatprep.subr.mxu0 0.0
    %1000 = vmatpush2.xpose.msra.mxu0 0.0
    %1001 = vmatprep.subr.mxu0 0.0
    %1002 = vmatpush2.xpose.msra.mxu0 0.0
    %1003 = vmatprep.subr.mxu0 0.0
    %1004 = vmatpush2.xpose.msra.mxu0 0.0
    %1005 = vmatprep.subr.mxu0 0.0
    %1006 = vmatpush2.xpose.msra.mxu0 0.0
    %1007 = vmatprep.subr.mxu0 0.0
    %1008 = vmatpush2.xpose.msra.mxu0 0.0
    %1009 = vmatprep.mubr.f32.mxu0 0.0
    %1010 = vmatmul.mubr.f32.gmra.mxu0 %v907
    %v1011 = vpop.f32.mrf.mxu0
    %v1012 = vadd.f32 %v405, %v1011
    %v1013 = vpop.f32.mrf.mxu0
    %1014 = vmatprep.mubr.f32.mxu0 0.0
    %1015 = vmatmul.mubr.f32.gmra.mxu0 %v910
    %v1016 = vpop.f32.mrf.mxu0
    %v1017 = vadd.f32 %v406, %v1016
    %v1018 = vpop.f32.mrf.mxu0
    %1019 = vmatprep.mubr.f32.mxu0 0.0
    %1020 = vmatmul.mubr.f32.gmra.mxu0 %v913
    %v1021 = vpop.f32.mrf.mxu0
    %v1022 = vadd.f32 %v407, %v1021
    %v1023 = vpop.f32.mrf.mxu0
    %1024 = vdwg.mxu0
    %vm1025 = vcmask 654336
    %v1026 = vsel %vm1025, %v1012, -inf
    %1027 = vmax.xlane.f32.xlu0 %v1026
    %v1028 = vpop.xlane.xlu0 %1027
    %v1029 = vsel %vm1025, %v1017, -inf
    %1030 = vmax.xlane.f32.xlu0 %v1029
    %v1031 = vpop.xlane.xlu0 %1030
    %vm1032 = vcmask 650240
    %v1033 = vsel %vm1032, %v1022, -inf
    %1034 = vmax.xlane.f32.xlu0 %v1033
    %v1035 = vpop.xlane.xlu0 %1034
    %v1036 = vsub.f32 %v1012, %v1028
    %v1037 = vsub.f32 %v1017, %v1031
    %v1038 = vsub.f32 %v1022, %v1035
    %v1039 = vmul.f32 %v1036, 1.442695
    %v1040 = vpow.pop %v1039
    %v1041 = vmul.f32 %v1037, 1.442695
    %v1042 = vpow.pop %v1041
    %v1043 = vmul.f32 %v1038, 1.442695
    %v1044 = vpow.pop %v1043
    %v1046 = vsel %vm1025, %v1040, 0
    %v1049 = vsel %vm1025, %v1042, 0
    %v1052 = vsel %vm1025, %v1044, 0
    %1054 = vmatprep.subr.mxu0 0.0
    %1055 = vmatpush1.msra.mxu0 0.0
    %1056 = vmatprep.subr.mxu0 0.0
    %1057 = vmatpush1.msra.mxu0 0.0
    %1058 = vmatprep.subr.mxu0 0.0
    %1059 = vmatpush1.msra.mxu0 0.0
    %1060 = vmatprep.subr.mxu0 0.0
    %1061 = vmatpush1.msra.mxu0 0.0
    %1062 = vmatprep.subr.mxu0 0.0
    %1063 = vmatpush1.msra.mxu0 0.0
    %1064 = vmatprep.subr.mxu0 0.0
    %1065 = vmatpush1.msra.mxu0 0.0
    %1066 = vmatprep.subr.mxu0 0.0
    %1067 = vmatpush1.msra.mxu0 %v279
    %1068 = vmatprep.subr.mxu0 0.0
    %1069 = vmatpush1.msra.mxu0 %v278
    %1070 = vmatprep.subr.mxu0 0.0
    %1071 = vmatpush1.msra.mxu0 %v277
    %1072 = vmatprep.subr.mxu0 0.0
    %1073 = vmatpush1.msra.mxu0 %v276
    %1074 = vmatprep.subr.mxu0 0.0
    %1075 = vmatpush1.msra.mxu0 %v275
    %1076 = vmatprep.subr.mxu0 0.0
    %1077 = vmatpush1.msra.mxu0 %v274
    %1078 = vmatprep.subr.mxu0 0.0
    %1079 = vmatpush1.msra.mxu0 %v273
    %1080 = vmatprep.subr.mxu0 0.0
    %1081 = vmatpush1.msra.mxu0 %v272
    %1082 = vmatprep.subr.mxu0 0.0
    %1083 = vmatpush1.msra.mxu0 %v271
    %1084 = vmatprep.subr.mxu0 0.0
    %1085 = vmatpush1.msra.mxu0 %v270
    %1086 = vmatprep.subr.mxu0 0.0
    %1087 = vmatpush2.msra.mxu0 0.0
    %1088 = vmatprep.subr.mxu0 0.0
    %1089 = vmatpush2.msra.mxu0 0.0
    %1090 = vmatprep.subr.mxu0 0.0
    %1091 = vmatpush2.msra.mxu0 0.0
    %1092 = vmatprep.subr.mxu0 0.0
    %1093 = vmatpush2.msra.mxu0 0.0
    %1094 = vmatprep.subr.mxu0 0.0
    %1095 = vmatpush2.msra.mxu0 0.0
    %1096 = vmatprep.subr.mxu0 0.0
    %1097 = vmatpush2.msra.mxu0 0.0
    %1098 = vmatprep.subr.mxu0 0.0
    %1099 = vmatpush2.msra.mxu0 0.0
    %1100 = vmatprep.subr.mxu0 0.0
    %1101 = vmatpush2.msra.mxu0 0.0
    %1102 = vmatprep.subr.mxu0 0.0
    %1103 = vmatpush2.msra.mxu0 0.0
    %1104 = vmatprep.subr.mxu0 0.0
    %1105 = vmatpush2.msra.mxu0 0.0
    %1106 = vmatprep.subr.mxu0 0.0
    %1107 = vmatpush2.msra.mxu0 0.0
    %1108 = vmatprep.subr.mxu0 0.0
    %1109 = vmatpush2.msra.mxu0 0.0
    %1110 = vmatprep.subr.mxu0 0.0
    %1111 = vmatpush2.msra.mxu0 0.0
    %1112 = vmatprep.subr.mxu0 0.0
    %1113 = vmatpush2.msra.mxu0 0.0
    %1114 = vmatprep.subr.mxu0 0.0
    %1115 = vmatpush2.msra.mxu0 0.0
    %1116 = vmatprep.subr.mxu0 0.0
    %1117 = vmatpush2.msra.mxu0 0.0
    %1118 = vmatprep.mubr.f32.mxu0 0.0
    %1119 = vmatmul.mubr.f32.gmra.mxu0 %v1046
    %v1120 = vpop.f32.mrf.mxu0
    %v1121 = vadd.f32 0.0, %v1120
    %v1122 = vpop.f32.mrf.mxu0
    %1123 = vmatprep.mubr.f32.mxu0 0.0
    %1124 = vmatmul.mubr.f32.gmra.mxu0 %v1049
    %v1125 = vpop.f32.mrf.mxu0
    %v1126 = vadd.f32 0.0, %v1125
    %v1127 = vpop.f32.mrf.mxu0
    %1128 = vmatprep.mubr.f32.mxu0 0.0
    %1129 = vmatmul.mubr.f32.gmra.mxu0 %v1052
    %v1130 = vpop.f32.mrf.mxu0
    %v1131 = vadd.f32 0.0, %v1130
    %v1132 = vpop.f32.mrf.mxu0
    %1133 = vdwg.mxu0
    %1134 = vmatprep.subr.mxu0 0.0
    %1135 = vmatpush1.msra.mxu0 0.0
    %1136 = vmatprep.subr.mxu0 0.0
    %1137 = vmatpush1.msra.mxu0 0.0
    %1138 = vmatprep.subr.mxu0 0.0
    %1139 = vmatpush1.msra.mxu0 0.0
    %1140 = vmatprep.subr.mxu0 0.0
    %1141 = vmatpush1.msra.mxu0 0.0
    %1142 = vmatprep.subr.mxu0 0.0
    %1143 = vmatpush1.msra.mxu0 0.0
    %1144 = vmatprep.subr.mxu0 0.0
    %1145 = vmatpush1.msra.mxu0 0.0
    %1146 = vmatprep.subr.mxu0 0.0
    %1147 = vmatpush1.msra.mxu0 %v902
    %1148 = vmatprep.subr.mxu0 0.0
    %1149 = vmatpush1.msra.mxu0 %v901
    %1150 = vmatprep.subr.mxu0 0.0
    %1151 = vmatpush1.msra.mxu0 %v900
    %1152 = vmatprep.subr.mxu0 0.0
    %1153 = vmatpush1.msra.mxu0 %v899
    %1154 = vmatprep.subr.mxu0 0.0
    %1155 = vmatpush1.msra.mxu0 %v898
    %1156 = vmatprep.subr.mxu0 0.0
    %1157 = vmatpush1.msra.mxu0 %v897
    %1158 = vmatprep.subr.mxu0 0.0
    %1159 = vmatpush1.msra.mxu0 %v896
    %1160 = vmatprep.subr.mxu0 0.0
    %1161 = vmatpush1.msra.mxu0 %v895
    %1162 = vmatprep.subr.mxu0 0.0
    %1163 = vmatpush1.msra.mxu0 %v894
    %1164 = vmatprep.subr.mxu0 0.0
    %1165 = vmatpush1.msra.mxu0 %v893
    %1166 = vmatprep.subr.mxu0 0.0
    %1167 = vmatpush2.msra.mxu0 0.0
    %1168 = vmatprep.subr.mxu0 0.0
    %1169 = vmatpush2.msra.mxu0 0.0
    %1170 = vmatprep.subr.mxu0 0.0
    %1171 = vmatpush2.msra.mxu0 0.0
    %1172 = vmatprep.subr.mxu0 0.0
    %1173 = vmatpush2.msra.mxu0 0.0
    %1174 = vmatprep.subr.mxu0 0.0
    %1175 = vmatpush2.msra.mxu0 0.0
    %1176 = vmatprep.subr.mxu0 0.0
    %1177 = vmatpush2.msra.mxu0 0.0
    %1178 = vmatprep.subr.mxu0 0.0
    %1179 = vmatpush2.msra.mxu0 0.0
    %1180 = vmatprep.subr.mxu0 0.0
    %1181 = vmatpush2.msra.mxu0 0.0
    %1182 = vmatprep.subr.mxu0 0.0
    %1183 = vmatpush2.msra.mxu0 0.0
    %1184 = vmatprep.subr.mxu0 0.0
    %1185 = vmatpush2.msra.mxu0 0.0
    %1186 = vmatprep.subr.mxu0 0.0
    %1187 = vmatpush2.msra.mxu0 0.0
    %1188 = vmatprep.subr.mxu0 0.0
    %1189 = vmatpush2.msra.mxu0 0.0
    %1190 = vmatprep.subr.mxu0 0.0
    %1191 = vmatpush2.msra.mxu0 0.0
    %1192 = vmatprep.subr.mxu0 0.0
    %1193 = vmatpush2.msra.mxu0 0.0
    %1194 = vmatprep.subr.mxu0 0.0
    %1195 = vmatpush2.msra.mxu0 0.0
    %1196 = vmatprep.subr.mxu0 0.0
    %1197 = vmatpush2.msra.mxu0 0.0
    %1198 = vmatprep.mubr.f32.mxu0 0.0
    %1199 = vmatmul.mubr.f32.gmra.mxu0 %v1046
    %v1200 = vpop.f32.mrf.mxu0
    %v1201 = vadd.f32 0.0, %v1200
    %v1202 = vpop.f32.mrf.mxu0
    %1203 = vmatprep.mubr.f32.mxu0 0.0
    %1204 = vmatmul.mubr.f32.gmra.mxu0 %v1049
    %v1205 = vpop.f32.mrf.mxu0
    %v1206 = vadd.f32 0.0, %v1205
    %v1207 = vpop.f32.mrf.mxu0
    %1208 = vmatprep.mubr.f32.mxu0 0.0
    %1209 = vmatmul.mubr.f32.gmra.mxu0 %v1052
    %v1210 = vpop.f32.mrf.mxu0
    %v1211 = vadd.f32 0.0, %v1210
    %v1212 = vpop.f32.mrf.mxu0
    %1213 = vdwg.mxu0
    %v1214 = vrcp.pop %v1121
    %v1215 = vrcp.pop %v1126
    %v1216 = vrcp.pop %v1131
    %v1217 = vmul.f32 %v1201, %v1214
    %v1218 = vmul.f32 %v1206, %v1215
    %v1219 = vmul.f32 %v1211, %v1216
    %v1220 = vpack.c.bf16 %v1218, %v1217
    %v1221 = vpack.c.bf16 %v1219, %v1219
    %v1222 = vld [vmem:[#allocation7] sm:$0xf]
    %v1223 = vld [vmem:[#allocation7 + $0x4] sm:$0xf]
    %v1224 = vld [vmem:[#allocation7 + $0x8] sm:$0xf]
    %v1225 = vld [vmem:[#allocation7 + $0xc] sm:$0xf]
    %v1226 = vld [vmem:[%s6] sm:$0x1]
    %v1228 = vlaneseq
    %v1229 = vshrl.u32 %v1228, 7
    %v1230 = vsub.s32 0, %v1229
    %v1231 = vrot.slane %v1226, %v1230
    %v1237 = vunpack.c.l.b16 %v1222
    %v1238 = vunpack.c.l.b16 %v1223
    %v1239 = vunpack.c.l.b16 %v1224
    %v1240 = vunpack.c.l.b16 %v1225
    %v1241 = vpack.c.b16 %v1238, %v1237
    %v1242 = vpack.c.b16 %v1240, %v1239
    %v1246 = vsel %vm543, %v1220, 0
    %v1249 = vsel %vm543, %v1221, 0
    %1251 = vmatprep.subr.bf16.mxu0 0
    %1252 = vmatpush1.bf16.msra.mxu0 0
    %1253 = vmatprep.subr.bf16.mxu0 0
    %1254 = vmatpush1.bf16.msra.mxu0 0
    %1255 = vmatprep.subr.bf16.mxu0 0
    %1256 = vmatpush1.bf16.msra.mxu0 0
    %1257 = vmatprep.subr.bf16.mxu0 0
    %1258 = vmatpush1.bf16.msra.mxu0 0
    %1259 = vmatprep.subr.bf16.mxu0 0
    %1260 = vmatpush1.bf16.msra.mxu0 0
    %1261 = vmatprep.subr.bf16.mxu0 0
    %1262 = vmatpush1.bf16.msra.mxu0 0
    %1263 = vmatprep.subr.bf16.mxu0 0
    %1264 = vmatpush1.bf16.msra.mxu0 %v1242
    %1265 = vmatprep.subr.bf16.mxu0 0
    %1266 = vmatpush1.bf16.msra.mxu0 %v1241
    %1267 = vmatprep.subr.bf16.mxu0 0
    %1268 = vmatpush2.bf16.msra.mxu0 0
    %1269 = vmatprep.subr.bf16.mxu0 0
    %1270 = vmatpush2.bf16.msra.mxu0 0
    %1271 = vmatprep.subr.bf16.mxu0 0
    %1272 = vmatpush2.bf16.msra.mxu0 0
    %1273 = vmatprep.subr.bf16.mxu0 0
    %1274 = vmatpush2.bf16.msra.mxu0 0
    %1275 = vmatprep.subr.bf16.mxu0 0
    %1276 = vmatpush2.bf16.msra.mxu0 0
    %1277 = vmatprep.subr.bf16.mxu0 0
    %1278 = vmatpush2.bf16.msra.mxu0 0
    %1279 = vmatprep.subr.bf16.mxu0 0
    %1280 = vmatpush2.bf16.msra.mxu0 0
    %1281 = vmatprep.subr.bf16.mxu0 0
    %1282 = vmatpush2.bf16.msra.mxu0 0
    %1283 = vmatprep.mubr.bf16.mxu0 0
    %1284 = vmatmul.mubr.bf16.gmra.mxu0 %v1246
    %v1285 = vpop.f32.mrf.mxu0
    %v1286 = vadd.f32 %v1231, %v1285
    %v1287 = vpop.f32.mrf.mxu0
    %v1288 = vpop.f32.mrf.mxu0
    %v1289 = vadd.f32 %v1231, %v1288
    %v1290 = vpop.f32.mrf.mxu0
    %1291 = vmatprep.mubr.bf16.mxu0 0
    %1292 = vmatmul.mubr.bf16.gmra.mxu0 %v1249
    %v1293 = vpop.f32.mrf.mxu0
    %v1294 = vadd.f32 %v1231, %v1293
    %v1295 = vpop.f32.mrf.mxu0
    %v1296 = vpop.f32.mrf.mxu0
    %v1297 = vpop.f32.mrf.mxu0
    %1298 = vdwg.mxu0
    %v1299 = vadd.f32 %v505, %v1286
    %v1300 = vadd.f32 %v510, %v1289
    %v1301 = vadd.f32 %v515, %v1294
    %v1302 = vld [vmem:[%s11] sm:$0x1]
    %v1303 = vld [vmem:[%s12] sm:$0x1]
    %v1304 = vsel %vm543, %v1299, 0.0
    %1305 = vadd.xlane.f32.xlu0 %v1304
    %v1306 = vpop.xlane.xlu0 %1305
    %v1307 = vsel %vm543, %v1300, 0.0
    %1308 = vadd.xlane.f32.xlu0 %v1307
    %v1309 = vpop.xlane.xlu0 %1308
    %vm1310 = vcmask 257024
    %v1311 = vsel %vm1310, %v1301, 0.0
    %1312 = vadd.xlane.f32.xlu0 %v1311
    %v1313 = vpop.xlane.xlu0 %1312
    %v1314 = vrcp.pop 32.0
    %v1315 = vmul.f32 %v1306, %v1314
    %v1316 = vmul.f32 %v1309, %v1314
    %v1317 = vmul.f32 %v1313, %v1314
    %v1318 = vsub.f32 %v1299, %v1315
    %v1319 = vsub.f32 %v1300, %v1316
    %v1320 = vsub.f32 %v1301, %v1317
    %v1321 = vmul.f32 %v1318, %v1318
    %v1322 = vmul.f32 %v1319, %v1319
    %v1323 = vmul.f32 %v1320, %v1320
    %v1324 = vsel %vm543, %v1321, 0.0
    %1325 = vadd.xlane.f32.xlu0 %v1324
    %v1326 = vpop.xlane.xlu0 %1325
    %v1327 = vsel %vm543, %v1322, 0.0
    %1328 = vadd.xlane.f32.xlu0 %v1327
    %v1329 = vpop.xlane.xlu0 %1328
    %v1330 = vsel %vm1310, %v1323, 0.0
    %1331 = vadd.xlane.f32.xlu0 %v1330
    %v1332 = vpop.xlane.xlu0 %1331
    %v1333 = vmul.f32 %v1326, %v1314
    %v1334 = vmul.f32 %v1329, %v1314
    %v1335 = vmul.f32 %v1332, %v1314
    %v1336 = vadd.f32 %v1333, 1e-05
    %v1337 = vadd.f32 %v1334, 1e-05
    %v1338 = vadd.f32 %v1335, 1e-05
    %v1339 = vrsqrt.pop %v1336
    %v1340 = vrsqrt.pop %v1337
    %v1341 = vrsqrt.pop %v1338
    %v1342 = vmul.f32 %v1318, %v1339
    %v1343 = vmul.f32 %v1319, %v1340
    %v1344 = vmul.f32 %v1320, %v1341
    %v1346 = vlaneseq
    %v1347 = vshrl.u32 %v1346, 7
    %v1348 = vsub.s32 0, %v1347
    %v1349 = vrot.slane %v1302, %v1348
    %v1351 = vmul.f32 %v1342, %v1349
    %v1352 = vmul.f32 %v1343, %v1349
    %v1353 = vmul.f32 %v1344, %v1349
    %v1355 = vlaneseq
    %v1356 = vshrl.u32 %v1355, 7
    %v1357 = vsub.s32 0, %v1356
    %v1358 = vrot.slane %v1303, %v1357
    %v1360 = vadd.f32 %v1351, %v1358
    %v1361 = vadd.f32 %v1352, %v1358
    %v1362 = vadd.f32 %v1353, %v1358
    %v1363 = vpack.c.bf16 %v1361, %v1360
    %v1364 = vpack.c.bf16 %v1362, %v1362
    %v1365 = vld [vmem:[#allocation8] sm:$0xff]
    %v1366 = vld [vmem:[#allocation8 + $0x8] sm:$0xff]
    %v1367 = vld [vmem:[#allocation8 + $0x10] sm:$0xff]
    %v1368 = vld [vmem:[#allocation8 + $0x18] sm:$0xff]
    %v1369 = vld [vmem:[#allocation8 + $0x20] sm:$0xff]
    %v1370 = vld [vmem:[#allocation8 + $0x28] sm:$0xff]
    %v1371 = vld [vmem:[#allocation8 + $0x30] sm:$0xff]
    %v1372 = vld [vmem:[#allocation8 + $0x38] sm:$0xff]
    %v1373 = vld [vmem:[#allocation8 + $0x40] sm:$0xff]
    %v1374 = vld [vmem:[#allocation8 + $0x48] sm:$0xff]
    %v1375 = vld [vmem:[#allocation8 + $0x50] sm:$0xff]
    %v1376 = vld [vmem:[#allocation8 + $0x58] sm:$0xff]
    %v1377 = vld [vmem:[#allocation8 + $0x60] sm:$0xff]
    %v1378 = vld [vmem:[#allocation8 + $0x68] sm:$0xff]
    %v1379 = vld [vmem:[#allocation8 + $0x70] sm:$0xff]
    %v1380 = vld [vmem:[#allocation8 + $0x78] sm:$0xff]
    %v1381 = vld [vmem:[#allocation8 + $0x80] sm:$0xff]
    %v1382 = vld [vmem:[#allocation8 + $0x88] sm:$0xff]
    %v1383 = vld [vmem:[#allocation8 + $0x90] sm:$0xff]
    %v1384 = vld [vmem:[#allocation8 + $0x98] sm:$0xff]
    %v1385 = vld [vmem:[#allocation8 + $0xa0] sm:$0xff]
    %v1386 = vld [vmem:[#allocation8 + $0xa8] sm:$0xff]
    %v1387 = vld [vmem:[#allocation8 + $0xb0] sm:$0xff]
    %v1388 = vld [vmem:[#allocation8 + $0xb8] sm:$0xff]
    %v1389 = vld [vmem:[#allocation8 + $0xc0] sm:$0xff]
    %v1390 = vld [vmem:[#allocation8 + $0xc8] sm:$0xff]
    %v1391 = vld [vmem:[#allocation8 + $0xd0] sm:$0xff]
    %v1392 = vld [vmem:[#allocation8 + $0xd8] sm:$0xff]
    %v1393 = vld [vmem:[#allocation8 + $0xe0] sm:$0xff]
    %v1394 = vld [vmem:[#allocation8 + $0xe8] sm:$0xff]
    %v1395 = vld [vmem:[#allocation8 + $0xf0] sm:$0xff]
    %v1396 = vld [vmem:[#allocation8 + $0xf8] sm:$0xff]
    %v1397 = vld [vmem:[#allocation10] sm:$0xff]
    %v1398 = vld [vmem:[#allocation10 + $0x8] sm:$0xff]
    %v1401 = vlaneseq
    %v1402 = vshrl.u32 %v1401, 7
    %v1403 = vsub.s32 0, %v1402
    %v1404 = vrot.slane %v1397, %v1403
    %v1405 = vlaneseq
    %v1406 = vshrl.u32 %v1405, 7
    %v1407 = vsub.s32 1, %v1406
    %v1408 = vrot.slane %v1397, %v1407
    %v1409 = vlaneseq
    %v1410 = vshrl.u32 %v1409, 7
    %v1411 = vsub.s32 2, %v1410
    %v1412 = vrot.slane %v1397, %v1411
    %v1413 = vlaneseq
    %v1414 = vshrl.u32 %v1413, 7
    %v1415 = vsub.s32 3, %v1414
    %v1416 = vrot.slane %v1397, %v1415
    %v1417 = vlaneseq
    %v1418 = vshrl.u32 %v1417, 7
    %v1419 = vsub.s32 4, %v1418
    %v1420 = vrot.slane %v1397, %v1419
    %v1421 = vlaneseq
    %v1422 = vshrl.u32 %v1421, 7
    %v1423 = vsub.s32 5, %v1422
    %v1424 = vrot.slane %v1397, %v1423
    %v1425 = vlaneseq
    %v1426 = vshrl.u32 %v1425, 7
    %v1427 = vsub.s32 6, %v1426
    %v1428 = vrot.slane %v1397, %v1427
    %v1429 = vlaneseq
    %v1430 = vshrl.u32 %v1429, 7
    %v1431 = vsub.s32 7, %v1430
    %v1432 = vrot.slane %v1397, %v1431
    %v1433 = vlaneseq
    %v1434 = vshrl.u32 %v1433, 7
    %v1435 = vsub.s32 0, %v1434
    %v1436 = vrot.slane %v1398, %v1435
    %v1437 = vlaneseq
    %v1438 = vshrl.u32 %v1437, 7
    %v1439 = vsub.s32 1, %v1438
    %v1440 = vrot.slane %v1398, %v1439
    %v1441 = vlaneseq
    %v1442 = vshrl.u32 %v1441, 7
    %v1443 = vsub.s32 2, %v1442
    %v1444 = vrot.slane %v1398, %v1443
    %v1445 = vlaneseq
    %v1446 = vshrl.u32 %v1445, 7
    %v1447 = vsub.s32 3, %v1446
    %v1448 = vrot.slane %v1398, %v1447
    %v1449 = vlaneseq
    %v1450 = vshrl.u32 %v1449, 7
    %v1451 = vsub.s32 4, %v1450
    %v1452 = vrot.slane %v1398, %v1451
    %v1453 = vlaneseq
    %v1454 = vshrl.u32 %v1453, 7
    %v1455 = vsub.s32 5, %v1454
    %v1456 = vrot.slane %v1398, %v1455
    %v1457 = vlaneseq
    %v1458 = vshrl.u32 %v1457, 7
    %v1459 = vsub.s32 6, %v1458
    %v1460 = vrot.slane %v1398, %v1459
    %v1461 = vlaneseq
    %v1462 = vshrl.u32 %v1461, 7
    %v1463 = vsub.s32 7, %v1462
    %v1464 = vrot.slane %v1398, %v1463
    %v1513 = vunpack.c.l.b16 %v1365
    %v1514 = vunpack.c.h.b16 %v1365
    %v1515 = vunpack.c.l.b16 %v1366
    %v1516 = vunpack.c.h.b16 %v1366
    %v1517 = vunpack.c.l.b16 %v1367
    %v1518 = vunpack.c.h.b16 %v1367
    %v1519 = vunpack.c.l.b16 %v1368
    %v1520 = vunpack.c.h.b16 %v1368
    %v1521 = vunpack.c.l.b16 %v1369
    %v1522 = vunpack.c.h.b16 %v1369
    %v1523 = vunpack.c.l.b16 %v1370
    %v1524 = vunpack.c.h.b16 %v1370
    %v1525 = vunpack.c.l.b16 %v1371
    %v1526 = vunpack.c.h.b16 %v1371
    %v1527 = vunpack.c.l.b16 %v1372
    %v1528 = vunpack.c.h.b16 %v1372
    %v1529 = vunpack.c.l.b16 %v1373
    %v1530 = vunpack.c.h.b16 %v1373
    %v1531 = vunpack.c.l.b16 %v1374
    %v1532 = vunpack.c.h.b16 %v1374
    %v1533 = vunpack.c.l.b16 %v1375
    %v1534 = vunpack.c.h.b16 %v1375
    %v1535 = vunpack.c.l.b16 %v1376
    %v1536 = vunpack.c.h.b16 %v1376
    %v1537 = vunpack.c.l.b16 %v1377
    %v1538 = vunpack.c.h.b16 %v1377
    %v1539 = vunpack.c.l.b16 %v1378
    %v1540 = vunpack.c.h.b16 %v1378
    %v1541 = vunpack.c.l.b16 %v1379
    %v1542 = vunpack.c.h.b16 %v1379
    %v1543 = vunpack.c.l.b16 %v1380
    %v1544 = vunpack.c.h.b16 %v1380
    %v1545 = vunpack.c.l.b16 %v1381
    %v1546 = vunpack.c.h.b16 %v1381
    %v1547 = vunpack.c.l.b16 %v1382
    %v1548 = vunpack.c.h.b16 %v1382
    %v1549 = vunpack.c.l.b16 %v1383
    %v1550 = vunpack.c.h.b16 %v1383
    %v1551 = vunpack.c.l.b16 %v1384
    %v1552 = vunpack.c.h.b16 %v1384
    %v1553 = vunpack.c.l.b16 %v1385
    %v1554 = vunpack.c.h.b16 %v1385
    %v1555 = vunpack.c.l.b16 %v1386
    %v1556 = vunpack.c.h.b16 %v1386
    %v1557 = vunpack.c.l.b16 %v1387
    %v1558 = vunpack.c.h.b16 %v1387
    %v1559 = vunpack.c.l.b16 %v1388
    %v1560 = vunpack.c.h.b16 %v1388
    %v1561 = vunpack.c.l.b16 %v1389
    %v1562 = vunpack.c.h.b16 %v1389
    %v1563 = vunpack.c.l.b16 %v1390
    %v1564 = vunpack.c.h.b16 %v1390
    %v1565 = vunpack.c.l.b16 %v1391
    %v1566 = vunpack.c.h.b16 %v1391
    %v1567 = vunpack.c.l.b16 %v1392
    %v1568 = vunpack.c.h.b16 %v1392
    %v1569 = vunpack.c.l.b16 %v1393
    %v1570 = vunpack.c.h.b16 %v1393
    %v1571 = vunpack.c.l.b16 %v1394
    %v1572 = vunpack.c.h.b16 %v1394
    %v1573 = vunpack.c.l.b16 %v1395
    %v1574 = vunpack.c.h.b16 %v1395
    %v1575 = vunpack.c.l.b16 %v1396
    %v1576 = vunpack.c.h.b16 %v1396
    %v1577 = vpack.c.b16 %v1529, %v1513
    %v1578 = vpack.c.b16 %v1530, %v1514
    %v1579 = vpack.c.b16 %v1531, %v1515
    %v1580 = vpack.c.b16 %v1532, %v1516
    %v1581 = vpack.c.b16 %v1533, %v1517
    %v1582 = vpack.c.b16 %v1534, %v1518
    %v1583 = vpack.c.b16 %v1535, %v1519
    %v1584 = vpack.c.b16 %v1536, %v1520
    %v1585 = vpack.c.b16 %v1537, %v1521
    %v1586 = vpack.c.b16 %v1538, %v1522
    %v1587 = vpack.c.b16 %v1539, %v1523
    %v1588 = vpack.c.b16 %v1540, %v1524
    %v1589 = vpack.c.b16 %v1541, %v1525
    %v1590 = vpack.c.b16 %v1542, %v1526
    %v1591 = vpack.c.b16 %v1543, %v1527
    %v1592 = vpack.c.b16 %v1544, %v1528
    %v1593 = vpack.c.b16 %v1561, %v1545
    %v1594 = vpack.c.b16 %v1562, %v1546
    %v1595 = vpack.c.b16 %v1563, %v1547
    %v1596 = vpack.c.b16 %v1564, %v1548
    %v1597 = vpack.c.b16 %v1565, %v1549
    %v1598 = vpack.c.b16 %v1566, %v1550
    %v1599 = vpack.c.b16 %v1567, %v1551
    %v1600 = vpack.c.b16 %v1568, %v1552
    %v1601 = vpack.c.b16 %v1569, %v1553
    %v1602 = vpack.c.b16 %v1570, %v1554
    %v1603 = vpack.c.b16 %v1571, %v1555
    %v1604 = vpack.c.b16 %v1572, %v1556
    %v1605 = vpack.c.b16 %v1573, %v1557
    %v1606 = vpack.c.b16 %v1574, %v1558
    %v1607 = vpack.c.b16 %v1575, %v1559
    %v1608 = vpack.c.b16 %v1576, %v1560
    %v1642 = vsel %vm543, %v1363, 0
    %v1645 = vsel %vm543, %v1364, 0
    %1647 = vmatprep.subr.bf16.mxu0 0
    %1648 = vmatpush1.bf16.msra.mxu0 0
    %1649 = vmatprep.subr.bf16.mxu0 0
    %1650 = vmatpush1.bf16.msra.mxu0 0
    %1651 = vmatprep.subr.bf16.mxu0 0
    %1652 = vmatpush1.bf16.msra.mxu0 0
    %1653 = vmatprep.subr.bf16.mxu0 0
    %1654 = vmatpush1.bf16.msra.mxu0 0
    %1655 = vmatprep.subr.bf16.mxu0 0
    %1656 = vmatpush1.bf16.msra.mxu0 0
    %1657 = vmatprep.subr.bf16.mxu0 0
    %1658 = vmatpush1.bf16.msra.mxu0 0
    %1659 = vmatprep.subr.bf16.mxu0 %v1594
    %1660 = vmatpush1.bf16.msra.mxu0 %v1593
    %1661 = vmatprep.subr.bf16.mxu0 %v1578
    %1662 = vmatpush1.bf16.msra.mxu0 %v1577
    %1663 = vmatprep.subr.bf16.mxu0 0
    %1664 = vmatpush2.bf16.msra.mxu0 0
    %1665 = vmatprep.subr.bf16.mxu0 0
    %1666 = vmatpush2.bf16.msra.mxu0 0
    %1667 = vmatprep.subr.bf16.mxu0 0
    %1668 = vmatpush2.bf16.msra.mxu0 0
    %1669 = vmatprep.subr.bf16.mxu0 0
    %1670 = vmatpush2.bf16.msra.mxu0 0
    %1671 = vmatprep.subr.bf16.mxu0 0
    %1672 = vmatpush2.bf16.msra.mxu0 0
    %1673 = vmatprep.subr.bf16.mxu0 0
    %1674 = vmatpush2.bf16.msra.mxu0 0
    %1675 = vmatprep.subr.bf16.mxu0 0
    %1676 = vmatpush2.bf16.msra.mxu0 0
    %1677 = vmatprep.subr.bf16.mxu0 0
    %1678 = vmatpush2.bf16.msra.mxu0 0
    %1679 = vmatprep.mubr.bf16.mxu0 0
    %1680 = vmatmul.mubr.bf16.gmra.mxu0 %v1642
    %v1681 = vpop.f32.mrf.mxu0
    %v1682 = vadd.f32 %v1404, %v1681
    %v1683 = vpop.f32.mrf.mxu0
    %v1684 = vadd.f32 %v1408, %v1683
    %v1685 = vpop.f32.mrf.mxu0
    %v1686 = vadd.f32 %v1404, %v1685
    %v1687 = vpop.f32.mrf.mxu0
    %v1688 = vadd.f32 %v1408, %v1687
    %1689 = vmatprep.mubr.bf16.mxu0 0
    %1690 = vmatmul.mubr.bf16.gmra.mxu0 %v1645
    %v1691 = vpop.f32.mrf.mxu0
    %v1692 = vadd.f32 %v1404, %v1691
    %v1693 = vpop.f32.mrf.mxu0
    %v1694 = vadd.f32 %v1408, %v1693
    %v1695 = vpop.f32.mrf.mxu0
    %v1696 = vpop.f32.mrf.mxu0
    %1697 = vdwg.mxu0
    %1698 = vmatprep.subr.bf16.mxu0 0
    %1699 = vmatpush1.bf16.msra.mxu0 0
    %1700 = vmatprep.subr.bf16.mxu0 0
    %1701 = vmatpush1.bf16.msra.mxu0 0
    %1702 = vmatprep.subr.bf16.mxu0 0
    %1703 = vmatpush1.bf16.msra.mxu0 0
    %1704 = vmatprep.subr.bf16.mxu0 0
    %1705 = vmatpush1.bf16.msra.mxu0 0
    %1706 = vmatprep.subr.bf16.mxu0 0
    %1707 = vmatpush1.bf16.msra.mxu0 0
    %1708 = vmatprep.subr.bf16.mxu0 0
    %1709 = vmatpush1.bf16.msra.mxu0 0
    %1710 = vmatprep.subr.bf16.mxu0 %v1596
    %1711 = vmatpush1.bf16.msra.mxu0 %v1595
    %1712 = vmatprep.subr.bf16.mxu0 %v1580
    %1713 = vmatpush1.bf16.msra.mxu0 %v1579
    %1714 = vmatprep.subr.bf16.mxu0 0
    %1715 = vmatpush2.bf16.msra.mxu0 0
    %1716 = vmatprep.subr.bf16.mxu0 0
    %1717 = vmatpush2.bf16.msra.mxu0 0
    %1718 = vmatprep.subr.bf16.mxu0 0
    %1719 = vmatpush2.bf16.msra.mxu0 0
    %1720 = vmatprep.subr.bf16.mxu0 0
    %1721 = vmatpush2.bf16.msra.mxu0 0
    %1722 = vmatprep.subr.bf16.mxu0 0
    %1723 = vmatpush2.bf16.msra.mxu0 0
    %1724 = vmatprep.subr.bf16.mxu0 0
    %1725 = vmatpush2.bf16.msra.mxu0 0
    %1726 = vmatprep.subr.bf16.mxu0 0
    %1727 = vmatpush2.bf16.msra.mxu0 0
    %1728 = vmatprep.subr.bf16.mxu0 0
    %1729 = vmatpush2.bf16.msra.mxu0 0
    %1730 = vmatprep.mubr.bf16.mxu0 0
    %1731 = vmatmul.mubr.bf16.gmra.mxu0 %v1642
    %v1732 = vpop.f32.mrf.mxu0
    %v1733 = vadd.f32 %v1412, %v1732
    %v1734 = vpop.f32.mrf.mxu0
    %v1735 = vadd.f32 %v1416, %v1734
    %v1736 = vpop.f32.mrf.mxu0
    %v1737 = vadd.f32 %v1412, %v1736
    %v1738 = vpop.f32.mrf.mxu0
    %v1739 = vadd.f32 %v1416, %v1738
    %1740 = vmatprep.mubr.bf16.mxu0 0
    %1741 = vmatmul.mubr.bf16.gmra.mxu0 %v1645
    %v1742 = vpop.f32.mrf.mxu0
    %v1743 = vadd.f32 %v1412, %v1742
    %v1744 = vpop.f32.mrf.mxu0
    %v1745 = vadd.f32 %v1416, %v1744
    %v1746 = vpop.f32.mrf.mxu0
    %v1747 = vpop.f32.mrf.mxu0
    %1748 = vdwg.mxu0
    %1749 = vmatprep.subr.bf16.mxu0 0
    %1750 = vmatpush1.bf16.msra.mxu0 0
    %1751 = vmatprep.subr.bf16.mxu0 0
    %1752 = vmatpush1.bf16.msra.mxu0 0
    %1753 = vmatprep.subr.bf16.mxu0 0
    %1754 = vmatpush1.bf16.msra.mxu0 0
    %1755 = vmatprep.subr.bf16.mxu0 0
    %1756 = vmatpush1.bf16.msra.mxu0 0
    %1757 = vmatprep.subr.bf16.mxu0 0
    %1758 = vmatpush1.bf16.msra.mxu0 0
    %1759 = vmatprep.subr.bf16.mxu0 0
    %1760 = vmatpush1.bf16.msra.mxu0 0
    %1761 = vmatprep.subr.bf16.mxu0 %v1598
    %1762 = vmatpush1.bf16.msra.mxu0 %v1597
    %1763 = vmatprep.subr.bf16.mxu0 %v1582
    %1764 = vmatpush1.bf16.msra.mxu0 %v1581
    %1765 = vmatprep.subr.bf16.mxu0 0
    %1766 = vmatpush2.bf16.msra.mxu0 0
    %1767 = vmatprep.subr.bf16.mxu0 0
    %1768 = vmatpush2.bf16.msra.mxu0 0
    %1769 = vmatprep.subr.bf16.mxu0 0
    %1770 = vmatpush2.bf16.msra.mxu0 0
    %1771 = vmatprep.subr.bf16.mxu0 0
    %1772 = vmatpush2.bf16.msra.mxu0 0
    %1773 = vmatprep.subr.bf16.mxu0 0
    %1774 = vmatpush2.bf16.msra.mxu0 0
    %1775 = vmatprep.subr.bf16.mxu0 0
    %1776 = vmatpush2.bf16.msra.mxu0 0
    %1777 = vmatprep.subr.bf16.mxu0 0
    %1778 = vmatpush2.bf16.msra.mxu0 0
    %1779 = vmatprep.subr.bf16.mxu0 0
    %1780 = vmatpush2.bf16.msra.mxu0 0
    %1781 = vmatprep.mubr.bf16.mxu0 0
    %1782 = vmatmul.mubr.bf16.gmra.mxu0 %v1642
    %v1783 = vpop.f32.mrf.mxu0
    %v1784 = vadd.f32 %v1420, %v1783
    %v1785 = vpop.f32.mrf.mxu0
    %v1786 = vadd.f32 %v1424, %v1785
    %v1787 = vpop.f32.mrf.mxu0
    %v1788 = vadd.f32 %v1420, %v1787
    %v1789 = vpop.f32.mrf.mxu0
    %v1790 = vadd.f32 %v1424, %v1789
    %1791 = vmatprep.mubr.bf16.mxu0 0
    %1792 = vmatmul.mubr.bf16.gmra.mxu0 %v1645
    %v1793 = vpop.f32.mrf.mxu0
    %v1794 = vadd.f32 %v1420, %v1793
    %v1795 = vpop.f32.mrf.mxu0
    %v1796 = vadd.f32 %v1424, %v1795
    %v1797 = vpop.f32.mrf.mxu0
    %v1798 = vpop.f32.mrf.mxu0
    %1799 = vdwg.mxu0
    %1800 = vmatprep.subr.bf16.mxu0 0
    %1801 = vmatpush1.bf16.msra.mxu0 0
    %1802 = vmatprep.subr.bf16.mxu0 0
    %1803 = vmatpush1.bf16.msra.mxu0 0
    %1804 = vmatprep.subr.bf16.mxu0 0
    %1805 = vmatpush1.bf16.msra.mxu0 0
    %1806 = vmatprep.subr.bf16.mxu0 0
    %1807 = vmatpush1.bf16.msra.mxu0 0
    %1808 = vmatprep.subr.bf16.mxu0 0
    %1809 = vmatpush1.bf16.msra.mxu0 0
    %1810 = vmatprep.subr.bf16.mxu0 0
    %1811 = vmatpush1.bf16.msra.mxu0 0
    %1812 = vmatprep.subr.bf16.mxu0 %v1600
    %1813 = vmatpush1.bf16.msra.mxu0 %v1599
    %1814 = vmatprep.subr.bf16.mxu0 %v1584
    %1815 = vmatpush1.bf16.msra.mxu0 %v1583
    %1816 = vmatprep.subr.bf16.mxu0 0
    %1817 = vmatpush2.bf16.msra.mxu0 0
    %1818 = vmatprep.subr.bf16.mxu0 0
    %1819 = vmatpush2.bf16.msra.mxu0 0
    %1820 = vmatprep.subr.bf16.mxu0 0
    %1821 = vmatpush2.bf16.msra.mxu0 0
    %1822 = vmatprep.subr.bf16.mxu0 0
    %1823 = vmatpush2.bf16.msra.mxu0 0
    %1824 = vmatprep.subr.bf16.mxu0 0
    %1825 = vmatpush2.bf16.msra.mxu0 0
    %1826 = vmatprep.subr.bf16.mxu0 0
    %1827 = vmatpush2.bf16.msra.mxu0 0
    %1828 = vmatprep.subr.bf16.mxu0 0
    %1829 = vmatpush2.bf16.msra.mxu0 0
    %1830 = vmatprep.subr.bf16.mxu0 0
    %1831 = vmatpush2.bf16.msra.mxu0 0
    %1832 = vmatprep.mubr.bf16.mxu0 0
    %1833 = vmatmul.mubr.bf16.gmra.mxu0 %v1642
    %v1834 = vpop.f32.mrf.mxu0
    %v1835 = vadd.f32 %v1428, %v1834
    %v1836 = vpop.f32.mrf.mxu0
    %v1837 = vadd.f32 %v1432, %v1836
    %v1838 = vpop.f32.mrf.mxu0
    %v1839 = vadd.f32 %v1428, %v1838
    %v1840 = vpop.f32.mrf.mxu0
    %v1841 = vadd.f32 %v1432, %v1840
    %1842 = vmatprep.mubr.bf16.mxu0 0
    %1843 = vmatmul.mubr.bf16.gmra.mxu0 %v1645
    %v1844 = vpop.f32.mrf.mxu0
    %v1845 = vadd.f32 %v1428, %v1844
    %v1846 = vpop.f32.mrf.mxu0
    %v1847 = vadd.f32 %v1432, %v1846
    %v1848 = vpop.f32.mrf.mxu0
    %v1849 = vpop.f32.mrf.mxu0
    %1850 = vdwg.mxu0
    %1851 = vmatprep.subr.bf16.mxu0 0
    %1852 = vmatpush1.bf16.msra.mxu0 0
    %1853 = vmatprep.subr.bf16.mxu0 0
    %1854 = vmatpush1.bf16.msra.mxu0 0
    %1855 = vmatprep.subr.bf16.mxu0 0
    %1856 = vmatpush1.bf16.msra.mxu0 0
    %1857 = vmatprep.subr.bf16.mxu0 0
    %1858 = vmatpush1.bf16.msra.mxu0 0
    %1859 = vmatprep.subr.bf16.mxu0 0
    %1860 = vmatpush1.bf16.msra.mxu0 0
    %1861 = vmatprep.subr.bf16.mxu0 0
    %1862 = vmatpush1.bf16.msra.mxu0 0
    %1863 = vmatprep.subr.bf16.mxu0 %v1602
    %1864 = vmatpush1.bf16.msra.mxu0 %v1601
    %1865 = vmatprep.subr.bf16.mxu0 %v1586
    %1866 = vmatpush1.bf16.msra.mxu0 %v1585
    %1867 = vmatprep.subr.bf16.mxu0 0
    %1868 = vmatpush2.bf16.msra.mxu0 0
    %1869 = vmatprep.subr.bf16.mxu0 0
    %1870 = vmatpush2.bf16.msra.mxu0 0
    %1871 = vmatprep.subr.bf16.mxu0 0
    %1872 = vmatpush2.bf16.msra.mxu0 0
    %1873 = vmatprep.subr.bf16.mxu0 0
    %1874 = vmatpush2.bf16.msra.mxu0 0
    %1875 = vmatprep.subr.bf16.mxu0 0
    %1876 = vmatpush2.bf16.msra.mxu0 0
    %1877 = vmatprep.subr.bf16.mxu0 0
    %1878 = vmatpush2.bf16.msra.mxu0 0
    %1879 = vmatprep.subr.bf16.mxu0 0
    %1880 = vmatpush2.bf16.msra.mxu0 0
    %1881 = vmatprep.subr.bf16.mxu0 0
    %1882 = vmatpush2.bf16.msra.mxu0 0
    %1883 = vmatprep.mubr.bf16.mxu0 0
    %1884 = vmatmul.mubr.bf16.gmra.mxu0 %v1642
    %v1885 = vpop.f32.mrf.mxu0
    %v1886 = vadd.f32 %v1436, %v1885
    %v1887 = vpop.f32.mrf.mxu0
    %v1888 = vadd.f32 %v1440, %v1887
    %v1889 = vpop.f32.mrf.mxu0
    %v1890 = vadd.f32 %v1436, %v1889
    %v1891 = vpop.f32.mrf.mxu0
    %v1892 = vadd.f32 %v1440, %v1891
    %1893 = vmatprep.mubr.bf16.mxu0 0
    %1894 = vmatmul.mubr.bf16.gmra.mxu0 %v1645
    %v1895 = vpop.f32.mrf.mxu0
    %v1896 = vadd.f32 %v1436, %v1895
    %v1897 = vpop.f32.mrf.mxu0
    %v1898 = vadd.f32 %v1440, %v1897
    %v1899 = vpop.f32.mrf.mxu0
    %v1900 = vpop.f32.mrf.mxu0
    %1901 = vdwg.mxu0
    %1902 = vmatprep.subr.bf16.mxu0 0
    %1903 = vmatpush1.bf16.msra.mxu0 0
    %1904 = vmatprep.subr.bf16.mxu0 0
    %1905 = vmatpush1.bf16.msra.mxu0 0
    %1906 = vmatprep.subr.bf16.mxu0 0
    %1907 = vmatpush1.bf16.msra.mxu0 0
    %1908 = vmatprep.subr.bf16.mxu0 0
    %1909 = vmatpush1.bf16.msra.mxu0 0
    %1910 = vmatprep.subr.bf16.mxu0 0
    %1911 = vmatpush1.bf16.msra.mxu0 0
    %1912 = vmatprep.subr.bf16.mxu0 0
    %1913 = vmatpush1.bf16.msra.mxu0 0
    %1914 = vmatprep.subr.bf16.mxu0 %v1604
    %1915 = vmatpush1.bf16.msra.mxu0 %v1603
    %1916 = vmatprep.subr.bf16.mxu0 %v1588
    %1917 = vmatpush1.bf16.msra.mxu0 %v1587
    %1918 = vmatprep.subr.bf16.mxu0 0
    %1919 = vmatpush2.bf16.msra.mxu0 0
    %1920 = vmatprep.subr.bf16.mxu0 0
    %1921 = vmatpush2.bf16.msra.mxu0 0
    %1922 = vmatprep.subr.bf16.mxu0 0
    %1923 = vmatpush2.bf16.msra.mxu0 0
    %1924 = vmatprep.subr.bf16.mxu0 0
    %1925 = vmatpush2.bf16.msra.mxu0 0
    %1926 = vmatprep.subr.bf16.mxu0 0
    %1927 = vmatpush2.bf16.msra.mxu0 0
    %1928 = vmatprep.subr.bf16.mxu0 0
    %1929 = vmatpush2.bf16.msra.mxu0 0
    %1930 = vmatprep.subr.bf16.mxu0 0
    %1931 = vmatpush2.bf16.msra.mxu0 0
    %1932 = vmatprep.subr.bf16.mxu0 0
    %1933 = vmatpush2.bf16.msra.mxu0 0
    %1934 = vmatprep.mubr.bf16.mxu0 0
    %1935 = vmatmul.mubr.bf16.gmra.mxu0 %v1642
    %v1936 = vpop.f32.mrf.mxu0
    %v1937 = vadd.f32 %v1444, %v1936
    %v1938 = vpop.f32.mrf.mxu0
    %v1939 = vadd.f32 %v1448, %v1938
    %v1940 = vpop.f32.mrf.mxu0
    %v1941 = vadd.f32 %v1444, %v1940
    %v1942 = vpop.f32.mrf.mxu0
    %v1943 = vadd.f32 %v1448, %v1942
    %1944 = vmatprep.mubr.bf16.mxu0 0
    %1945 = vmatmul.mubr.bf16.gmra.mxu0 %v1645
    %v1946 = vpop.f32.mrf.mxu0
    %v1947 = vadd.f32 %v1444, %v1946
    %v1948 = vpop.f32.mrf.mxu0
    %v1949 = vadd.f32 %v1448, %v1948
    %v1950 = vpop.f32.mrf.mxu0
    %v1951 = vpop.f32.mrf.mxu0
    %1952 = vdwg.mxu0
    %1953 = vmatprep.subr.bf16.mxu0 0
    %1954 = vmatpush1.bf16.msra.mxu0 0
    %1955 = vmatprep.subr.bf16.mxu0 0
    %1956 = vmatpush1.bf16.msra.mxu0 0
    %1957 = vmatprep.subr.bf16.mxu0 0
    %1958 = vmatpush1.bf16.msra.mxu0 0
    %1959 = vmatprep.subr.bf16.mxu0 0
    %1960 = vmatpush1.bf16.msra.mxu0 0
    %1961 = vmatprep.subr.bf16.mxu0 0
    %1962 = vmatpush1.bf16.msra.mxu0 0
    %1963 = vmatprep.subr.bf16.mxu0 0
    %1964 = vmatpush1.bf16.msra.mxu0 0
    %1965 = vmatprep.subr.bf16.mxu0 %v1606
    %1966 = vmatpush1.bf16.msra.mxu0 %v1605
    %1967 = vmatprep.subr.bf16.mxu0 %v1590
    %1968 = vmatpush1.bf16.msra.mxu0 %v1589
    %1969 = vmatprep.subr.bf16.mxu0 0
    %1970 = vmatpush2.bf16.msra.mxu0 0
    %1971 = vmatprep.subr.bf16.mxu0 0
    %1972 = vmatpush2.bf16.msra.mxu0 0
    %1973 = vmatprep.subr.bf16.mxu0 0
    %1974 = vmatpush2.bf16.msra.mxu0 0
    %1975 = vmatprep.subr.bf16.mxu0 0
    %1976 = vmatpush2.bf16.msra.mxu0 0
    %1977 = vmatprep.subr.bf16.mxu0 0
    %1978 = vmatpush2.bf16.msra.mxu0 0
    %1979 = vmatprep.subr.bf16.mxu0 0
    %1980 = vmatpush2.bf16.msra.mxu0 0
    %1981 = vmatprep.subr.bf16.mxu0 0
    %1982 = vmatpush2.bf16.msra.mxu0 0
    %1983 = vmatprep.subr.bf16.mxu0 0
    %1984 = vmatpush2.bf16.msra.mxu0 0
    %1985 = vmatprep.mubr.bf16.mxu0 0
    %1986 = vmatmul.mubr.bf16.gmra.mxu0 %v1642
    %v1987 = vpop.f32.mrf.mxu0
    %v1988 = vadd.f32 %v1452, %v1987
    %v1989 = vpop.f32.mrf.mxu0
    %v1990 = vadd.f32 %v1456, %v1989
    %v1991 = vpop.f32.mrf.mxu0
    %v1992 = vadd.f32 %v1452, %v1991
    %v1993 = vpop.f32.mrf.mxu0
    %v1994 = vadd.f32 %v1456, %v1993
    %1995 = vmatprep.mubr.bf16.mxu0 0
    %1996 = vmatmul.mubr.bf16.gmra.mxu0 %v1645
    %v1997 = vpop.f32.mrf.mxu0
    %v1998 = vadd.f32 %v1452, %v1997
    %v1999 = vpop.f32.mrf.mxu0
    %v2000 = vadd.f32 %v1456, %v1999
    %v2001 = vpop.f32.mrf.mxu0
    %v2002 = vpop.f32.mrf.mxu0
    %2003 = vdwg.mxu0
    %2004 = vmatprep.subr.bf16.mxu0 0
    %2005 = vmatpush1.bf16.msra.mxu0 0
    %2006 = vmatprep.subr.bf16.mxu0 0
    %2007 = vmatpush1.bf16.msra.mxu0 0
    %2008 = vmatprep.subr.bf16.mxu0 0
    %2009 = vmatpush1.bf16.msra.mxu0 0
    %2010 = vmatprep.subr.bf16.mxu0 0
    %2011 = vmatpush1.bf16.msra.mxu0 0
    %2012 = vmatprep.subr.bf16.mxu0 0
    %2013 = vmatpush1.bf16.msra.mxu0 0
    %2014 = vmatprep.subr.bf16.mxu0 0
    %2015 = vmatpush1.bf16.msra.mxu0 0
    %2016 = vmatprep.subr.bf16.mxu0 %v1608
    %2017 = vmatpush1.bf16.msra.mxu0 %v1607
    %2018 = vmatprep.subr.bf16.mxu0 %v1592
    %2019 = vmatpush1.bf16.msra.mxu0 %v1591
    %2020 = vmatprep.subr.bf16.mxu0 0
    %2021 = vmatpush2.bf16.msra.mxu0 0
    %2022 = vmatprep.subr.bf16.mxu0 0
    %2023 = vmatpush2.bf16.msra.mxu0 0
    %2024 = vmatprep.subr.bf16.mxu0 0
    %2025 = vmatpush2.bf16.msra.mxu0 0
    %2026 = vmatprep.subr.bf16.mxu0 0
    %2027 = vmatpush2.bf16.msra.mxu0 0
    %2028 = vmatprep.subr.bf16.mxu0 0
    %2029 = vmatpush2.bf16.msra.mxu0 0
    %2030 = vmatprep.subr.bf16.mxu0 0
    %2031 = vmatpush2.bf16.msra.mxu0 0
    %2032 = vmatprep.subr.bf16.mxu0 0
    %2033 = vmatpush2.bf16.msra.mxu0 0
    %2034 = vmatprep.subr.bf16.mxu0 0
    %2035 = vmatpush2.bf16.msra.mxu0 0
    %2036 = vmatprep.mubr.bf16.mxu0 0
    %2037 = vmatmul.mubr.bf16.gmra.mxu0 %v1642
    %v2038 = vpop.f32.mrf.mxu0
    %v2039 = vadd.f32 %v1460, %v2038
    %v2040 = vpop.f32.mrf.mxu0
    %v2041 = vadd.f32 %v1464, %v2040
    %v2042 = vpop.f32.mrf.mxu0
    %v2043 = vadd.f32 %v1460, %v2042
    %v2044 = vpop.f32.mrf.mxu0
    %v2045 = vadd.f32 %v1464, %v2044
    %2046 = vmatprep.mubr.bf16.mxu0 0
    %2047 = vmatmul.mubr.bf16.gmra.mxu0 %v1645
    %v2048 = vpop.f32.mrf.mxu0
    %v2049 = vadd.f32 %v1460, %v2048
    %v2050 = vpop.f32.mrf.mxu0
    %v2051 = vadd.f32 %v1464, %v2050
    %v2052 = vpop.f32.mrf.mxu0
    %v2053 = vpop.f32.mrf.mxu0
    %2054 = vdwg.mxu0
    %v2055 = vmax.f32 %v1682, 0.0
    %v2056 = vmax.f32 %v1684, 0.0
    %v2057 = vmax.f32 %v1733, 0.0
    %v2058 = vmax.f32 %v1735, 0.0
    %v2059 = vmax.f32 %v1784, 0.0
    %v2060 = vmax.f32 %v1786, 0.0
    %v2061 = vmax.f32 %v1835, 0.0
    %v2062 = vmax.f32 %v1837, 0.0
    %v2063 = vmax.f32 %v1886, 0.0
    %v2064 = vmax.f32 %v1888, 0.0
    %v2065 = vmax.f32 %v1937, 0.0
    %v2066 = vmax.f32 %v1939, 0.0
    %v2067 = vmax.f32 %v1988, 0.0
    %v2068 = vmax.f32 %v1990, 0.0
    %v2069 = vmax.f32 %v2039, 0.0
    %v2070 = vmax.f32 %v2041, 0.0
    %v2071 = vmax.f32 %v1686, 0.0
    %v2072 = vmax.f32 %v1688, 0.0
    %v2073 = vmax.f32 %v1737, 0.0
    %v2074 = vmax.f32 %v1739, 0.0
    %v2075 = vmax.f32 %v1788, 0.0
    %v2076 = vmax.f32 %v1790, 0.0
    %v2077 = vmax.f32 %v1839, 0.0
    %v2078 = vmax.f32 %v1841, 0.0
    %v2079 = vmax.f32 %v1890, 0.0
    %v2080 = vmax.f32 %v1892, 0.0
    %v2081 = vmax.f32 %v1941, 0.0
    %v2082 = vmax.f32 %v1943, 0.0
    %v2083 = vmax.f32 %v1992, 0.0
    %v2084 = vmax.f32 %v1994, 0.0
    %v2085 = vmax.f32 %v2043, 0.0
    %v2086 = vmax.f32 %v2045, 0.0
    %v2087 = vmax.f32 %v1692, 0.0
    %v2088 = vmax.f32 %v1694, 0.0
    %v2089 = vmax.f32 %v1743, 0.0
    %v2090 = vmax.f32 %v1745, 0.0
    %v2091 = vmax.f32 %v1794, 0.0
    %v2092 = vmax.f32 %v1796, 0.0
    %v2093 = vmax.f32 %v1845, 0.0
    %v2094 = vmax.f32 %v1847, 0.0
    %v2095 = vmax.f32 %v1896, 0.0
    %v2096 = vmax.f32 %v1898, 0.0
    %v2097 = vmax.f32 %v1947, 0.0
    %v2098 = vmax.f32 %v1949, 0.0
    %v2099 = vmax.f32 %v1998, 0.0
    %v2100 = vmax.f32 %v2000, 0.0
    %v2101 = vmax.f32 %v2049, 0.0
    %v2102 = vmax.f32 %v2051, 0.0
    %v2103 = vpack.c.bf16 %v2071, %v2055
    %v2104 = vpack.c.bf16 %v2072, %v2056
    %v2105 = vpack.c.bf16 %v2073, %v2057
    %v2106 = vpack.c.bf16 %v2074, %v2058
    %v2107 = vpack.c.bf16 %v2075, %v2059
    %v2108 = vpack.c.bf16 %v2076, %v2060
    %v2109 = vpack.c.bf16 %v2077, %v2061
    %v2110 = vpack.c.bf16 %v2078, %v2062
    %v2111 = vpack.c.bf16 %v2079, %v2063
    %v2112 = vpack.c.bf16 %v2080, %v2064
    %v2113 = vpack.c.bf16 %v2081, %v2065
    %v2114 = vpack.c.bf16 %v2082, %v2066
    %v2115 = vpack.c.bf16 %v2083, %v2067
    %v2116 = vpack.c.bf16 %v2084, %v2068
    %v2117 = vpack.c.bf16 %v2085, %v2069
    %v2118 = vpack.c.bf16 %v2086, %v2070
    %v2119 = vpack.c.bf16 %v2087, %v2087
    %v2120 = vpack.c.bf16 %v2088, %v2088
    %v2121 = vpack.c.bf16 %v2089, %v2089
    %v2122 = vpack.c.bf16 %v2090, %v2090
    %v2123 = vpack.c.bf16 %v2091, %v2091
    %v2124 = vpack.c.bf16 %v2092, %v2092
    %v2125 = vpack.c.bf16 %v2093, %v2093
    %v2126 = vpack.c.bf16 %v2094, %v2094
    %v2127 = vpack.c.bf16 %v2095, %v2095
    %v2128 = vpack.c.bf16 %v2096, %v2096
    %v2129 = vpack.c.bf16 %v2097, %v2097
    %v2130 = vpack.c.bf16 %v2098, %v2098
    %v2131 = vpack.c.bf16 %v2099, %v2099
    %v2132 = vpack.c.bf16 %v2100, %v2100
    %v2133 = vpack.c.bf16 %v2101, %v2101
    %v2134 = vpack.c.bf16 %v2102, %v2102
    %v2135 = vld [vmem:[#allocation11] sm:$0xff]
    %v2136 = vld [vmem:[#allocation11 + $0x8] sm:$0xff]
    %v2137 = vld [vmem:[#allocation11 + $0x10] sm:$0xff]
    %v2138 = vld [vmem:[#allocation11 + $0x18] sm:$0xff]
    %v2139 = vld [vmem:[#allocation11 + $0x20] sm:$0xff]
    %v2140 = vld [vmem:[#allocation11 + $0x28] sm:$0xff]
    %v2141 = vld [vmem:[#allocation11 + $0x30] sm:$0xff]
    %v2142 = vld [vmem:[#allocation11 + $0x38] sm:$0xff]
    %v2143 = vld [vmem:[#allocation11 + $0x40] sm:$0xff]
    %v2144 = vld [vmem:[#allocation11 + $0x48] sm:$0xff]
    %v2145 = vld [vmem:[#allocation11 + $0x50] sm:$0xff]
    %v2146 = vld [vmem:[#allocation11 + $0x58] sm:$0xff]
    %v2147 = vld [vmem:[#allocation11 + $0x60] sm:$0xff]
    %v2148 = vld [vmem:[#allocation11 + $0x68] sm:$0xff]
    %v2149 = vld [vmem:[#allocation11 + $0x70] sm:$0xff]
    %v2150 = vld [vmem:[#allocation11 + $0x78] sm:$0xff]
    %v2151 = vld [vmem:[#allocation11 + $0x80] sm:$0xff]
    %v2152 = vld [vmem:[#allocation11 + $0x88] sm:$0xff]
    %v2153 = vld [vmem:[#allocation11 + $0x90] sm:$0xff]
    %v2154 = vld [vmem:[#allocation11 + $0x98] sm:$0xff]
    %v2155 = vld [vmem:[#allocation11 + $0xa0] sm:$0xff]
    %v2156 = vld [vmem:[#allocation11 + $0xa8] sm:$0xff]
    %v2157 = vld [vmem:[#allocation11 + $0xb0] sm:$0xff]
    %v2158 = vld [vmem:[#allocation11 + $0xb8] sm:$0xff]
    %v2159 = vld [vmem:[#allocation11 + $0xc0] sm:$0xff]
    %v2160 = vld [vmem:[#allocation11 + $0xc8] sm:$0xff]
    %v2161 = vld [vmem:[#allocation11 + $0xd0] sm:$0xff]
    %v2162 = vld [vmem:[#allocation11 + $0xd8] sm:$0xff]
    %v2163 = vld [vmem:[#allocation11 + $0xe0] sm:$0xff]
    %v2164 = vld [vmem:[#allocation11 + $0xe8] sm:$0xff]
    %v2165 = vld [vmem:[#allocation11 + $0xf0] sm:$0xff]
    %v2166 = vld [vmem:[#allocation11 + $0xf8] sm:$0xff]
    %v2167 = vld [vmem:[%s10] sm:$0x1]
    %v2169 = vlaneseq
    %v2170 = vshrl.u32 %v2169, 7
    %v2171 = vsub.s32 0, %v2170
    %v2172 = vrot.slane %v2167, %v2171
    %v2206 = vunpack.c.l.b16 %v2135
    %v2207 = vunpack.c.h.b16 %v2135
    %v2208 = vunpack.c.l.b16 %v2136
    %v2209 = vunpack.c.h.b16 %v2136
    %v2210 = vunpack.c.l.b16 %v2137
    %v2211 = vunpack.c.h.b16 %v2137
    %v2212 = vunpack.c.l.b16 %v2138
    %v2213 = vunpack.c.h.b16 %v2138
    %v2214 = vunpack.c.l.b16 %v2139
    %v2215 = vunpack.c.h.b16 %v2139
    %v2216 = vunpack.c.l.b16 %v2140
    %v2217 = vunpack.c.h.b16 %v2140
    %v2218 = vunpack.c.l.b16 %v2141
    %v2219 = vunpack.c.h.b16 %v2141
    %v2220 = vunpack.c.l.b16 %v2142
    %v2221 = vunpack.c.h.b16 %v2142
    %v2222 = vunpack.c.l.b16 %v2143
    %v2223 = vunpack.c.h.b16 %v2143
    %v2224 = vunpack.c.l.b16 %v2144
    %v2225 = vunpack.c.h.b16 %v2144
    %v2226 = vunpack.c.l.b16 %v2145
    %v2227 = vunpack.c.h.b16 %v2145
    %v2228 = vunpack.c.l.b16 %v2146
    %v2229 = vunpack.c.h.b16 %v2146
    %v2230 = vunpack.c.l.b16 %v2147
    %v2231 = vunpack.c.h.b16 %v2147
    %v2232 = vunpack.c.l.b16 %v2148
    %v2233 = vunpack.c.h.b16 %v2148
    %v2234 = vunpack.c.l.b16 %v2149
    %v2235 = vunpack.c.h.b16 %v2149
    %v2236 = vunpack.c.l.b16 %v2150
    %v2237 = vunpack.c.h.b16 %v2150
    %v2238 = vunpack.c.l.b16 %v2151
    %v2239 = vunpack.c.h.b16 %v2151
    %v2240 = vunpack.c.l.b16 %v2152
    %v2241 = vunpack.c.h.b16 %v2152
    %v2242 = vunpack.c.l.b16 %v2153
    %v2243 = vunpack.c.h.b16 %v2153
    %v2244 = vunpack.c.l.b16 %v2154
    %v2245 = vunpack.c.h.b16 %v2154
    %v2246 = vunpack.c.l.b16 %v2155
    %v2247 = vunpack.c.h.b16 %v2155
    %v2248 = vunpack.c.l.b16 %v2156
    %v2249 = vunpack.c.h.b16 %v2156
    %v2250 = vunpack.c.l.b16 %v2157
    %v2251 = vunpack.c.h.b16 %v2157
    %v2252 = vunpack.c.l.b16 %v2158
    %v2253 = vunpack.c.h.b16 %v2158
    %v2254 = vunpack.c.l.b16 %v2159
    %v2255 = vunpack.c.h.b16 %v2159
    %v2256 = vunpack.c.l.b16 %v2160
    %v2257 = vunpack.c.h.b16 %v2160
    %v2258 = vunpack.c.l.b16 %v2161
    %v2259 = vunpack.c.h.b16 %v2161
    %v2260 = vunpack.c.l.b16 %v2162
    %v2261 = vunpack.c.h.b16 %v2162
    %v2262 = vunpack.c.l.b16 %v2163
    %v2263 = vunpack.c.h.b16 %v2163
    %v2264 = vunpack.c.l.b16 %v2164
    %v2265 = vunpack.c.h.b16 %v2164
    %v2266 = vunpack.c.l.b16 %v2165
    %v2267 = vunpack.c.h.b16 %v2165
    %v2268 = vunpack.c.l.b16 %v2166
    %v2269 = vunpack.c.h.b16 %v2166
    %v2270 = vpack.c.b16 %v2222, %v2206
    %v2271 = vpack.c.b16 %v2223, %v2207
    %v2272 = vpack.c.b16 %v2224, %v2208
    %v2273 = vpack.c.b16 %v2225, %v2209
    %v2274 = vpack.c.b16 %v2226, %v2210
    %v2275 = vpack.c.b16 %v2227, %v2211
    %v2276 = vpack.c.b16 %v2228, %v2212
    %v2277 = vpack.c.b16 %v2229, %v2213
    %v2278 = vpack.c.b16 %v2230, %v2214
    %v2279 = vpack.c.b16 %v2231, %v2215
    %v2280 = vpack.c.b16 %v2232, %v2216
    %v2281 = vpack.c.b16 %v2233, %v2217
    %v2282 = vpack.c.b16 %v2234, %v2218
    %v2283 = vpack.c.b16 %v2235, %v2219
    %v2284 = vpack.c.b16 %v2236, %v2220
    %v2285 = vpack.c.b16 %v2237, %v2221
    %v2286 = vpack.c.b16 %v2254, %v2238
    %v2287 = vpack.c.b16 %v2255, %v2239
    %v2288 = vpack.c.b16 %v2256, %v2240
    %v2289 = vpack.c.b16 %v2257, %v2241
    %v2290 = vpack.c.b16 %v2258, %v2242
    %v2291 = vpack.c.b16 %v2259, %v2243
    %v2292 = vpack.c.b16 %v2260, %v2244
    %v2293 = vpack.c.b16 %v2261, %v2245
    %v2294 = vpack.c.b16 %v2262, %v2246
    %v2295 = vpack.c.b16 %v2263, %v2247
    %v2296 = vpack.c.b16 %v2264, %v2248
    %v2297 = vpack.c.b16 %v2265, %v2249
    %v2298 = vpack.c.b16 %v2266, %v2250
    %v2299 = vpack.c.b16 %v2267, %v2251
    %v2300 = vpack.c.b16 %v2268, %v2252
    %v2301 = vpack.c.b16 %v2269, %v2253
    %2334 = vmatprep.subr.bf16.mxu0 0
    %2335 = vmatpush1.bf16.xpose.msra.mxu0 0
    %2336 = vmatprep.subr.bf16.mxu0 0
    %2337 = vmatpush1.bf16.xpose.msra.mxu0 0
    %2338 = vmatprep.subr.bf16.mxu0 0
    %2339 = vmatpush1.bf16.xpose.msra.mxu0 0
    %2340 = vmatprep.subr.bf16.mxu0 0
    %2341 = vmatpush1.bf16.xpose.msra.mxu0 0
    %2342 = vmatprep.subr.bf16.mxu0 0
    %2343 = vmatpush1.bf16.xpose.msra.mxu0 0
    %2344 = vmatprep.subr.bf16.mxu0 0
    %2345 = vmatpush1.bf16.xpose.msra.mxu0 0
    %2346 = vmatprep.subr.bf16.mxu0 %v2287
    %2347 = vmatpush1.bf16.xpose.msra.mxu0 %v2286
    %2348 = vmatprep.subr.bf16.mxu0 %v2271
    %2349 = vmatpush1.bf16.xpose.msra.mxu0 %v2270
    %2350 = vmatprep.subr.bf16.mxu0 0
    %2351 = vmatpush2.bf16.xpose.msra.mxu0 0
    %2352 = vmatprep.subr.bf16.mxu0 0
    %2353 = vmatpush2.bf16.xpose.msra.mxu0 0
    %2354 = vmatprep.subr.bf16.mxu0 0
    %2355 = vmatpush2.bf16.xpose.msra.mxu0 0
    %2356 = vmatprep.subr.bf16.mxu0 0
    %2357 = vmatpush2.bf16.xpose.msra.mxu0 0
    %2358 = vmatprep.subr.bf16.mxu0 0
    %2359 = vmatpush2.bf16.xpose.msra.mxu0 0
    %2360 = vmatprep.subr.bf16.mxu0 0
    %2361 = vmatpush2.bf16.xpose.msra.mxu0 0
    %2362 = vmatprep.subr.bf16.mxu0 0
    %2363 = vmatpush2.bf16.xpose.msra.mxu0 0
    %2364 = vmatprep.subr.bf16.mxu0 0
    %2365 = vmatpush2.bf16.xpose.msra.mxu0 0
    %2366 = vmatprep.mubr.bf16.mxu0 %v2104
    %2367 = vmatmul.mubr.bf16.gmra.mxu0 %v2103
    %v2368 = vpop.f32.mrf.mxu0
    %v2369 = vadd.f32 %v2172, %v2368
    %v2370 = vpop.f32.mrf.mxu0
    %v2371 = vpop.f32.mrf.mxu0
    %v2372 = vadd.f32 %v2172, %v2371
    %v2373 = vpop.f32.mrf.mxu0
    %2374 = vmatprep.mubr.bf16.mxu0 %v2120
    %2375 = vmatmul.mubr.bf16.gmra.mxu0 %v2119
    %v2376 = vpop.f32.mrf.mxu0
    %v2377 = vadd.f32 %v2172, %v2376
    %v2378 = vpop.f32.mrf.mxu0
    %v2379 = vpop.f32.mrf.mxu0
    %v2380 = vpop.f32.mrf.mxu0
    %2381 = vdwg.mxu0
    %2382 = vmatprep.subr.bf16.mxu0 0
    %2383 = vmatpush1.bf16.xpose.msra.mxu0 0
    %2384 = vmatprep.subr.bf16.mxu0 0
    %2385 = vmatpush1.bf16.xpose.msra.mxu0 0
    %2386 = vmatprep.subr.bf16.mxu0 0
    %2387 = vmatpush1.bf16.xpose.msra.mxu0 0
    %2388 = vmatprep.subr.bf16.mxu0 0
    %2389 = vmatpush1.bf16.xpose.msra.mxu0 0
    %2390 = vmatprep.subr.bf16.mxu0 0
    %2391 = vmatpush1.bf16.xpose.msra.mxu0 0
    %2392 = vmatprep.subr.bf16.mxu0 0
    %2393 = vmatpush1.bf16.xpose.msra.mxu0 0
    %2394 = vmatprep.subr.bf16.mxu0 %v2289
    %2395 = vmatpush1.bf16.xpose.msra.mxu0 %v2288
    %2396 = vmatprep.subr.bf16.mxu0 %v2273
    %2397 = vmatpush1.bf16.xpose.msra.mxu0 %v2272
    %2398 = vmatprep.subr.bf16.mxu0 0
    %2399 = vmatpush2.bf16.xpose.msra.mxu0 0
    %2400 = vmatprep.subr.bf16.mxu0 0
    %2401 = vmatpush2.bf16.xpose.msra.mxu0 0
    %2402 = vmatprep.subr.bf16.mxu0 0
    %2403 = vmatpush2.bf16.xpose.msra.mxu0 0
    %2404 = vmatprep.subr.bf16.mxu0 0
    %2405 = vmatpush2.bf16.xpose.msra.mxu0 0
    %2406 = vmatprep.subr.bf16.mxu0 0
    %2407 = vmatpush2.bf16.xpose.msra.mxu0 0
    %2408 = vmatprep.subr.bf16.mxu0 0
    %2409 = vmatpush2.bf16.xpose.msra.mxu0 0
    %2410 = vmatprep.subr.bf16.mxu0 0
    %2411 = vmatpush2.bf16.xpose.msra.mxu0 0
    %2412 = vmatprep.subr.bf16.mxu0 0
    %2413 = vmatpush2.bf16.xpose.msra.mxu0 0
    %2414 = vmatprep.mubr.bf16.mxu0 %v2106
    %2415 = vmatmul.mubr.bf16.gmra.mxu0 %v2105
    %v2416 = vpop.f32.mrf.mxu0
    %v2417 = vadd.f32 %v2369, %v2416
    %v2418 = vpop.f32.mrf.mxu0
    %v2419 = vpop.f32.mrf.mxu0
    %v2420 = vadd.f32 %v2372, %v2419
    %v2421 = vpop.f32.mrf.mxu0
    %2422 = vmatprep.mubr.bf16.mxu0 %v2122
    %2423 = vmatmul.mubr.bf16.gmra.mxu0 %v2121
    %v2424 = vpop.f32.mrf.mxu0
    %v2425 = vadd.f32 %v2377, %v2424
    %v2426 = vpop.f32.mrf.mxu0
    %v2427 = vpop.f32.mrf.mxu0
    %v2428 = vpop.f32.mrf.mxu0
    %2429 = vdwg.mxu0
    %2430 = vmatprep.subr.bf16.mxu0 0
    %2431 = vmatpush1.bf16.xpose.msra.mxu0 0
    %2432 = vmatprep.subr.bf16.mxu0 0
    %2433 = vmatpush1.bf16.xpose.msra.mxu0 0
    %2434 = vmatprep.subr.bf16.mxu0 0
    %2435 = vmatpush1.bf16.xpose.msra.mxu0 0
    %2436 = vmatprep.subr.bf16.mxu0 0
    %2437 = vmatpush1.bf16.xpose.msra.mxu0 0
    %2438 = vmatprep.subr.bf16.mxu0 0
    %2439 = vmatpush1.bf16.xpose.msra.mxu0 0
    %2440 = vmatprep.subr.bf16.mxu0 0
    %2441 = vmatpush1.bf16.xpose.msra.mxu0 0
    %2442 = vmatprep.subr.bf16.mxu0 %v2291
    %2443 = vmatpush1.bf16.xpose.msra.mxu0 %v2290
    %2444 = vmatprep.subr.bf16.mxu0 %v2275
    %2445 = vmatpush1.bf16.xpose.msra.mxu0 %v2274
    %2446 = vmatprep.subr.bf16.mxu0 0
    %2447 = vmatpush2.bf16.xpose.msra.mxu0 0
    %2448 = vmatprep.subr.bf16.mxu0 0
    %2449 = vmatpush2.bf16.xpose.msra.mxu0 0
    %2450 = vmatprep.subr.bf16.mxu0 0
    %2451 = vmatpush2.bf16.xpose.msra.mxu0 0
    %2452 = vmatprep.subr.bf16.mxu0 0
    %2453 = vmatpush2.bf16.xpose.msra.mxu0 0
    %2454 = vmatprep.subr.bf16.mxu0 0
    %2455 = vmatpush2.bf16.xpose.msra.mxu0 0
    %2456 = vmatprep.subr.bf16.mxu0 0
    %2457 = vmatpush2.bf16.xpose.msra.mxu0 0
    %2458 = vmatprep.subr.bf16.mxu0 0
    %2459 = vmatpush2.bf16.xpose.msra.mxu0 0
    %2460 = vmatprep.subr.bf16.mxu0 0
    %2461 = vmatpush2.bf16.xpose.msra.mxu0 0
    %2462 = vmatprep.mubr.bf16.mxu0 %v2108
    %2463 = vmatmul.mubr.bf16.gmra.mxu0 %v2107
    %v2464 = vpop.f32.mrf.mxu0
    %v2465 = vadd.f32 %v2417, %v2464
    %v2466 = vpop.f32.mrf.mxu0
    %v2467 = vpop.f32.mrf.mxu0
    %v2468 = vadd.f32 %v2420, %v2467
    %v2469 = vpop.f32.mrf.mxu0
    %2470 = vmatprep.mubr.bf16.mxu0 %v2124
    %2471 = vmatmul.mubr.bf16.gmra.mxu0 %v2123
    %v2472 = vpop.f32.mrf.mxu0
    %v2473 = vadd.f32 %v2425, %v2472
    %v2474 = vpop.f32.mrf.mxu0
    %v2475 = vpop.f32.mrf.mxu0
    %v2476 = vpop.f32.mrf.mxu0
    %2477 = vdwg.mxu0
    %2478 = vmatprep.subr.bf16.mxu0 0
    %2479 = vmatpush1.bf16.xpose.msra.mxu0 0
    %2480 = vmatprep.subr.bf16.mxu0 0
    %2481 = vmatpush1.bf16.xpose.msra.mxu0 0
    %2482 = vmatprep.subr.bf16.mxu0 0
    %2483 = vmatpush1.bf16.xpose.msra.mxu0 0
    %2484 = vmatprep.subr.bf16.mxu0 0
    %2485 = vmatpush1.bf16.xpose.msra.mxu0 0
    %2486 = vmatprep.subr.bf16.mxu0 0
    %2487 = vmatpush1.bf16.xpose.msra.mxu0 0
    %2488 = vmatprep.subr.bf16.mxu0 0
    %2489 = vmatpush1.bf16.xpose.msra.mxu0 0
    %2490 = vmatprep.subr.bf16.mxu0 %v2293
    %2491 = vmatpush1.bf16.xpose.msra.mxu0 %v2292
    %2492 = vmatprep.subr.bf16.mxu0 %v2277
    %2493 = vmatpush1.bf16.xpose.msra.mxu0 %v2276
    %2494 = vmatprep.subr.bf16.mxu0 0
    %2495 = vmatpush2.bf16.xpose.msra.mxu0 0
    %2496 = vmatprep.subr.bf16.mxu0 0
    %2497 = vmatpush2.bf16.xpose.msra.mxu0 0
    %2498 = vmatprep.subr.bf16.mxu0 0
    %2499 = vmatpush2.bf16.xpose.msra.mxu0 0
    %2500 = vmatprep.subr.bf16.mxu0 0
    %2501 = vmatpush2.bf16.xpose.msra.mxu0 0
    %2502 = vmatprep.subr.bf16.mxu0 0
    %2503 = vmatpush2.bf16.xpose.msra.mxu0 0
    %2504 = vmatprep.subr.bf16.mxu0 0
    %2505 = vmatpush2.bf16.xpose.msra.mxu0 0
    %2506 = vmatprep.subr.bf16.mxu0 0
    %2507 = vmatpush2.bf16.xpose.msra.mxu0 0
    %2508 = vmatprep.subr.bf16.mxu0 0
    %2509 = vmatpush2.bf16.xpose.msra.mxu0 0
    %2510 = vmatprep.mubr.bf16.mxu0 %v2110
    %2511 = vmatmul.mubr.bf16.gmra.mxu0 %v2109
    %v2512 = vpop.f32.mrf.mxu0
    %v2513 = vadd.f32 %v2465, %v2512
    %v2514 = vpop.f32.mrf.mxu0
    %v2515 = vpop.f32.mrf.mxu0
    %v2516 = vadd.f32 %v2468, %v2515
    %v2517 = vpop.f32.mrf.mxu0
    %2518 = vmatprep.mubr.bf16.mxu0 %v2126
    %2519 = vmatmul.mubr.bf16.gmra.mxu0 %v2125
    %v2520 = vpop.f32.mrf.mxu0
    %v2521 = vadd.f32 %v2473, %v2520
    %v2522 = vpop.f32.mrf.mxu0
    %v2523 = vpop.f32.mrf.mxu0
    %v2524 = vpop.f32.mrf.mxu0
    %2525 = vdwg.mxu0
    %2526 = vmatprep.subr.bf16.mxu0 0
    %2527 = vmatpush1.bf16.xpose.msra.mxu0 0
    %2528 = vmatprep.subr.bf16.mxu0 0
    %2529 = vmatpush1.bf16.xpose.msra.mxu0 0
    %2530 = vmatprep.subr.bf16.mxu0 0
    %2531 = vmatpush1.bf16.xpose.msra.mxu0 0
    %2532 = vmatprep.subr.bf16.mxu0 0
    %2533 = vmatpush1.bf16.xpose.msra.mxu0 0
    %2534 = vmatprep.subr.bf16.mxu0 0
    %2535 = vmatpush1.bf16.xpose.msra.mxu0 0
    %2536 = vmatprep.subr.bf16.mxu0 0
    %2537 = vmatpush1.bf16.xpose.msra.mxu0 0
    %2538 = vmatprep.subr.bf16.mxu0 %v2295
    %2539 = vmatpush1.bf16.xpose.msra.mxu0 %v2294
    %2540 = vmatprep.subr.bf16.mxu0 %v2279
    %2541 = vmatpush1.bf16.xpose.msra.mxu0 %v2278
    %2542 = vmatprep.subr.bf16.mxu0 0
    %2543 = vmatpush2.bf16.xpose.msra.mxu0 0
    %2544 = vmatprep.subr.bf16.mxu0 0
    %2545 = vmatpush2.bf16.xpose.msra.mxu0 0
    %2546 = vmatprep.subr.bf16.mxu0 0
    %2547 = vmatpush2.bf16.xpose.msra.mxu0 0
    %2548 = vmatprep.subr.bf16.mxu0 0
    %2549 = vmatpush2.bf16.xpose.msra.mxu0 0
    %2550 = vmatprep.subr.bf16.mxu0 0
    %2551 = vmatpush2.bf16.xpose.msra.mxu0 0
    %2552 = vmatprep.subr.bf16.mxu0 0
    %2553 = vmatpush2.bf16.xpose.msra.mxu0 0
    %2554 = vmatprep.subr.bf16.mxu0 0
    %2555 = vmatpush2.bf16.xpose.msra.mxu0 0
    %2556 = vmatprep.subr.bf16.mxu0 0
    %2557 = vmatpush2.bf16.xpose.msra.mxu0 0
    %2558 = vmatprep.mubr.bf16.mxu0 %v2112
    %2559 = vmatmul.mubr.bf16.gmra.mxu0 %v2111
    %v2560 = vpop.f32.mrf.mxu0
    %v2561 = vadd.f32 %v2513, %v2560
    %v2562 = vpop.f32.mrf.mxu0
    %v2563 = vpop.f32.mrf.mxu0
    %v2564 = vadd.f32 %v2516, %v2563
    %v2565 = vpop.f32.mrf.mxu0
    %2566 = vmatprep.mubr.bf16.mxu0 %v2128
    %2567 = vmatmul.mubr.bf16.gmra.mxu0 %v2127
    %v2568 = vpop.f32.mrf.mxu0
    %v2569 = vadd.f32 %v2521, %v2568
    %v2570 = vpop.f32.mrf.mxu0
    %v2571 = vpop.f32.mrf.mxu0
    %v2572 = vpop.f32.mrf.mxu0
    %2573 = vdwg.mxu0
    %2574 = vmatprep.subr.bf16.mxu0 0
    %2575 = vmatpush1.bf16.xpose.msra.mxu0 0
    %2576 = vmatprep.subr.bf16.mxu0 0
    %2577 = vmatpush1.bf16.xpose.msra.mxu0 0
    %2578 = vmatprep.subr.bf16.mxu0 0
    %2579 = vmatpush1.bf16.xpose.msra.mxu0 0
    %2580 = vmatprep.subr.bf16.mxu0 0
    %2581 = vmatpush1.bf16.xpose.msra.mxu0 0
    %2582 = vmatprep.subr.bf16.mxu0 0
    %2583 = vmatpush1.bf16.xpose.msra.mxu0 0
    %2584 = vmatprep.subr.bf16.mxu0 0
    %2585 = vmatpush1.bf16.xpose.msra.mxu0 0
    %2586 = vmatprep.subr.bf16.mxu0 %v2297
    %2587 = vmatpush1.bf16.xpose.msra.mxu0 %v2296
    %2588 = vmatprep.subr.bf16.mxu0 %v2281
    %2589 = vmatpush1.bf16.xpose.msra.mxu0 %v2280
    %2590 = vmatprep.subr.bf16.mxu0 0
    %2591 = vmatpush2.bf16.xpose.msra.mxu0 0
    %2592 = vmatprep.subr.bf16.mxu0 0
    %2593 = vmatpush2.bf16.xpose.msra.mxu0 0
    %2594 = vmatprep.subr.bf16.mxu0 0
    %2595 = vmatpush2.bf16.xpose.msra.mxu0 0
    %2596 = vmatprep.subr.bf16.mxu0 0
    %2597 = vmatpush2.bf16.xpose.msra.mxu0 0
    %2598 = vmatprep.subr.bf16.mxu0 0
    %2599 = vmatpush2.bf16.xpose.msra.mxu0 0
    %2600 = vmatprep.subr.bf16.mxu0 0
    %2601 = vmatpush2.bf16.xpose.msra.mxu0 0
    %2602 = vmatprep.subr.bf16.mxu0 0
    %2603 = vmatpush2.bf16.xpose.msra.mxu0 0
    %2604 = vmatprep.subr.bf16.mxu0 0
    %2605 = vmatpush2.bf16.xpose.msra.mxu0 0
    %2606 = vmatprep.mubr.bf16.mxu0 %v2114
    %2607 = vmatmul.mubr.bf16.gmra.mxu0 %v2113
    %v2608 = vpop.f32.mrf.mxu0
    %v2609 = vadd.f32 %v2561, %v2608
    %v2610 = vpop.f32.mrf.mxu0
    %v2611 = vpop.f32.mrf.mxu0
    %v2612 = vadd.f32 %v2564, %v2611
    %v2613 = vpop.f32.mrf.mxu0
    %2614 = vmatprep.mubr.bf16.mxu0 %v2130
    %2615 = vmatmul.mubr.bf16.gmra.mxu0 %v2129
    %v2616 = vpop.f32.mrf.mxu0
    %v2617 = vadd.f32 %v2569, %v2616
    %v2618 = vpop.f32.mrf.mxu0
    %v2619 = vpop.f32.mrf.mxu0
    %v2620 = vpop.f32.mrf.mxu0
    %2621 = vdwg.mxu0
    %2622 = vmatprep.subr.bf16.mxu0 0
    %2623 = vmatpush1.bf16.xpose.msra.mxu0 0
    %2624 = vmatprep.subr.bf16.mxu0 0
    %2625 = vmatpush1.bf16.xpose.msra.mxu0 0
    %2626 = vmatprep.subr.bf16.mxu0 0
    %2627 = vmatpush1.bf16.xpose.msra.mxu0 0
    %2628 = vmatprep.subr.bf16.mxu0 0
    %2629 = vmatpush1.bf16.xpose.msra.mxu0 0
    %2630 = vmatprep.subr.bf16.mxu0 0
    %2631 = vmatpush1.bf16.xpose.msra.mxu0 0
    %2632 = vmatprep.subr.bf16.mxu0 0
    %2633 = vmatpush1.bf16.xpose.msra.mxu0 0
    %2634 = vmatprep.subr.bf16.mxu0 %v2299
    %2635 = vmatpush1.bf16.xpose.msra.mxu0 %v2298
    %2636 = vmatprep.subr.bf16.mxu0 %v2283
    %2637 = vmatpush1.bf16.xpose.msra.mxu0 %v2282
    %2638 = vmatprep.subr.bf16.mxu0 0
    %2639 = vmatpush2.bf16.xpose.msra.mxu0 0
    %2640 = vmatprep.subr.bf16.mxu0 0
    %2641 = vmatpush2.bf16.xpose.msra.mxu0 0
    %2642 = vmatprep.subr.bf16.mxu0 0
    %2643 = vmatpush2.bf16.xpose.msra.mxu0 0
    %2644 = vmatprep.subr.bf16.mxu0 0
    %2645 = vmatpush2.bf16.xpose.msra.mxu0 0
    %2646 = vmatprep.subr.bf16.mxu0 0
    %2647 = vmatpush2.bf16.xpose.msra.mxu0 0
    %2648 = vmatprep.subr.bf16.mxu0 0
    %2649 = vmatpush2.bf16.xpose.msra.mxu0 0
    %2650 = vmatprep.subr.bf16.mxu0 0
    %2651 = vmatpush2.bf16.xpose.msra.mxu0 0
    %2652 = vmatprep.subr.bf16.mxu0 0
    %2653 = vmatpush2.bf16.xpose.msra.mxu0 0
    %2654 = vmatprep.mubr.bf16.mxu0 %v2116
    %2655 = vmatmul.mubr.bf16.gmra.mxu0 %v2115
    %v2656 = vpop.f32.mrf.mxu0
    %v2657 = vadd.f32 %v2609, %v2656
    %v2658 = vpop.f32.mrf.mxu0
    %v2659 = vpop.f32.mrf.mxu0
    %v2660 = vadd.f32 %v2612, %v2659
    %v2661 = vpop.f32.mrf.mxu0
    %2662 = vmatprep.mubr.bf16.mxu0 %v2132
    %2663 = vmatmul.mubr.bf16.gmra.mxu0 %v2131
    %v2664 = vpop.f32.mrf.mxu0
    %v2665 = vadd.f32 %v2617, %v2664
    %v2666 = vpop.f32.mrf.mxu0
    %v2667 = vpop.f32.mrf.mxu0
    %v2668 = vpop.f32.mrf.mxu0
    %2669 = vdwg.mxu0
    %2670 = vmatprep.subr.bf16.mxu0 0
    %2671 = vmatpush1.bf16.xpose.msra.mxu0 0
    %2672 = vmatprep.subr.bf16.mxu0 0
    %2673 = vmatpush1.bf16.xpose.msra.mxu0 0
    %2674 = vmatprep.subr.bf16.mxu0 0
    %2675 = vmatpush1.bf16.xpose.msra.mxu0 0
    %2676 = vmatprep.subr.bf16.mxu0 0
    %2677 = vmatpush1.bf16.xpose.msra.mxu0 0
    %2678 = vmatprep.subr.bf16.mxu0 0
    %2679 = vmatpush1.bf16.xpose.msra.mxu0 0
    %2680 = vmatprep.subr.bf16.mxu0 0
    %2681 = vmatpush1.bf16.xpose.msra.mxu0 0
    %2682 = vmatprep.subr.bf16.mxu0 %v2301
    %2683 = vmatpush1.bf16.xpose.msra.mxu0 %v2300
    %2684 = vmatprep.subr.bf16.mxu0 %v2285
    %2685 = vmatpush1.bf16.xpose.msra.mxu0 %v2284
    %2686 = vmatprep.subr.bf16.mxu0 0
    %2687 = vmatpush2.bf16.xpose.msra.mxu0 0
    %2688 = vmatprep.subr.bf16.mxu0 0
    %2689 = vmatpush2.bf16.xpose.msra.mxu0 0
    %2690 = vmatprep.subr.bf16.mxu0 0
    %2691 = vmatpush2.bf16.xpose.msra.mxu0 0
    %2692 = vmatprep.subr.bf16.mxu0 0
    %2693 = vmatpush2.bf16.xpose.msra.mxu0 0
    %2694 = vmatprep.subr.bf16.mxu0 0
    %2695 = vmatpush2.bf16.xpose.msra.mxu0 0
    %2696 = vmatprep.subr.bf16.mxu0 0
    %2697 = vmatpush2.bf16.xpose.msra.mxu0 0
    %2698 = vmatprep.subr.bf16.mxu0 0
    %2699 = vmatpush2.bf16.xpose.msra.mxu0 0
    %2700 = vmatprep.subr.bf16.mxu0 0
    %2701 = vmatpush2.bf16.xpose.msra.mxu0 0
    %2702 = vmatprep.mubr.bf16.mxu0 %v2118
    %2703 = vmatmul.mubr.bf16.gmra.mxu0 %v2117
    %v2704 = vpop.f32.mrf.mxu0
    %v2705 = vadd.f32 %v2657, %v2704
    %v2706 = vpop.f32.mrf.mxu0
    %v2707 = vpop.f32.mrf.mxu0
    %v2708 = vadd.f32 %v2660, %v2707
    %v2709 = vpop.f32.mrf.mxu0
    %2710 = vmatprep.mubr.bf16.mxu0 %v2134
    %2711 = vmatmul.mubr.bf16.gmra.mxu0 %v2133
    %v2712 = vpop.f32.mrf.mxu0
    %v2713 = vadd.f32 %v2665, %v2712
    %v2714 = vpop.f32.mrf.mxu0
    %v2715 = vpop.f32.mrf.mxu0
    %v2716 = vpop.f32.mrf.mxu0
    %2717 = vdwg.mxu0
    %v2718 = vadd.f32 %v1360, %v2705
    %v2719 = vadd.f32 %v1361, %v2708
    %v2720 = vadd.f32 %v1362, %v2713
    %v2721 = vld [vmem:[%s13] sm:$0x1]
    %v2722 = vld [vmem:[%s14] sm:$0x1]
    %v2723 = vsel %vm543, %v2718, 0.0
    %2724 = vadd.xlane.f32.xlu0 %v2723
    %v2725 = vpop.xlane.xlu0 %2724
    %v2726 = vsel %vm543, %v2719, 0.0
    %2727 = vadd.xlane.f32.xlu0 %v2726
    %v2728 = vpop.xlane.xlu0 %2727
    %v2729 = vsel %vm1310, %v2720, 0.0
    %2730 = vadd.xlane.f32.xlu0 %v2729
    %v2731 = vpop.xlane.xlu0 %2730
    %v2732 = vmul.f32 %v2725, %v1314
    %v2733 = vmul.f32 %v2728, %v1314
    %v2734 = vmul.f32 %v2731, %v1314
    %v2735 = vsub.f32 %v2718, %v2732
    %v2736 = vsub.f32 %v2719, %v2733
    %v2737 = vsub.f32 %v2720, %v2734
    %v2738 = vmul.f32 %v2735, %v2735
    %v2739 = vmul.f32 %v2736, %v2736
    %v2740 = vmul.f32 %v2737, %v2737
    %v2741 = vsel %vm543, %v2738, 0.0
    %2742 = vadd.xlane.f32.xlu0 %v2741
    %v2743 = vpop.xlane.xlu0 %2742
    %v2744 = vsel %vm543, %v2739, 0.0
    %2745 = vadd.xlane.f32.xlu0 %v2744
    %v2746 = vpop.xlane.xlu0 %2745
    %v2747 = vsel %vm1310, %v2740, 0.0
    %2748 = vadd.xlane.f32.xlu0 %v2747
    %v2749 = vpop.xlane.xlu0 %2748
    %v2750 = vmul.f32 %v2743, %v1314
    %v2751 = vmul.f32 %v2746, %v1314
    %v2752 = vmul.f32 %v2749, %v1314
    %v2753 = vadd.f32 %v2750, 1e-05
    %v2754 = vadd.f32 %v2751, 1e-05
    %v2755 = vadd.f32 %v2752, 1e-05
    %v2756 = vrsqrt.pop %v2753
    %v2757 = vrsqrt.pop %v2754
    %v2758 = vrsqrt.pop %v2755
    %v2759 = vmul.f32 %v2735, %v2756
    %v2760 = vmul.f32 %v2736, %v2757
    %v2761 = vmul.f32 %v2737, %v2758
    %v2763 = vlaneseq
    %v2764 = vshrl.u32 %v2763, 7
    %v2765 = vsub.s32 0, %v2764
    %v2766 = vrot.slane %v2721, %v2765
    %v2768 = vmul.f32 %v2759, %v2766
    %v2769 = vmul.f32 %v2760, %v2766
    %v2770 = vmul.f32 %v2761, %v2766
    %v2772 = vlaneseq
    %v2773 = vshrl.u32 %v2772, 7
    %v2774 = vsub.s32 0, %v2773
    %v2775 = vrot.slane %v2722, %v2774
    %v2777 = vadd.f32 %v2768, %v2775
    %v2778 = vadd.f32 %v2769, %v2775
    %v2779 = vadd.f32 %v2770, %v2775
    %v2780 = vpack.c.bf16 %v2778, %v2777
    %v2781 = vpack.c.bf16 %v2779, %v2779
    %s2782 = scalar_lea.vmem %s3, 16
    %v2783 = vld [vmem:[%s2782] sm:$0xf]
    %v2784 = vld [vmem:[%s2782 + $0x4] sm:$0xf]
    %v2785 = vld [vmem:[%s2782 + $0x8] sm:$0xf]
    %v2786 = vld [vmem:[%s2782 + $0xc] sm:$0xf]
    %s2787 = scalar_lea.vmem %s4, 1
    %v2788 = vld [vmem:[%s2787] sm:$0x1]
    %v2790 = vlaneseq
    %v2791 = vshrl.u32 %v2790, 7
    %v2792 = vsub.s32 0, %v2791
    %v2793 = vrot.slane %v2788, %v2792
    %v2799 = vunpack.c.l.b16 %v2783
    %v2800 = vunpack.c.l.b16 %v2784
    %v2801 = vunpack.c.l.b16 %v2785
    %v2802 = vunpack.c.l.b16 %v2786
    %v2803 = vpack.c.b16 %v2800, %v2799
    %v2804 = vpack.c.b16 %v2802, %v2801
    %v2808 = vsel %vm543, %v2780, 0
    %v2811 = vsel %vm543, %v2781, 0
    %2813 = vmatprep.subr.bf16.mxu0 0
    %2814 = vmatpush1.bf16.msra.mxu0 0
    %2815 = vmatprep.subr.bf16.mxu0 0
    %2816 = vmatpush1.bf16.msra.mxu0 0
    %2817 = vmatprep.subr.bf16.mxu0 0
    %2818 = vmatpush1.bf16.msra.mxu0 0
    %2819 = vmatprep.subr.bf16.mxu0 0
    %2820 = vmatpush1.bf16.msra.mxu0 0
    %2821 = vmatprep.subr.bf16.mxu0 0
    %2822 = vmatpush1.bf16.msra.mxu0 0
    %2823 = vmatprep.subr.bf16.mxu0 0
    %2824 = vmatpush1.bf16.msra.mxu0 0
    %2825 = vmatprep.subr.bf16.mxu0 0
    %2826 = vmatpush1.bf16.msra.mxu0 %v2804
    %2827 = vmatprep.subr.bf16.mxu0 0
    %2828 = vmatpush1.bf16.msra.mxu0 %v2803
    %2829 = vmatprep.subr.bf16.mxu0 0
    %2830 = vmatpush2.bf16.msra.mxu0 0
    %2831 = vmatprep.subr.bf16.mxu0 0
    %2832 = vmatpush2.bf16.msra.mxu0 0
    %2833 = vmatprep.subr.bf16.mxu0 0
    %2834 = vmatpush2.bf16.msra.mxu0 0
    %2835 = vmatprep.subr.bf16.mxu0 0
    %2836 = vmatpush2.bf16.msra.mxu0 0
    %2837 = vmatprep.subr.bf16.mxu0 0
    %2838 = vmatpush2.bf16.msra.mxu0 0
    %2839 = vmatprep.subr.bf16.mxu0 0
    %2840 = vmatpush2.bf16.msra.mxu0 0
    %2841 = vmatprep.subr.bf16.mxu0 0
    %2842 = vmatpush2.bf16.msra.mxu0 0
    %2843 = vmatprep.subr.bf16.mxu0 0
    %2844 = vmatpush2.bf16.msra.mxu0 0
    %2845 = vmatprep.mubr.bf16.mxu0 0
    %2846 = vmatmul.mubr.bf16.gmra.mxu0 %v2808
    %v2847 = vpop.f32.mrf.mxu0
    %v2848 = vadd.f32 %v2793, %v2847
    %v2849 = vpop.f32.mrf.mxu0
    %v2850 = vpop.f32.mrf.mxu0
    %v2851 = vadd.f32 %v2793, %v2850
    %v2852 = vpop.f32.mrf.mxu0
    %2853 = vmatprep.mubr.bf16.mxu0 0
    %2854 = vmatmul.mubr.bf16.gmra.mxu0 %v2811
    %v2855 = vpop.f32.mrf.mxu0
    %v2856 = vadd.f32 %v2793, %v2855
    %v2857 = vpop.f32.mrf.mxu0
    %v2858 = vpop.f32.mrf.mxu0
    %v2859 = vpop.f32.mrf.mxu0
    %2860 = vdwg.mxu0
    %2864 = vrot.lane.b32.xlu0 %v2848, 96
    %v2865 = vpop.permute.xlu0 %2864
    %2866 = vrot.lane.b32.xlu0 %v2851, 96
    %v2867 = vpop.permute.xlu0 %2866
    %2868 = vrot.lane.b32.xlu0 %v2856, 96
    %v2869 = vpop.permute.xlu0 %2868
    %v2872 = vsel %vm640, %v2869, 0
    %2874 = vmatprep.subr.mxu0 0.0
    %2875 = vmatpush1.msra.mxu0 0.0
    %2876 = vmatprep.subr.mxu0 0.0
    %2877 = vmatpush1.msra.mxu0 0.0
    %2878 = vmatprep.subr.mxu0 0.0
    %2879 = vmatpush1.msra.mxu0 0.0
    %2880 = vmatprep.subr.mxu0 0.0
    %2881 = vmatpush1.msra.mxu0 0.0
    %2882 = vmatprep.subr.mxu0 0.0
    %2883 = vmatpush1.msra.mxu0 0.0
    %2884 = vmatprep.subr.mxu0 0.0
    %2885 = vmatpush1.msra.mxu0 0.0
    %2886 = vmatprep.subr.mxu0 0.0
    %2887 = vmatpush1.msra.mxu0 0.0
    %2888 = vmatprep.subr.mxu0 0.0
    %2889 = vmatpush1.msra.mxu0 0.0
    %2890 = vmatprep.subr.mxu0 0.0
    %2891 = vmatpush1.msra.mxu0 0.0
    %2892 = vmatprep.subr.mxu0 0.0
    %2893 = vmatpush1.msra.mxu0 0.0
    %2894 = vmatprep.subr.mxu0 0.0
    %2895 = vmatpush1.msra.mxu0 0.0
    %2896 = vmatprep.subr.mxu0 0.0
    %2897 = vmatpush1.msra.mxu0 0.0
    %2898 = vmatprep.subr.mxu0 0.0
    %2899 = vmatpush1.msra.mxu0 0.0
    %2900 = vmatprep.subr.mxu0 0.0
    %2901 = vmatpush1.msra.mxu0 %v2872
    %2902 = vmatprep.subr.mxu0 0.0
    %2903 = vmatpush1.msra.mxu0 %v2867
    %2904 = vmatprep.subr.mxu0 0.0
    %2905 = vmatpush1.msra.mxu0 %v2865
    %2906 = vmatprep.subr.mxu0 0.0
    %2907 = vmatpush2.msra.mxu0 0.0
    %2908 = vmatprep.subr.mxu0 0.0
    %2909 = vmatpush2.msra.mxu0 0.0
    %2910 = vmatprep.subr.mxu0 0.0
    %2911 = vmatpush2.msra.mxu0 0.0
    %2912 = vmatprep.subr.mxu0 0.0
    %2913 = vmatpush2.msra.mxu0 0.0
    %2914 = vmatprep.subr.mxu0 0.0
    %2915 = vmatpush2.msra.mxu0 0.0
    %2916 = vmatprep.subr.mxu0 0.0
    %2917 = vmatpush2.msra.mxu0 0.0
    %2918 = vmatprep.subr.mxu0 0.0
    %2919 = vmatpush2.msra.mxu0 0.0
    %2920 = vmatprep.subr.mxu0 0.0
    %2921 = vmatpush2.msra.mxu0 0.0
    %2922 = vmatprep.subr.mxu0 0.0
    %2923 = vmatpush2.msra.mxu0 0.0
    %2924 = vmatprep.subr.mxu0 0.0
    %2925 = vmatpush2.msra.mxu0 0.0
    %2926 = vmatprep.subr.mxu0 0.0
    %2927 = vmatpush2.msra.mxu0 0.0
    %2928 = vmatprep.subr.mxu0 0.0
    %2929 = vmatpush2.msra.mxu0 0.0
    %2930 = vmatprep.subr.mxu0 0.0
    %2931 = vmatpush2.msra.mxu0 0.0
    %2932 = vmatprep.subr.mxu0 0.0
    %2933 = vmatpush2.msra.mxu0 0.0
    %2934 = vmatprep.subr.mxu0 0.0
    %2935 = vmatpush2.msra.mxu0 0.0
    %2936 = vmatprep.subr.mxu0 0.0
    %2937 = vmatpush2.msra.mxu0 0.0
    %2938 = vmatprep.mubr.f32.mxu0 0.0
    %2939 = vmatmul.mubr.f32.gmra.mxu0 %v611
    %v2940 = vpop.f32.mrf.mxu0
    %v2941 = vadd.f32 0.0, %v2940
    %v2942 = vpop.f32.mrf.mxu0
    %2943 = vmatprep.mubr.f32.mxu0 0.0
    %2944 = vmatmul.mubr.f32.gmra.mxu0 %v614
    %v2945 = vpop.f32.mrf.mxu0
    %v2946 = vadd.f32 0.0, %v2945
    %v2947 = vpop.f32.mrf.mxu0
    %2948 = vmatprep.mubr.f32.mxu0 0.0
    %2949 = vmatmul.mubr.f32.gmra.mxu0 %v617
    %v2950 = vpop.f32.mrf.mxu0
    %v2951 = vadd.f32 0.0, %v2950
    %v2952 = vpop.f32.mrf.mxu0
    %2953 = vmatprep.mubr.f32.mxu0 0.0
    %2954 = vmatmul.mubr.f32.gmra.mxu0 %v620
    %v2955 = vpop.f32.mrf.mxu0
    %v2956 = vadd.f32 0.0, %v2955
    %v2957 = vpop.f32.mrf.mxu0
    %2958 = vmatprep.mubr.f32.mxu0 0.0
    %2959 = vmatmul.mubr.f32.gmra.mxu0 %v623
    %v2960 = vpop.f32.mrf.mxu0
    %v2961 = vadd.f32 0.0, %v2960
    %v2962 = vpop.f32.mrf.mxu0
    %2963 = vmatprep.mubr.f32.mxu0 0.0
    %2964 = vmatmul.mubr.f32.gmra.mxu0 %v626
    %v2965 = vpop.f32.mrf.mxu0
    %v2966 = vadd.f32 0.0, %v2965
    %v2967 = vpop.f32.mrf.mxu0
    %2968 = vmatprep.mubr.f32.mxu0 0.0
    %2969 = vmatmul.mubr.f32.gmra.mxu0 %v629
    %v2970 = vpop.f32.mrf.mxu0
    %v2971 = vadd.f32 0.0, %v2970
    %v2972 = vpop.f32.mrf.mxu0
    %2973 = vmatprep.mubr.f32.mxu0 0.0
    %2974 = vmatmul.mubr.f32.gmra.mxu0 %v632
    %v2975 = vpop.f32.mrf.mxu0
    %v2976 = vadd.f32 0.0, %v2975
    %v2977 = vpop.f32.mrf.mxu0
    %2978 = vmatprep.mubr.f32.mxu0 0.0
    %2979 = vmatmul.mubr.f32.gmra.mxu0 %v635
    %v2980 = vpop.f32.mrf.mxu0
    %v2981 = vadd.f32 0.0, %v2980
    %v2982 = vpop.f32.mrf.mxu0
    %2983 = vmatprep.mubr.f32.mxu0 0.0
    %2984 = vmatmul.mubr.f32.gmra.mxu0 %v638
    %v2985 = vpop.f32.mrf.mxu0
    %v2986 = vadd.f32 0.0, %v2985
    %v2987 = vpop.f32.mrf.mxu0
    %2988 = vdwg.mxu0
    %v2989 = vmul.f32 %v2941, %v270
    %v2990 = vmul.f32 %v2946, %v271
    %v2991 = vmul.f32 %v2951, %v272
    %v2992 = vmul.f32 %v2956, %v273
    %v2993 = vmul.f32 %v2961, %v274
    %v2994 = vmul.f32 %v2966, %v275
    %v2995 = vmul.f32 %v2971, %v276
    %v2996 = vmul.f32 %v2976, %v277
    %v2997 = vmul.f32 %v2981, %v278
    %v2998 = vmul.f32 %v2986, %v279
    %2999 = vrot.lane.b32.xlu0 %v2848, 64
    %v3000 = vpop.permute.xlu0 %2999
    %3001 = vrot.lane.b32.xlu0 %v2851, 64
    %v3002 = vpop.permute.xlu0 %3001
    %3003 = vrot.lane.b32.xlu0 %v2856, 64
    %v3004 = vpop.permute.xlu0 %3003
    %v3007 = vsel %vm640, %v3004, 0
    %3009 = vmatprep.subr.mxu0 0.0
    %3010 = vmatpush1.msra.mxu0 0.0
    %3011 = vmatprep.subr.mxu0 0.0
    %3012 = vmatpush1.msra.mxu0 0.0
    %3013 = vmatprep.subr.mxu0 0.0
    %3014 = vmatpush1.msra.mxu0 0.0
    %3015 = vmatprep.subr.mxu0 0.0
    %3016 = vmatpush1.msra.mxu0 0.0
    %3017 = vmatprep.subr.mxu0 0.0
    %3018 = vmatpush1.msra.mxu0 0.0
    %3019 = vmatprep.subr.mxu0 0.0
    %3020 = vmatpush1.msra.mxu0 0.0
    %3021 = vmatprep.subr.mxu0 0.0
    %3022 = vmatpush1.msra.mxu0 0.0
    %3023 = vmatprep.subr.mxu0 0.0
    %3024 = vmatpush1.msra.mxu0 0.0
    %3025 = vmatprep.subr.mxu0 0.0
    %3026 = vmatpush1.msra.mxu0 0.0
    %3027 = vmatprep.subr.mxu0 0.0
    %3028 = vmatpush1.msra.mxu0 0.0
    %3029 = vmatprep.subr.mxu0 0.0
    %3030 = vmatpush1.msra.mxu0 0.0
    %3031 = vmatprep.subr.mxu0 0.0
    %3032 = vmatpush1.msra.mxu0 0.0
    %3033 = vmatprep.subr.mxu0 0.0
    %3034 = vmatpush1.msra.mxu0 0.0
    %3035 = vmatprep.subr.mxu0 0.0
    %3036 = vmatpush1.msra.mxu0 %v3007
    %3037 = vmatprep.subr.mxu0 0.0
    %3038 = vmatpush1.msra.mxu0 %v3002
    %3039 = vmatprep.subr.mxu0 0.0
    %3040 = vmatpush1.msra.mxu0 %v3000
    %3041 = vmatprep.subr.mxu0 0.0
    %3042 = vmatpush2.msra.mxu0 0.0
    %3043 = vmatprep.subr.mxu0 0.0
    %3044 = vmatpush2.msra.mxu0 0.0
    %3045 = vmatprep.subr.mxu0 0.0
    %3046 = vmatpush2.msra.mxu0 0.0
    %3047 = vmatprep.subr.mxu0 0.0
    %3048 = vmatpush2.msra.mxu0 0.0
    %3049 = vmatprep.subr.mxu0 0.0
    %3050 = vmatpush2.msra.mxu0 0.0
    %3051 = vmatprep.subr.mxu0 0.0
    %3052 = vmatpush2.msra.mxu0 0.0
    %3053 = vmatprep.subr.mxu0 0.0
    %3054 = vmatpush2.msra.mxu0 0.0
    %3055 = vmatprep.subr.mxu0 0.0
    %3056 = vmatpush2.msra.mxu0 0.0
    %3057 = vmatprep.subr.mxu0 0.0
    %3058 = vmatpush2.msra.mxu0 0.0
    %3059 = vmatprep.subr.mxu0 0.0
    %3060 = vmatpush2.msra.mxu0 0.0
    %3061 = vmatprep.subr.mxu0 0.0
    %3062 = vmatpush2.msra.mxu0 0.0
    %3063 = vmatprep.subr.mxu0 0.0
    %3064 = vmatpush2.msra.mxu0 0.0
    %3065 = vmatprep.subr.mxu0 0.0
    %3066 = vmatpush2.msra.mxu0 0.0
    %3067 = vmatprep.subr.mxu0 0.0
    %3068 = vmatpush2.msra.mxu0 0.0
    %3069 = vmatprep.subr.mxu0 0.0
    %3070 = vmatpush2.msra.mxu0 0.0
    %3071 = vmatprep.subr.mxu0 0.0
    %3072 = vmatpush2.msra.mxu0 0.0
    %3073 = vmatprep.mubr.f32.mxu0 0.0
    %3074 = vmatmul.mubr.f32.gmra.mxu0 %v611
    %v3075 = vpop.f32.mrf.mxu0
    %v3076 = vadd.f32 0.0, %v3075
    %v3077 = vpop.f32.mrf.mxu0
    %3078 = vmatprep.mubr.f32.mxu0 0.0
    %3079 = vmatmul.mubr.f32.gmra.mxu0 %v614
    %v3080 = vpop.f32.mrf.mxu0
    %v3081 = vadd.f32 0.0, %v3080
    %v3082 = vpop.f32.mrf.mxu0
    %3083 = vmatprep.mubr.f32.mxu0 0.0
    %3084 = vmatmul.mubr.f32.gmra.mxu0 %v617
    %v3085 = vpop.f32.mrf.mxu0
    %v3086 = vadd.f32 0.0, %v3085
    %v3087 = vpop.f32.mrf.mxu0
    %3088 = vmatprep.mubr.f32.mxu0 0.0
    %3089 = vmatmul.mubr.f32.gmra.mxu0 %v620
    %v3090 = vpop.f32.mrf.mxu0
    %v3091 = vadd.f32 0.0, %v3090
    %v3092 = vpop.f32.mrf.mxu0
    %3093 = vmatprep.mubr.f32.mxu0 0.0
    %3094 = vmatmul.mubr.f32.gmra.mxu0 %v623
    %v3095 = vpop.f32.mrf.mxu0
    %v3096 = vadd.f32 0.0, %v3095
    %v3097 = vpop.f32.mrf.mxu0
    %3098 = vmatprep.mubr.f32.mxu0 0.0
    %3099 = vmatmul.mubr.f32.gmra.mxu0 %v626
    %v3100 = vpop.f32.mrf.mxu0
    %v3101 = vadd.f32 0.0, %v3100
    %v3102 = vpop.f32.mrf.mxu0
    %3103 = vmatprep.mubr.f32.mxu0 0.0
    %3104 = vmatmul.mubr.f32.gmra.mxu0 %v629
    %v3105 = vpop.f32.mrf.mxu0
    %v3106 = vadd.f32 0.0, %v3105
    %v3107 = vpop.f32.mrf.mxu0
    %3108 = vmatprep.mubr.f32.mxu0 0.0
    %3109 = vmatmul.mubr.f32.gmra.mxu0 %v632
    %v3110 = vpop.f32.mrf.mxu0
    %v3111 = vadd.f32 0.0, %v3110
    %v3112 = vpop.f32.mrf.mxu0
    %3113 = vmatprep.mubr.f32.mxu0 0.0
    %3114 = vmatmul.mubr.f32.gmra.mxu0 %v635
    %v3115 = vpop.f32.mrf.mxu0
    %v3116 = vadd.f32 0.0, %v3115
    %v3117 = vpop.f32.mrf.mxu0
    %3118 = vmatprep.mubr.f32.mxu0 0.0
    %3119 = vmatmul.mubr.f32.gmra.mxu0 %v638
    %v3120 = vpop.f32.mrf.mxu0
    %v3121 = vadd.f32 0.0, %v3120
    %v3122 = vpop.f32.mrf.mxu0
    %3123 = vdwg.mxu0
    %v3124 = vmul.f32 %v3076, %v270
    %v3125 = vmul.f32 %v3081, %v271
    %v3126 = vmul.f32 %v3086, %v272
    %v3127 = vmul.f32 %v3091, %v273
    %v3128 = vmul.f32 %v3096, %v274
    %v3129 = vmul.f32 %v3101, %v275
    %v3130 = vmul.f32 %v3106, %v276
    %v3131 = vmul.f32 %v3111, %v277
    %v3132 = vmul.f32 %v3116, %v278
    %v3133 = vmul.f32 %v3121, %v279
    %v3134 = vmul.f32 %v2848, 0.35355338
    %v3135 = vmul.f32 %v2851, 0.35355338
    %v3136 = vmul.f32 %v2856, 0.35355338
    %v3138 = vsel %vm543, %v3134, 0
    %v3141 = vsel %vm543, %v3135, 0
    %v3144 = vsel %vm543, %v3136, 0
    %v3147 = vsel %vm543, %v2989, 0
    %v3150 = vsel %vm543, %v2990, 0
    %v3153 = vsel %vm543, %v2991, 0
    %v3156 = vsel %vm543, %v2992, 0
    %v3159 = vsel %vm543, %v2993, 0
    %v3162 = vsel %vm543, %v2994, 0
    %v3165 = vsel %vm543, %v2995, 0
    %v3168 = vsel %vm543, %v2996, 0
    %v3171 = vsel %vm543, %v2997, 0
    %v3174 = vsel %vm543, %v2998, 0
    %3176 = vmatprep.subr.mxu0 0.0
    %3177 = vmatpush1.xpose.msra.mxu0 0.0
    %3178 = vmatprep.subr.mxu0 0.0
    %3179 = vmatpush1.xpose.msra.mxu0 0.0
    %3180 = vmatprep.subr.mxu0 0.0
    %3181 = vmatpush1.xpose.msra.mxu0 0.0
    %3182 = vmatprep.subr.mxu0 0.0
    %3183 = vmatpush1.xpose.msra.mxu0 0.0
    %3184 = vmatprep.subr.mxu0 0.0
    %3185 = vmatpush1.xpose.msra.mxu0 0.0
    %3186 = vmatprep.subr.mxu0 0.0
    %3187 = vmatpush1.xpose.msra.mxu0 0.0
    %3188 = vmatprep.subr.mxu0 0.0
    %3189 = vmatpush1.xpose.msra.mxu0 %v3174
    %3190 = vmatprep.subr.mxu0 0.0
    %3191 = vmatpush1.xpose.msra.mxu0 %v3171
    %3192 = vmatprep.subr.mxu0 0.0
    %3193 = vmatpush1.xpose.msra.mxu0 %v3168
    %3194 = vmatprep.subr.mxu0 0.0
    %3195 = vmatpush1.xpose.msra.mxu0 %v3165
    %3196 = vmatprep.subr.mxu0 0.0
    %3197 = vmatpush1.xpose.msra.mxu0 %v3162
    %3198 = vmatprep.subr.mxu0 0.0
    %3199 = vmatpush1.xpose.msra.mxu0 %v3159
    %3200 = vmatprep.subr.mxu0 0.0
    %3201 = vmatpush1.xpose.msra.mxu0 %v3156
    %3202 = vmatprep.subr.mxu0 0.0
    %3203 = vmatpush1.xpose.msra.mxu0 %v3153
    %3204 = vmatprep.subr.mxu0 0.0
    %3205 = vmatpush1.xpose.msra.mxu0 %v3150
    %3206 = vmatprep.subr.mxu0 0.0
    %3207 = vmatpush1.xpose.msra.mxu0 %v3147
    %3208 = vmatprep.subr.mxu0 0.0
    %3209 = vmatpush2.xpose.msra.mxu0 0.0
    %3210 = vmatprep.subr.mxu0 0.0
    %3211 = vmatpush2.xpose.msra.mxu0 0.0
    %3212 = vmatprep.subr.mxu0 0.0
    %3213 = vmatpush2.xpose.msra.mxu0 0.0
    %3214 = vmatprep.subr.mxu0 0.0
    %3215 = vmatpush2.xpose.msra.mxu0 0.0
    %3216 = vmatprep.subr.mxu0 0.0
    %3217 = vmatpush2.xpose.msra.mxu0 0.0
    %3218 = vmatprep.subr.mxu0 0.0
    %3219 = vmatpush2.xpose.msra.mxu0 0.0
    %3220 = vmatprep.subr.mxu0 0.0
    %3221 = vmatpush2.xpose.msra.mxu0 0.0
    %3222 = vmatprep.subr.mxu0 0.0
    %3223 = vmatpush2.xpose.msra.mxu0 0.0
    %3224 = vmatprep.subr.mxu0 0.0
    %3225 = vmatpush2.xpose.msra.mxu0 0.0
    %3226 = vmatprep.subr.mxu0 0.0
    %3227 = vmatpush2.xpose.msra.mxu0 0.0
    %3228 = vmatprep.subr.mxu0 0.0
    %3229 = vmatpush2.xpose.msra.mxu0 0.0
    %3230 = vmatprep.subr.mxu0 0.0
    %3231 = vmatpush2.xpose.msra.mxu0 0.0
    %3232 = vmatprep.subr.mxu0 0.0
    %3233 = vmatpush2.xpose.msra.mxu0 0.0
    %3234 = vmatprep.subr.mxu0 0.0
    %3235 = vmatpush2.xpose.msra.mxu0 0.0
    %3236 = vmatprep.subr.mxu0 0.0
    %3237 = vmatpush2.xpose.msra.mxu0 0.0
    %3238 = vmatprep.subr.mxu0 0.0
    %3239 = vmatpush2.xpose.msra.mxu0 0.0
    %3240 = vmatprep.mubr.f32.mxu0 0.0
    %3241 = vmatmul.mubr.f32.gmra.mxu0 %v3138
    %v3242 = vpop.f32.mrf.mxu0
    %v3243 = vadd.f32 %v405, %v3242
    %v3244 = vpop.f32.mrf.mxu0
    %3245 = vmatprep.mubr.f32.mxu0 0.0
    %3246 = vmatmul.mubr.f32.gmra.mxu0 %v3141
    %v3247 = vpop.f32.mrf.mxu0
    %v3248 = vadd.f32 %v406, %v3247
    %v3249 = vpop.f32.mrf.mxu0
    %3250 = vmatprep.mubr.f32.mxu0 0.0
    %3251 = vmatmul.mubr.f32.gmra.mxu0 %v3144
    %v3252 = vpop.f32.mrf.mxu0
    %v3253 = vadd.f32 %v407, %v3252
    %v3254 = vpop.f32.mrf.mxu0
    %3255 = vdwg.mxu0
    %v3256 = vsel %vm1025, %v3243, -inf
    %3257 = vmax.xlane.f32.xlu0 %v3256
    %v3258 = vpop.xlane.xlu0 %3257
    %v3259 = vsel %vm1025, %v3248, -inf
    %3260 = vmax.xlane.f32.xlu0 %v3259
    %v3261 = vpop.xlane.xlu0 %3260
    %v3262 = vsel %vm1032, %v3253, -inf
    %3263 = vmax.xlane.f32.xlu0 %v3262
    %v3264 = vpop.xlane.xlu0 %3263
    %v3265 = vsub.f32 %v3243, %v3258
    %v3266 = vsub.f32 %v3248, %v3261
    %v3267 = vsub.f32 %v3253, %v3264
    %v3268 = vmul.f32 %v3265, 1.442695
    %v3269 = vpow.pop %v3268
    %v3270 = vmul.f32 %v3266, 1.442695
    %v3271 = vpow.pop %v3270
    %v3272 = vmul.f32 %v3267, 1.442695
    %v3273 = vpow.pop %v3272
    %v3275 = vsel %vm1025, %v3269, 0
    %v3278 = vsel %vm1025, %v3271, 0
    %v3281 = vsel %vm1025, %v3273, 0
    %3283 = vmatprep.subr.mxu0 0.0
    %3284 = vmatpush1.msra.mxu0 0.0
    %3285 = vmatprep.subr.mxu0 0.0
    %3286 = vmatpush1.msra.mxu0 0.0
    %3287 = vmatprep.subr.mxu0 0.0
    %3288 = vmatpush1.msra.mxu0 0.0
    %3289 = vmatprep.subr.mxu0 0.0
    %3290 = vmatpush1.msra.mxu0 0.0
    %3291 = vmatprep.subr.mxu0 0.0
    %3292 = vmatpush1.msra.mxu0 0.0
    %3293 = vmatprep.subr.mxu0 0.0
    %3294 = vmatpush1.msra.mxu0 0.0
    %3295 = vmatprep.subr.mxu0 0.0
    %3296 = vmatpush1.msra.mxu0 %v279
    %3297 = vmatprep.subr.mxu0 0.0
    %3298 = vmatpush1.msra.mxu0 %v278
    %3299 = vmatprep.subr.mxu0 0.0
    %3300 = vmatpush1.msra.mxu0 %v277
    %3301 = vmatprep.subr.mxu0 0.0
    %3302 = vmatpush1.msra.mxu0 %v276
    %3303 = vmatprep.subr.mxu0 0.0
    %3304 = vmatpush1.msra.mxu0 %v275
    %3305 = vmatprep.subr.mxu0 0.0
    %3306 = vmatpush1.msra.mxu0 %v274
    %3307 = vmatprep.subr.mxu0 0.0
    %3308 = vmatpush1.msra.mxu0 %v273
    %3309 = vmatprep.subr.mxu0 0.0
    %3310 = vmatpush1.msra.mxu0 %v272
    %3311 = vmatprep.subr.mxu0 0.0
    %3312 = vmatpush1.msra.mxu0 %v271
    %3313 = vmatprep.subr.mxu0 0.0
    %3314 = vmatpush1.msra.mxu0 %v270
    %3315 = vmatprep.subr.mxu0 0.0
    %3316 = vmatpush2.msra.mxu0 0.0
    %3317 = vmatprep.subr.mxu0 0.0
    %3318 = vmatpush2.msra.mxu0 0.0
    %3319 = vmatprep.subr.mxu0 0.0
    %3320 = vmatpush2.msra.mxu0 0.0
    %3321 = vmatprep.subr.mxu0 0.0
    %3322 = vmatpush2.msra.mxu0 0.0
    %3323 = vmatprep.subr.mxu0 0.0
    %3324 = vmatpush2.msra.mxu0 0.0
    %3325 = vmatprep.subr.mxu0 0.0
    %3326 = vmatpush2.msra.mxu0 0.0
    %3327 = vmatprep.subr.mxu0 0.0
    %3328 = vmatpush2.msra.mxu0 0.0
    %3329 = vmatprep.subr.mxu0 0.0
    %3330 = vmatpush2.msra.mxu0 0.0
    %3331 = vmatprep.subr.mxu0 0.0
    %3332 = vmatpush2.msra.mxu0 0.0
    %3333 = vmatprep.subr.mxu0 0.0
    %3334 = vmatpush2.msra.mxu0 0.0
    %3335 = vmatprep.subr.mxu0 0.0
    %3336 = vmatpush2.msra.mxu0 0.0
    %3337 = vmatprep.subr.mxu0 0.0
    %3338 = vmatpush2.msra.mxu0 0.0
    %3339 = vmatprep.subr.mxu0 0.0
    %3340 = vmatpush2.msra.mxu0 0.0
    %3341 = vmatprep.subr.mxu0 0.0
    %3342 = vmatpush2.msra.mxu0 0.0
    %3343 = vmatprep.subr.mxu0 0.0
    %3344 = vmatpush2.msra.mxu0 0.0
    %3345 = vmatprep.subr.mxu0 0.0
    %3346 = vmatpush2.msra.mxu0 0.0
    %3347 = vmatprep.mubr.f32.mxu0 0.0
    %3348 = vmatmul.mubr.f32.gmra.mxu0 %v3275
    %v3349 = vpop.f32.mrf.mxu0
    %v3350 = vadd.f32 0.0, %v3349
    %v3351 = vpop.f32.mrf.mxu0
    %3352 = vmatprep.mubr.f32.mxu0 0.0
    %3353 = vmatmul.mubr.f32.gmra.mxu0 %v3278
    %v3354 = vpop.f32.mrf.mxu0
    %v3355 = vadd.f32 0.0, %v3354
    %v3356 = vpop.f32.mrf.mxu0
    %3357 = vmatprep.mubr.f32.mxu0 0.0
    %3358 = vmatmul.mubr.f32.gmra.mxu0 %v3281
    %v3359 = vpop.f32.mrf.mxu0
    %v3360 = vadd.f32 0.0, %v3359
    %v3361 = vpop.f32.mrf.mxu0
    %3362 = vdwg.mxu0
    %3363 = vmatprep.subr.mxu0 0.0
    %3364 = vmatpush1.msra.mxu0 0.0
    %3365 = vmatprep.subr.mxu0 0.0
    %3366 = vmatpush1.msra.mxu0 0.0
    %3367 = vmatprep.subr.mxu0 0.0
    %3368 = vmatpush1.msra.mxu0 0.0
    %3369 = vmatprep.subr.mxu0 0.0
    %3370 = vmatpush1.msra.mxu0 0.0
    %3371 = vmatprep.subr.mxu0 0.0
    %3372 = vmatpush1.msra.mxu0 0.0
    %3373 = vmatprep.subr.mxu0 0.0
    %3374 = vmatpush1.msra.mxu0 0.0
    %3375 = vmatprep.subr.mxu0 0.0
    %3376 = vmatpush1.msra.mxu0 %v3133
    %3377 = vmatprep.subr.mxu0 0.0
    %3378 = vmatpush1.msra.mxu0 %v3132
    %3379 = vmatprep.subr.mxu0 0.0
    %3380 = vmatpush1.msra.mxu0 %v3131
    %3381 = vmatprep.subr.mxu0 0.0
    %3382 = vmatpush1.msra.mxu0 %v3130
    %3383 = vmatprep.subr.mxu0 0.0
    %3384 = vmatpush1.msra.mxu0 %v3129
    %3385 = vmatprep.subr.mxu0 0.0
    %3386 = vmatpush1.msra.mxu0 %v3128
    %3387 = vmatprep.subr.mxu0 0.0
    %3388 = vmatpush1.msra.mxu0 %v3127
    %3389 = vmatprep.subr.mxu0 0.0
    %3390 = vmatpush1.msra.mxu0 %v3126
    %3391 = vmatprep.subr.mxu0 0.0
    %3392 = vmatpush1.msra.mxu0 %v3125
    %3393 = vmatprep.subr.mxu0 0.0
    %3394 = vmatpush1.msra.mxu0 %v3124
    %3395 = vmatprep.subr.mxu0 0.0
    %3396 = vmatpush2.msra.mxu0 0.0
    %3397 = vmatprep.subr.mxu0 0.0
    %3398 = vmatpush2.msra.mxu0 0.0
    %3399 = vmatprep.subr.mxu0 0.0
    %3400 = vmatpush2.msra.mxu0 0.0
    %3401 = vmatprep.subr.mxu0 0.0
    %3402 = vmatpush2.msra.mxu0 0.0
    %3403 = vmatprep.subr.mxu0 0.0
    %3404 = vmatpush2.msra.mxu0 0.0
    %3405 = vmatprep.subr.mxu0 0.0
    %3406 = vmatpush2.msra.mxu0 0.0
    %3407 = vmatprep.subr.mxu0 0.0
    %3408 = vmatpush2.msra.mxu0 0.0
    %3409 = vmatprep.subr.mxu0 0.0
    %3410 = vmatpush2.msra.mxu0 0.0
    %3411 = vmatprep.subr.mxu0 0.0
    %3412 = vmatpush2.msra.mxu0 0.0
    %3413 = vmatprep.subr.mxu0 0.0
    %3414 = vmatpush2.msra.mxu0 0.0
    %3415 = vmatprep.subr.mxu0 0.0
    %3416 = vmatpush2.msra.mxu0 0.0
    %3417 = vmatprep.subr.mxu0 0.0
    %3418 = vmatpush2.msra.mxu0 0.0
    %3419 = vmatprep.subr.mxu0 0.0
    %3420 = vmatpush2.msra.mxu0 0.0
    %3421 = vmatprep.subr.mxu0 0.0
    %3422 = vmatpush2.msra.mxu0 0.0
    %3423 = vmatprep.subr.mxu0 0.0
    %3424 = vmatpush2.msra.mxu0 0.0
    %3425 = vmatprep.subr.mxu0 0.0
    %3426 = vmatpush2.msra.mxu0 0.0
    %3427 = vmatprep.mubr.f32.mxu0 0.0
    %3428 = vmatmul.mubr.f32.gmra.mxu0 %v3275
    %v3429 = vpop.f32.mrf.mxu0
    %v3430 = vadd.f32 0.0, %v3429
    %v3431 = vpop.f32.mrf.mxu0
    %3432 = vmatprep.mubr.f32.mxu0 0.0
    %3433 = vmatmul.mubr.f32.gmra.mxu0 %v3278
    %v3434 = vpop.f32.mrf.mxu0
    %v3435 = vadd.f32 0.0, %v3434
    %v3436 = vpop.f32.mrf.mxu0
    %3437 = vmatprep.mubr.f32.mxu0 0.0
    %3438 = vmatmul.mubr.f32.gmra.mxu0 %v3281
    %v3439 = vpop.f32.mrf.mxu0
    %v3440 = vadd.f32 0.0, %v3439
    %v3441 = vpop.f32.mrf.mxu0
    %3442 = vdwg.mxu0
    %v3443 = vrcp.pop %v3350
    %v3444 = vrcp.pop %v3355
    %v3445 = vrcp.pop %v3360
    %v3446 = vmul.f32 %v3430, %v3443
    %v3447 = vmul.f32 %v3435, %v3444
    %v3448 = vmul.f32 %v3440, %v3445
    %v3449 = vpack.c.bf16 %v3447, %v3446
    %v3450 = vpack.c.bf16 %v3448, %v3448
    %s3451 = scalar_lea.vmem [#allocation7], 16
    %v3452 = vld [vmem:[%s3451] sm:$0xf]
    %v3453 = vld [vmem:[%s3451 + $0x4] sm:$0xf]
    %v3454 = vld [vmem:[%s3451 + $0x8] sm:$0xf]
    %v3455 = vld [vmem:[%s3451 + $0xc] sm:$0xf]
    %s3456 = scalar_lea.vmem %s6, 1
    %v3457 = vld [vmem:[%s3456] sm:$0x1]
    %v3459 = vlaneseq
    %v3460 = vshrl.u32 %v3459, 7
    %v3461 = vsub.s32 0, %v3460
    %v3462 = vrot.slane %v3457, %v3461
    %v3468 = vunpack.c.l.b16 %v3452
    %v3469 = vunpack.c.l.b16 %v3453
    %v3470 = vunpack.c.l.b16 %v3454
    %v3471 = vunpack.c.l.b16 %v3455
    %v3472 = vpack.c.b16 %v3469, %v3468
    %v3473 = vpack.c.b16 %v3471, %v3470
    %v3477 = vsel %vm543, %v3449, 0
    %v3480 = vsel %vm543, %v3450, 0
    %3482 = vmatprep.subr.bf16.mxu0 0
    %3483 = vmatpush1.bf16.msra.mxu0 0
    %3484 = vmatprep.subr.bf16.mxu0 0
    %3485 = vmatpush1.bf16.msra.mxu0 0
    %3486 = vmatprep.subr.bf16.mxu0 0
    %3487 = vmatpush1.bf16.msra.mxu0 0
    %3488 = vmatprep.subr.bf16.mxu0 0
    %3489 = vmatpush1.bf16.msra.mxu0 0
    %3490 = vmatprep.subr.bf16.mxu0 0
    %3491 = vmatpush1.bf16.msra.mxu0 0
    %3492 = vmatprep.subr.bf16.mxu0 0
    %3493 = vmatpush1.bf16.msra.mxu0 0
    %3494 = vmatprep.subr.bf16.mxu0 0
    %3495 = vmatpush1.bf16.msra.mxu0 %v3473
    %3496 = vmatprep.subr.bf16.mxu0 0
    %3497 = vmatpush1.bf16.msra.mxu0 %v3472
    %3498 = vmatprep.subr.bf16.mxu0 0
    %3499 = vmatpush2.bf16.msra.mxu0 0
    %3500 = vmatprep.subr.bf16.mxu0 0
    %3501 = vmatpush2.bf16.msra.mxu0 0
    %3502 = vmatprep.subr.bf16.mxu0 0
    %3503 = vmatpush2.bf16.msra.mxu0 0
    %3504 = vmatprep.subr.bf16.mxu0 0
    %3505 = vmatpush2.bf16.msra.mxu0 0
    %3506 = vmatprep.subr.bf16.mxu0 0
    %3507 = vmatpush2.bf16.msra.mxu0 0
    %3508 = vmatprep.subr.bf16.mxu0 0
    %3509 = vmatpush2.bf16.msra.mxu0 0
    %3510 = vmatprep.subr.bf16.mxu0 0
    %3511 = vmatpush2.bf16.msra.mxu0 0
    %3512 = vmatprep.subr.bf16.mxu0 0
    %3513 = vmatpush2.bf16.msra.mxu0 0
    %3514 = vmatprep.mubr.bf16.mxu0 0
    %3515 = vmatmul.mubr.bf16.gmra.mxu0 %v3477
    %v3516 = vpop.f32.mrf.mxu0
    %v3517 = vadd.f32 %v3462, %v3516
    %v3518 = vpop.f32.mrf.mxu0
    %v3519 = vpop.f32.mrf.mxu0
    %v3520 = vadd.f32 %v3462, %v3519
    %v3521 = vpop.f32.mrf.mxu0
    %3522 = vmatprep.mubr.bf16.mxu0 0
    %3523 = vmatmul.mubr.bf16.gmra.mxu0 %v3480
    %v3524 = vpop.f32.mrf.mxu0
    %v3525 = vadd.f32 %v3462, %v3524
    %v3526 = vpop.f32.mrf.mxu0
    %v3527 = vpop.f32.mrf.mxu0
    %v3528 = vpop.f32.mrf.mxu0
    %3529 = vdwg.mxu0
    %v3530 = vadd.f32 %v2777, %v3517
    %v3531 = vadd.f32 %v2778, %v3520
    %v3532 = vadd.f32 %v2779, %v3525
    %s3533 = scalar_lea.vmem %s11, 1
    %v3534 = vld [vmem:[%s3533] sm:$0x1]
    %s3535 = scalar_lea.vmem %s12, 1
    %v3536 = vld [vmem:[%s3535] sm:$0x1]
    %v3537 = vsel %vm543, %v3530, 0.0
    %3538 = vadd.xlane.f32.xlu0 %v3537
    %v3539 = vpop.xlane.xlu0 %3538
    %v3540 = vsel %vm543, %v3531, 0.0
    %3541 = vadd.xlane.f32.xlu0 %v3540
    %v3542 = vpop.xlane.xlu0 %3541
    %v3543 = vsel %vm1310, %v3532, 0.0
    %3544 = vadd.xlane.f32.xlu0 %v3543
    %v3545 = vpop.xlane.xlu0 %3544
    %v3546 = vmul.f32 %v3539, %v1314
    %v3547 = vmul.f32 %v3542, %v1314
    %v3548 = vmul.f32 %v3545, %v1314
    %v3549 = vsub.f32 %v3530, %v3546
    %v3550 = vsub.f32 %v3531, %v3547
    %v3551 = vsub.f32 %v3532, %v3548
    %v3552 = vmul.f32 %v3549, %v3549
    %v3553 = vmul.f32 %v3550, %v3550
    %v3554 = vmul.f32 %v3551, %v3551
    %v3555 = vsel %vm543, %v3552, 0.0
    %3556 = vadd.xlane.f32.xlu0 %v3555
    %v3557 = vpop.xlane.xlu0 %3556
    %v3558 = vsel %vm543, %v3553, 0.0
    %3559 = vadd.xlane.f32.xlu0 %v3558
    %v3560 = vpop.xlane.xlu0 %3559
    %v3561 = vsel %vm1310, %v3554, 0.0
    %3562 = vadd.xlane.f32.xlu0 %v3561
    %v3563 = vpop.xlane.xlu0 %3562
    %v3564 = vmul.f32 %v3557, %v1314
    %v3565 = vmul.f32 %v3560, %v1314
    %v3566 = vmul.f32 %v3563, %v1314
    %v3567 = vadd.f32 %v3564, 1e-05
    %v3568 = vadd.f32 %v3565, 1e-05
    %v3569 = vadd.f32 %v3566, 1e-05
    %v3570 = vrsqrt.pop %v3567
    %v3571 = vrsqrt.pop %v3568
    %v3572 = vrsqrt.pop %v3569
    %v3573 = vmul.f32 %v3549, %v3570
    %v3574 = vmul.f32 %v3550, %v3571
    %v3575 = vmul.f32 %v3551, %v3572
    %v3577 = vlaneseq
    %v3578 = vshrl.u32 %v3577, 7
    %v3579 = vsub.s32 0, %v3578
    %v3580 = vrot.slane %v3534, %v3579
    %v3582 = vmul.f32 %v3573, %v3580
    %v3583 = vmul.f32 %v3574, %v3580
    %v3584 = vmul.f32 %v3575, %v3580
    %v3586 = vlaneseq
    %v3587 = vshrl.u32 %v3586, 7
    %v3588 = vsub.s32 0, %v3587
    %v3589 = vrot.slane %v3536, %v3588
    %v3591 = vadd.f32 %v3582, %v3589
    %v3592 = vadd.f32 %v3583, %v3589
    %v3593 = vadd.f32 %v3584, %v3589
    %v3594 = vpack.c.bf16 %v3592, %v3591
    %v3595 = vpack.c.bf16 %v3593, %v3593
    %s3596 = scalar_lea.vmem [#allocation8], 256
    %v3597 = vld [vmem:[%s3596] sm:$0xff]
    %v3598 = vld [vmem:[%s3596 + $0x8] sm:$0xff]
    %v3599 = vld [vmem:[%s3596 + $0x10] sm:$0xff]
    %v3600 = vld [vmem:[%s3596 + $0x18] sm:$0xff]
    %v3601 = vld [vmem:[%s3596 + $0x20] sm:$0xff]
    %v3602 = vld [vmem:[%s3596 + $0x28] sm:$0xff]
    %v3603 = vld [vmem:[%s3596 + $0x30] sm:$0xff]
    %v3604 = vld [vmem:[%s3596 + $0x38] sm:$0xff]
    %v3605 = vld [vmem:[%s3596 + $0x40] sm:$0xff]
    %v3606 = vld [vmem:[%s3596 + $0x48] sm:$0xff]
    %v3607 = vld [vmem:[%s3596 + $0x50] sm:$0xff]
    %v3608 = vld [vmem:[%s3596 + $0x58] sm:$0xff]
    %v3609 = vld [vmem:[%s3596 + $0x60] sm:$0xff]
    %v3610 = vld [vmem:[%s3596 + $0x68] sm:$0xff]
    %v3611 = vld [vmem:[%s3596 + $0x70] sm:$0xff]
    %v3612 = vld [vmem:[%s3596 + $0x78] sm:$0xff]
    %v3613 = vld [vmem:[%s3596 + $0x80] sm:$0xff]
    %v3614 = vld [vmem:[%s3596 + $0x88] sm:$0xff]
    %v3615 = vld [vmem:[%s3596 + $0x90] sm:$0xff]
    %v3616 = vld [vmem:[%s3596 + $0x98] sm:$0xff]
    %v3617 = vld [vmem:[%s3596 + $0xa0] sm:$0xff]
    %v3618 = vld [vmem:[%s3596 + $0xa8] sm:$0xff]
    %v3619 = vld [vmem:[%s3596 + $0xb0] sm:$0xff]
    %v3620 = vld [vmem:[%s3596 + $0xb8] sm:$0xff]
    %v3621 = vld [vmem:[%s3596 + $0xc0] sm:$0xff]
    %v3622 = vld [vmem:[%s3596 + $0xc8] sm:$0xff]
    %v3623 = vld [vmem:[%s3596 + $0xd0] sm:$0xff]
    %v3624 = vld [vmem:[%s3596 + $0xd8] sm:$0xff]
    %v3625 = vld [vmem:[%s3596 + $0xe0] sm:$0xff]
    %v3626 = vld [vmem:[%s3596 + $0xe8] sm:$0xff]
    %v3627 = vld [vmem:[%s3596 + $0xf0] sm:$0xff]
    %v3628 = vld [vmem:[%s3596 + $0xf8] sm:$0xff]
    %s3629 = scalar_lea.vmem [#allocation10], 16
    %v3630 = vld [vmem:[%s3629] sm:$0xff]
    %v3631 = vld [vmem:[%s3629 + $0x8] sm:$0xff]
    %v3634 = vlaneseq
    %v3635 = vshrl.u32 %v3634, 7
    %v3636 = vsub.s32 0, %v3635
    %v3637 = vrot.slane %v3630, %v3636
    %v3638 = vlaneseq
    %v3639 = vshrl.u32 %v3638, 7
    %v3640 = vsub.s32 1, %v3639
    %v3641 = vrot.slane %v3630, %v3640
    %v3642 = vlaneseq
    %v3643 = vshrl.u32 %v3642, 7
    %v3644 = vsub.s32 2, %v3643
    %v3645 = vrot.slane %v3630, %v3644
    %v3646 = vlaneseq
    %v3647 = vshrl.u32 %v3646, 7
    %v3648 = vsub.s32 3, %v3647
    %v3649 = vrot.slane %v3630, %v3648
    %v3650 = vlaneseq
    %v3651 = vshrl.u32 %v3650, 7
    %v3652 = vsub.s32 4, %v3651
    %v3653 = vrot.slane %v3630, %v3652
    %v3654 = vlaneseq
    %v3655 = vshrl.u32 %v3654, 7
    %v3656 = vsub.s32 5, %v3655
    %v3657 = vrot.slane %v3630, %v3656
    %v3658 = vlaneseq
    %v3659 = vshrl.u32 %v3658, 7
    %v3660 = vsub.s32 6, %v3659
    %v3661 = vrot.slane %v3630, %v3660
    %v3662 = vlaneseq
    %v3663 = vshrl.u32 %v3662, 7
    %v3664 = vsub.s32 7, %v3663
    %v3665 = vrot.slane %v3630, %v3664
    %v3666 = vlaneseq
    %v3667 = vshrl.u32 %v3666, 7
    %v3668 = vsub.s32 0, %v3667
    %v3669 = vrot.slane %v3631, %v3668
    %v3670 = vlaneseq
    %v3671 = vshrl.u32 %v3670, 7
    %v3672 = vsub.s32 1, %v3671
    %v3673 = vrot.slane %v3631, %v3672
    %v3674 = vlaneseq
    %v3675 = vshrl.u32 %v3674, 7
    %v3676 = vsub.s32 2, %v3675
    %v3677 = vrot.slane %v3631, %v3676
    %v3678 = vlaneseq
    %v3679 = vshrl.u32 %v3678, 7
    %v3680 = vsub.s32 3, %v3679
    %v3681 = vrot.slane %v3631, %v3680
    %v3682 = vlaneseq
    %v3683 = vshrl.u32 %v3682, 7
    %v3684 = vsub.s32 4, %v3683
    %v3685 = vrot.slane %v3631, %v3684
    %v3686 = vlaneseq
    %v3687 = vshrl.u32 %v3686, 7
    %v3688 = vsub.s32 5, %v3687
    %v3689 = vrot.slane %v3631, %v3688
    %v3690 = vlaneseq
    %v3691 = vshrl.u32 %v3690, 7
    %v3692 = vsub.s32 6, %v3691
    %v3693 = vrot.slane %v3631, %v3692
    %v3694 = vlaneseq
    %v3695 = vshrl.u32 %v3694, 7
    %v3696 = vsub.s32 7, %v3695
    %v3697 = vrot.slane %v3631, %v3696
    %v3746 = vunpack.c.l.b16 %v3597
    %v3747 = vunpack.c.h.b16 %v3597
    %v3748 = vunpack.c.l.b16 %v3598
    %v3749 = vunpack.c.h.b16 %v3598
    %v3750 = vunpack.c.l.b16 %v3599
    %v3751 = vunpack.c.h.b16 %v3599
    %v3752 = vunpack.c.l.b16 %v3600
    %v3753 = vunpack.c.h.b16 %v3600
    %v3754 = vunpack.c.l.b16 %v3601
    %v3755 = vunpack.c.h.b16 %v3601
    %v3756 = vunpack.c.l.b16 %v3602
    %v3757 = vunpack.c.h.b16 %v3602
    %v3758 = vunpack.c.l.b16 %v3603
    %v3759 = vunpack.c.h.b16 %v3603
    %v3760 = vunpack.c.l.b16 %v3604
    %v3761 = vunpack.c.h.b16 %v3604
    %v3762 = vunpack.c.l.b16 %v3605
    %v3763 = vunpack.c.h.b16 %v3605
    %v3764 = vunpack.c.l.b16 %v3606
    %v3765 = vunpack.c.h.b16 %v3606
    %v3766 = vunpack.c.l.b16 %v3607
    %v3767 = vunpack.c.h.b16 %v3607
    %v3768 = vunpack.c.l.b16 %v3608
    %v3769 = vunpack.c.h.b16 %v3608
    %v3770 = vunpack.c.l.b16 %v3609
    %v3771 = vunpack.c.h.b16 %v3609
    %v3772 = vunpack.c.l.b16 %v3610
    %v3773 = vunpack.c.h.b16 %v3610
    %v3774 = vunpack.c.l.b16 %v3611
    %v3775 = vunpack.c.h.b16 %v3611
    %v3776 = vunpack.c.l.b16 %v3612
    %v3777 = vunpack.c.h.b16 %v3612
    %v3778 = vunpack.c.l.b16 %v3613
    %v3779 = vunpack.c.h.b16 %v3613
    %v3780 = vunpack.c.l.b16 %v3614
    %v3781 = vunpack.c.h.b16 %v3614
    %v3782 = vunpack.c.l.b16 %v3615
    %v3783 = vunpack.c.h.b16 %v3615
    %v3784 = vunpack.c.l.b16 %v3616
    %v3785 = vunpack.c.h.b16 %v3616
    %v3786 = vunpack.c.l.b16 %v3617
    %v3787 = vunpack.c.h.b16 %v3617
    %v3788 = vunpack.c.l.b16 %v3618
    %v3789 = vunpack.c.h.b16 %v3618
    %v3790 = vunpack.c.l.b16 %v3619
    %v3791 = vunpack.c.h.b16 %v3619
    %v3792 = vunpack.c.l.b16 %v3620
    %v3793 = vunpack.c.h.b16 %v3620
    %v3794 = vunpack.c.l.b16 %v3621
    %v3795 = vunpack.c.h.b16 %v3621
    %v3796 = vunpack.c.l.b16 %v3622
    %v3797 = vunpack.c.h.b16 %v3622
    %v3798 = vunpack.c.l.b16 %v3623
    %v3799 = vunpack.c.h.b16 %v3623
    %v3800 = vunpack.c.l.b16 %v3624
    %v3801 = vunpack.c.h.b16 %v3624
    %v3802 = vunpack.c.l.b16 %v3625
    %v3803 = vunpack.c.h.b16 %v3625
    %v3804 = vunpack.c.l.b16 %v3626
    %v3805 = vunpack.c.h.b16 %v3626
    %v3806 = vunpack.c.l.b16 %v3627
    %v3807 = vunpack.c.h.b16 %v3627
    %v3808 = vunpack.c.l.b16 %v3628
    %v3809 = vunpack.c.h.b16 %v3628
    %v3810 = vpack.c.b16 %v3762, %v3746
    %v3811 = vpack.c.b16 %v3763, %v3747
    %v3812 = vpack.c.b16 %v3764, %v3748
    %v3813 = vpack.c.b16 %v3765, %v3749
    %v3814 = vpack.c.b16 %v3766, %v3750
    %v3815 = vpack.c.b16 %v3767, %v3751
    %v3816 = vpack.c.b16 %v3768, %v3752
    %v3817 = vpack.c.b16 %v3769, %v3753
    %v3818 = vpack.c.b16 %v3770, %v3754
    %v3819 = vpack.c.b16 %v3771, %v3755
    %v3820 = vpack.c.b16 %v3772, %v3756
    %v3821 = vpack.c.b16 %v3773, %v3757
    %v3822 = vpack.c.b16 %v3774, %v3758
    %v3823 = vpack.c.b16 %v3775, %v3759
    %v3824 = vpack.c.b16 %v3776, %v3760
    %v3825 = vpack.c.b16 %v3777, %v3761
    %v3826 = vpack.c.b16 %v3794, %v3778
    %v3827 = vpack.c.b16 %v3795, %v3779
    %v3828 = vpack.c.b16 %v3796, %v3780
    %v3829 = vpack.c.b16 %v3797, %v3781
    %v3830 = vpack.c.b16 %v3798, %v3782
    %v3831 = vpack.c.b16 %v3799, %v3783
    %v3832 = vpack.c.b16 %v3800, %v3784
    %v3833 = vpack.c.b16 %v3801, %v3785
    %v3834 = vpack.c.b16 %v3802, %v3786
    %v3835 = vpack.c.b16 %v3803, %v3787
    %v3836 = vpack.c.b16 %v3804, %v3788
    %v3837 = vpack.c.b16 %v3805, %v3789
    %v3838 = vpack.c.b16 %v3806, %v3790
    %v3839 = vpack.c.b16 %v3807, %v3791
    %v3840 = vpack.c.b16 %v3808, %v3792
    %v3841 = vpack.c.b16 %v3809, %v3793
    %v3875 = vsel %vm543, %v3594, 0
    %v3878 = vsel %vm543, %v3595, 0
    %3880 = vmatprep.subr.bf16.mxu0 0
    %3881 = vmatpush1.bf16.msra.mxu0 0
    %3882 = vmatprep.subr.bf16.mxu0 0
    %3883 = vmatpush1.bf16.msra.mxu0 0
    %3884 = vmatprep.subr.bf16.mxu0 0
    %3885 = vmatpush1.bf16.msra.mxu0 0
    %3886 = vmatprep.subr.bf16.mxu0 0
    %3887 = vmatpush1.bf16.msra.mxu0 0
    %3888 = vmatprep.subr.bf16.mxu0 0
    %3889 = vmatpush1.bf16.msra.mxu0 0
    %3890 = vmatprep.subr.bf16.mxu0 0
    %3891 = vmatpush1.bf16.msra.mxu0 0
    %3892 = vmatprep.subr.bf16.mxu0 %v3827
    %3893 = vmatpush1.bf16.msra.mxu0 %v3826
    %3894 = vmatprep.subr.bf16.mxu0 %v3811
    %3895 = vmatpush1.bf16.msra.mxu0 %v3810
    %3896 = vmatprep.subr.bf16.mxu0 0
    %3897 = vmatpush2.bf16.msra.mxu0 0
    %3898 = vmatprep.subr.bf16.mxu0 0
    %3899 = vmatpush2.bf16.msra.mxu0 0
    %3900 = vmatprep.subr.bf16.mxu0 0
    %3901 = vmatpush2.bf16.msra.mxu0 0
    %3902 = vmatprep.subr.bf16.mxu0 0
    %3903 = vmatpush2.bf16.msra.mxu0 0
    %3904 = vmatprep.subr.bf16.mxu0 0
    %3905 = vmatpush2.bf16.msra.mxu0 0
    %3906 = vmatprep.subr.bf16.mxu0 0
    %3907 = vmatpush2.bf16.msra.mxu0 0
    %3908 = vmatprep.subr.bf16.mxu0 0
    %3909 = vmatpush2.bf16.msra.mxu0 0
    %3910 = vmatprep.subr.bf16.mxu0 0
    %3911 = vmatpush2.bf16.msra.mxu0 0
    %3912 = vmatprep.mubr.bf16.mxu0 0
    %3913 = vmatmul.mubr.bf16.gmra.mxu0 %v3875
    %v3914 = vpop.f32.mrf.mxu0
    %v3915 = vadd.f32 %v3637, %v3914
    %v3916 = vpop.f32.mrf.mxu0
    %v3917 = vadd.f32 %v3641, %v3916
    %v3918 = vpop.f32.mrf.mxu0
    %v3919 = vadd.f32 %v3637, %v3918
    %v3920 = vpop.f32.mrf.mxu0
    %v3921 = vadd.f32 %v3641, %v3920
    %3922 = vmatprep.mubr.bf16.mxu0 0
    %3923 = vmatmul.mubr.bf16.gmra.mxu0 %v3878
    %v3924 = vpop.f32.mrf.mxu0
    %v3925 = vadd.f32 %v3637, %v3924
    %v3926 = vpop.f32.mrf.mxu0
    %v3927 = vadd.f32 %v3641, %v3926
    %v3928 = vpop.f32.mrf.mxu0
    %v3929 = vpop.f32.mrf.mxu0
    %3930 = vdwg.mxu0
    %3931 = vmatprep.subr.bf16.mxu0 0
    %3932 = vmatpush1.bf16.msra.mxu0 0
    %3933 = vmatprep.subr.bf16.mxu0 0
    %3934 = vmatpush1.bf16.msra.mxu0 0
    %3935 = vmatprep.subr.bf16.mxu0 0
    %3936 = vmatpush1.bf16.msra.mxu0 0
    %3937 = vmatprep.subr.bf16.mxu0 0
    %3938 = vmatpush1.bf16.msra.mxu0 0
    %3939 = vmatprep.subr.bf16.mxu0 0
    %3940 = vmatpush1.bf16.msra.mxu0 0
    %3941 = vmatprep.subr.bf16.mxu0 0
    %3942 = vmatpush1.bf16.msra.mxu0 0
    %3943 = vmatprep.subr.bf16.mxu0 %v3829
    %3944 = vmatpush1.bf16.msra.mxu0 %v3828
    %3945 = vmatprep.subr.bf16.mxu0 %v3813
    %3946 = vmatpush1.bf16.msra.mxu0 %v3812
    %3947 = vmatprep.subr.bf16.mxu0 0
    %3948 = vmatpush2.bf16.msra.mxu0 0
    %3949 = vmatprep.subr.bf16.mxu0 0
    %3950 = vmatpush2.bf16.msra.mxu0 0
    %3951 = vmatprep.subr.bf16.mxu0 0
    %3952 = vmatpush2.bf16.msra.mxu0 0
    %3953 = vmatprep.subr.bf16.mxu0 0
    %3954 = vmatpush2.bf16.msra.mxu0 0
    %3955 = vmatprep.subr.bf16.mxu0 0
    %3956 = vmatpush2.bf16.msra.mxu0 0
    %3957 = vmatprep.subr.bf16.mxu0 0
    %3958 = vmatpush2.bf16.msra.mxu0 0
    %3959 = vmatprep.subr.bf16.mxu0 0
    %3960 = vmatpush2.bf16.msra.mxu0 0
    %3961 = vmatprep.subr.bf16.mxu0 0
    %3962 = vmatpush2.bf16.msra.mxu0 0
    %3963 = vmatprep.mubr.bf16.mxu0 0
    %3964 = vmatmul.mubr.bf16.gmra.mxu0 %v3875
    %v3965 = vpop.f32.mrf.mxu0
    %v3966 = vadd.f32 %v3645, %v3965
    %v3967 = vpop.f32.mrf.mxu0
    %v3968 = vadd.f32 %v3649, %v3967
    %v3969 = vpop.f32.mrf.mxu0
    %v3970 = vadd.f32 %v3645, %v3969
    %v3971 = vpop.f32.mrf.mxu0
    %v3972 = vadd.f32 %v3649, %v3971
    %3973 = vmatprep.mubr.bf16.mxu0 0
    %3974 = vmatmul.mubr.bf16.gmra.mxu0 %v3878
    %v3975 = vpop.f32.mrf.mxu0
    %v3976 = vadd.f32 %v3645, %v3975
    %v3977 = vpop.f32.mrf.mxu0
    %v3978 = vadd.f32 %v3649, %v3977
    %v3979 = vpop.f32.mrf.mxu0
    %v3980 = vpop.f32.mrf.mxu0
    %3981 = vdwg.mxu0
    %3982 = vmatprep.subr.bf16.mxu0 0
    %3983 = vmatpush1.bf16.msra.mxu0 0
    %3984 = vmatprep.subr.bf16.mxu0 0
    %3985 = vmatpush1.bf16.msra.mxu0 0
    %3986 = vmatprep.subr.bf16.mxu0 0
    %3987 = vmatpush1.bf16.msra.mxu0 0
    %3988 = vmatprep.subr.bf16.mxu0 0
    %3989 = vmatpush1.bf16.msra.mxu0 0
    %3990 = vmatprep.subr.bf16.mxu0 0
    %3991 = vmatpush1.bf16.msra.mxu0 0
    %3992 = vmatprep.subr.bf16.mxu0 0
    %3993 = vmatpush1.bf16.msra.mxu0 0
    %3994 = vmatprep.subr.bf16.mxu0 %v3831
    %3995 = vmatpush1.bf16.msra.mxu0 %v3830
    %3996 = vmatprep.subr.bf16.mxu0 %v3815
    %3997 = vmatpush1.bf16.msra.mxu0 %v3814
    %3998 = vmatprep.subr.bf16.mxu0 0
    %3999 = vmatpush2.bf16.msra.mxu0 0
    %4000 = vmatprep.subr.bf16.mxu0 0
    %4001 = vmatpush2.bf16.msra.mxu0 0
    %4002 = vmatprep.subr.bf16.mxu0 0
    %4003 = vmatpush2.bf16.msra.mxu0 0
    %4004 = vmatprep.subr.bf16.mxu0 0
    %4005 = vmatpush2.bf16.msra.mxu0 0
    %4006 = vmatprep.subr.bf16.mxu0 0
    %4007 = vmatpush2.bf16.msra.mxu0 0
    %4008 = vmatprep.subr.bf16.mxu0 0
    %4009 = vmatpush2.bf16.msra.mxu0 0
    %4010 = vmatprep.subr.bf16.mxu0 0
    %4011 = vmatpush2.bf16.msra.mxu0 0
    %4012 = vmatprep.subr.bf16.mxu0 0
    %4013 = vmatpush2.bf16.msra.mxu0 0
    %4014 = vmatprep.mubr.bf16.mxu0 0
    %4015 = vmatmul.mubr.bf16.gmra.mxu0 %v3875
    %v4016 = vpop.f32.mrf.mxu0
    %v4017 = vadd.f32 %v3653, %v4016
    %v4018 = vpop.f32.mrf.mxu0
    %v4019 = vadd.f32 %v3657, %v4018
    %v4020 = vpop.f32.mrf.mxu0
    %v4021 = vadd.f32 %v3653, %v4020
    %v4022 = vpop.f32.mrf.mxu0
    %v4023 = vadd.f32 %v3657, %v4022
    %4024 = vmatprep.mubr.bf16.mxu0 0
    %4025 = vmatmul.mubr.bf16.gmra.mxu0 %v3878
    %v4026 = vpop.f32.mrf.mxu0
    %v4027 = vadd.f32 %v3653, %v4026
    %v4028 = vpop.f32.mrf.mxu0
    %v4029 = vadd.f32 %v3657, %v4028
    %v4030 = vpop.f32.mrf.mxu0
    %v4031 = vpop.f32.mrf.mxu0
    %4032 = vdwg.mxu0
    %4033 = vmatprep.subr.bf16.mxu0 0
    %4034 = vmatpush1.bf16.msra.mxu0 0
    %4035 = vmatprep.subr.bf16.mxu0 0
    %4036 = vmatpush1.bf16.msra.mxu0 0
    %4037 = vmatprep.subr.bf16.mxu0 0
    %4038 = vmatpush1.bf16.msra.mxu0 0
    %4039 = vmatprep.subr.bf16.mxu0 0
    %4040 = vmatpush1.bf16.msra.mxu0 0
    %4041 = vmatprep.subr.bf16.mxu0 0
    %4042 = vmatpush1.bf16.msra.mxu0 0
    %4043 = vmatprep.subr.bf16.mxu0 0
    %4044 = vmatpush1.bf16.msra.mxu0 0
    %4045 = vmatprep.subr.bf16.mxu0 %v3833
    %4046 = vmatpush1.bf16.msra.mxu0 %v3832
    %4047 = vmatprep.subr.bf16.mxu0 %v3817
    %4048 = vmatpush1.bf16.msra.mxu0 %v3816
    %4049 = vmatprep.subr.bf16.mxu0 0
    %4050 = vmatpush2.bf16.msra.mxu0 0
    %4051 = vmatprep.subr.bf16.mxu0 0
    %4052 = vmatpush2.bf16.msra.mxu0 0
    %4053 = vmatprep.subr.bf16.mxu0 0
    %4054 = vmatpush2.bf16.msra.mxu0 0
    %4055 = vmatprep.subr.bf16.mxu0 0
    %4056 = vmatpush2.bf16.msra.mxu0 0
    %4057 = vmatprep.subr.bf16.mxu0 0
    %4058 = vmatpush2.bf16.msra.mxu0 0
    %4059 = vmatprep.subr.bf16.mxu0 0
    %4060 = vmatpush2.bf16.msra.mxu0 0
    %4061 = vmatprep.subr.bf16.mxu0 0
    %4062 = vmatpush2.bf16.msra.mxu0 0
    %4063 = vmatprep.subr.bf16.mxu0 0
    %4064 = vmatpush2.bf16.msra.mxu0 0
    %4065 = vmatprep.mubr.bf16.mxu0 0
    %4066 = vmatmul.mubr.bf16.gmra.mxu0 %v3875
    %v4067 = vpop.f32.mrf.mxu0
    %v4068 = vadd.f32 %v3661, %v4067
    %v4069 = vpop.f32.mrf.mxu0
    %v4070 = vadd.f32 %v3665, %v4069
    %v4071 = vpop.f32.mrf.mxu0
    %v4072 = vadd.f32 %v3661, %v4071
    %v4073 = vpop.f32.mrf.mxu0
    %v4074 = vadd.f32 %v3665, %v4073
    %4075 = vmatprep.mubr.bf16.mxu0 0
    %4076 = vmatmul.mubr.bf16.gmra.mxu0 %v3878
    %v4077 = vpop.f32.mrf.mxu0
    %v4078 = vadd.f32 %v3661, %v4077
    %v4079 = vpop.f32.mrf.mxu0
    %v4080 = vadd.f32 %v3665, %v4079
    %v4081 = vpop.f32.mrf.mxu0
    %v4082 = vpop.f32.mrf.mxu0
    %4083 = vdwg.mxu0
    %4084 = vmatprep.subr.bf16.mxu0 0
    %4085 = vmatpush1.bf16.msra.mxu0 0
    %4086 = vmatprep.subr.bf16.mxu0 0
    %4087 = vmatpush1.bf16.msra.mxu0 0
    %4088 = vmatprep.subr.bf16.mxu0 0
    %4089 = vmatpush1.bf16.msra.mxu0 0
    %4090 = vmatprep.subr.bf16.mxu0 0
    %4091 = vmatpush1.bf16.msra.mxu0 0
    %4092 = vmatprep.subr.bf16.mxu0 0
    %4093 = vmatpush1.bf16.msra.mxu0 0
    %4094 = vmatprep.subr.bf16.mxu0 0
    %4095 = vmatpush1.bf16.msra.mxu0 0
    %4096 = vmatprep.subr.bf16.mxu0 %v3835
    %4097 = vmatpush1.bf16.msra.mxu0 %v3834
    %4098 = vmatprep.subr.bf16.mxu0 %v3819
    %4099 = vmatpush1.bf16.msra.mxu0 %v3818
    %4100 = vmatprep.subr.bf16.mxu0 0
    %4101 = vmatpush2.bf16.msra.mxu0 0
    %4102 = vmatprep.subr.bf16.mxu0 0
    %4103 = vmatpush2.bf16.msra.mxu0 0
    %4104 = vmatprep.subr.bf16.mxu0 0
    %4105 = vmatpush2.bf16.msra.mxu0 0
    %4106 = vmatprep.subr.bf16.mxu0 0
    %4107 = vmatpush2.bf16.msra.mxu0 0
    %4108 = vmatprep.subr.bf16.mxu0 0
    %4109 = vmatpush2.bf16.msra.mxu0 0
    %4110 = vmatprep.subr.bf16.mxu0 0
    %4111 = vmatpush2.bf16.msra.mxu0 0
    %4112 = vmatprep.subr.bf16.mxu0 0
    %4113 = vmatpush2.bf16.msra.mxu0 0
    %4114 = vmatprep.subr.bf16.mxu0 0
    %4115 = vmatpush2.bf16.msra.mxu0 0
    %4116 = vmatprep.mubr.bf16.mxu0 0
    %4117 = vmatmul.mubr.bf16.gmra.mxu0 %v3875
    %v4118 = vpop.f32.mrf.mxu0
    %v4119 = vadd.f32 %v3669, %v4118
    %v4120 = vpop.f32.mrf.mxu0
    %v4121 = vadd.f32 %v3673, %v4120
    %v4122 = vpop.f32.mrf.mxu0
    %v4123 = vadd.f32 %v3669, %v4122
    %v4124 = vpop.f32.mrf.mxu0
    %v4125 = vadd.f32 %v3673, %v4124
    %4126 = vmatprep.mubr.bf16.mxu0 0
    %4127 = vmatmul.mubr.bf16.gmra.mxu0 %v3878
    %v4128 = vpop.f32.mrf.mxu0
    %v4129 = vadd.f32 %v3669, %v4128
    %v4130 = vpop.f32.mrf.mxu0
    %v4131 = vadd.f32 %v3673, %v4130
    %v4132 = vpop.f32.mrf.mxu0
    %v4133 = vpop.f32.mrf.mxu0
    %4134 = vdwg.mxu0
    %4135 = vmatprep.subr.bf16.mxu0 0
    %4136 = vmatpush1.bf16.msra.mxu0 0
    %4137 = vmatprep.subr.bf16.mxu0 0
    %4138 = vmatpush1.bf16.msra.mxu0 0
    %4139 = vmatprep.subr.bf16.mxu0 0
    %4140 = vmatpush1.bf16.msra.mxu0 0
    %4141 = vmatprep.subr.bf16.mxu0 0
    %4142 = vmatpush1.bf16.msra.mxu0 0
    %4143 = vmatprep.subr.bf16.mxu0 0
    %4144 = vmatpush1.bf16.msra.mxu0 0
    %4145 = vmatprep.subr.bf16.mxu0 0
    %4146 = vmatpush1.bf16.msra.mxu0 0
    %4147 = vmatprep.subr.bf16.mxu0 %v3837
    %4148 = vmatpush1.bf16.msra.mxu0 %v3836
    %4149 = vmatprep.subr.bf16.mxu0 %v3821
    %4150 = vmatpush1.bf16.msra.mxu0 %v3820
    %4151 = vmatprep.subr.bf16.mxu0 0
    %4152 = vmatpush2.bf16.msra.mxu0 0
    %4153 = vmatprep.subr.bf16.mxu0 0
    %4154 = vmatpush2.bf16.msra.mxu0 0
    %4155 = vmatprep.subr.bf16.mxu0 0
    %4156 = vmatpush2.bf16.msra.mxu0 0
    %4157 = vmatprep.subr.bf16.mxu0 0
    %4158 = vmatpush2.bf16.msra.mxu0 0
    %4159 = vmatprep.subr.bf16.mxu0 0
    %4160 = vmatpush2.bf16.msra.mxu0 0
    %4161 = vmatprep.subr.bf16.mxu0 0
    %4162 = vmatpush2.bf16.msra.mxu0 0
    %4163 = vmatprep.subr.bf16.mxu0 0
    %4164 = vmatpush2.bf16.msra.mxu0 0
    %4165 = vmatprep.subr.bf16.mxu0 0
    %4166 = vmatpush2.bf16.msra.mxu0 0
    %4167 = vmatprep.mubr.bf16.mxu0 0
    %4168 = vmatmul.mubr.bf16.gmra.mxu0 %v3875
    %v4169 = vpop.f32.mrf.mxu0
    %v4170 = vadd.f32 %v3677, %v4169
    %v4171 = vpop.f32.mrf.mxu0
    %v4172 = vadd.f32 %v3681, %v4171
    %v4173 = vpop.f32.mrf.mxu0
    %v4174 = vadd.f32 %v3677, %v4173
    %v4175 = vpop.f32.mrf.mxu0
    %v4176 = vadd.f32 %v3681, %v4175
    %4177 = vmatprep.mubr.bf16.mxu0 0
    %4178 = vmatmul.mubr.bf16.gmra.mxu0 %v3878
    %v4179 = vpop.f32.mrf.mxu0
    %v4180 = vadd.f32 %v3677, %v4179
    %v4181 = vpop.f32.mrf.mxu0
    %v4182 = vadd.f32 %v3681, %v4181
    %v4183 = vpop.f32.mrf.mxu0
    %v4184 = vpop.f32.mrf.mxu0
    %4185 = vdwg.mxu0
    %4186 = vmatprep.subr.bf16.mxu0 0
    %4187 = vmatpush1.bf16.msra.mxu0 0
    %4188 = vmatprep.subr.bf16.mxu0 0
    %4189 = vmatpush1.bf16.msra.mxu0 0
    %4190 = vmatprep.subr.bf16.mxu0 0
    %4191 = vmatpush1.bf16.msra.mxu0 0
    %4192 = vmatprep.subr.bf16.mxu0 0
    %4193 = vmatpush1.bf16.msra.mxu0 0
    %4194 = vmatprep.subr.bf16.mxu0 0
    %4195 = vmatpush1.bf16.msra.mxu0 0
    %4196 = vmatprep.subr.bf16.mxu0 0
    %4197 = vmatpush1.bf16.msra.mxu0 0
    %4198 = vmatprep.subr.bf16.mxu0 %v3839
    %4199 = vmatpush1.bf16.msra.mxu0 %v3838
    %4200 = vmatprep.subr.bf16.mxu0 %v3823
    %4201 = vmatpush1.bf16.msra.mxu0 %v3822
    %4202 = vmatprep.subr.bf16.mxu0 0
    %4203 = vmatpush2.bf16.msra.mxu0 0
    %4204 = vmatprep.subr.bf16.mxu0 0
    %4205 = vmatpush2.bf16.msra.mxu0 0
    %4206 = vmatprep.subr.bf16.mxu0 0
    %4207 = vmatpush2.bf16.msra.mxu0 0
    %4208 = vmatprep.subr.bf16.mxu0 0
    %4209 = vmatpush2.bf16.msra.mxu0 0
    %4210 = vmatprep.subr.bf16.mxu0 0
    %4211 = vmatpush2.bf16.msra.mxu0 0
    %4212 = vmatprep.subr.bf16.mxu0 0
    %4213 = vmatpush2.bf16.msra.mxu0 0
    %4214 = vmatprep.subr.bf16.mxu0 0
    %4215 = vmatpush2.bf16.msra.mxu0 0
    %4216 = vmatprep.subr.bf16.mxu0 0
    %4217 = vmatpush2.bf16.msra.mxu0 0
    %4218 = vmatprep.mubr.bf16.mxu0 0
    %4219 = vmatmul.mubr.bf16.gmra.mxu0 %v3875
    %v4220 = vpop.f32.mrf.mxu0
    %v4221 = vadd.f32 %v3685, %v4220
    %v4222 = vpop.f32.mrf.mxu0
    %v4223 = vadd.f32 %v3689, %v4222
    %v4224 = vpop.f32.mrf.mxu0
    %v4225 = vadd.f32 %v3685, %v4224
    %v4226 = vpop.f32.mrf.mxu0
    %v4227 = vadd.f32 %v3689, %v4226
    %4228 = vmatprep.mubr.bf16.mxu0 0
    %4229 = vmatmul.mubr.bf16.gmra.mxu0 %v3878
    %v4230 = vpop.f32.mrf.mxu0
    %v4231 = vadd.f32 %v3685, %v4230
    %v4232 = vpop.f32.mrf.mxu0
    %v4233 = vadd.f32 %v3689, %v4232
    %v4234 = vpop.f32.mrf.mxu0
    %v4235 = vpop.f32.mrf.mxu0
    %4236 = vdwg.mxu0
    %4237 = vmatprep.subr.bf16.mxu0 0
    %4238 = vmatpush1.bf16.msra.mxu0 0
    %4239 = vmatprep.subr.bf16.mxu0 0
    %4240 = vmatpush1.bf16.msra.mxu0 0
    %4241 = vmatprep.subr.bf16.mxu0 0
    %4242 = vmatpush1.bf16.msra.mxu0 0
    %4243 = vmatprep.subr.bf16.mxu0 0
    %4244 = vmatpush1.bf16.msra.mxu0 0
    %4245 = vmatprep.subr.bf16.mxu0 0
    %4246 = vmatpush1.bf16.msra.mxu0 0
    %4247 = vmatprep.subr.bf16.mxu0 0
    %4248 = vmatpush1.bf16.msra.mxu0 0
    %4249 = vmatprep.subr.bf16.mxu0 %v3841
    %4250 = vmatpush1.bf16.msra.mxu0 %v3840
    %4251 = vmatprep.subr.bf16.mxu0 %v3825
    %4252 = vmatpush1.bf16.msra.mxu0 %v3824
    %4253 = vmatprep.subr.bf16.mxu0 0
    %4254 = vmatpush2.bf16.msra.mxu0 0
    %4255 = vmatprep.subr.bf16.mxu0 0
    %4256 = vmatpush2.bf16.msra.mxu0 0
    %4257 = vmatprep.subr.bf16.mxu0 0
    %4258 = vmatpush2.bf16.msra.mxu0 0
    %4259 = vmatprep.subr.bf16.mxu0 0
    %4260 = vmatpush2.bf16.msra.mxu0 0
    %4261 = vmatprep.subr.bf16.mxu0 0
    %4262 = vmatpush2.bf16.msra.mxu0 0
    %4263 = vmatprep.subr.bf16.mxu0 0
    %4264 = vmatpush2.bf16.msra.mxu0 0
    %4265 = vmatprep.subr.bf16.mxu0 0
    %4266 = vmatpush2.bf16.msra.mxu0 0
    %4267 = vmatprep.subr.bf16.mxu0 0
    %4268 = vmatpush2.bf16.msra.mxu0 0
    %4269 = vmatprep.mubr.bf16.mxu0 0
    %4270 = vmatmul.mubr.bf16.gmra.mxu0 %v3875
    %v4271 = vpop.f32.mrf.mxu0
    %v4272 = vadd.f32 %v3693, %v4271
    %v4273 = vpop.f32.mrf.mxu0
    %v4274 = vadd.f32 %v3697, %v4273
    %v4275 = vpop.f32.mrf.mxu0
    %v4276 = vadd.f32 %v3693, %v4275
    %v4277 = vpop.f32.mrf.mxu0
    %v4278 = vadd.f32 %v3697, %v4277
    %4279 = vmatprep.mubr.bf16.mxu0 0
    %4280 = vmatmul.mubr.bf16.gmra.mxu0 %v3878
    %v4281 = vpop.f32.mrf.mxu0
    %v4282 = vadd.f32 %v3693, %v4281
    %v4283 = vpop.f32.mrf.mxu0
    %v4284 = vadd.f32 %v3697, %v4283
    %v4285 = vpop.f32.mrf.mxu0
    %v4286 = vpop.f32.mrf.mxu0
    %4287 = vdwg.mxu0
    %v4288 = vmax.f32 %v3915, 0.0
    %v4289 = vmax.f32 %v3917, 0.0
    %v4290 = vmax.f32 %v3966, 0.0
    %v4291 = vmax.f32 %v3968, 0.0
    %v4292 = vmax.f32 %v4017, 0.0
    %v4293 = vmax.f32 %v4019, 0.0
    %v4294 = vmax.f32 %v4068, 0.0
    %v4295 = vmax.f32 %v4070, 0.0
    %v4296 = vmax.f32 %v4119, 0.0
    %v4297 = vmax.f32 %v4121, 0.0
    %v4298 = vmax.f32 %v4170, 0.0
    %v4299 = vmax.f32 %v4172, 0.0
    %v4300 = vmax.f32 %v4221, 0.0
    %v4301 = vmax.f32 %v4223, 0.0
    %v4302 = vmax.f32 %v4272, 0.0
    %v4303 = vmax.f32 %v4274, 0.0
    %v4304 = vmax.f32 %v3919, 0.0
    %v4305 = vmax.f32 %v3921, 0.0
    %v4306 = vmax.f32 %v3970, 0.0
    %v4307 = vmax.f32 %v3972, 0.0
    %v4308 = vmax.f32 %v4021, 0.0
    %v4309 = vmax.f32 %v4023, 0.0
    %v4310 = vmax.f32 %v4072, 0.0
    %v4311 = vmax.f32 %v4074, 0.0
    %v4312 = vmax.f32 %v4123, 0.0
    %v4313 = vmax.f32 %v4125, 0.0
    %v4314 = vmax.f32 %v4174, 0.0
    %v4315 = vmax.f32 %v4176, 0.0
    %v4316 = vmax.f32 %v4225, 0.0
    %v4317 = vmax.f32 %v4227, 0.0
    %v4318 = vmax.f32 %v4276, 0.0
    %v4319 = vmax.f32 %v4278, 0.0
    %v4320 = vmax.f32 %v3925, 0.0
    %v4321 = vmax.f32 %v3927, 0.0
    %v4322 = vmax.f32 %v3976, 0.0
    %v4323 = vmax.f32 %v3978, 0.0
    %v4324 = vmax.f32 %v4027, 0.0
    %v4325 = vmax.f32 %v4029, 0.0
    %v4326 = vmax.f32 %v4078, 0.0
    %v4327 = vmax.f32 %v4080, 0.0
    %v4328 = vmax.f32 %v4129, 0.0
    %v4329 = vmax.f32 %v4131, 0.0
    %v4330 = vmax.f32 %v4180, 0.0
    %v4331 = vmax.f32 %v4182, 0.0
    %v4332 = vmax.f32 %v4231, 0.0
    %v4333 = vmax.f32 %v4233, 0.0
    %v4334 = vmax.f32 %v4282, 0.0
    %v4335 = vmax.f32 %v4284, 0.0
    %v4336 = vpack.c.bf16 %v4304, %v4288
    %v4337 = vpack.c.bf16 %v4305, %v4289
    %v4338 = vpack.c.bf16 %v4306, %v4290
    %v4339 = vpack.c.bf16 %v4307, %v4291
    %v4340 = vpack.c.bf16 %v4308, %v4292
    %v4341 = vpack.c.bf16 %v4309, %v4293
    %v4342 = vpack.c.bf16 %v4310, %v4294
    %v4343 = vpack.c.bf16 %v4311, %v4295
    %v4344 = vpack.c.bf16 %v4312, %v4296
    %v4345 = vpack.c.bf16 %v4313, %v4297
    %v4346 = vpack.c.bf16 %v4314, %v4298
    %v4347 = vpack.c.bf16 %v4315, %v4299
    %v4348 = vpack.c.bf16 %v4316, %v4300
    %v4349 = vpack.c.bf16 %v4317, %v4301
    %v4350 = vpack.c.bf16 %v4318, %v4302
    %v4351 = vpack.c.bf16 %v4319, %v4303
    %v4352 = vpack.c.bf16 %v4320, %v4320
    %v4353 = vpack.c.bf16 %v4321, %v4321
    %v4354 = vpack.c.bf16 %v4322, %v4322
    %v4355 = vpack.c.bf16 %v4323, %v4323
    %v4356 = vpack.c.bf16 %v4324, %v4324
    %v4357 = vpack.c.bf16 %v4325, %v4325
    %v4358 = vpack.c.bf16 %v4326, %v4326
    %v4359 = vpack.c.bf16 %v4327, %v4327
    %v4360 = vpack.c.bf16 %v4328, %v4328
    %v4361 = vpack.c.bf16 %v4329, %v4329
    %v4362 = vpack.c.bf16 %v4330, %v4330
    %v4363 = vpack.c.bf16 %v4331, %v4331
    %v4364 = vpack.c.bf16 %v4332, %v4332
    %v4365 = vpack.c.bf16 %v4333, %v4333
    %v4366 = vpack.c.bf16 %v4334, %v4334
    %v4367 = vpack.c.bf16 %v4335, %v4335
    %s4368 = scalar_lea.vmem [#allocation11], 256
    %v4369 = vld [vmem:[%s4368] sm:$0xff]
    %v4370 = vld [vmem:[%s4368 + $0x8] sm:$0xff]
    %v4371 = vld [vmem:[%s4368 + $0x10] sm:$0xff]
    %v4372 = vld [vmem:[%s4368 + $0x18] sm:$0xff]
    %v4373 = vld [vmem:[%s4368 + $0x20] sm:$0xff]
    %v4374 = vld [vmem:[%s4368 + $0x28] sm:$0xff]
    %v4375 = vld [vmem:[%s4368 + $0x30] sm:$0xff]
    %v4376 = vld [vmem:[%s4368 + $0x38] sm:$0xff]
    %v4377 = vld [vmem:[%s4368 + $0x40] sm:$0xff]
    %v4378 = vld [vmem:[%s4368 + $0x48] sm:$0xff]
    %v4379 = vld [vmem:[%s4368 + $0x50] sm:$0xff]
    %v4380 = vld [vmem:[%s4368 + $0x58] sm:$0xff]
    %v4381 = vld [vmem:[%s4368 + $0x60] sm:$0xff]
    %v4382 = vld [vmem:[%s4368 + $0x68] sm:$0xff]
    %v4383 = vld [vmem:[%s4368 + $0x70] sm:$0xff]
    %v4384 = vld [vmem:[%s4368 + $0x78] sm:$0xff]
    %v4385 = vld [vmem:[%s4368 + $0x80] sm:$0xff]
    %v4386 = vld [vmem:[%s4368 + $0x88] sm:$0xff]
    %v4387 = vld [vmem:[%s4368 + $0x90] sm:$0xff]
    %v4388 = vld [vmem:[%s4368 + $0x98] sm:$0xff]
    %v4389 = vld [vmem:[%s4368 + $0xa0] sm:$0xff]
    %v4390 = vld [vmem:[%s4368 + $0xa8] sm:$0xff]
    %v4391 = vld [vmem:[%s4368 + $0xb0] sm:$0xff]
    %v4392 = vld [vmem:[%s4368 + $0xb8] sm:$0xff]
    %v4393 = vld [vmem:[%s4368 + $0xc0] sm:$0xff]
    %v4394 = vld [vmem:[%s4368 + $0xc8] sm:$0xff]
    %v4395 = vld [vmem:[%s4368 + $0xd0] sm:$0xff]
    %v4396 = vld [vmem:[%s4368 + $0xd8] sm:$0xff]
    %v4397 = vld [vmem:[%s4368 + $0xe0] sm:$0xff]
    %v4398 = vld [vmem:[%s4368 + $0xe8] sm:$0xff]
    %v4399 = vld [vmem:[%s4368 + $0xf0] sm:$0xff]
    %v4400 = vld [vmem:[%s4368 + $0xf8] sm:$0xff]
    %s4401 = scalar_lea.vmem %s10, 1
    %v4402 = vld [vmem:[%s4401] sm:$0x1]
    %v4404 = vlaneseq
    %v4405 = vshrl.u32 %v4404, 7
    %v4406 = vsub.s32 0, %v4405
    %v4407 = vrot.slane %v4402, %v4406
    %v4441 = vunpack.c.l.b16 %v4369
    %v4442 = vunpack.c.h.b16 %v4369
    %v4443 = vunpack.c.l.b16 %v4370
    %v4444 = vunpack.c.h.b16 %v4370
    %v4445 = vunpack.c.l.b16 %v4371
    %v4446 = vunpack.c.h.b16 %v4371
    %v4447 = vunpack.c.l.b16 %v4372
    %v4448 = vunpack.c.h.b16 %v4372
    %v4449 = vunpack.c.l.b16 %v4373
    %v4450 = vunpack.c.h.b16 %v4373
    %v4451 = vunpack.c.l.b16 %v4374
    %v4452 = vunpack.c.h.b16 %v4374
    %v4453 = vunpack.c.l.b16 %v4375
    %v4454 = vunpack.c.h.b16 %v4375
    %v4455 = vunpack.c.l.b16 %v4376
    %v4456 = vunpack.c.h.b16 %v4376
    %v4457 = vunpack.c.l.b16 %v4377
    %v4458 = vunpack.c.h.b16 %v4377
    %v4459 = vunpack.c.l.b16 %v4378
    %v4460 = vunpack.c.h.b16 %v4378
    %v4461 = vunpack.c.l.b16 %v4379
    %v4462 = vunpack.c.h.b16 %v4379
    %v4463 = vunpack.c.l.b16 %v4380
    %v4464 = vunpack.c.h.b16 %v4380
    %v4465 = vunpack.c.l.b16 %v4381
    %v4466 = vunpack.c.h.b16 %v4381
    %v4467 = vunpack.c.l.b16 %v4382
    %v4468 = vunpack.c.h.b16 %v4382
    %v4469 = vunpack.c.l.b16 %v4383
    %v4470 = vunpack.c.h.b16 %v4383
    %v4471 = vunpack.c.l.b16 %v4384
    %v4472 = vunpack.c.h.b16 %v4384
    %v4473 = vunpack.c.l.b16 %v4385
    %v4474 = vunpack.c.h.b16 %v4385
    %v4475 = vunpack.c.l.b16 %v4386
    %v4476 = vunpack.c.h.b16 %v4386
    %v4477 = vunpack.c.l.b16 %v4387
    %v4478 = vunpack.c.h.b16 %v4387
    %v4479 = vunpack.c.l.b16 %v4388
    %v4480 = vunpack.c.h.b16 %v4388
    %v4481 = vunpack.c.l.b16 %v4389
    %v4482 = vunpack.c.h.b16 %v4389
    %v4483 = vunpack.c.l.b16 %v4390
    %v4484 = vunpack.c.h.b16 %v4390
    %v4485 = vunpack.c.l.b16 %v4391
    %v4486 = vunpack.c.h.b16 %v4391
    %v4487 = vunpack.c.l.b16 %v4392
    %v4488 = vunpack.c.h.b16 %v4392
    %v4489 = vunpack.c.l.b16 %v4393
    %v4490 = vunpack.c.h.b16 %v4393
    %v4491 = vunpack.c.l.b16 %v4394
    %v4492 = vunpack.c.h.b16 %v4394
    %v4493 = vunpack.c.l.b16 %v4395
    %v4494 = vunpack.c.h.b16 %v4395
    %v4495 = vunpack.c.l.b16 %v4396
    %v4496 = vunpack.c.h.b16 %v4396
    %v4497 = vunpack.c.l.b16 %v4397
    %v4498 = vunpack.c.h.b16 %v4397
    %v4499 = vunpack.c.l.b16 %v4398
    %v4500 = vunpack.c.h.b16 %v4398
    %v4501 = vunpack.c.l.b16 %v4399
    %v4502 = vunpack.c.h.b16 %v4399
    %v4503 = vunpack.c.l.b16 %v4400
    %v4504 = vunpack.c.h.b16 %v4400
    %v4505 = vpack.c.b16 %v4457, %v4441
    %v4506 = vpack.c.b16 %v4458, %v4442
    %v4507 = vpack.c.b16 %v4459, %v4443
    %v4508 = vpack.c.b16 %v4460, %v4444
    %v4509 = vpack.c.b16 %v4461, %v4445
    %v4510 = vpack.c.b16 %v4462, %v4446
    %v4511 = vpack.c.b16 %v4463, %v4447
    %v4512 = vpack.c.b16 %v4464, %v4448
    %v4513 = vpack.c.b16 %v4465, %v4449
    %v4514 = vpack.c.b16 %v4466, %v4450
    %v4515 = vpack.c.b16 %v4467, %v4451
    %v4516 = vpack.c.b16 %v4468, %v4452
    %v4517 = vpack.c.b16 %v4469, %v4453
    %v4518 = vpack.c.b16 %v4470, %v4454
    %v4519 = vpack.c.b16 %v4471, %v4455
    %v4520 = vpack.c.b16 %v4472, %v4456
    %v4521 = vpack.c.b16 %v4489, %v4473
    %v4522 = vpack.c.b16 %v4490, %v4474
    %v4523 = vpack.c.b16 %v4491, %v4475
    %v4524 = vpack.c.b16 %v4492, %v4476
    %v4525 = vpack.c.b16 %v4493, %v4477
    %v4526 = vpack.c.b16 %v4494, %v4478
    %v4527 = vpack.c.b16 %v4495, %v4479
    %v4528 = vpack.c.b16 %v4496, %v4480
    %v4529 = vpack.c.b16 %v4497, %v4481
    %v4530 = vpack.c.b16 %v4498, %v4482
    %v4531 = vpack.c.b16 %v4499, %v4483
    %v4532 = vpack.c.b16 %v4500, %v4484
    %v4533 = vpack.c.b16 %v4501, %v4485
    %v4534 = vpack.c.b16 %v4502, %v4486
    %v4535 = vpack.c.b16 %v4503, %v4487
    %v4536 = vpack.c.b16 %v4504, %v4488
    %4569 = vmatprep.subr.bf16.mxu0 0
    %4570 = vmatpush1.bf16.xpose.msra.mxu0 0
    %4571 = vmatprep.subr.bf16.mxu0 0
    %4572 = vmatpush1.bf16.xpose.msra.mxu0 0
    %4573 = vmatprep.subr.bf16.mxu0 0
    %4574 = vmatpush1.bf16.xpose.msra.mxu0 0
    %4575 = vmatprep.subr.bf16.mxu0 0
    %4576 = vmatpush1.bf16.xpose.msra.mxu0 0
    %4577 = vmatprep.subr.bf16.mxu0 0
    %4578 = vmatpush1.bf16.xpose.msra.mxu0 0
    %4579 = vmatprep.subr.bf16.mxu0 0
    %4580 = vmatpush1.bf16.xpose.msra.mxu0 0
    %4581 = vmatprep.subr.bf16.mxu0 %v4522
    %4582 = vmatpush1.bf16.xpose.msra.mxu0 %v4521
    %4583 = vmatprep.subr.bf16.mxu0 %v4506
    %4584 = vmatpush1.bf16.xpose.msra.mxu0 %v4505
    %4585 = vmatprep.subr.bf16.mxu0 0
    %4586 = vmatpush2.bf16.xpose.msra.mxu0 0
    %4587 = vmatprep.subr.bf16.mxu0 0
    %4588 = vmatpush2.bf16.xpose.msra.mxu0 0
    %4589 = vmatprep.subr.bf16.mxu0 0
    %4590 = vmatpush2.bf16.xpose.msra.mxu0 0
    %4591 = vmatprep.subr.bf16.mxu0 0
    %4592 = vmatpush2.bf16.xpose.msra.mxu0 0
    %4593 = vmatprep.subr.bf16.mxu0 0
    %4594 = vmatpush2.bf16.xpose.msra.mxu0 0
    %4595 = vmatprep.subr.bf16.mxu0 0
    %4596 = vmatpush2.bf16.xpose.msra.mxu0 0
    %4597 = vmatprep.subr.bf16.mxu0 0
    %4598 = vmatpush2.bf16.xpose.msra.mxu0 0
    %4599 = vmatprep.subr.bf16.mxu0 0
    %4600 = vmatpush2.bf16.xpose.msra.mxu0 0
    %4601 = vmatprep.mubr.bf16.mxu0 %v4337
    %4602 = vmatmul.mubr.bf16.gmra.mxu0 %v4336
    %v4603 = vpop.f32.mrf.mxu0
    %v4604 = vadd.f32 %v4407, %v4603
    %v4605 = vpop.f32.mrf.mxu0
    %v4606 = vpop.f32.mrf.mxu0
    %v4607 = vadd.f32 %v4407, %v4606
    %v4608 = vpop.f32.mrf.mxu0
    %4609 = vmatprep.mubr.bf16.mxu0 %v4353
    %4610 = vmatmul.mubr.bf16.gmra.mxu0 %v4352
    %v4611 = vpop.f32.mrf.mxu0
    %v4612 = vadd.f32 %v4407, %v4611
    %v4613 = vpop.f32.mrf.mxu0
    %v4614 = vpop.f32.mrf.mxu0
    %v4615 = vpop.f32.mrf.mxu0
    %4616 = vdwg.mxu0
    %4617 = vmatprep.subr.bf16.mxu0 0
    %4618 = vmatpush1.bf16.xpose.msra.mxu0 0
    %4619 = vmatprep.subr.bf16.mxu0 0
    %4620 = vmatpush1.bf16.xpose.msra.mxu0 0
    %4621 = vmatprep.subr.bf16.mxu0 0
    %4622 = vmatpush1.bf16.xpose.msra.mxu0 0
    %4623 = vmatprep.subr.bf16.mxu0 0
    %4624 = vmatpush1.bf16.xpose.msra.mxu0 0
    %4625 = vmatprep.subr.bf16.mxu0 0
    %4626 = vmatpush1.bf16.xpose.msra.mxu0 0
    %4627 = vmatprep.subr.bf16.mxu0 0
    %4628 = vmatpush1.bf16.xpose.msra.mxu0 0
    %4629 = vmatprep.subr.bf16.mxu0 %v4524
    %4630 = vmatpush1.bf16.xpose.msra.mxu0 %v4523
    %4631 = vmatprep.subr.bf16.mxu0 %v4508
    %4632 = vmatpush1.bf16.xpose.msra.mxu0 %v4507
    %4633 = vmatprep.subr.bf16.mxu0 0
    %4634 = vmatpush2.bf16.xpose.msra.mxu0 0
    %4635 = vmatprep.subr.bf16.mxu0 0
    %4636 = vmatpush2.bf16.xpose.msra.mxu0 0
    %4637 = vmatprep.subr.bf16.mxu0 0
    %4638 = vmatpush2.bf16.xpose.msra.mxu0 0
    %4639 = vmatprep.subr.bf16.mxu0 0
    %4640 = vmatpush2.bf16.xpose.msra.mxu0 0
    %4641 = vmatprep.subr.bf16.mxu0 0
    %4642 = vmatpush2.bf16.xpose.msra.mxu0 0
    %4643 = vmatprep.subr.bf16.mxu0 0
    %4644 = vmatpush2.bf16.xpose.msra.mxu0 0
    %4645 = vmatprep.subr.bf16.mxu0 0
    %4646 = vmatpush2.bf16.xpose.msra.mxu0 0
    %4647 = vmatprep.subr.bf16.mxu0 0
    %4648 = vmatpush2.bf16.xpose.msra.mxu0 0
    %4649 = vmatprep.mubr.bf16.mxu0 %v4339
    %4650 = vmatmul.mubr.bf16.gmra.mxu0 %v4338
    %v4651 = vpop.f32.mrf.mxu0
    %v4652 = vadd.f32 %v4604, %v4651
    %v4653 = vpop.f32.mrf.mxu0
    %v4654 = vpop.f32.mrf.mxu0
    %v4655 = vadd.f32 %v4607, %v4654
    %v4656 = vpop.f32.mrf.mxu0
    %4657 = vmatprep.mubr.bf16.mxu0 %v4355
    %4658 = vmatmul.mubr.bf16.gmra.mxu0 %v4354
    %v4659 = vpop.f32.mrf.mxu0
    %v4660 = vadd.f32 %v4612, %v4659
    %v4661 = vpop.f32.mrf.mxu0
    %v4662 = vpop.f32.mrf.mxu0
    %v4663 = vpop.f32.mrf.mxu0
    %4664 = vdwg.mxu0
    %4665 = vmatprep.subr.bf16.mxu0 0
    %4666 = vmatpush1.bf16.xpose.msra.mxu0 0
    %4667 = vmatprep.subr.bf16.mxu0 0
    %4668 = vmatpush1.bf16.xpose.msra.mxu0 0
    %4669 = vmatprep.subr.bf16.mxu0 0
    %4670 = vmatpush1.bf16.xpose.msra.mxu0 0
    %4671 = vmatprep.subr.bf16.mxu0 0
    %4672 = vmatpush1.bf16.xpose.msra.mxu0 0
    %4673 = vmatprep.subr.bf16.mxu0 0
    %4674 = vmatpush1.bf16.xpose.msra.mxu0 0
    %4675 = vmatprep.subr.bf16.mxu0 0
    %4676 = vmatpush1.bf16.xpose.msra.mxu0 0
    %4677 = vmatprep.subr.bf16.mxu0 %v4526
    %4678 = vmatpush1.bf16.xpose.msra.mxu0 %v4525
    %4679 = vmatprep.subr.bf16.mxu0 %v4510
    %4680 = vmatpush1.bf16.xpose.msra.mxu0 %v4509
    %4681 = vmatprep.subr.bf16.mxu0 0
    %4682 = vmatpush2.bf16.xpose.msra.mxu0 0
    %4683 = vmatprep.subr.bf16.mxu0 0
    %4684 = vmatpush2.bf16.xpose.msra.mxu0 0
    %4685 = vmatprep.subr.bf16.mxu0 0
    %4686 = vmatpush2.bf16.xpose.msra.mxu0 0
    %4687 = vmatprep.subr.bf16.mxu0 0
    %4688 = vmatpush2.bf16.xpose.msra.mxu0 0
    %4689 = vmatprep.subr.bf16.mxu0 0
    %4690 = vmatpush2.bf16.xpose.msra.mxu0 0
    %4691 = vmatprep.subr.bf16.mxu0 0
    %4692 = vmatpush2.bf16.xpose.msra.mxu0 0
    %4693 = vmatprep.subr.bf16.mxu0 0
    %4694 = vmatpush2.bf16.xpose.msra.mxu0 0
    %4695 = vmatprep.subr.bf16.mxu0 0
    %4696 = vmatpush2.bf16.xpose.msra.mxu0 0
    %4697 = vmatprep.mubr.bf16.mxu0 %v4341
    %4698 = vmatmul.mubr.bf16.gmra.mxu0 %v4340
    %v4699 = vpop.f32.mrf.mxu0
    %v4700 = vadd.f32 %v4652, %v4699
    %v4701 = vpop.f32.mrf.mxu0
    %v4702 = vpop.f32.mrf.mxu0
    %v4703 = vadd.f32 %v4655, %v4702
    %v4704 = vpop.f32.mrf.mxu0
    %4705 = vmatprep.mubr.bf16.mxu0 %v4357
    %4706 = vmatmul.mubr.bf16.gmra.mxu0 %v4356
    %v4707 = vpop.f32.mrf.mxu0
    %v4708 = vadd.f32 %v4660, %v4707
    %v4709 = vpop.f32.mrf.mxu0
    %v4710 = vpop.f32.mrf.mxu0
    %v4711 = vpop.f32.mrf.mxu0
    %4712 = vdwg.mxu0
    %4713 = vmatprep.subr.bf16.mxu0 0
    %4714 = vmatpush1.bf16.xpose.msra.mxu0 0
    %4715 = vmatprep.subr.bf16.mxu0 0
    %4716 = vmatpush1.bf16.xpose.msra.mxu0 0
    %4717 = vmatprep.subr.bf16.mxu0 0
    %4718 = vmatpush1.bf16.xpose.msra.mxu0 0
    %4719 = vmatprep.subr.bf16.mxu0 0
    %4720 = vmatpush1.bf16.xpose.msra.mxu0 0
    %4721 = vmatprep.subr.bf16.mxu0 0
    %4722 = vmatpush1.bf16.xpose.msra.mxu0 0
    %4723 = vmatprep.subr.bf16.mxu0 0
    %4724 = vmatpush1.bf16.xpose.msra.mxu0 0
    %4725 = vmatprep.subr.bf16.mxu0 %v4528
    %4726 = vmatpush1.bf16.xpose.msra.mxu0 %v4527
    %4727 = vmatprep.subr.bf16.mxu0 %v4512
    %4728 = vmatpush1.bf16.xpose.msra.mxu0 %v4511
    %4729 = vmatprep.subr.bf16.mxu0 0
    %4730 = vmatpush2.bf16.xpose.msra.mxu0 0
    %4731 = vmatprep.subr.bf16.mxu0 0
    %4732 = vmatpush2.bf16.xpose.msra.mxu0 0
    %4733 = vmatprep.subr.bf16.mxu0 0
    %4734 = vmatpush2.bf16.xpose.msra.mxu0 0
    %4735 = vmatprep.subr.bf16.mxu0 0
    %4736 = vmatpush2.bf16.xpose.msra.mxu0 0
    %4737 = vmatprep.subr.bf16.mxu0 0
    %4738 = vmatpush2.bf16.xpose.msra.mxu0 0
    %4739 = vmatprep.subr.bf16.mxu0 0
    %4740 = vmatpush2.bf16.xpose.msra.mxu0 0
    %4741 = vmatprep.subr.bf16.mxu0 0
    %4742 = vmatpush2.bf16.xpose.msra.mxu0 0
    %4743 = vmatprep.subr.bf16.mxu0 0
    %4744 = vmatpush2.bf16.xpose.msra.mxu0 0
    %4745 = vmatprep.mubr.bf16.mxu0 %v4343
    %4746 = vmatmul.mubr.bf16.gmra.mxu0 %v4342
    %v4747 = vpop.f32.mrf.mxu0
    %v4748 = vadd.f32 %v4700, %v4747
    %v4749 = vpop.f32.mrf.mxu0
    %v4750 = vpop.f32.mrf.mxu0
    %v4751 = vadd.f32 %v4703, %v4750
    %v4752 = vpop.f32.mrf.mxu0
    %4753 = vmatprep.mubr.bf16.mxu0 %v4359
    %4754 = vmatmul.mubr.bf16.gmra.mxu0 %v4358
    %v4755 = vpop.f32.mrf.mxu0
    %v4756 = vadd.f32 %v4708, %v4755
    %v4757 = vpop.f32.mrf.mxu0
    %v4758 = vpop.f32.mrf.mxu0
    %v4759 = vpop.f32.mrf.mxu0
    %4760 = vdwg.mxu0
    %4761 = vmatprep.subr.bf16.mxu0 0
    %4762 = vmatpush1.bf16.xpose.msra.mxu0 0
    %4763 = vmatprep.subr.bf16.mxu0 0
    %4764 = vmatpush1.bf16.xpose.msra.mxu0 0
    %4765 = vmatprep.subr.bf16.mxu0 0
    %4766 = vmatpush1.bf16.xpose.msra.mxu0 0
    %4767 = vmatprep.subr.bf16.mxu0 0
    %4768 = vmatpush1.bf16.xpose.msra.mxu0 0
    %4769 = vmatprep.subr.bf16.mxu0 0
    %4770 = vmatpush1.bf16.xpose.msra.mxu0 0
    %4771 = vmatprep.subr.bf16.mxu0 0
    %4772 = vmatpush1.bf16.xpose.msra.mxu0 0
    %4773 = vmatprep.subr.bf16.mxu0 %v4530
    %4774 = vmatpush1.bf16.xpose.msra.mxu0 %v4529
    %4775 = vmatprep.subr.bf16.mxu0 %v4514
    %4776 = vmatpush1.bf16.xpose.msra.mxu0 %v4513
    %4777 = vmatprep.subr.bf16.mxu0 0
    %4778 = vmatpush2.bf16.xpose.msra.mxu0 0
    %4779 = vmatprep.subr.bf16.mxu0 0
    %4780 = vmatpush2.bf16.xpose.msra.mxu0 0
    %4781 = vmatprep.subr.bf16.mxu0 0
    %4782 = vmatpush2.bf16.xpose.msra.mxu0 0
    %4783 = vmatprep.subr.bf16.mxu0 0
    %4784 = vmatpush2.bf16.xpose.msra.mxu0 0
    %4785 = vmatprep.subr.bf16.mxu0 0
    %4786 = vmatpush2.bf16.xpose.msra.mxu0 0
    %4787 = vmatprep.subr.bf16.mxu0 0
    %4788 = vmatpush2.bf16.xpose.msra.mxu0 0
    %4789 = vmatprep.subr.bf16.mxu0 0
    %4790 = vmatpush2.bf16.xpose.msra.mxu0 0
    %4791 = vmatprep.subr.bf16.mxu0 0
    %4792 = vmatpush2.bf16.xpose.msra.mxu0 0
    %4793 = vmatprep.mubr.bf16.mxu0 %v4345
    %4794 = vmatmul.mubr.bf16.gmra.mxu0 %v4344
    %v4795 = vpop.f32.mrf.mxu0
    %v4796 = vadd.f32 %v4748, %v4795
    %v4797 = vpop.f32.mrf.mxu0
    %v4798 = vpop.f32.mrf.mxu0
    %v4799 = vadd.f32 %v4751, %v4798
    %v4800 = vpop.f32.mrf.mxu0
    %4801 = vmatprep.mubr.bf16.mxu0 %v4361
    %4802 = vmatmul.mubr.bf16.gmra.mxu0 %v4360
    %v4803 = vpop.f32.mrf.mxu0
    %v4804 = vadd.f32 %v4756, %v4803
    %v4805 = vpop.f32.mrf.mxu0
    %v4806 = vpop.f32.mrf.mxu0
    %v4807 = vpop.f32.mrf.mxu0
    %4808 = vdwg.mxu0
    %4809 = vmatprep.subr.bf16.mxu0 0
    %4810 = vmatpush1.bf16.xpose.msra.mxu0 0
    %4811 = vmatprep.subr.bf16.mxu0 0
    %4812 = vmatpush1.bf16.xpose.msra.mxu0 0
    %4813 = vmatprep.subr.bf16.mxu0 0
    %4814 = vmatpush1.bf16.xpose.msra.mxu0 0
    %4815 = vmatprep.subr.bf16.mxu0 0
    %4816 = vmatpush1.bf16.xpose.msra.mxu0 0
    %4817 = vmatprep.subr.bf16.mxu0 0
    %4818 = vmatpush1.bf16.xpose.msra.mxu0 0
    %4819 = vmatprep.subr.bf16.mxu0 0
    %4820 = vmatpush1.bf16.xpose.msra.mxu0 0
    %4821 = vmatprep.subr.bf16.mxu0 %v4532
    %4822 = vmatpush1.bf16.xpose.msra.mxu0 %v4531
    %4823 = vmatprep.subr.bf16.mxu0 %v4516
    %4824 = vmatpush1.bf16.xpose.msra.mxu0 %v4515
    %4825 = vmatprep.subr.bf16.mxu0 0
    %4826 = vmatpush2.bf16.xpose.msra.mxu0 0
    %4827 = vmatprep.subr.bf16.mxu0 0
    %4828 = vmatpush2.bf16.xpose.msra.mxu0 0
    %4829 = vmatprep.subr.bf16.mxu0 0
    %4830 = vmatpush2.bf16.xpose.msra.mxu0 0
    %4831 = vmatprep.subr.bf16.mxu0 0
    %4832 = vmatpush2.bf16.xpose.msra.mxu0 0
    %4833 = vmatprep.subr.bf16.mxu0 0
    %4834 = vmatpush2.bf16.xpose.msra.mxu0 0
    %4835 = vmatprep.subr.bf16.mxu0 0
    %4836 = vmatpush2.bf16.xpose.msra.mxu0 0
    %4837 = vmatprep.subr.bf16.mxu0 0
    %4838 = vmatpush2.bf16.xpose.msra.mxu0 0
    %4839 = vmatprep.subr.bf16.mxu0 0
    %4840 = vmatpush2.bf16.xpose.msra.mxu0 0
    %4841 = vmatprep.mubr.bf16.mxu0 %v4347
    %4842 = vmatmul.mubr.bf16.gmra.mxu0 %v4346
    %v4843 = vpop.f32.mrf.mxu0
    %v4844 = vadd.f32 %v4796, %v4843
    %v4845 = vpop.f32.mrf.mxu0
    %v4846 = vpop.f32.mrf.mxu0
    %v4847 = vadd.f32 %v4799, %v4846
    %v4848 = vpop.f32.mrf.mxu0
    %4849 = vmatprep.mubr.bf16.mxu0 %v4363
    %4850 = vmatmul.mubr.bf16.gmra.mxu0 %v4362
    %v4851 = vpop.f32.mrf.mxu0
    %v4852 = vadd.f32 %v4804, %v4851
    %v4853 = vpop.f32.mrf.mxu0
    %v4854 = vpop.f32.mrf.mxu0
    %v4855 = vpop.f32.mrf.mxu0
    %4856 = vdwg.mxu0
    %4857 = vmatprep.subr.bf16.mxu0 0
    %4858 = vmatpush1.bf16.xpose.msra.mxu0 0
    %4859 = vmatprep.subr.bf16.mxu0 0
    %4860 = vmatpush1.bf16.xpose.msra.mxu0 0
    %4861 = vmatprep.subr.bf16.mxu0 0
    %4862 = vmatpush1.bf16.xpose.msra.mxu0 0
    %4863 = vmatprep.subr.bf16.mxu0 0
    %4864 = vmatpush1.bf16.xpose.msra.mxu0 0
    %4865 = vmatprep.subr.bf16.mxu0 0
    %4866 = vmatpush1.bf16.xpose.msra.mxu0 0
    %4867 = vmatprep.subr.bf16.mxu0 0
    %4868 = vmatpush1.bf16.xpose.msra.mxu0 0
    %4869 = vmatprep.subr.bf16.mxu0 %v4534
    %4870 = vmatpush1.bf16.xpose.msra.mxu0 %v4533
    %4871 = vmatprep.subr.bf16.mxu0 %v4518
    %4872 = vmatpush1.bf16.xpose.msra.mxu0 %v4517
    %4873 = vmatprep.subr.bf16.mxu0 0
    %4874 = vmatpush2.bf16.xpose.msra.mxu0 0
    %4875 = vmatprep.subr.bf16.mxu0 0
    %4876 = vmatpush2.bf16.xpose.msra.mxu0 0
    %4877 = vmatprep.subr.bf16.mxu0 0
    %4878 = vmatpush2.bf16.xpose.msra.mxu0 0
    %4879 = vmatprep.subr.bf16.mxu0 0
    %4880 = vmatpush2.bf16.xpose.msra.mxu0 0
    %4881 = vmatprep.subr.bf16.mxu0 0
    %4882 = vmatpush2.bf16.xpose.msra.mxu0 0
    %4883 = vmatprep.subr.bf16.mxu0 0
    %4884 = vmatpush2.bf16.xpose.msra.mxu0 0
    %4885 = vmatprep.subr.bf16.mxu0 0
    %4886 = vmatpush2.bf16.xpose.msra.mxu0 0
    %4887 = vmatprep.subr.bf16.mxu0 0
    %4888 = vmatpush2.bf16.xpose.msra.mxu0 0
    %4889 = vmatprep.mubr.bf16.mxu0 %v4349
    %4890 = vmatmul.mubr.bf16.gmra.mxu0 %v4348
    %v4891 = vpop.f32.mrf.mxu0
    %v4892 = vadd.f32 %v4844, %v4891
    %v4893 = vpop.f32.mrf.mxu0
    %v4894 = vpop.f32.mrf.mxu0
    %v4895 = vadd.f32 %v4847, %v4894
    %v4896 = vpop.f32.mrf.mxu0
    %4897 = vmatprep.mubr.bf16.mxu0 %v4365
    %4898 = vmatmul.mubr.bf16.gmra.mxu0 %v4364
    %v4899 = vpop.f32.mrf.mxu0
    %v4900 = vadd.f32 %v4852, %v4899
    %v4901 = vpop.f32.mrf.mxu0
    %v4902 = vpop.f32.mrf.mxu0
    %v4903 = vpop.f32.mrf.mxu0
    %4904 = vdwg.mxu0
    %4905 = vmatprep.subr.bf16.mxu0 0
    %4906 = vmatpush1.bf16.xpose.msra.mxu0 0
    %4907 = vmatprep.subr.bf16.mxu0 0
    %4908 = vmatpush1.bf16.xpose.msra.mxu0 0
    %4909 = vmatprep.subr.bf16.mxu0 0
    %4910 = vmatpush1.bf16.xpose.msra.mxu0 0
    %4911 = vmatprep.subr.bf16.mxu0 0
    %4912 = vmatpush1.bf16.xpose.msra.mxu0 0
    %4913 = vmatprep.subr.bf16.mxu0 0
    %4914 = vmatpush1.bf16.xpose.msra.mxu0 0
    %4915 = vmatprep.subr.bf16.mxu0 0
    %4916 = vmatpush1.bf16.xpose.msra.mxu0 0
    %4917 = vmatprep.subr.bf16.mxu0 %v4536
    %4918 = vmatpush1.bf16.xpose.msra.mxu0 %v4535
    %4919 = vmatprep.subr.bf16.mxu0 %v4520
    %4920 = vmatpush1.bf16.xpose.msra.mxu0 %v4519
    %4921 = vmatprep.subr.bf16.mxu0 0
    %4922 = vmatpush2.bf16.xpose.msra.mxu0 0
    %4923 = vmatprep.subr.bf16.mxu0 0
    %4924 = vmatpush2.bf16.xpose.msra.mxu0 0
    %4925 = vmatprep.subr.bf16.mxu0 0
    %4926 = vmatpush2.bf16.xpose.msra.mxu0 0
    %4927 = vmatprep.subr.bf16.mxu0 0
    %4928 = vmatpush2.bf16.xpose.msra.mxu0 0
    %4929 = vmatprep.subr.bf16.mxu0 0
    %4930 = vmatpush2.bf16.xpose.msra.mxu0 0
    %4931 = vmatprep.subr.bf16.mxu0 0
    %4932 = vmatpush2.bf16.xpose.msra.mxu0 0
    %4933 = vmatprep.subr.bf16.mxu0 0
    %4934 = vmatpush2.bf16.xpose.msra.mxu0 0
    %4935 = vmatprep.subr.bf16.mxu0 0
    %4936 = vmatpush2.bf16.xpose.msra.mxu0 0
    %4937 = vmatprep.mubr.bf16.mxu0 %v4351
    %4938 = vmatmul.mubr.bf16.gmra.mxu0 %v4350
    %v4939 = vpop.f32.mrf.mxu0
    %v4940 = vadd.f32 %v4892, %v4939
    %v4941 = vpop.f32.mrf.mxu0
    %v4942 = vpop.f32.mrf.mxu0
    %v4943 = vadd.f32 %v4895, %v4942
    %v4944 = vpop.f32.mrf.mxu0
    %4945 = vmatprep.mubr.bf16.mxu0 %v4367
    %4946 = vmatmul.mubr.bf16.gmra.mxu0 %v4366
    %v4947 = vpop.f32.mrf.mxu0
    %v4948 = vadd.f32 %v4900, %v4947
    %v4949 = vpop.f32.mrf.mxu0
    %v4950 = vpop.f32.mrf.mxu0
    %v4951 = vpop.f32.mrf.mxu0
    %4952 = vdwg.mxu0
    %v4953 = vadd.f32 %v3591, %v4940
    %v4954 = vadd.f32 %v3592, %v4943
    %v4955 = vadd.f32 %v3593, %v4948
    %s4956 = scalar_lea.vmem %s13, 1
    %v4957 = vld [vmem:[%s4956] sm:$0x1]
    %s4958 = scalar_lea.vmem %s14, 1
    %v4959 = vld [vmem:[%s4958] sm:$0x1]
    %v4960 = vsel %vm543, %v4953, 0.0
    %4961 = vadd.xlane.f32.xlu0 %v4960
    %v4962 = vpop.xlane.xlu0 %4961
    %v4963 = vsel %vm543, %v4954, 0.0
    %4964 = vadd.xlane.f32.xlu0 %v4963
    %v4965 = vpop.xlane.xlu0 %4964
    %v4966 = vsel %vm1310, %v4955, 0.0
    %4967 = vadd.xlane.f32.xlu0 %v4966
    %v4968 = vpop.xlane.xlu0 %4967
    %v4969 = vmul.f32 %v4962, %v1314
    %v4970 = vmul.f32 %v4965, %v1314
    %v4971 = vmul.f32 %v4968, %v1314
    %v4972 = vsub.f32 %v4953, %v4969
    %v4973 = vsub.f32 %v4954, %v4970
    %v4974 = vsub.f32 %v4955, %v4971
    %v4975 = vmul.f32 %v4972, %v4972
    %v4976 = vmul.f32 %v4973, %v4973
    %v4977 = vmul.f32 %v4974, %v4974
    %v4978 = vsel %vm543, %v4975, 0.0
    %4979 = vadd.xlane.f32.xlu0 %v4978
    %v4980 = vpop.xlane.xlu0 %4979
    %v4981 = vsel %vm543, %v4976, 0.0
    %4982 = vadd.xlane.f32.xlu0 %v4981
    %v4983 = vpop.xlane.xlu0 %4982
    %v4984 = vsel %vm1310, %v4977, 0.0
    %4985 = vadd.xlane.f32.xlu0 %v4984
    %v4986 = vpop.xlane.xlu0 %4985
    %v4987 = vmul.f32 %v4980, %v1314
    %v4988 = vmul.f32 %v4983, %v1314
    %v4989 = vmul.f32 %v4986, %v1314
    %v4990 = vadd.f32 %v4987, 1e-05
    %v4991 = vadd.f32 %v4988, 1e-05
    %v4992 = vadd.f32 %v4989, 1e-05
    %v4993 = vrsqrt.pop %v4990
    %v4994 = vrsqrt.pop %v4991
    %v4995 = vrsqrt.pop %v4992
    %v4996 = vmul.f32 %v4972, %v4993
    %v4997 = vmul.f32 %v4973, %v4994
    %v4998 = vmul.f32 %v4974, %v4995
    %v5000 = vlaneseq
    %v5001 = vshrl.u32 %v5000, 7
    %v5002 = vsub.s32 0, %v5001
    %v5003 = vrot.slane %v4957, %v5002
    %v5005 = vmul.f32 %v4996, %v5003
    %v5006 = vmul.f32 %v4997, %v5003
    %v5007 = vmul.f32 %v4998, %v5003
    %v5009 = vlaneseq
    %v5010 = vshrl.u32 %v5009, 7
    %v5011 = vsub.s32 0, %v5010
    %v5012 = vrot.slane %v4959, %v5011
    %v5014 = vadd.f32 %v5005, %v5012
    %v5015 = vadd.f32 %v5006, %v5012
    %v5016 = vadd.f32 %v5007, %v5012
    %v5018 = vsel %vm609, %v412, 0
    %v5021 = vsel %vm640, %v5016, 0
    %5023 = vmatprep.subr.mxu0 0.0
    %5024 = vmatpush1.msra.mxu0 0.0
    %5025 = vmatprep.subr.mxu0 0.0
    %5026 = vmatpush1.msra.mxu0 0.0
    %5027 = vmatprep.subr.mxu0 0.0
    %5028 = vmatpush1.msra.mxu0 0.0
    %5029 = vmatprep.subr.mxu0 0.0
    %5030 = vmatpush1.msra.mxu0 0.0
    %5031 = vmatprep.subr.mxu0 0.0
    %5032 = vmatpush1.msra.mxu0 0.0
    %5033 = vmatprep.subr.mxu0 0.0
    %5034 = vmatpush1.msra.mxu0 0.0
    %5035 = vmatprep.subr.mxu0 0.0
    %5036 = vmatpush1.msra.mxu0 0.0
    %5037 = vmatprep.subr.mxu0 0.0
    %5038 = vmatpush1.msra.mxu0 0.0
    %5039 = vmatprep.subr.mxu0 0.0
    %5040 = vmatpush1.msra.mxu0 0.0
    %5041 = vmatprep.subr.mxu0 0.0
    %5042 = vmatpush1.msra.mxu0 0.0
    %5043 = vmatprep.subr.mxu0 0.0
    %5044 = vmatpush1.msra.mxu0 0.0
    %5045 = vmatprep.subr.mxu0 0.0
    %5046 = vmatpush1.msra.mxu0 0.0
    %5047 = vmatprep.subr.mxu0 0.0
    %5048 = vmatpush1.msra.mxu0 0.0
    %5049 = vmatprep.subr.mxu0 0.0
    %5050 = vmatpush1.msra.mxu0 %v5021
    %5051 = vmatprep.subr.mxu0 0.0
    %5052 = vmatpush1.msra.mxu0 %v5015
    %5053 = vmatprep.subr.mxu0 0.0
    %5054 = vmatpush1.msra.mxu0 %v5014
    %5055 = vmatprep.subr.mxu0 0.0
    %5056 = vmatpush2.msra.mxu0 0.0
    %5057 = vmatprep.subr.mxu0 0.0
    %5058 = vmatpush2.msra.mxu0 0.0
    %5059 = vmatprep.subr.mxu0 0.0
    %5060 = vmatpush2.msra.mxu0 0.0
    %5061 = vmatprep.subr.mxu0 0.0
    %5062 = vmatpush2.msra.mxu0 0.0
    %5063 = vmatprep.subr.mxu0 0.0
    %5064 = vmatpush2.msra.mxu0 0.0
    %5065 = vmatprep.subr.mxu0 0.0
    %5066 = vmatpush2.msra.mxu0 0.0
    %5067 = vmatprep.subr.mxu0 0.0
    %5068 = vmatpush2.msra.mxu0 0.0
    %5069 = vmatprep.subr.mxu0 0.0
    %5070 = vmatpush2.msra.mxu0 0.0
    %5071 = vmatprep.subr.mxu0 0.0
    %5072 = vmatpush2.msra.mxu0 0.0
    %5073 = vmatprep.subr.mxu0 0.0
    %5074 = vmatpush2.msra.mxu0 0.0
    %5075 = vmatprep.subr.mxu0 0.0
    %5076 = vmatpush2.msra.mxu0 0.0
    %5077 = vmatprep.subr.mxu0 0.0
    %5078 = vmatpush2.msra.mxu0 0.0
    %5079 = vmatprep.subr.mxu0 0.0
    %5080 = vmatpush2.msra.mxu0 0.0
    %5081 = vmatprep.subr.mxu0 0.0
    %5082 = vmatpush2.msra.mxu0 0.0
    %5083 = vmatprep.subr.mxu0 0.0
    %5084 = vmatpush2.msra.mxu0 0.0
    %5085 = vmatprep.subr.mxu0 0.0
    %5086 = vmatpush2.msra.mxu0 0.0
    %5087 = vmatprep.mubr.f32.mxu0 0.0
    %5088 = vmatmul.mubr.f32.gmra.mxu0 %v5018
    %v5089 = vpop.f32.mrf.mxu0
    %v5090 = vadd.f32 0.0, %v5089
    %v5091 = vpop.f32.mrf.mxu0
    %5092 = vdwg.mxu0
    %v5093 = vld [vmem:[#allocation13] sm:$0xff]
    %v5094 = vld [vmem:[#allocation13 + $0x8] sm:$0xff]
    %v5095 = vld [vmem:[#allocation13 + $0x10] sm:$0xff]
    %v5096 = vld [vmem:[#allocation13 + $0x18] sm:$0xff]
    %v5097 = vld [vmem:[%s16] sm:$0x1]
    %v5099 = vlaneseq
    %v5100 = vshrl.u32 %v5099, 7
    %v5101 = vsub.s32 0, %v5100
    %v5102 = vrot.slane %v5097, %v5101
    %v5105 = vsel %vm543, %v5090, 0
    %5107 = vmatprep.subr.mxu0 0.0
    %5108 = vmatpush1.msra.mxu0 0.0
    %5109 = vmatprep.subr.mxu0 0.0
    %5110 = vmatpush1.msra.mxu0 0.0
    %5111 = vmatprep.subr.mxu0 0.0
    %5112 = vmatpush1.msra.mxu0 0.0
    %5113 = vmatprep.subr.mxu0 0.0
    %5114 = vmatpush1.msra.mxu0 0.0
    %5115 = vmatprep.subr.mxu0 0.0
    %5116 = vmatpush1.msra.mxu0 0.0
    %5117 = vmatprep.subr.mxu0 0.0
    %5118 = vmatpush1.msra.mxu0 0.0
    %5119 = vmatprep.subr.mxu0 0.0
    %5120 = vmatpush1.msra.mxu0 0.0
    %5121 = vmatprep.subr.mxu0 0.0
    %5122 = vmatpush1.msra.mxu0 0.0
    %5123 = vmatprep.subr.mxu0 0.0
    %5124 = vmatpush1.msra.mxu0 0.0
    %5125 = vmatprep.subr.mxu0 0.0
    %5126 = vmatpush1.msra.mxu0 0.0
    %5127 = vmatprep.subr.mxu0 0.0
    %5128 = vmatpush1.msra.mxu0 0.0
    %5129 = vmatprep.subr.mxu0 0.0
    %5130 = vmatpush1.msra.mxu0 0.0
    %5131 = vmatprep.subr.mxu0 0.0
    %5132 = vmatpush1.msra.mxu0 %v5096
    %5133 = vmatprep.subr.mxu0 0.0
    %5134 = vmatpush1.msra.mxu0 %v5095
    %5135 = vmatprep.subr.mxu0 0.0
    %5136 = vmatpush1.msra.mxu0 %v5094
    %5137 = vmatprep.subr.mxu0 0.0
    %5138 = vmatpush1.msra.mxu0 %v5093
    %5139 = vmatprep.subr.mxu0 0.0
    %5140 = vmatpush2.msra.mxu0 0.0
    %5141 = vmatprep.subr.mxu0 0.0
    %5142 = vmatpush2.msra.mxu0 0.0
    %5143 = vmatprep.subr.mxu0 0.0
    %5144 = vmatpush2.msra.mxu0 0.0
    %5145 = vmatprep.subr.mxu0 0.0
    %5146 = vmatpush2.msra.mxu0 0.0
    %5147 = vmatprep.subr.mxu0 0.0
    %5148 = vmatpush2.msra.mxu0 0.0
    %5149 = vmatprep.subr.mxu0 0.0
    %5150 = vmatpush2.msra.mxu0 0.0
    %5151 = vmatprep.subr.mxu0 0.0
    %5152 = vmatpush2.msra.mxu0 0.0
    %5153 = vmatprep.subr.mxu0 0.0
    %5154 = vmatpush2.msra.mxu0 0.0
    %5155 = vmatprep.subr.mxu0 0.0
    %5156 = vmatpush2.msra.mxu0 0.0
    %5157 = vmatprep.subr.mxu0 0.0
    %5158 = vmatpush2.msra.mxu0 0.0
    %5159 = vmatprep.subr.mxu0 0.0
    %5160 = vmatpush2.msra.mxu0 0.0
    %5161 = vmatprep.subr.mxu0 0.0
    %5162 = vmatpush2.msra.mxu0 0.0
    %5163 = vmatprep.subr.mxu0 0.0
    %5164 = vmatpush2.msra.mxu0 0.0
    %5165 = vmatprep.subr.mxu0 0.0
    %5166 = vmatpush2.msra.mxu0 0.0
    %5167 = vmatprep.subr.mxu0 0.0
    %5168 = vmatpush2.msra.mxu0 0.0
    %5169 = vmatprep.subr.mxu0 0.0
    %5170 = vmatpush2.msra.mxu0 0.0
    %5171 = vmatprep.mubr.f32.mxu0 0.0
    %5172 = vmatmul.mubr.f32.gmra.mxu0 %v5105
    %v5173 = vpop.f32.mrf.mxu0
    %v5174 = vadd.f32 %v5102, %v5173
    %v5175 = vpop.f32.mrf.mxu0
    %5176 = vdwg.mxu0
    %5177 = vst [vmem:[#allocation14] sm:$0xf] %v5174
    // Predicated region
    $region98: #{tpu_custom_call.1} parent=1 // pred_check
      _
    $region99: #{tpu_custom_call.1} parent=1 // pred_check_branch
      %5179 = sbr.rel (0) target = $region101
    $region100: #{tpu_custom_call.1} parent=1 // pred_region
      %s5181 = ssub.s32 64, 64
      %5182 = vsyncadd [#allocation4], %s5181
      %s5184 = sshll.u32 [#allocation14], 4
      %s5185 = int_to_ptr.vmem [resolvable:$true] %s5184
      %5187 = dma.vmem_to_hbm [thread:$0]  %s5185, 64, %s17, [#allocation4]
    $region101: #{tpu_custom_call.1} parent=1 // pred_fallthru
      _
    // Predicated region
    $region102: #{tpu_custom_call.1} parent=1 // pred_check
      _
    $region103: #{tpu_custom_call.1} parent=1 // pred_check_branch
      %5189 = sbr.rel (0) target = $region105
    $region104: #{tpu_custom_call.1} parent=1 // pred_region
      %5190 = dma.done [#allocation4], 64
    $region105: #{tpu_custom_call.1} parent=1 // pred_fallthru
      _
    %5191 = vsyncpa [#allocation3], 1
    %5192 = vsyncpa [#allocation6], 1
    %5193 = vsyncpa [#allocation9], 1
    %5194 = vsyncpa [#allocation12], 1
    %5195 = vsyncpa [#allocation4], 1

// kernel: tpu_custom_call.1
$region0: #{tpu_custom_call.1}
  #allocation0 [shape = 'u32[]', space=smem, size = 0x4, offset = 0x4, fixed_abs, tag = 'smem constant byte address 0x4 - core index']
  #allocation1 [shape = 'u32[144,128]{1,0:T(1,128)}', space=vmem, size = 0x12000, scoped, tag = 'internal scratch']
  %s0 = inlined_call_operand.vmem [shape: f32[20,7], index: 0, kind: input, shape index: {}]
  %s1 = inlined_call_operand.hbm [shape: f32[7,32], index: 1, kind: input, shape index: {}]
  %s2 = inlined_call_operand.hbm [shape: f32[1,32], index: 2, kind: input, shape index: {}]
  %s3 = inlined_call_operand.vmem [shape: bf16[2,32,96], index: 3, kind: input, shape index: {}]
  %s4 = inlined_call_operand.vmem [shape: f32[2,1,96], index: 4, kind: input, shape index: {}]
  %s5 = inlined_call_operand.hbm [shape: bf16[2,32,32], index: 5, kind: input, shape index: {}]
  %s6 = inlined_call_operand.vmem [shape: f32[2,1,32], index: 6, kind: input, shape index: {}]
  %s7 = inlined_call_operand.hbm [shape: bf16[2,32,2048], index: 7, kind: input, shape index: {}]
  %s8 = inlined_call_operand.hbm [shape: f32[2,1,2048], index: 8, kind: input, shape index: {}]
  %s9 = inlined_call_operand.hbm [shape: bf16[2,32,2048], index: 9, kind: input, shape index: {}]
  %s10 = inlined_call_operand.vmem [shape: f32[2,1,32], index: 10, kind: input, shape index: {}]
  %s11 = inlined_call_operand.vmem [shape: f32[2,1,32], index: 11, kind: input, shape index: {}]
  %s12 = inlined_call_operand.vmem [shape: f32[2,1,32], index: 12, kind: input, shape index: {}]
  %s13 = inlined_call_operand.vmem [shape: f32[2,1,32], index: 13, kind: input, shape index: {}]
  %s14 = inlined_call_operand.vmem [shape: f32[2,1,32], index: 14, kind: input, shape index: {}]
  %s15 = inlined_call_operand.hbm [shape: f32[32,128], index: 15, kind: input, shape index: {}]
  %s16 = inlined_call_operand.vmem [shape: f32[1,128], index: 16, kind: input, shape index: {}]
  %s17 = inlined_call_operand.hbm [shape: f32[4,128], index: 17, kind: output, shape index: {}]
  %s18 = sld [smem:[#allocation0]]
  $region106: #{tpu_custom_call.1} parent=0
    _
  %s20 = ssub.s32 1, %s18
  %s21 = scalar_select 0, %s20, %s18
  $region1: #{tpu_custom_call.1} parent=0
    #allocation2 [shape = 'u8[4096]{0}', space=vmem, size = 0x1000, scoped, tag = 'input window, operand 1, single buffered']
    #allocation3 [shape = 's32[1]{0}', space=sflag, size = 0x4, scoped, tag = 'scoped memory for tpu_custom_call.1']
    #allocation4 [shape = 's32[1]{0}', space=sflag, size = 0x4, scoped, tag = 'scoped memory for tpu_custom_call.1']
    #allocation5 [shape = 'u8[512]{0}', space=vmem, size = 0x400, scoped, tag = 'input window, operand 2, single buffered']
    #allocation6 [shape = 's32[1]{0}', space=sflag, size = 0x4, scoped, tag = 'scoped memory for tpu_custom_call.1']
    #allocation7 [shape = 'u8[16384]{0}', space=vmem, size = 0x4000, scoped, tag = 'input window, operand 5, single buffered']
    #allocation8 [shape = 'u8[262144]{0}', space=vmem, size = 0x40000, scoped, tag = 'input window, operand 7, single buffered']
    #allocation9 [shape = 's32[1]{0}', space=sflag, size = 0x4, scoped, tag = 'scoped memory for tpu_custom_call.1']
    #allocation10 [shape = 'u8[16384]{0}', space=vmem, size = 0x4000, scoped, tag = 'input window, operand 8, single buffered']
    #allocation11 [shape = 'u8[262144]{0}', space=vmem, size = 0x40000, scoped, tag = 'input window, operand 9, single buffered']
    #allocation12 [shape = 's32[1]{0}', space=sflag, size = 0x4, scoped, tag = 'scoped memory for tpu_custom_call.1']
    #allocation13 [shape = 'u8[16384]{0}', space=vmem, size = 0x4000, scoped, tag = 'input window, operand 15, single buffered']
    #allocation14 [shape = 'u8[2048]{0}', space=vmem, size = 0x800, scoped, tag = 'output window, operand 0, single buffered']
    %22 = vsyncpa [#allocation3], 0
    %23 = vsyncpa [#allocation6], 0
    %24 = vsyncpa [#allocation9], 0
    %25 = vsyncpa [#allocation12], 0
    %26 = vsyncpa [#allocation4], 0
    // Predicated region
    $region2: #{tpu_custom_call.1} parent=1 // pred_check
      _
    $region3: #{tpu_custom_call.1} parent=1 // pred_check_branch
      %28 = sbr.rel (0) target = $region5
    $region4: #{tpu_custom_call.1} parent=1 // pred_region
      _
    $region5: #{tpu_custom_call.1} parent=1 // pred_fallthru
      _
    // Predicated region
    $region6: #{tpu_custom_call.1} parent=1 // pred_check
      _
    $region7: #{tpu_custom_call.1} parent=1 // pred_check_branch
      %30 = sbr.rel (0) target = $region9
    $region8: #{tpu_custom_call.1} parent=1 // pred_region
      %s32 = ssub.s32 128, 128
      %33 = vsyncadd [#allocation3], %s32
      %s35 = sshll.u32 [#allocation2], 4
      %s36 = int_to_ptr.vmem [resolvable:$true] %s35
      %38 = dma.hbm_to_vmem [thread:$0]  %s1, 128, %s36, [#allocation3]
    $region9: #{tpu_custom_call.1} parent=1 // pred_fallthru
      _
    // Predicated region
    $region10: #{tpu_custom_call.1} parent=1 // pred_check
      _
    $region11: #{tpu_custom_call.1} parent=1 // pred_check_branch
      %40 = sbr.rel (0) target = $region13
    $region12: #{tpu_custom_call.1} parent=1 // pred_region
      %s42 = ssub.s32 16, 16
      %43 = vsyncadd [#allocation6], %s42
      %s45 = sshll.u32 [#allocation5], 4
      %s46 = int_to_ptr.vmem [resolvable:$true] %s45
      %48 = dma.hbm_to_vmem [thread:$0]  %s2, 16, %s46, [#allocation6]
    $region13: #{tpu_custom_call.1} parent=1 // pred_fallthru
      _
    // Predicated region
    $region14: #{tpu_custom_call.1} parent=1 // pred_check
      _
    $region15: #{tpu_custom_call.1} parent=1 // pred_check_branch
      %50 = sbr.rel (0) target = $region17
    $region16: #{tpu_custom_call.1} parent=1 // pred_region
      _
    $region17: #{tpu_custom_call.1} parent=1 // pred_fallthru
      _
    // Predicated region
    $region18: #{tpu_custom_call.1} parent=1 // pred_check
      _
    $region19: #{tpu_custom_call.1} parent=1 // pred_check_branch
      %52 = sbr.rel (0) target = $region21
    $region20: #{tpu_custom_call.1} parent=1 // pred_region
      _
    $region21: #{tpu_custom_call.1} parent=1 // pred_fallthru
      _
    // Predicated region
    $region22: #{tpu_custom_call.1} parent=1 // pred_check
      _
    $region23: #{tpu_custom_call.1} parent=1 // pred_check_branch
      %54 = sbr.rel (0) target = $region25
    $region24: #{tpu_custom_call.1} parent=1 // pred_region
      %s56 = ssub.s32 512, 512
      %57 = vsyncadd [#allocation6], %s56
      %s58 = sshll.u32 [#allocation7], 4
      %s59 = int_to_ptr.vmem [resolvable:$true] %s58
      %64 = dma.hbm_to_vmem [thread:$0]  %s5, 512, %s59, [#allocation6], 64, 64, 4
    $region25: #{tpu_custom_call.1} parent=1 // pred_fallthru
      _
    // Predicated region
    $region26: #{tpu_custom_call.1} parent=1 // pred_check
      _
    $region27: #{tpu_custom_call.1} parent=1 // pred_check_branch
      %66 = sbr.rel (0) target = $region29
    $region28: #{tpu_custom_call.1} parent=1 // pred_region
      _
    $region29: #{tpu_custom_call.1} parent=1 // pred_fallthru
      _
    // Predicated region
    $region30: #{tpu_custom_call.1} parent=1 // pred_check
      _
    $region31: #{tpu_custom_call.1} parent=1 // pred_check_branch
      %68 = sbr.rel (0) target = $region33
    $region32: #{tpu_custom_call.1} parent=1 // pred_region
      %s70 = ssub.s32 8192, 8192
      %71 = vsyncadd [#allocation9], %s70
      %s72 = sshll.u32 [#allocation8], 4
      %s73 = int_to_ptr.vmem [resolvable:$true] %s72
      %78 = dma.hbm_to_vmem [thread:$0]  %s7, 8192, %s73, [#allocation9], 1024, 1024, 64
    $region33: #{tpu_custom_call.1} parent=1 // pred_fallthru
      _
    // Predicated region
    $region34: #{tpu_custom_call.1} parent=1 // pred_check
      _
    $region35: #{tpu_custom_call.1} parent=1 // pred_check_branch
      %80 = sbr.rel (0) target = $region37
    $region36: #{tpu_custom_call.1} parent=1 // pred_region
      %s82 = ssub.s32 512, 512
      %83 = vsyncadd [#allocation9], %s82
      %s84 = sshll.u32 [#allocation10], 4
      %s85 = int_to_ptr.vmem [resolvable:$true] %s84
      %90 = dma.hbm_to_vmem [thread:$0]  %s8, 512, %s85, [#allocation9], 256, 256, 16
    $region37: #{tpu_custom_call.1} parent=1 // pred_fallthru
      _
    // Predicated region
    $region38: #{tpu_custom_call.1} parent=1 // pred_check
      _
    $region39: #{tpu_custom_call.1} parent=1 // pred_check_branch
      %92 = sbr.rel (0) target = $region41
    $region40: #{tpu_custom_call.1} parent=1 // pred_region
      %s94 = ssub.s32 8192, 8192
      %95 = vsyncadd [#allocation12], %s94
      %s96 = sshll.u32 [#allocation11], 4
      %s97 = int_to_ptr.vmem [resolvable:$true] %s96
      %102 = dma.hbm_to_vmem [thread:$0]  %s9, 8192, %s97, [#allocation12], 1024, 1024, 64
    $region41: #{tpu_custom_call.1} parent=1 // pred_fallthru
      _
    // Predicated region
    $region42: #{tpu_custom_call.1} parent=1 // pred_check
      _
    $region43: #{tpu_custom_call.1} parent=1 // pred_check_branch
      %104 = sbr.rel (0) target = $region45
    $region44: #{tpu_custom_call.1} parent=1 // pred_region
      _
    $region45: #{tpu_custom_call.1} parent=1 // pred_fallthru
      _
    // Predicated region
    $region46: #{tpu_custom_call.1} parent=1 // pred_check
      _
    $region47: #{tpu_custom_call.1} parent=1 // pred_check_branch
      %106 = sbr.rel (0) target = $region49
    $region48: #{tpu_custom_call.1} parent=1 // pred_region
      _
    $region49: #{tpu_custom_call.1} parent=1 // pred_fallthru
      _
    // Predicated region
    $region50: #{tpu_custom_call.1} parent=1 // pred_check
      _
    $region51: #{tpu_custom_call.1} parent=1 // pred_check_branch
      %108 = sbr.rel (0) target = $region53
    $region52: #{tpu_custom_call.1} parent=1 // pred_region
      _
    $region53: #{tpu_custom_call.1} parent=1 // pred_fallthru
      _
    // Predicated region
    $region54: #{tpu_custom_call.1} parent=1 // pred_check
      _
    $region55: #{tpu_custom_call.1} parent=1 // pred_check_branch
      %110 = sbr.rel (0) target = $region57
    $region56: #{tpu_custom_call.1} parent=1 // pred_region
      _
    $region57: #{tpu_custom_call.1} parent=1 // pred_fallthru
      _
    // Predicated region
    $region58: #{tpu_custom_call.1} parent=1 // pred_check
      _
    $region59: #{tpu_custom_call.1} parent=1 // pred_check_branch
      %112 = sbr.rel (0) target = $region61
    $region60: #{tpu_custom_call.1} parent=1 // pred_region
      _
    $region61: #{tpu_custom_call.1} parent=1 // pred_fallthru
      _
    // Predicated region
    $region62: #{tpu_custom_call.1} parent=1 // pred_check
      _
    $region63: #{tpu_custom_call.1} parent=1 // pred_check_branch
      %114 = sbr.rel (0) target = $region65
    $region64: #{tpu_custom_call.1} parent=1 // pred_region
      %s116 = ssub.s32 512, 512
      %117 = vsyncadd [#allocation12], %s116
      %s118 = sshll.u32 [#allocation13], 4
      %s119 = int_to_ptr.vmem [resolvable:$true] %s118
      %124 = dma.hbm_to_vmem [thread:$0]  %s15, 512, %s119, [#allocation12], 128, 128, 8
    $region65: #{tpu_custom_call.1} parent=1 // pred_fallthru
      _
    // Predicated region
    $region66: #{tpu_custom_call.1} parent=1 // pred_check
      _
    $region67: #{tpu_custom_call.1} parent=1 // pred_check_branch
      %126 = sbr.rel (0) target = $region69
    $region68: #{tpu_custom_call.1} parent=1 // pred_region
      _
    $region69: #{tpu_custom_call.1} parent=1 // pred_fallthru
      _
    // Predicated region
    $region70: #{tpu_custom_call.1} parent=1 // pred_check
      _
    $region71: #{tpu_custom_call.1} parent=1 // pred_check_branch
      %128 = sbr.rel (0) target = $region73
    $region72: #{tpu_custom_call.1} parent=1 // pred_region
      %129 = dma.done [#allocation3], 128
    $region73: #{tpu_custom_call.1} parent=1 // pred_fallthru
      _
    // Predicated region
    $region74: #{tpu_custom_call.1} parent=1 // pred_check
      _
    $region75: #{tpu_custom_call.1} parent=1 // pred_check_branch
      %131 = sbr.rel (0) target = $region77
    $region76: #{tpu_custom_call.1} parent=1 // pred_region
      %132 = dma.done [#allocation6], 16
    $region77: #{tpu_custom_call.1} parent=1 // pred_fallthru
      _
    // Predicated region
    $region78: #{tpu_custom_call.1} parent=1 // pred_check
      _
    $region79: #{tpu_custom_call.1} parent=1 // pred_check_branch
      %134 = sbr.rel (0) target = $region81
    $region80: #{tpu_custom_call.1} parent=1 // pred_region
      %135 = dma.done [#allocation6], 512
    $region81: #{tpu_custom_call.1} parent=1 // pred_fallthru
      _
    // Predicated region
    $region82: #{tpu_custom_call.1} parent=1 // pred_check
      _
    $region83: #{tpu_custom_call.1} parent=1 // pred_check_branch
      %137 = sbr.rel (0) target = $region85
    $region84: #{tpu_custom_call.1} parent=1 // pred_region
      %138 = dma.done [#allocation9], 8192
    $region85: #{tpu_custom_call.1} parent=1 // pred_fallthru
      _
    // Predicated region
    $region86: #{tpu_custom_call.1} parent=1 // pred_check
      _
    $region87: #{tpu_custom_call.1} parent=1 // pred_check_branch
      %140 = sbr.rel (0) target = $region89
    $region88: #{tpu_custom_call.1} parent=1 // pred_region
      %141 = dma.done [#allocation9], 512
    $region89: #{tpu_custom_call.1} parent=1 // pred_fallthru
      _
    // Predicated region
    $region90: #{tpu_custom_call.1} parent=1 // pred_check
      _
    $region91: #{tpu_custom_call.1} parent=1 // pred_check_branch
      %143 = sbr.rel (0) target = $region93
    $region92: #{tpu_custom_call.1} parent=1 // pred_region
      %144 = dma.done [#allocation12], 8192
    $region93: #{tpu_custom_call.1} parent=1 // pred_fallthru
      _
    // Predicated region
    $region94: #{tpu_custom_call.1} parent=1 // pred_check
      _
    $region95: #{tpu_custom_call.1} parent=1 // pred_check_branch
      %146 = sbr.rel (0) target = $region97
    $region96: #{tpu_custom_call.1} parent=1 // pred_region
      %147 = dma.done [#allocation12], 512
    $region97: #{tpu_custom_call.1} parent=1 // pred_fallthru
      _
    %v149 = vlaneseq
    %v150 = vshrl.u32 %v149, 7
    %v151 = vadd.s32 %v150, 8
    %v152 = vadd.s32 %v150, 16
    %v153 = vadd.s32 %v150, 24
    %v154 = vadd.s32 %v150, 32
    %v155 = vadd.s32 %v150, 40
    %v156 = vadd.s32 %v150, 48
    %v157 = vadd.s32 %v150, 56
    %v158 = vadd.s32 %v150, 64
    %v159 = vadd.s32 %v150, 72
    %vm160 = vcmp.ge.s32.totalorder %v150, 20
    %vm161 = vcmp.ge.s32.totalorder %v151, 20
    %vm162 = vcmp.ge.s32.totalorder %v152, 20
    %vm163 = vcmp.ge.s32.totalorder %v153, 20
    %vm164 = vcmp.ge.s32.totalorder %v154, 20
    %vm165 = vcmp.ge.s32.totalorder %v155, 20
    %vm166 = vcmp.ge.s32.totalorder %v156, 20
    %vm167 = vcmp.ge.s32.totalorder %v157, 20
    %vm168 = vcmp.ge.s32.totalorder %v158, 20
    %vm169 = vcmp.ge.s32.totalorder %v159, 20
    %v170 = vsel %vm160, 1, 0
    %v171 = vsel %vm161, 1, 0
    %v172 = vsel %vm162, 1, 0
    %v173 = vsel %vm163, 1, 0
    %v174 = vsel %vm164, 1, 0
    %v175 = vsel %vm165, 1, 0
    %v176 = vsel %vm166, 1, 0
    %v177 = vsel %vm167, 1, 0
    %v178 = vsel %vm168, 1, 0
    %v179 = vsel %vm169, 1, 0
    %vm180 = vcmp.ge.s32.totalorder %v150, 40
    %vm181 = vcmp.ge.s32.totalorder %v151, 40
    %vm182 = vcmp.ge.s32.totalorder %v152, 40
    %vm183 = vcmp.ge.s32.totalorder %v153, 40
    %vm184 = vcmp.ge.s32.totalorder %v154, 40
    %vm185 = vcmp.ge.s32.totalorder %v155, 40
    %vm186 = vcmp.ge.s32.totalorder %v156, 40
    %vm187 = vcmp.ge.s32.totalorder %v157, 40
    %vm188 = vcmp.ge.s32.totalorder %v158, 40
    %vm189 = vcmp.ge.s32.totalorder %v159, 40
    %v190 = vsel %vm180, 1, 0
    %v191 = vsel %vm181, 1, 0
    %v192 = vsel %vm182, 1, 0
    %v193 = vsel %vm183, 1, 0
    %v194 = vsel %vm184, 1, 0
    %v195 = vsel %vm185, 1, 0
    %v196 = vsel %vm186, 1, 0
    %v197 = vsel %vm187, 1, 0
    %v198 = vsel %vm188, 1, 0
    %v199 = vsel %vm189, 1, 0
    %v200 = vadd.s32 %v170, %v190
    %v201 = vadd.s32 %v171, %v191
    %v202 = vadd.s32 %v172, %v192
    %v203 = vadd.s32 %v173, %v193
    %v204 = vadd.s32 %v174, %v194
    %v205 = vadd.s32 %v175, %v195
    %v206 = vadd.s32 %v176, %v196
    %v207 = vadd.s32 %v177, %v197
    %v208 = vadd.s32 %v178, %v198
    %v209 = vadd.s32 %v179, %v199
    %vm210 = vcmp.ge.s32.totalorder %v150, 60
    %vm211 = vcmp.ge.s32.totalorder %v151, 60
    %vm212 = vcmp.ge.s32.totalorder %v152, 60
    %vm213 = vcmp.ge.s32.totalorder %v153, 60
    %vm214 = vcmp.ge.s32.totalorder %v154, 60
    %vm215 = vcmp.ge.s32.totalorder %v155, 60
    %vm216 = vcmp.ge.s32.totalorder %v156, 60
    %vm217 = vcmp.ge.s32.totalorder %v157, 60
    %vm218 = vcmp.ge.s32.totalorder %v158, 60
    %vm219 = vcmp.ge.s32.totalorder %v159, 60
    %v220 = vsel %vm210, 1, 0
    %v221 = vsel %vm211, 1, 0
    %v222 = vsel %vm212, 1, 0
    %v223 = vsel %vm213, 1, 0
    %v224 = vsel %vm214, 1, 0
    %v225 = vsel %vm215, 1, 0
    %v226 = vsel %vm216, 1, 0
    %v227 = vsel %vm217, 1, 0
    %v228 = vsel %vm218, 1, 0
    %v229 = vsel %vm219, 1, 0
    %v230 = vadd.s32 %v200, %v220
    %v231 = vadd.s32 %v201, %v221
    %v232 = vadd.s32 %v202, %v222
    %v233 = vadd.s32 %v203, %v223
    %v234 = vadd.s32 %v204, %v224
    %v235 = vadd.s32 %v205, %v225
    %v236 = vadd.s32 %v206, %v226
    %v237 = vadd.s32 %v207, %v227
    %v238 = vadd.s32 %v208, %v228
    %v239 = vadd.s32 %v209, %v229
    %v240 = vlaneseq
    %v241 = vand.u32 %v240, 127
    %vm242 = vcmp.ge.s32.totalorder %v241, 8
    %v243 = vsel %vm242, 1, 0
    %vm244 = vcmp.ge.s32.totalorder %v241, 16
    %v245 = vsel %vm244, 1, 0
    %v246 = vadd.s32 %v243, %v245
    %vm247 = vcmp.ge.s32.totalorder %v241, 24
    %v248 = vsel %vm247, 1, 0
    %v249 = vadd.s32 %v246, %v248
    %vm250 = vcmp.eq.s32.totalorder %v230, %v249
    %vm251 = vcmp.eq.s32.totalorder %v231, %v249
    %vm252 = vcmp.eq.s32.totalorder %v232, %v249
    %vm253 = vcmp.eq.s32.totalorder %v233, %v249
    %vm254 = vcmp.eq.s32.totalorder %v234, %v249
    %vm255 = vcmp.eq.s32.totalorder %v235, %v249
    %vm256 = vcmp.eq.s32.totalorder %v236, %v249
    %vm257 = vcmp.eq.s32.totalorder %v237, %v249
    %vm258 = vcmp.eq.s32.totalorder %v238, %v249
    %vm259 = vcmp.eq.s32.totalorder %v239, %v249
    %v260 = vsel %vm250, 1, 0
    %v261 = vsel %vm251, 1, 0
    %v262 = vsel %vm252, 1, 0
    %v263 = vsel %vm253, 1, 0
    %v264 = vsel %vm254, 1, 0
    %v265 = vsel %vm255, 1, 0
    %v266 = vsel %vm256, 1, 0
    %v267 = vsel %vm257, 1, 0
    %v268 = vsel %vm258, 1, 0
    %v269 = vsel %vm259, 1, 0
    %v270 = vcvt.s32.f32 %v260
    %v271 = vcvt.s32.f32 %v261
    %v272 = vcvt.s32.f32 %v262
    %v273 = vcvt.s32.f32 %v263
    %v274 = vcvt.s32.f32 %v264
    %v275 = vcvt.s32.f32 %v265
    %v276 = vcvt.s32.f32 %v266
    %v277 = vcvt.s32.f32 %v267
    %v278 = vcvt.s32.f32 %v268
    %v279 = vcvt.s32.f32 %v269
    %v280 = vmul.u32 %v230, 20
    %v281 = vmul.u32 %v231, 20
    %v282 = vmul.u32 %v232, 20
    %v283 = vmul.u32 %v233, 20
    %v284 = vmul.u32 %v234, 20
    %v285 = vmul.u32 %v235, 20
    %v286 = vmul.u32 %v236, 20
    %v287 = vmul.u32 %v237, 20
    %v288 = vmul.u32 %v238, 20
    %v289 = vmul.u32 %v239, 20
    %v290 = vsub.s32 %v150, %v280
    %v291 = vsub.s32 %v151, %v281
    %v292 = vsub.s32 %v152, %v282
    %v293 = vsub.s32 %v153, %v283
    %v294 = vsub.s32 %v154, %v284
    %v295 = vsub.s32 %v155, %v285
    %v296 = vsub.s32 %v156, %v286
    %v297 = vsub.s32 %v157, %v287
    %v298 = vsub.s32 %v158, %v288
    %v299 = vsub.s32 %v159, %v289
    %vm300 = vcmp.eq.s32.totalorder %v290, %v241
    %vm301 = vcmp.eq.s32.totalorder %v291, %v241
    %vm302 = vcmp.eq.s32.totalorder %v292, %v241
    %vm303 = vcmp.eq.s32.totalorder %v293, %v241
    %vm304 = vcmp.eq.s32.totalorder %v294, %v241
    %vm305 = vcmp.eq.s32.totalorder %v295, %v241
    %vm306 = vcmp.eq.s32.totalorder %v296, %v241
    %vm307 = vcmp.eq.s32.totalorder %v297, %v241
    %vm308 = vcmp.eq.s32.totalorder %v298, %v241
    %vm309 = vcmp.eq.s32.totalorder %v299, %v241
    %v310 = vsel %vm300, 1, 0
    %v311 = vsel %vm301, 1, 0
    %v312 = vsel %vm302, 1, 0
    %v313 = vsel %vm303, 1, 0
    %v314 = vsel %vm304, 1, 0
    %v315 = vsel %vm305, 1, 0
    %v316 = vsel %vm306, 1, 0
    %v317 = vsel %vm307, 1, 0
    %v318 = vsel %vm308, 1, 0
    %v319 = vsel %vm309, 1, 0
    %v320 = vcvt.s32.f32 %v310
    %v321 = vcvt.s32.f32 %v311
    %v322 = vcvt.s32.f32 %v312
    %v323 = vcvt.s32.f32 %v313
    %v324 = vcvt.s32.f32 %v314
    %v325 = vcvt.s32.f32 %v315
    %v326 = vcvt.s32.f32 %v316
    %v327 = vcvt.s32.f32 %v317
    %v328 = vcvt.s32.f32 %v318
    %v329 = vcvt.s32.f32 %v319
    %vm330 = vcmp.ge.s32.totalorder %v150, 5
    %vm331 = vcmp.ge.s32.totalorder %v151, 5
    %vm332 = vcmp.ge.s32.totalorder %v152, 5
    %v333 = vsel %vm330, 1, 0
    %v334 = vsel %vm331, 1, 0
    %v335 = vsel %vm332, 1, 0
    %vm336 = vcmp.ge.s32.totalorder %v150, 10
    %vm337 = vcmp.ge.s32.totalorder %v151, 10
    %vm338 = vcmp.ge.s32.totalorder %v152, 10
    %v339 = vsel %vm336, 1, 0
    %v340 = vsel %vm337, 1, 0
    %v341 = vsel %vm338, 1, 0
    %v342 = vadd.s32 %v333, %v339
    %v343 = vadd.s32 %v334, %v340
    %v344 = vadd.s32 %v335, %v341
    %vm345 = vcmp.ge.s32.totalorder %v150, 15
    %vm346 = vcmp.ge.s32.totalorder %v151, 15
    %vm347 = vcmp.ge.s32.totalorder %v152, 15
    %v348 = vsel %vm345, 1, 0
    %v349 = vsel %vm346, 1, 0
    %v350 = vsel %vm347, 1, 0
    %v351 = vadd.s32 %v342, %v348
    %v352 = vadd.s32 %v343, %v349
    %v353 = vadd.s32 %v344, %v350
    %vm354 = vcmp.ge.s32.totalorder %v241, 5
    %v355 = vsel %vm354, 1, 0
    %vm356 = vcmp.ge.s32.totalorder %v241, 10
    %v357 = vsel %vm356, 1, 0
    %v358 = vadd.s32 %v355, %v357
    %vm359 = vcmp.ge.s32.totalorder %v241, 15
    %v360 = vsel %vm359, 1, 0
    %v361 = vadd.s32 %v358, %v360
    %vm362 = vcmp.ge.s32.totalorder %v241, 20
    %v363 = vsel %vm362, 1, 0
    %v364 = vadd.s32 %v361, %v363
    %vm365 = vcmp.ge.s32.totalorder %v241, 25
    %v366 = vsel %vm365, 1, 0
    %v367 = vadd.s32 %v364, %v366
    %vm368 = vcmp.ge.s32.totalorder %v241, 30
    %v369 = vsel %vm368, 1, 0
    %v370 = vadd.s32 %v367, %v369
    %vm371 = vcmp.ge.s32.totalorder %v241, 35
    %v372 = vsel %vm371, 1, 0
    %v373 = vadd.s32 %v370, %v372
    %vm374 = vcmp.ge.s32.totalorder %v241, 40
    %v375 = vsel %vm374, 1, 0
    %v376 = vadd.s32 %v373, %v375
    %vm377 = vcmp.ge.s32.totalorder %v241, 45
    %v378 = vsel %vm377, 1, 0
    %v379 = vadd.s32 %v376, %v378
    %vm380 = vcmp.ge.s32.totalorder %v241, 50
    %v381 = vsel %vm380, 1, 0
    %v382 = vadd.s32 %v379, %v381
    %vm383 = vcmp.ge.s32.totalorder %v241, 55
    %v384 = vsel %vm383, 1, 0
    %v385 = vadd.s32 %v382, %v384
    %vm386 = vcmp.ge.s32.totalorder %v241, 60
    %v387 = vsel %vm386, 1, 0
    %v388 = vadd.s32 %v385, %v387
    %vm389 = vcmp.ge.s32.totalorder %v241, 65
    %v390 = vsel %vm389, 1, 0
    %v391 = vadd.s32 %v388, %v390
    %vm392 = vcmp.ge.s32.totalorder %v241, 70
    %v393 = vsel %vm392, 1, 0
    %v394 = vadd.s32 %v391, %v393
    %vm395 = vcmp.ge.s32.totalorder %v241, 75
    %v396 = vsel %vm395, 1, 0
    %v397 = vadd.s32 %v394, %v396
    %v398 = vadd.s32 %v363, %v375
    %v399 = vadd.s32 %v398, %v387
    %v400 = vmul.u32 %v399, 4
    %v401 = vsub.s32 %v397, %v400
    %vm402 = vcmp.eq.s32.totalorder %v351, %v401
    %vm403 = vcmp.eq.s32.totalorder %v352, %v401
    %vm404 = vcmp.eq.s32.totalorder %v353, %v401
    %v405 = vsel %vm402, 0.0, -1e+30
    %v406 = vsel %vm403, 0.0, -1e+30
    %v407 = vsel %vm404, 0.0, -1e+30
    %v408 = vmul.u32 %v150, 5
    %v409 = vadd.s32 %v408, 4
    %vm410 = vcmp.eq.s32.totalorder %v241, %v409
    %v411 = vsel %vm410, 1, 0
    %v412 = vcvt.s32.f32 %v411
    %v413 = vld [vmem:[%s0] sm:$0xff]
    %v414 = vld [vmem:[%s0 + $0x8] sm:$0xff]
    %v415 = vld [vmem:[%s0 + $0x10] sm:$0xf]
    %v416 = vld [vmem:[#allocation2] sm:$0x7f]
    %v417 = vld [vmem:[#allocation5] sm:$0x1]
    %v419 = vlaneseq
    %v420 = vshrl.u32 %v419, 7
    %v421 = vsub.s32 0, %v420
    %v422 = vrot.slane %v417, %v421
    %vm424 = vcmask 56320
    %v426 = vsel %vm424, %v413, 0
    %v429 = vsel %vm424, %v414, 0
    %v432 = vsel %vm424, %v415, 0
    %vm434 = vcmask 1046528
    %v436 = vsel %vm434, %v416, 0
    %438 = vmatprep.subr.mxu0 0.0
    %439 = vmatpush1.msra.mxu0 0.0
    %440 = vmatprep.subr.mxu0 0.0
    %441 = vmatpush1.msra.mxu0 0.0
    %442 = vmatprep.subr.mxu0 0.0
    %443 = vmatpush1.msra.mxu0 0.0
    %444 = vmatprep.subr.mxu0 0.0
    %445 = vmatpush1.msra.mxu0 0.0
    %446 = vmatprep.subr.mxu0 0.0
    %447 = vmatpush1.msra.mxu0 0.0
    %448 = vmatprep.subr.mxu0 0.0
    %449 = vmatpush1.msra.mxu0 0.0
    %450 = vmatprep.subr.mxu0 0.0
    %451 = vmatpush1.msra.mxu0 0.0
    %452 = vmatprep.subr.mxu0 0.0
    %453 = vmatpush1.msra.mxu0 0.0
    %454 = vmatprep.subr.mxu0 0.0
    %455 = vmatpush1.msra.mxu0 0.0
    %456 = vmatprep.subr.mxu0 0.0
    %457 = vmatpush1.msra.mxu0 0.0
    %458 = vmatprep.subr.mxu0 0.0
    %459 = vmatpush1.msra.mxu0 0.0
    %460 = vmatprep.subr.mxu0 0.0
    %461 = vmatpush1.msra.mxu0 0.0
    %462 = vmatprep.subr.mxu0 0.0
    %463 = vmatpush1.msra.mxu0 0.0
    %464 = vmatprep.subr.mxu0 0.0
    %465 = vmatpush1.msra.mxu0 0.0
    %466 = vmatprep.subr.mxu0 0.0
    %467 = vmatpush1.msra.mxu0 0.0
    %468 = vmatprep.subr.mxu0 0.0
    %469 = vmatpush1.msra.mxu0 %v436
    %470 = vmatprep.subr.mxu0 0.0
    %471 = vmatpush2.msra.mxu0 0.0
    %472 = vmatprep.subr.mxu0 0.0
    %473 = vmatpush2.msra.mxu0 0.0
    %474 = vmatprep.subr.mxu0 0.0
    %475 = vmatpush2.msra.mxu0 0.0
    %476 = vmatprep.subr.mxu0 0.0
    %477 = vmatpush2.msra.mxu0 0.0
    %478 = vmatprep.subr.mxu0 0.0
    %479 = vmatpush2.msra.mxu0 0.0
    %480 = vmatprep.subr.mxu0 0.0
    %481 = vmatpush2.msra.mxu0 0.0
    %482 = vmatprep.subr.mxu0 0.0
    %483 = vmatpush2.msra.mxu0 0.0
    %484 = vmatprep.subr.mxu0 0.0
    %485 = vmatpush2.msra.mxu0 0.0
    %486 = vmatprep.subr.mxu0 0.0
    %487 = vmatpush2.msra.mxu0 0.0
    %488 = vmatprep.subr.mxu0 0.0
    %489 = vmatpush2.msra.mxu0 0.0
    %490 = vmatprep.subr.mxu0 0.0
    %491 = vmatpush2.msra.mxu0 0.0
    %492 = vmatprep.subr.mxu0 0.0
    %493 = vmatpush2.msra.mxu0 0.0
    %494 = vmatprep.subr.mxu0 0.0
    %495 = vmatpush2.msra.mxu0 0.0
    %496 = vmatprep.subr.mxu0 0.0
    %497 = vmatpush2.msra.mxu0 0.0
    %498 = vmatprep.subr.mxu0 0.0
    %499 = vmatpush2.msra.mxu0 0.0
    %500 = vmatprep.subr.mxu0 0.0
    %501 = vmatpush2.msra.mxu0 0.0
    %502 = vmatprep.mubr.f32.mxu0 0.0
    %503 = vmatmul.mubr.f32.gmra.mxu0 %v426
    %v504 = vpop.f32.mrf.mxu0
    %v505 = vadd.f32 %v422, %v504
    %v506 = vpop.f32.mrf.mxu0
    %507 = vmatprep.mubr.f32.mxu0 0.0
    %508 = vmatmul.mubr.f32.gmra.mxu0 %v429
    %v509 = vpop.f32.mrf.mxu0
    %v510 = vadd.f32 %v422, %v509
    %v511 = vpop.f32.mrf.mxu0
    %512 = vmatprep.mubr.f32.mxu0 0.0
    %513 = vmatmul.mubr.f32.gmra.mxu0 %v432
    %v514 = vpop.f32.mrf.mxu0
    %v515 = vadd.f32 %v422, %v514
    %v516 = vpop.f32.mrf.mxu0
    %517 = vdwg.mxu0
    %v518 = vpack.c.bf16 %v510, %v505
    %v519 = vpack.c.bf16 %v515, %v515
    %v520 = vld [vmem:[%s3] sm:$0xf]
    %v521 = vld [vmem:[%s3 + $0x4] sm:$0xf]
    %v522 = vld [vmem:[%s3 + $0x8] sm:$0xf]
    %v523 = vld [vmem:[%s3 + $0xc] sm:$0xf]
    %v524 = vld [vmem:[%s4] sm:$0x1]
    %v526 = vlaneseq
    %v527 = vshrl.u32 %v526, 7
    %v528 = vsub.s32 0, %v527
    %v529 = vrot.slane %v524, %v528
    %v535 = vunpack.c.l.b16 %v520
    %v536 = vunpack.c.l.b16 %v521
    %v537 = vunpack.c.l.b16 %v522
    %v538 = vunpack.c.l.b16 %v523
    %v539 = vpack.c.b16 %v536, %v535
    %v540 = vpack.c.b16 %v538, %v537
    %vm543 = vcmask 261120
    %v545 = vsel %vm543, %v518, 0
    %v548 = vsel %vm543, %v519, 0
    %550 = vmatprep.subr.bf16.mxu0 0
    %551 = vmatpush1.bf16.msra.mxu0 0
    %552 = vmatprep.subr.bf16.mxu0 0
    %553 = vmatpush1.bf16.msra.mxu0 0
    %554 = vmatprep.subr.bf16.mxu0 0
    %555 = vmatpush1.bf16.msra.mxu0 0
    %556 = vmatprep.subr.bf16.mxu0 0
    %557 = vmatpush1.bf16.msra.mxu0 0
    %558 = vmatprep.subr.bf16.mxu0 0
    %559 = vmatpush1.bf16.msra.mxu0 0
    %560 = vmatprep.subr.bf16.mxu0 0
    %561 = vmatpush1.bf16.msra.mxu0 0
    %562 = vmatprep.subr.bf16.mxu0 0
    %563 = vmatpush1.bf16.msra.mxu0 %v540
    %564 = vmatprep.subr.bf16.mxu0 0
    %565 = vmatpush1.bf16.msra.mxu0 %v539
    %566 = vmatprep.subr.bf16.mxu0 0
    %567 = vmatpush2.bf16.msra.mxu0 0
    %568 = vmatprep.subr.bf16.mxu0 0
    %569 = vmatpush2.bf16.msra.mxu0 0
    %570 = vmatprep.subr.bf16.mxu0 0
    %571 = vmatpush2.bf16.msra.mxu0 0
    %572 = vmatprep.subr.bf16.mxu0 0
    %573 = vmatpush2.bf16.msra.mxu0 0
    %574 = vmatprep.subr.bf16.mxu0 0
    %575 = vmatpush2.bf16.msra.mxu0 0
    %576 = vmatprep.subr.bf16.mxu0 0
    %577 = vmatpush2.bf16.msra.mxu0 0
    %578 = vmatprep.subr.bf16.mxu0 0
    %579 = vmatpush2.bf16.msra.mxu0 0
    %580 = vmatprep.subr.bf16.mxu0 0
    %581 = vmatpush2.bf16.msra.mxu0 0
    %582 = vmatprep.mubr.bf16.mxu0 0
    %583 = vmatmul.mubr.bf16.gmra.mxu0 %v545
    %v584 = vpop.f32.mrf.mxu0
    %v585 = vadd.f32 %v529, %v584
    %v586 = vpop.f32.mrf.mxu0
    %v587 = vpop.f32.mrf.mxu0
    %v588 = vadd.f32 %v529, %v587
    %v589 = vpop.f32.mrf.mxu0
    %590 = vmatprep.mubr.bf16.mxu0 0
    %591 = vmatmul.mubr.bf16.gmra.mxu0 %v548
    %v592 = vpop.f32.mrf.mxu0
    %v593 = vadd.f32 %v529, %v592
    %v594 = vpop.f32.mrf.mxu0
    %v595 = vpop.f32.mrf.mxu0
    %v596 = vpop.f32.mrf.mxu0
    %597 = vdwg.mxu0
    %601 = vrot.lane.b32.xlu0 %v585, 96
    %v602 = vpop.permute.xlu0 %601
    %603 = vrot.lane.b32.xlu0 %v588, 96
    %v604 = vpop.permute.xlu0 %603
    %605 = vrot.lane.b32.xlu0 %v593, 96
    %v606 = vpop.permute.xlu0 %605
    %vm609 = vcmask 162816
    %v611 = vsel %vm609, %v320, 0
    %v614 = vsel %vm609, %v321, 0
    %v617 = vsel %vm609, %v322, 0
    %v620 = vsel %vm609, %v323, 0
    %v623 = vsel %vm609, %v324, 0
    %v626 = vsel %vm609, %v325, 0
    %v629 = vsel %vm609, %v326, 0
    %v632 = vsel %vm609, %v327, 0
    %v635 = vsel %vm609, %v328, 0
    %v638 = vsel %vm609, %v329, 0
    %vm640 = vcmask 1043456
    %v641 = vsel %vm640, %v606, 0
    %643 = vmatprep.subr.mxu0 0.0
    %644 = vmatpush1.msra.mxu0 0.0
    %645 = vmatprep.subr.mxu0 0.0
    %646 = vmatpush1.msra.mxu0 0.0
    %647 = vmatprep.subr.mxu0 0.0
    %648 = vmatpush1.msra.mxu0 0.0
    %649 = vmatprep.subr.mxu0 0.0
    %650 = vmatpush1.msra.mxu0 0.0
    %651 = vmatprep.subr.mxu0 0.0
    %652 = vmatpush1.msra.mxu0 0.0
    %653 = vmatprep.subr.mxu0 0.0
    %654 = vmatpush1.msra.mxu0 0.0
    %655 = vmatprep.subr.mxu0 0.0
    %656 = vmatpush1.msra.mxu0 0.0
    %657 = vmatprep.subr.mxu0 0.0
    %658 = vmatpush1.msra.mxu0 0.0
    %659 = vmatprep.subr.mxu0 0.0
    %660 = vmatpush1.msra.mxu0 0.0
    %661 = vmatprep.subr.mxu0 0.0
    %662 = vmatpush1.msra.mxu0 0.0
    %663 = vmatprep.subr.mxu0 0.0
    %664 = vmatpush1.msra.mxu0 0.0
    %665 = vmatprep.subr.mxu0 0.0
    %666 = vmatpush1.msra.mxu0 0.0
    %667 = vmatprep.subr.mxu0 0.0
    %668 = vmatpush1.msra.mxu0 0.0
    %669 = vmatprep.subr.mxu0 0.0
    %670 = vmatpush1.msra.mxu0 %v641
    %671 = vmatprep.subr.mxu0 0.0
    %672 = vmatpush1.msra.mxu0 %v604
    %673 = vmatprep.subr.mxu0 0.0
    %674 = vmatpush1.msra.mxu0 %v602
    %675 = vmatprep.subr.mxu0 0.0
    %676 = vmatpush2.msra.mxu0 0.0
    %677 = vmatprep.subr.mxu0 0.0
    %678 = vmatpush2.msra.mxu0 0.0
    %679 = vmatprep.subr.mxu0 0.0
    %680 = vmatpush2.msra.mxu0 0.0
    %681 = vmatprep.subr.mxu0 0.0
    %682 = vmatpush2.msra.mxu0 0.0
    %683 = vmatprep.subr.mxu0 0.0
    %684 = vmatpush2.msra.mxu0 0.0
    %685 = vmatprep.subr.mxu0 0.0
    %686 = vmatpush2.msra.mxu0 0.0
    %687 = vmatprep.subr.mxu0 0.0
    %688 = vmatpush2.msra.mxu0 0.0
    %689 = vmatprep.subr.mxu0 0.0
    %690 = vmatpush2.msra.mxu0 0.0
    %691 = vmatprep.subr.mxu0 0.0
    %692 = vmatpush2.msra.mxu0 0.0
    %693 = vmatprep.subr.mxu0 0.0
    %694 = vmatpush2.msra.mxu0 0.0
    %695 = vmatprep.subr.mxu0 0.0
    %696 = vmatpush2.msra.mxu0 0.0
    %697 = vmatprep.subr.mxu0 0.0
    %698 = vmatpush2.msra.mxu0 0.0
    %699 = vmatprep.subr.mxu0 0.0
    %700 = vmatpush2.msra.mxu0 0.0
    %701 = vmatprep.subr.mxu0 0.0
    %702 = vmatpush2.msra.mxu0 0.0
    %703 = vmatprep.subr.mxu0 0.0
    %704 = vmatpush2.msra.mxu0 0.0
    %705 = vmatprep.subr.mxu0 0.0
    %706 = vmatpush2.msra.mxu0 0.0
    %707 = vmatprep.mubr.f32.mxu0 0.0
    %708 = vmatmul.mubr.f32.gmra.mxu0 %v611
    %v709 = vpop.f32.mrf.mxu0
    %v710 = vadd.f32 0.0, %v709
    %v711 = vpop.f32.mrf.mxu0
    %712 = vmatprep.mubr.f32.mxu0 0.0
    %713 = vmatmul.mubr.f32.gmra.mxu0 %v614
    %v714 = vpop.f32.mrf.mxu0
    %v715 = vadd.f32 0.0, %v714
    %v716 = vpop.f32.mrf.mxu0
    %717 = vmatprep.mubr.f32.mxu0 0.0
    %718 = vmatmul.mubr.f32.gmra.mxu0 %v617
    %v719 = vpop.f32.mrf.mxu0
    %v720 = vadd.f32 0.0, %v719
    %v721 = vpop.f32.mrf.mxu0
    %722 = vmatprep.mubr.f32.mxu0 0.0
    %723 = vmatmul.mubr.f32.gmra.mxu0 %v620
    %v724 = vpop.f32.mrf.mxu0
    %v725 = vadd.f32 0.0, %v724
    %v726 = vpop.f32.mrf.mxu0
    %727 = vmatprep.mubr.f32.mxu0 0.0
    %728 = vmatmul.mubr.f32.gmra.mxu0 %v623
    %v729 = vpop.f32.mrf.mxu0
    %v730 = vadd.f32 0.0, %v729
    %v731 = vpop.f32.mrf.mxu0
    %732 = vmatprep.mubr.f32.mxu0 0.0
    %733 = vmatmul.mubr.f32.gmra.mxu0 %v626
    %v734 = vpop.f32.mrf.mxu0
    %v735 = vadd.f32 0.0, %v734
    %v736 = vpop.f32.mrf.mxu0
    %737 = vmatprep.mubr.f32.mxu0 0.0
    %738 = vmatmul.mubr.f32.gmra.mxu0 %v629
    %v739 = vpop.f32.mrf.mxu0
    %v740 = vadd.f32 0.0, %v739
    %v741 = vpop.f32.mrf.mxu0
    %742 = vmatprep.mubr.f32.mxu0 0.0
    %743 = vmatmul.mubr.f32.gmra.mxu0 %v632
    %v744 = vpop.f32.mrf.mxu0
    %v745 = vadd.f32 0.0, %v744
    %v746 = vpop.f32.mrf.mxu0
    %747 = vmatprep.mubr.f32.mxu0 0.0
    %748 = vmatmul.mubr.f32.gmra.mxu0 %v635
    %v749 = vpop.f32.mrf.mxu0
    %v750 = vadd.f32 0.0, %v749
    %v751 = vpop.f32.mrf.mxu0
    %752 = vmatprep.mubr.f32.mxu0 0.0
    %753 = vmatmul.mubr.f32.gmra.mxu0 %v638
    %v754 = vpop.f32.mrf.mxu0
    %v755 = vadd.f32 0.0, %v754
    %v756 = vpop.f32.mrf.mxu0
    %757 = vdwg.mxu0
    %v758 = vmul.f32 %v710, %v270
    %v759 = vmul.f32 %v715, %v271
    %v760 = vmul.f32 %v720, %v272
    %v761 = vmul.f32 %v725, %v273
    %v762 = vmul.f32 %v730, %v274
    %v763 = vmul.f32 %v735, %v275
    %v764 = vmul.f32 %v740, %v276
    %v765 = vmul.f32 %v745, %v277
    %v766 = vmul.f32 %v750, %v278
    %v767 = vmul.f32 %v755, %v279
    %768 = vrot.lane.b32.xlu0 %v585, 64
    %v769 = vpop.permute.xlu0 %768
    %770 = vrot.lane.b32.xlu0 %v588, 64
    %v771 = vpop.permute.xlu0 %770
    %772 = vrot.lane.b32.xlu0 %v593, 64
    %v773 = vpop.permute.xlu0 %772
    %v776 = vsel %vm640, %v773, 0
    %778 = vmatprep.subr.mxu0 0.0
    %779 = vmatpush1.msra.mxu0 0.0
    %780 = vmatprep.subr.mxu0 0.0
    %781 = vmatpush1.msra.mxu0 0.0
    %782 = vmatprep.subr.mxu0 0.0
    %783 = vmatpush1.msra.mxu0 0.0
    %784 = vmatprep.subr.mxu0 0.0
    %785 = vmatpush1.msra.mxu0 0.0
    %786 = vmatprep.subr.mxu0 0.0
    %787 = vmatpush1.msra.mxu0 0.0
    %788 = vmatprep.subr.mxu0 0.0
    %789 = vmatpush1.msra.mxu0 0.0
    %790 = vmatprep.subr.mxu0 0.0
    %791 = vmatpush1.msra.mxu0 0.0
    %792 = vmatprep.subr.mxu0 0.0
    %793 = vmatpush1.msra.mxu0 0.0
    %794 = vmatprep.subr.mxu0 0.0
    %795 = vmatpush1.msra.mxu0 0.0
    %796 = vmatprep.subr.mxu0 0.0
    %797 = vmatpush1.msra.mxu0 0.0
    %798 = vmatprep.subr.mxu0 0.0
    %799 = vmatpush1.msra.mxu0 0.0
    %800 = vmatprep.subr.mxu0 0.0
    %801 = vmatpush1.msra.mxu0 0.0
    %802 = vmatprep.subr.mxu0 0.0
    %803 = vmatpush1.msra.mxu0 0.0
    %804 = vmatprep.subr.mxu0 0.0
    %805 = vmatpush1.msra.mxu0 %v776
    %806 = vmatprep.subr.mxu0 0.0
    %807 = vmatpush1.msra.mxu0 %v771
    %808 = vmatprep.subr.mxu0 0.0
    %809 = vmatpush1.msra.mxu0 %v769
    %810 = vmatprep.subr.mxu0 0.0
    %811 = vmatpush2.msra.mxu0 0.0
    %812 = vmatprep.subr.mxu0 0.0
    %813 = vmatpush2.msra.mxu0 0.0
    %814 = vmatprep.subr.mxu0 0.0
    %815 = vmatpush2.msra.mxu0 0.0
    %816 = vmatprep.subr.mxu0 0.0
    %817 = vmatpush2.msra.mxu0 0.0
    %818 = vmatprep.subr.mxu0 0.0
    %819 = vmatpush2.msra.mxu0 0.0
    %820 = vmatprep.subr.mxu0 0.0
    %821 = vmatpush2.msra.mxu0 0.0
    %822 = vmatprep.subr.mxu0 0.0
    %823 = vmatpush2.msra.mxu0 0.0
    %824 = vmatprep.subr.mxu0 0.0
    %825 = vmatpush2.msra.mxu0 0.0
    %826 = vmatprep.subr.mxu0 0.0
    %827 = vmatpush2.msra.mxu0 0.0
    %828 = vmatprep.subr.mxu0 0.0
    %829 = vmatpush2.msra.mxu0 0.0
    %830 = vmatprep.subr.mxu0 0.0
    %831 = vmatpush2.msra.mxu0 0.0
    %832 = vmatprep.subr.mxu0 0.0
    %833 = vmatpush2.msra.mxu0 0.0
    %834 = vmatprep.subr.mxu0 0.0
    %835 = vmatpush2.msra.mxu0 0.0
    %836 = vmatprep.subr.mxu0 0.0
    %837 = vmatpush2.msra.mxu0 0.0
    %838 = vmatprep.subr.mxu0 0.0
    %839 = vmatpush2.msra.mxu0 0.0
    %840 = vmatprep.subr.mxu0 0.0
    %841 = vmatpush2.msra.mxu0 0.0
    %842 = vmatprep.mubr.f32.mxu0 0.0
    %843 = vmatmul.mubr.f32.gmra.mxu0 %v611
    %v844 = vpop.f32.mrf.mxu0
    %v845 = vadd.f32 0.0, %v844
    %v846 = vpop.f32.mrf.mxu0
    %847 = vmatprep.mubr.f32.mxu0 0.0
    %848 = vmatmul.mubr.f32.gmra.mxu0 %v614
    %v849 = vpop.f32.mrf.mxu0
    %v850 = vadd.f32 0.0, %v849
    %v851 = vpop.f32.mrf.mxu0
    %852 = vmatprep.mubr.f32.mxu0 0.0
    %853 = vmatmul.mubr.f32.gmra.mxu0 %v617
    %v854 = vpop.f32.mrf.mxu0
    %v855 = vadd.f32 0.0, %v854
    %v856 = vpop.f32.mrf.mxu0
    %857 = vmatprep.mubr.f32.mxu0 0.0
    %858 = vmatmul.mubr.f32.gmra.mxu0 %v620
    %v859 = vpop.f32.mrf.mxu0
    %v860 = vadd.f32 0.0, %v859
    %v861 = vpop.f32.mrf.mxu0
    %862 = vmatprep.mubr.f32.mxu0 0.0
    %863 = vmatmul.mubr.f32.gmra.mxu0 %v623
    %v864 = vpop.f32.mrf.mxu0
    %v865 = vadd.f32 0.0, %v864
    %v866 = vpop.f32.mrf.mxu0
    %867 = vmatprep.mubr.f32.mxu0 0.0
    %868 = vmatmul.mubr.f32.gmra.mxu0 %v626
    %v869 = vpop.f32.mrf.mxu0
    %v870 = vadd.f32 0.0, %v869
    %v871 = vpop.f32.mrf.mxu0
    %872 = vmatprep.mubr.f32.mxu0 0.0
    %873 = vmatmul.mubr.f32.gmra.mxu0 %v629
    %v874 = vpop.f32.mrf.mxu0
    %v875 = vadd.f32 0.0, %v874
    %v876 = vpop.f32.mrf.mxu0
    %877 = vmatprep.mubr.f32.mxu0 0.0
    %878 = vmatmul.mubr.f32.gmra.mxu0 %v632
    %v879 = vpop.f32.mrf.mxu0
    %v880 = vadd.f32 0.0, %v879
    %v881 = vpop.f32.mrf.mxu0
    %882 = vmatprep.mubr.f32.mxu0 0.0
    %883 = vmatmul.mubr.f32.gmra.mxu0 %v635
    %v884 = vpop.f32.mrf.mxu0
    %v885 = vadd.f32 0.0, %v884
    %v886 = vpop.f32.mrf.mxu0
    %887 = vmatprep.mubr.f32.mxu0 0.0
    %888 = vmatmul.mubr.f32.gmra.mxu0 %v638
    %v889 = vpop.f32.mrf.mxu0
    %v890 = vadd.f32 0.0, %v889
    %v891 = vpop.f32.mrf.mxu0
    %892 = vdwg.mxu0
    %v893 = vmul.f32 %v845, %v270
    %v894 = vmul.f32 %v850, %v271
    %v895 = vmul.f32 %v855, %v272
    %v896 = vmul.f32 %v860, %v273
    %v897 = vmul.f32 %v865, %v274
    %v898 = vmul.f32 %v870, %v275
    %v899 = vmul.f32 %v875, %v276
    %v900 = vmul.f32 %v880, %v277
    %v901 = vmul.f32 %v885, %v278
    %v902 = vmul.f32 %v890, %v279
    %v903 = vmul.f32 %v585, 0.35355338
    %v904 = vmul.f32 %v588, 0.35355338
    %v905 = vmul.f32 %v593, 0.35355338
    %v907 = vsel %vm543, %v903, 0
    %v910 = vsel %vm543, %v904, 0
    %v913 = vsel %vm543, %v905, 0
    %v916 = vsel %vm543, %v758, 0
    %v919 = vsel %vm543, %v759, 0
    %v922 = vsel %vm543, %v760, 0
    %v925 = vsel %vm543, %v761, 0
    %v928 = vsel %vm543, %v762, 0
    %v931 = vsel %vm543, %v763, 0
    %v934 = vsel %vm543, %v764, 0
    %v937 = vsel %vm543, %v765, 0
    %v940 = vsel %vm543, %v766, 0
    %v943 = vsel %vm543, %v767, 0
    %945 = vmatprep.subr.mxu0 0.0
    %946 = vmatpush1.xpose.msra.mxu0 0.0
    %947 = vmatprep.subr.mxu0 0.0
    %948 = vmatpush1.xpose.msra.mxu0 0.0
    %949 = vmatprep.subr.mxu0 0.0
    %950 = vmatpush1.xpose.msra.mxu0 0.0
    %951 = vmatprep.subr.mxu0 0.0
    %952 = vmatpush1.xpose.msra.mxu0 0.0
    %953 = vmatprep.subr.mxu0 0.0
    %954 = vmatpush1.xpose.msra.mxu0 0.0
    %955 = vmatprep.subr.mxu0 0.0
    %956 = vmatpush1.xpose.msra.mxu0 0.0
    %957 = vmatprep.subr.mxu0 0.0
    %958 = vmatpush1.xpose.msra.mxu0 %v943
    %959 = vmatprep.subr.mxu0 0.0
    %960 = vmatpush1.xpose.msra.mxu0 %v940
    %961 = vmatprep.subr.mxu0 0.0
    %962 = vmatpush1.xpose.msra.mxu0 %v937
    %963 = vmatprep.subr.mxu0 0.0
    %964 = vmatpush1.xpose.msra.mxu0 %v934
    %965 = vmatprep.subr.mxu0 0.0
    %966 = vmatpush1.xpose.msra.mxu0 %v931
    %967 = vmatprep.subr.mxu0 0.0
    %968 = vmatpush1.xpose.msra.mxu0 %v928
    %969 = vmatprep.subr.mxu0 0.0
    %970 = vmatpush1.xpose.msra.mxu0 %v925
    %971 = vmatprep.subr.mxu0 0.0
    %972 = vmatpush1.xpose.msra.mxu0 %v922
    %973 = vmatprep.subr.mxu0 0.0
    %974 = vmatpush1.xpose.msra.mxu0 %v919
    %975 = vmatprep.subr.mxu0 0.0
    %976 = vmatpush1.xpose.msra.mxu0 %v916
    %977 = vmatprep.subr.mxu0 0.0
    %978 = vmatpush2.xpose.msra.mxu0 0.0
    %979 = vmatprep.subr.mxu0 0.0
    %980 = vmatpush2.xpose.msra.mxu0 0.0
    %981 = vmatprep.subr.mxu0 0.0
    %982 = vmatpush2.xpose.msra.mxu0 0.0
    %983 = vmatprep.subr.mxu0 0.0
    %984 = vmatpush2.xpose.msra.mxu0 0.0
    %985 = vmatprep.subr.mxu0 0.0
    %986 = vmatpush2.xpose.msra.mxu0 0.0
    %987 = vmatprep.subr.mxu0 0.0
    %988 = vmatpush2.xpose.msra.mxu0 0.0
    %989 = vmatprep.subr.mxu0 0.0
    %990 = vmatpush2.xpose.msra.mxu0 0.0
    %991 = vmatprep.subr.mxu0 0.0
    %992 = vmatpush2.xpose.msra.mxu0 0.0
    %993 = vmatprep.subr.mxu0 0.0
    %994 = vmatpush2.xpose.msra.mxu0 0.0
    %995 = vmatprep.subr.mxu0 0.0
    %996 = vmatpush2.xpose.msra.mxu0 0.0
    %997 = vmatprep.subr.mxu0 0.0
    %998 = vmatpush2.xpose.msra.mxu0 0.0
    %999 = vmatprep.subr.mxu0 0.0
    %1000 = vmatpush2.xpose.msra.mxu0 0.0
    %1001 = vmatprep.subr.mxu0 0.0
    %1002 = vmatpush2.xpose.msra.mxu0 0.0
    %1003 = vmatprep.subr.mxu0 0.0
    %1004 = vmatpush2.xpose.msra.mxu0 0.0
    %1005 = vmatprep.subr.mxu0 0.0
    %1006 = vmatpush2.xpose.msra.mxu0 0.0
    %1007 = vmatprep.subr.mxu0 0.0
    %1008 = vmatpush2.xpose.msra.mxu0 0.0
    %1009 = vmatprep.mubr.f32.mxu0 0.0
    %1010 = vmatmul.mubr.f32.gmra.mxu0 %v907
    %v1011 = vpop.f32.mrf.mxu0
    %v1012 = vadd.f32 %v405, %v1011
    %v1013 = vpop.f32.mrf.mxu0
    %1014 = vmatprep.mubr.f32.mxu0 0.0
    %1015 = vmatmul.mubr.f32.gmra.mxu0 %v910
    %v1016 = vpop.f32.mrf.mxu0
    %v1017 = vadd.f32 %v406, %v1016
    %v1018 = vpop.f32.mrf.mxu0
    %1019 = vmatprep.mubr.f32.mxu0 0.0
    %1020 = vmatmul.mubr.f32.gmra.mxu0 %v913
    %v1021 = vpop.f32.mrf.mxu0
    %v1022 = vadd.f32 %v407, %v1021
    %v1023 = vpop.f32.mrf.mxu0
    %1024 = vdwg.mxu0
    %vm1025 = vcmask 654336
    %v1026 = vsel %vm1025, %v1012, -inf
    %1027 = vmax.xlane.f32.xlu0 %v1026
    %v1028 = vpop.xlane.xlu0 %1027
    %v1029 = vsel %vm1025, %v1017, -inf
    %1030 = vmax.xlane.f32.xlu0 %v1029
    %v1031 = vpop.xlane.xlu0 %1030
    %vm1032 = vcmask 650240
    %v1033 = vsel %vm1032, %v1022, -inf
    %1034 = vmax.xlane.f32.xlu0 %v1033
    %v1035 = vpop.xlane.xlu0 %1034
    %v1036 = vsub.f32 %v1012, %v1028
    %v1037 = vsub.f32 %v1017, %v1031
    %v1038 = vsub.f32 %v1022, %v1035
    %v1039 = vmul.f32 %v1036, 1.442695
    %v1040 = vpow.pop %v1039
    %v1041 = vmul.f32 %v1037, 1.442695
    %v1042 = vpow.pop %v1041
    %v1043 = vmul.f32 %v1038, 1.442695
    %v1044 = vpow.pop %v1043
    %v1046 = vsel %vm1025, %v1040, 0
    %v1049 = vsel %vm1025, %v1042, 0
    %v1052 = vsel %vm1025, %v1044, 0
    %1054 = vmatprep.subr.mxu0 0.0
    %1055 = vmatpush1.msra.mxu0 0.0
    %1056 = vmatprep.subr.mxu0 0.0
    %1057 = vmatpush1.msra.mxu0 0.0
    %1058 = vmatprep.subr.mxu0 0.0
    %1059 = vmatpush1.msra.mxu0 0.0
    %1060 = vmatprep.subr.mxu0 0.0
    %1061 = vmatpush1.msra.mxu0 0.0
    %1062 = vmatprep.subr.mxu0 0.0
    %1063 = vmatpush1.msra.mxu0 0.0
    %1064 = vmatprep.subr.mxu0 0.0
    %1065 = vmatpush1.msra.mxu0 0.0
    %1066 = vmatprep.subr.mxu0 0.0
    %1067 = vmatpush1.msra.mxu0 %v279
    %1068 = vmatprep.subr.mxu0 0.0
    %1069 = vmatpush1.msra.mxu0 %v278
    %1070 = vmatprep.subr.mxu0 0.0
    %1071 = vmatpush1.msra.mxu0 %v277
    %1072 = vmatprep.subr.mxu0 0.0
    %1073 = vmatpush1.msra.mxu0 %v276
    %1074 = vmatprep.subr.mxu0 0.0
    %1075 = vmatpush1.msra.mxu0 %v275
    %1076 = vmatprep.subr.mxu0 0.0
    %1077 = vmatpush1.msra.mxu0 %v274
    %1078 = vmatprep.subr.mxu0 0.0
    %1079 = vmatpush1.msra.mxu0 %v273
    %1080 = vmatprep.subr.mxu0 0.0
    %1081 = vmatpush1.msra.mxu0 %v272
    %1082 = vmatprep.subr.mxu0 0.0
    %1083 = vmatpush1.msra.mxu0 %v271
    %1084 = vmatprep.subr.mxu0 0.0
    %1085 = vmatpush1.msra.mxu0 %v270
    %1086 = vmatprep.subr.mxu0 0.0
    %1087 = vmatpush2.msra.mxu0 0.0
    %1088 = vmatprep.subr.mxu0 0.0
    %1089 = vmatpush2.msra.mxu0 0.0
    %1090 = vmatprep.subr.mxu0 0.0
    %1091 = vmatpush2.msra.mxu0 0.0
    %1092 = vmatprep.subr.mxu0 0.0
    %1093 = vmatpush2.msra.mxu0 0.0
    %1094 = vmatprep.subr.mxu0 0.0
    %1095 = vmatpush2.msra.mxu0 0.0
    %1096 = vmatprep.subr.mxu0 0.0
    %1097 = vmatpush2.msra.mxu0 0.0
    %1098 = vmatprep.subr.mxu0 0.0
    %1099 = vmatpush2.msra.mxu0 0.0
    %1100 = vmatprep.subr.mxu0 0.0
    %1101 = vmatpush2.msra.mxu0 0.0
    %1102 = vmatprep.subr.mxu0 0.0
    %1103 = vmatpush2.msra.mxu0 0.0
    %1104 = vmatprep.subr.mxu0 0.0
    %1105 = vmatpush2.msra.mxu0 0.0
    %1106 = vmatprep.subr.mxu0 0.0
    %1107 = vmatpush2.msra.mxu0 0.0
    %1108 = vmatprep.subr.mxu0 0.0
    %1109 = vmatpush2.msra.mxu0 0.0
    %1110 = vmatprep.subr.mxu0 0.0
    %1111 = vmatpush2.msra.mxu0 0.0
    %1112 = vmatprep.subr.mxu0 0.0
    %1113 = vmatpush2.msra.mxu0 0.0
    %1114 = vmatprep.subr.mxu0 0.0
    %1115 = vmatpush2.msra.mxu0 0.0
    %1116 = vmatprep.subr.mxu0 0.0
    %1117 = vmatpush2.msra.mxu0 0.0
    %1118 = vmatprep.mubr.f32.mxu0 0.0
    %1119 = vmatmul.mubr.f32.gmra.mxu0 %v1046
    %v1120 = vpop.f32.mrf.mxu0
    %v1121 = vadd.f32 0.0, %v1120
    %v1122 = vpop.f32.mrf.mxu0
    %1123 = vmatprep.mubr.f32.mxu0 0.0
    %1124 = vmatmul.mubr.f32.gmra.mxu0 %v1049
    %v1125 = vpop.f32.mrf.mxu0
    %v1126 = vadd.f32 0.0, %v1125
    %v1127 = vpop.f32.mrf.mxu0
    %1128 = vmatprep.mubr.f32.mxu0 0.0
    %1129 = vmatmul.mubr.f32.gmra.mxu0 %v1052
    %v1130 = vpop.f32.mrf.mxu0
    %v1131 = vadd.f32 0.0, %v1130
    %v1132 = vpop.f32.mrf.mxu0
    %1133 = vdwg.mxu0
    %1134 = vmatprep.subr.mxu0 0.0
    %1135 = vmatpush1.msra.mxu0 0.0
    %1136 = vmatprep.subr.mxu0 0.0
    %1137 = vmatpush1.msra.mxu0 0.0
    %1138 = vmatprep.subr.mxu0 0.0
    %1139 = vmatpush1.msra.mxu0 0.0
    %1140 = vmatprep.subr.mxu0 0.0
    %1141 = vmatpush1.msra.mxu0 0.0
    %1142 = vmatprep.subr.mxu0 0.0
    %1143 = vmatpush1.msra.mxu0 0.0
    %1144 = vmatprep.subr.mxu0 0.0
    %1145 = vmatpush1.msra.mxu0 0.0
    %1146 = vmatprep.subr.mxu0 0.0
    %1147 = vmatpush1.msra.mxu0 %v902
    %1148 = vmatprep.subr.mxu0 0.0
    %1149 = vmatpush1.msra.mxu0 %v901
    %1150 = vmatprep.subr.mxu0 0.0
    %1151 = vmatpush1.msra.mxu0 %v900
    %1152 = vmatprep.subr.mxu0 0.0
    %1153 = vmatpush1.msra.mxu0 %v899
    %1154 = vmatprep.subr.mxu0 0.0
    %1155 = vmatpush1.msra.mxu0 %v898
    %1156 = vmatprep.subr.mxu0 0.0
    %1157 = vmatpush1.msra.mxu0 %v897
    %1158 = vmatprep.subr.mxu0 0.0
    %1159 = vmatpush1.msra.mxu0 %v896
    %1160 = vmatprep.subr.mxu0 0.0
    %1161 = vmatpush1.msra.mxu0 %v895
    %1162 = vmatprep.subr.mxu0 0.0
    %1163 = vmatpush1.msra.mxu0 %v894
    %1164 = vmatprep.subr.mxu0 0.0
    %1165 = vmatpush1.msra.mxu0 %v893
    %1166 = vmatprep.subr.mxu0 0.0
    %1167 = vmatpush2.msra.mxu0 0.0
    %1168 = vmatprep.subr.mxu0 0.0
    %1169 = vmatpush2.msra.mxu0 0.0
    %1170 = vmatprep.subr.mxu0 0.0
    %1171 = vmatpush2.msra.mxu0 0.0
    %1172 = vmatprep.subr.mxu0 0.0
    %1173 = vmatpush2.msra.mxu0 0.0
    %1174 = vmatprep.subr.mxu0 0.0
    %1175 = vmatpush2.msra.mxu0 0.0
    %1176 = vmatprep.subr.mxu0 0.0
    %1177 = vmatpush2.msra.mxu0 0.0
    %1178 = vmatprep.subr.mxu0 0.0
    %1179 = vmatpush2.msra.mxu0 0.0
    %1180 = vmatprep.subr.mxu0 0.0
    %1181 = vmatpush2.msra.mxu0 0.0
    %1182 = vmatprep.subr.mxu0 0.0
    %1183 = vmatpush2.msra.mxu0 0.0
    %1184 = vmatprep.subr.mxu0 0.0
    %1185 = vmatpush2.msra.mxu0 0.0
    %1186 = vmatprep.subr.mxu0 0.0
    %1187 = vmatpush2.msra.mxu0 0.0
    %1188 = vmatprep.subr.mxu0 0.0
    %1189 = vmatpush2.msra.mxu0 0.0
    %1190 = vmatprep.subr.mxu0 0.0
    %1191 = vmatpush2.msra.mxu0 0.0
    %1192 = vmatprep.subr.mxu0 0.0
    %1193 = vmatpush2.msra.mxu0 0.0
    %1194 = vmatprep.subr.mxu0 0.0
    %1195 = vmatpush2.msra.mxu0 0.0
    %1196 = vmatprep.subr.mxu0 0.0
    %1197 = vmatpush2.msra.mxu0 0.0
    %1198 = vmatprep.mubr.f32.mxu0 0.0
    %1199 = vmatmul.mubr.f32.gmra.mxu0 %v1046
    %v1200 = vpop.f32.mrf.mxu0
    %v1201 = vadd.f32 0.0, %v1200
    %v1202 = vpop.f32.mrf.mxu0
    %1203 = vmatprep.mubr.f32.mxu0 0.0
    %1204 = vmatmul.mubr.f32.gmra.mxu0 %v1049
    %v1205 = vpop.f32.mrf.mxu0
    %v1206 = vadd.f32 0.0, %v1205
    %v1207 = vpop.f32.mrf.mxu0
    %1208 = vmatprep.mubr.f32.mxu0 0.0
    %1209 = vmatmul.mubr.f32.gmra.mxu0 %v1052
    %v1210 = vpop.f32.mrf.mxu0
    %v1211 = vadd.f32 0.0, %v1210
    %v1212 = vpop.f32.mrf.mxu0
    %1213 = vdwg.mxu0
    %v1214 = vrcp.pop %v1121
    %v1215 = vrcp.pop %v1126
    %v1216 = vrcp.pop %v1131
    %v1217 = vmul.f32 %v1201, %v1214
    %v1218 = vmul.f32 %v1206, %v1215
    %v1219 = vmul.f32 %v1211, %v1216
    %v1220 = vpack.c.bf16 %v1218, %v1217
    %v1221 = vpack.c.bf16 %v1219, %v1219
    %v1222 = vld [vmem:[#allocation7] sm:$0xf]
    %v1223 = vld [vmem:[#allocation7 + $0x4] sm:$0xf]
    %v1224 = vld [vmem:[#allocation7 + $0x8] sm:$0xf]
    %v1225 = vld [vmem:[#allocation7 + $0xc] sm:$0xf]
    %v1226 = vld [vmem:[%s6] sm:$0x1]
    %v1228 = vlaneseq
    %v1229 = vshrl.u32 %v1228, 7
    %v1230 = vsub.s32 0, %v1229
    %v1231 = vrot.slane %v1226, %v1230
    %v1237 = vunpack.c.l.b16 %v1222
    %v1238 = vunpack.c.l.b16 %v1223
    %v1239 = vunpack.c.l.b16 %v1224
    %v1240 = vunpack.c.l.b16 %v1225
    %v1241 = vpack.c.b16 %v1238, %v1237
    %v1242 = vpack.c.b16 %v1240, %v1239
    %v1246 = vsel %vm543, %v1220, 0
    %v1249 = vsel %vm543, %v1221, 0
    %1251 = vmatprep.subr.bf16.mxu0 0
    %1252 = vmatpush1.bf16.msra.mxu0 0
    %1253 = vmatprep.subr.bf16.mxu0 0
    %1254 = vmatpush1.bf16.msra.mxu0 0
    %1255 = vmatprep.subr.bf16.mxu0 0
    %1256 = vmatpush1.bf16.msra.mxu0 0
    %1257 = vmatprep.subr.bf16.mxu0 0
    %1258 = vmatpush1.bf16.msra.mxu0 0
    %1259 = vmatprep.subr.bf16.mxu0 0
    %1260 = vmatpush1.bf16.msra.mxu0 0
    %1261 = vmatprep.subr.bf16.mxu0 0
    %1262 = vmatpush1.bf16.msra.mxu0 0
    %1263 = vmatprep.subr.bf16.mxu0 0
    %1264 = vmatpush1.bf16.msra.mxu0 %v1242
    %1265 = vmatprep.subr.bf16.mxu0 0
    %1266 = vmatpush1.bf16.msra.mxu0 %v1241
    %1267 = vmatprep.subr.bf16.mxu0 0
    %1268 = vmatpush2.bf16.msra.mxu0 0
    %1269 = vmatprep.subr.bf16.mxu0 0
    %1270 = vmatpush2.bf16.msra.mxu0 0
    %1271 = vmatprep.subr.bf16.mxu0 0
    %1272 = vmatpush2.bf16.msra.mxu0 0
    %1273 = vmatprep.subr.bf16.mxu0 0
    %1274 = vmatpush2.bf16.msra.mxu0 0
    %1275 = vmatprep.subr.bf16.mxu0 0
    %1276 = vmatpush2.bf16.msra.mxu0 0
    %1277 = vmatprep.subr.bf16.mxu0 0
    %1278 = vmatpush2.bf16.msra.mxu0 0
    %1279 = vmatprep.subr.bf16.mxu0 0
    %1280 = vmatpush2.bf16.msra.mxu0 0
    %1281 = vmatprep.subr.bf16.mxu0 0
    %1282 = vmatpush2.bf16.msra.mxu0 0
    %1283 = vmatprep.mubr.bf16.mxu0 0
    %1284 = vmatmul.mubr.bf16.gmra.mxu0 %v1246
    %v1285 = vpop.f32.mrf.mxu0
    %v1286 = vadd.f32 %v1231, %v1285
    %v1287 = vpop.f32.mrf.mxu0
    %v1288 = vpop.f32.mrf.mxu0
    %v1289 = vadd.f32 %v1231, %v1288
    %v1290 = vpop.f32.mrf.mxu0
    %1291 = vmatprep.mubr.bf16.mxu0 0
    %1292 = vmatmul.mubr.bf16.gmra.mxu0 %v1249
    %v1293 = vpop.f32.mrf.mxu0
    %v1294 = vadd.f32 %v1231, %v1293
    %v1295 = vpop.f32.mrf.mxu0
    %v1296 = vpop.f32.mrf.mxu0
    %v1297 = vpop.f32.mrf.mxu0
    %1298 = vdwg.mxu0
    %v1299 = vadd.f32 %v505, %v1286
    %v1300 = vadd.f32 %v510, %v1289
    %v1301 = vadd.f32 %v515, %v1294
    %v1302 = vld [vmem:[%s11] sm:$0x1]
    %v1303 = vld [vmem:[%s12] sm:$0x1]
    %v1304 = vsel %vm543, %v1299, 0.0
    %1305 = vadd.xlane.f32.xlu0 %v1304
    %v1306 = vpop.xlane.xlu0 %1305
    %v1307 = vsel %vm543, %v1300, 0.0
    %1308 = vadd.xlane.f32.xlu0 %v1307
    %v1309 = vpop.xlane.xlu0 %1308
    %vm1310 = vcmask 257024
    %v1311 = vsel %vm1310, %v1301, 0.0
    %1312 = vadd.xlane.f32.xlu0 %v1311
    %v1313 = vpop.xlane.xlu0 %1312
    %v1314 = vrcp.pop 32.0
    %v1315 = vmul.f32 %v1306, %v1314
    %v1316 = vmul.f32 %v1309, %v1314
    %v1317 = vmul.f32 %v1313, %v1314
    %v1318 = vsub.f32 %v1299, %v1315
    %v1319 = vsub.f32 %v1300, %v1316
    %v1320 = vsub.f32 %v1301, %v1317
    %v1321 = vmul.f32 %v1318, %v1318
    %v1322 = vmul.f32 %v1319, %v1319
    %v1323 = vmul.f32 %v1320, %v1320
    %v1324 = vsel %vm543, %v1321, 0.0
    %1325 = vadd.xlane.f32.xlu0 %v1324
    %v1326 = vpop.xlane.xlu0 %1325
    %v1327 = vsel %vm543, %v1322, 0.0
    %1328 = vadd.xlane.f32.xlu0 %v1327
    %v1329 = vpop.xlane.xlu0 %1328
    %v1330 = vsel %vm1310, %v1323, 0.0
    %1331 = vadd.xlane.f32.xlu0 %v1330
    %v1332 = vpop.xlane.xlu0 %1331
    %v1333 = vmul.f32 %v1326, %v1314
    %v1334 = vmul.f32 %v1329, %v1314
    %v1335 = vmul.f32 %v1332, %v1314
    %v1336 = vadd.f32 %v1333, 1e-05
    %v1337 = vadd.f32 %v1334, 1e-05
    %v1338 = vadd.f32 %v1335, 1e-05
    %v1339 = vrsqrt.pop %v1336
    %v1340 = vrsqrt.pop %v1337
    %v1341 = vrsqrt.pop %v1338
    %v1342 = vmul.f32 %v1318, %v1339
    %v1343 = vmul.f32 %v1319, %v1340
    %v1344 = vmul.f32 %v1320, %v1341
    %v1346 = vlaneseq
    %v1347 = vshrl.u32 %v1346, 7
    %v1348 = vsub.s32 0, %v1347
    %v1349 = vrot.slane %v1302, %v1348
    %v1351 = vmul.f32 %v1342, %v1349
    %v1352 = vmul.f32 %v1343, %v1349
    %v1353 = vmul.f32 %v1344, %v1349
    %v1355 = vlaneseq
    %v1356 = vshrl.u32 %v1355, 7
    %v1357 = vsub.s32 0, %v1356
    %v1358 = vrot.slane %v1303, %v1357
    %v1360 = vadd.f32 %v1351, %v1358
    %v1361 = vadd.f32 %v1352, %v1358
    %v1362 = vadd.f32 %v1353, %v1358
    %v1363 = vpack.c.bf16 %v1361, %v1360
    %v1364 = vpack.c.bf16 %v1362, %v1362
    %v1365 = vld [vmem:[#allocation8] sm:$0xff]
    %v1366 = vld [vmem:[#allocation8 + $0x8] sm:$0xff]
    %v1367 = vld [vmem:[#allocation8 + $0x10] sm:$0xff]
    %v1368 = vld [vmem:[#allocation8 + $0x18] sm:$0xff]
    %v1369 = vld [vmem:[#allocation8 + $0x20] sm:$0xff]
    %v1370 = vld [vmem:[#allocation8 + $0x28] sm:$0xff]
    %v1371 = vld [vmem:[#allocation8 + $0x30] sm:$0xff]
    %v1372 = vld [vmem:[#allocation8 + $0x38] sm:$0xff]
    %v1373 = vld [vmem:[#allocation8 + $0x40] sm:$0xff]
    %v1374 = vld [vmem:[#allocation8 + $0x48] sm:$0xff]
    %v1375 = vld [vmem:[#allocation8 + $0x50] sm:$0xff]
    %v1376 = vld [vmem:[#allocation8 + $0x58] sm:$0xff]
    %v1377 = vld [vmem:[#allocation8 + $0x60] sm:$0xff]
    %v1378 = vld [vmem:[#allocation8 + $0x68] sm:$0xff]
    %v1379 = vld [vmem:[#allocation8 + $0x70] sm:$0xff]
    %v1380 = vld [vmem:[#allocation8 + $0x78] sm:$0xff]
    %v1381 = vld [vmem:[#allocation8 + $0x80] sm:$0xff]
    %v1382 = vld [vmem:[#allocation8 + $0x88] sm:$0xff]
    %v1383 = vld [vmem:[#allocation8 + $0x90] sm:$0xff]
    %v1384 = vld [vmem:[#allocation8 + $0x98] sm:$0xff]
    %v1385 = vld [vmem:[#allocation8 + $0xa0] sm:$0xff]
    %v1386 = vld [vmem:[#allocation8 + $0xa8] sm:$0xff]
    %v1387 = vld [vmem:[#allocation8 + $0xb0] sm:$0xff]
    %v1388 = vld [vmem:[#allocation8 + $0xb8] sm:$0xff]
    %v1389 = vld [vmem:[#allocation8 + $0xc0] sm:$0xff]
    %v1390 = vld [vmem:[#allocation8 + $0xc8] sm:$0xff]
    %v1391 = vld [vmem:[#allocation8 + $0xd0] sm:$0xff]
    %v1392 = vld [vmem:[#allocation8 + $0xd8] sm:$0xff]
    %v1393 = vld [vmem:[#allocation8 + $0xe0] sm:$0xff]
    %v1394 = vld [vmem:[#allocation8 + $0xe8] sm:$0xff]
    %v1395 = vld [vmem:[#allocation8 + $0xf0] sm:$0xff]
    %v1396 = vld [vmem:[#allocation8 + $0xf8] sm:$0xff]
    %v1397 = vld [vmem:[#allocation10] sm:$0xff]
    %v1398 = vld [vmem:[#allocation10 + $0x8] sm:$0xff]
    %v1401 = vlaneseq
    %v1402 = vshrl.u32 %v1401, 7
    %v1403 = vsub.s32 0, %v1402
    %v1404 = vrot.slane %v1397, %v1403
    %v1405 = vlaneseq
    %v1406 = vshrl.u32 %v1405, 7
    %v1407 = vsub.s32 1, %v1406
    %v1408 = vrot.slane %v1397, %v1407
    %v1409 = vlaneseq
    %v1410 = vshrl.u32 %v1409, 7
    %v1411 = vsub.s32 2, %v1410
    %v1412 = vrot.slane %v1397, %v1411
    %v1413 = vlaneseq
    %v1414 = vshrl.u32 %v1413, 7
    %v1415 = vsub.s32 3, %v1414
    %v1416 = vrot.slane %v1397, %v1415
    %v1417 = vlaneseq
    %v1418 = vshrl.u32 %v1417, 7
    %v1419 = vsub.s32 4, %v1418
    %v1420 = vrot.slane %v1397, %v1419
    %v1421 = vlaneseq
    %v1422 = vshrl.u32 %v1421, 7
    %v1423 = vsub.s32 5, %v1422
    %v1424 = vrot.slane %v1397, %v1423
    %v1425 = vlaneseq
    %v1426 = vshrl.u32 %v1425, 7
    %v1427 = vsub.s32 6, %v1426
    %v1428 = vrot.slane %v1397, %v1427
    %v1429 = vlaneseq
    %v1430 = vshrl.u32 %v1429, 7
    %v1431 = vsub.s32 7, %v1430
    %v1432 = vrot.slane %v1397, %v1431
    %v1433 = vlaneseq
    %v1434 = vshrl.u32 %v1433, 7
    %v1435 = vsub.s32 0, %v1434
    %v1436 = vrot.slane %v1398, %v1435
    %v1437 = vlaneseq
    %v1438 = vshrl.u32 %v1437, 7
    %v1439 = vsub.s32 1, %v1438
    %v1440 = vrot.slane %v1398, %v1439
    %v1441 = vlaneseq
    %v1442 = vshrl.u32 %v1441, 7
    %v1443 = vsub.s32 2, %v1442
    %v1444 = vrot.slane %v1398, %v1443
    %v1445 = vlaneseq
    %v1446 = vshrl.u32 %v1445, 7
    %v1447 = vsub.s32 3, %v1446
    %v1448 = vrot.slane %v1398, %v1447
    %v1449 = vlaneseq
    %v1450 = vshrl.u32 %v1449, 7
    %v1451 = vsub.s32 4, %v1450
    %v1452 = vrot.slane %v1398, %v1451
    %v1453 = vlaneseq
    %v1454 = vshrl.u32 %v1453, 7
    %v1455 = vsub.s32 5, %v1454
    %v1456 = vrot.slane %v1398, %v1455
    %v1457 = vlaneseq
    %v1458 = vshrl.u32 %v1457, 7
    %v1459 = vsub.s32 6, %v1458
    %v1460 = vrot.slane %v1398, %v1459
    %v1461 = vlaneseq
    %v1462 = vshrl.u32 %v1461, 7
    %v1463 = vsub.s32 7, %v1462
    %v1464 = vrot.slane %v1398, %v1463
    %v1513 = vunpack.c.l.b16 %v1365
    %v1514 = vunpack.c.h.b16 %v1365
    %v1515 = vunpack.c.l.b16 %v1366
    %v1516 = vunpack.c.h.b16 %v1366
    %v1517 = vunpack.c.l.b16 %v1367
    %v1518 = vunpack.c.h.b16 %v1367
    %v1519 = vunpack.c.l.b16 %v1368
    %v1520 = vunpack.c.h.b16 %v1368
    %v1521 = vunpack.c.l.b16 %v1369
    %v1522 = vunpack.c.h.b16 %v1369
    %v1523 = vunpack.c.l.b16 %v1370
    %v1524 = vunpack.c.h.b16 %v1370
    %v1525 = vunpack.c.l.b16 %v1371
    %v1526 = vunpack.c.h.b16 %v1371
    %v1527 = vunpack.c.l.b16 %v1372
    %v1528 = vunpack.c.h.b16 %v1372
    %v1529 = vunpack.c.l.b16 %v1373
    %v1530 = vunpack.c.h.b16 %v1373
    %v1531 = vunpack.c.l.b16 %v1374
    %v1532 = vunpack.c.h.b16 %v1374
    %v1533 = vunpack.c.l.b16 %v1375
    %v1534 = vunpack.c.h.b16 %v1375
    %v1535 = vunpack.c.l.b16 %v1376
    %v1536 = vunpack.c.h.b16 %v1376
    %v1537 = vunpack.c.l.b16 %v1377
    %v1538 = vunpack.c.h.b16 %v1377
    %v1539 = vunpack.c.l.b16 %v1378
    %v1540 = vunpack.c.h.b16 %v1378
    %v1541 = vunpack.c.l.b16 %v1379
    %v1542 = vunpack.c.h.b16 %v1379
    %v1543 = vunpack.c.l.b16 %v1380
    %v1544 = vunpack.c.h.b16 %v1380
    %v1545 = vunpack.c.l.b16 %v1381
    %v1546 = vunpack.c.h.b16 %v1381
    %v1547 = vunpack.c.l.b16 %v1382
    %v1548 = vunpack.c.h.b16 %v1382
    %v1549 = vunpack.c.l.b16 %v1383
    %v1550 = vunpack.c.h.b16 %v1383
    %v1551 = vunpack.c.l.b16 %v1384
    %v1552 = vunpack.c.h.b16 %v1384
    %v1553 = vunpack.c.l.b16 %v1385
    %v1554 = vunpack.c.h.b16 %v1385
    %v1555 = vunpack.c.l.b16 %v1386
    %v1556 = vunpack.c.h.b16 %v1386
    %v1557 = vunpack.c.l.b16 %v1387
    %v1558 = vunpack.c.h.b16 %v1387
    %v1559 = vunpack.c.l.b16 %v1388
    %v1560 = vunpack.c.h.b16 %v1388
    %v1561 = vunpack.c.l.b16 %v1389
    %v1562 = vunpack.c.h.b16 %v1389
    %v1563 = vunpack.c.l.b16 %v1390
    %v1564 = vunpack.c.h.b16 %v1390
    %v1565 = vunpack.c.l.b16 %v1391
    %v1566 = vunpack.c.h.b16 %v1391
    %v1567 = vunpack.c.l.b16 %v1392
    %v1568 = vunpack.c.h.b16 %v1392
    %v1569 = vunpack.c.l.b16 %v1393
    %v1570 = vunpack.c.h.b16 %v1393
    %v1571 = vunpack.c.l.b16 %v1394
    %v1572 = vunpack.c.h.b16 %v1394
    %v1573 = vunpack.c.l.b16 %v1395
    %v1574 = vunpack.c.h.b16 %v1395
    %v1575 = vunpack.c.l.b16 %v1396
    %v1576 = vunpack.c.h.b16 %v1396
    %v1577 = vpack.c.b16 %v1529, %v1513
    %v1578 = vpack.c.b16 %v1530, %v1514
    %v1579 = vpack.c.b16 %v1531, %v1515
    %v1580 = vpack.c.b16 %v1532, %v1516
    %v1581 = vpack.c.b16 %v1533, %v1517
    %v1582 = vpack.c.b16 %v1534, %v1518
    %v1583 = vpack.c.b16 %v1535, %v1519
    %v1584 = vpack.c.b16 %v1536, %v1520
    %v1585 = vpack.c.b16 %v1537, %v1521
    %v1586 = vpack.c.b16 %v1538, %v1522
    %v1587 = vpack.c.b16 %v1539, %v1523
    %v1588 = vpack.c.b16 %v1540, %v1524
    %v1589 = vpack.c.b16 %v1541, %v1525
    %v1590 = vpack.c.b16 %v1542, %v1526
    %v1591 = vpack.c.b16 %v1543, %v1527
    %v1592 = vpack.c.b16 %v1544, %v1528
    %v1593 = vpack.c.b16 %v1561, %v1545
    %v1594 = vpack.c.b16 %v1562, %v1546
    %v1595 = vpack.c.b16 %v1563, %v1547
    %v1596 = vpack.c.b16 %v1564, %v1548
    %v1597 = vpack.c.b16 %v1565, %v1549
    %v1598 = vpack.c.b16 %v1566, %v1550
    %v1599 = vpack.c.b16 %v1567, %v1551
    %v1600 = vpack.c.b16 %v1568, %v1552
    %v1601 = vpack.c.b16 %v1569, %v1553
    %v1602 = vpack.c.b16 %v1570, %v1554
    %v1603 = vpack.c.b16 %v1571, %v1555
    %v1604 = vpack.c.b16 %v1572, %v1556
    %v1605 = vpack.c.b16 %v1573, %v1557
    %v1606 = vpack.c.b16 %v1574, %v1558
    %v1607 = vpack.c.b16 %v1575, %v1559
    %v1608 = vpack.c.b16 %v1576, %v1560
    %v1642 = vsel %vm543, %v1363, 0
    %v1645 = vsel %vm543, %v1364, 0
    %1647 = vmatprep.subr.bf16.mxu0 0
    %1648 = vmatpush1.bf16.msra.mxu0 0
    %1649 = vmatprep.subr.bf16.mxu0 0
    %1650 = vmatpush1.bf16.msra.mxu0 0
    %1651 = vmatprep.subr.bf16.mxu0 0
    %1652 = vmatpush1.bf16.msra.mxu0 0
    %1653 = vmatprep.subr.bf16.mxu0 0
    %1654 = vmatpush1.bf16.msra.mxu0 0
    %1655 = vmatprep.subr.bf16.mxu0 0
    %1656 = vmatpush1.bf16.msra.mxu0 0
    %1657 = vmatprep.subr.bf16.mxu0 0
    %1658 = vmatpush1.bf16.msra.mxu0 0
    %1659 = vmatprep.subr.bf16.mxu0 %v1594
    %1660 = vmatpush1.bf16.msra.mxu0 %v1593
    %1661 = vmatprep.subr.bf16.mxu0 %v1578
    %1662 = vmatpush1.bf16.msra.mxu0 %v1577
    %1663 = vmatprep.subr.bf16.mxu0 0
    %1664 = vmatpush2.bf16.msra.mxu0 0
    %1665 = vmatprep.subr.bf16.mxu0 0
    %1666 = vmatpush2.bf16.msra.mxu0 0
    %1667 = vmatprep.subr.bf16.mxu0 0
    %1668 = vmatpush2.bf16.msra.mxu0 0
    %1669 = vmatprep.subr.bf16.mxu0 0
    %1670 = vmatpush2.bf16.msra.mxu0 0
    %1671 = vmatprep.subr.bf16.mxu0 0
    %1672 = vmatpush2.bf16.msra.mxu0 0
    %1673 = vmatprep.subr.bf16.mxu0 0
    %1674 = vmatpush2.bf16.msra.mxu0 0
    %1675 = vmatprep.subr.bf16.mxu0 0
    %1676 = vmatpush2.bf16.msra.mxu0 0
    %1677 = vmatprep.subr.bf16.mxu0 0
    %1678 = vmatpush2.bf16.msra.mxu0 0
    %1679 = vmatprep.mubr.bf16.mxu0 0
    %1680 = vmatmul.mubr.bf16.gmra.mxu0 %v1642
    %v1681 = vpop.f32.mrf.mxu0
    %v1682 = vadd.f32 %v1404, %v1681
    %v1683 = vpop.f32.mrf.mxu0
    %v1684 = vadd.f32 %v1408, %v1683
    %v1685 = vpop.f32.mrf.mxu0
    %v1686 = vadd.f32 %v1404, %v1685
    %v1687 = vpop.f32.mrf.mxu0
    %v1688 = vadd.f32 %v1408, %v1687
    %1689 = vmatprep.mubr.bf16.mxu0 0
    %1690 = vmatmul.mubr.bf16.gmra.mxu0 %v1645
    %v1691 = vpop.f32.mrf.mxu0
    %v1692 = vadd.f32 %v1404, %v1691
    %v1693 = vpop.f32.mrf.mxu0
    %v1694 = vadd.f32 %v1408, %v1693
    %v1695 = vpop.f32.mrf.mxu0
    %v1696 = vpop.f32.mrf.mxu0
    %1697 = vdwg.mxu0
    %1698 = vmatprep.subr.bf16.mxu0 0
    %1699 = vmatpush1.bf16.msra.mxu0 0
    %1700 = vmatprep.subr.bf16.mxu0 0
    %1701 = vmatpush1.bf16.msra.mxu0 0
    %1702 = vmatprep.subr.bf16.mxu0 0
    %1703 = vmatpush1.bf16.msra.mxu0 0
    %1704 = vmatprep.subr.bf16.mxu0 0
    %1705 = vmatpush1.bf16.msra.mxu0 0
    %1706 = vmatprep.subr.bf16.mxu0 0
    %1707 = vmatpush1.bf16.msra.mxu0 0
    %1708 = vmatprep.subr.bf16.mxu0 0
    %1709 = vmatpush1.bf16.msra.mxu0 0
    %1710 = vmatprep.subr.bf16.mxu0 %v1596
    %1711 = vmatpush1.bf16.msra.mxu0 %v1595
    %1712 = vmatprep.subr.bf16.mxu0 %v1580
    %1713 = vmatpush1.bf16.msra.mxu0 %v1579
    %1714 = vmatprep.subr.bf16.mxu0 0
    %1715 = vmatpush2.bf16.msra.mxu0 0
    %1716 = vmatprep.subr.bf16.mxu0 0
    %1717 = vmatpush2.bf16.msra.mxu0 0
    %1718 = vmatprep.subr.bf16.mxu0 0
    %1719 = vmatpush2.bf16.msra.mxu0 0
    %1720 = vmatprep.subr.bf16.mxu0 0
    %1721 = vmatpush2.bf16.msra.mxu0 0
    %1722 = vmatprep.subr.bf16.mxu0 0
    %1723 = vmatpush2.bf16.msra.mxu0 0
    %1724 = vmatprep.subr.bf16.mxu0 0
    %1725 = vmatpush2.bf16.msra.mxu0 0
    %1726 = vmatprep.subr.bf16.mxu0 0
    %1727 = vmatpush2.bf16.msra.mxu0 0
    %1728 = vmatprep.subr.bf16.mxu0 0
    %1729 = vmatpush2.bf16.msra.mxu0 0
    %1730 = vmatprep.mubr.bf16.mxu0 0
    %1731 = vmatmul.mubr.bf16.gmra.mxu0 %v1642
    %v1732 = vpop.f32.mrf.mxu0
    %v1733 = vadd.f32 %v1412, %v1732
    %v1734 = vpop.f32.mrf.mxu0
    %v1735 = vadd.f32 %v1416, %v1734
    %v1736 = vpop.f32.mrf.mxu0
    %v1737 = vadd.f32 %v1412, %v1736
    %v1738 = vpop.f32.mrf.mxu0
    %v1739 = vadd.f32 %v1416, %v1738
    %1740 = vmatprep.mubr.bf16.mxu0 0
    %1741 = vmatmul.mubr.bf16.gmra.mxu0 %v1645
    %v1742 = vpop.f32.mrf.mxu0
    %v1743 = vadd.f32 %v1412, %v1742
    %v1744 = vpop.f32.mrf.mxu0
    %v1745 = vadd.f32 %v1416, %v1744
    %v1746 = vpop.f32.mrf.mxu0
    %v1747 = vpop.f32.mrf.mxu0
    %1748 = vdwg.mxu0
    %1749 = vmatprep.subr.bf16.mxu0 0
    %1750 = vmatpush1.bf16.msra.mxu0 0
    %1751 = vmatprep.subr.bf16.mxu0 0
    %1752 = vmatpush1.bf16.msra.mxu0 0
    %1753 = vmatprep.subr.bf16.mxu0 0
    %1754 = vmatpush1.bf16.msra.mxu0 0
    %1755 = vmatprep.subr.bf16.mxu0 0
    %1756 = vmatpush1.bf16.msra.mxu0 0
    %1757 = vmatprep.subr.bf16.mxu0 0
    %1758 = vmatpush1.bf16.msra.mxu0 0
    %1759 = vmatprep.subr.bf16.mxu0 0
    %1760 = vmatpush1.bf16.msra.mxu0 0
    %1761 = vmatprep.subr.bf16.mxu0 %v1598
    %1762 = vmatpush1.bf16.msra.mxu0 %v1597
    %1763 = vmatprep.subr.bf16.mxu0 %v1582
    %1764 = vmatpush1.bf16.msra.mxu0 %v1581
    %1765 = vmatprep.subr.bf16.mxu0 0
    %1766 = vmatpush2.bf16.msra.mxu0 0
    %1767 = vmatprep.subr.bf16.mxu0 0
    %1768 = vmatpush2.bf16.msra.mxu0 0
    %1769 = vmatprep.subr.bf16.mxu0 0
    %1770 = vmatpush2.bf16.msra.mxu0 0
    %1771 = vmatprep.subr.bf16.mxu0 0
    %1772 = vmatpush2.bf16.msra.mxu0 0
    %1773 = vmatprep.subr.bf16.mxu0 0
    %1774 = vmatpush2.bf16.msra.mxu0 0
    %1775 = vmatprep.subr.bf16.mxu0 0
    %1776 = vmatpush2.bf16.msra.mxu0 0
    %1777 = vmatprep.subr.bf16.mxu0 0
    %1778 = vmatpush2.bf16.msra.mxu0 0
    %1779 = vmatprep.subr.bf16.mxu0 0
    %1780 = vmatpush2.bf16.msra.mxu0 0
    %1781 = vmatprep.mubr.bf16.mxu0 0
    %1782 = vmatmul.mubr.bf16.gmra.mxu0 %v1642
    %v1783 = vpop.f32.mrf.mxu0
    %v1784 = vadd.f32 %v1420, %v1783
    %v1785 = vpop.f32.mrf.mxu0
    %v1786 = vadd.f32 %v1424, %v1785
    %v1787 = vpop.f32.mrf.mxu0
    %v1788 = vadd.f32 %v1420, %v1787
    %v1789 = vpop.f32.mrf.mxu0
    %v1790 = vadd.f32 %v1424, %v1789
    %1791 = vmatprep.mubr.bf16.mxu0 0
    %1792 = vmatmul.mubr.bf16.gmra.mxu0 %v1645
    %v1793 = vpop.f32.mrf.mxu0
    %v1794 = vadd.f32 %v1420, %v1793
    %v1795 = vpop.f32.mrf.mxu0
    %v1796 = vadd.f32 %v1424, %v1795
    %v1797 = vpop.f32.mrf.mxu0
    %v1798 = vpop.f32.mrf.mxu0
    %1799 = vdwg.mxu0
    %1800 = vmatprep.subr.bf16.mxu0 0
    %1801 = vmatpush1.bf16.msra.mxu0 0
    %1802 = vmatprep.subr.bf16.mxu0 0
    %1803 = vmatpush1.bf16.msra.mxu0 0
    %1804 = vmatprep.subr.bf16.mxu0 0
    %1805 = vmatpush1.bf16.msra.mxu0 0
    %1806 = vmatprep.subr.bf16.mxu0 0
    %1807 = vmatpush1.bf16.msra.mxu0 0
    %1808 = vmatprep.subr.bf16.mxu0 0
    %1809 = vmatpush1.bf16.msra.mxu0 0
    %1810 = vmatprep.subr.bf16.mxu0 0
    %1811 = vmatpush1.bf16.msra.mxu0 0
    %1812 = vmatprep.subr.bf16.mxu0 %v1600
    %1813 = vmatpush1.bf16.msra.mxu0 %v1599
    %1814 = vmatprep.subr.bf16.mxu0 %v1584
    %1815 = vmatpush1.bf16.msra.mxu0 %v1583
    %1816 = vmatprep.subr.bf16.mxu0 0
    %1817 = vmatpush2.bf16.msra.mxu0 0
    %1818 = vmatprep.subr.bf16.mxu0 0
    %1819 = vmatpush2.bf16.msra.mxu0 0
    %1820 = vmatprep.subr.bf16.mxu0 0
    %1821 = vmatpush2.bf16.msra.mxu0 0
    %1822 = vmatprep.subr.bf16.mxu0 0
    %1823 = vmatpush2.bf16.msra.mxu0 0
    %1824 = vmatprep.subr.bf16.mxu0 0
    %1825 = vmatpush2.bf16.msra.mxu0 0
    %1826 = vmatprep.subr.bf16.mxu0 0
    %1827 = vmatpush2.bf16.msra.mxu0 0
    %1828 = vmatprep.subr.bf16.mxu0 0
    %1829 = vmatpush2.bf16.msra.mxu0 0
    %1830 = vmatprep.subr.bf16.mxu0 0
    %1831 = vmatpush2.bf16.msra.mxu0 0
    %1832 = vmatprep.mubr.bf16.mxu0 0
    %1833 = vmatmul.mubr.bf16.gmra.mxu0 %v1642
    %v1834 = vpop.f32.mrf.mxu0
    %v1835 = vadd.f32 %v1428, %v1834
    %v1836 = vpop.f32.mrf.mxu0
    %v1837 = vadd.f32 %v1432, %v1836
    %v1838 = vpop.f32.mrf.mxu0
    %v1839 = vadd.f32 %v1428, %v1838
    %v1840 = vpop.f32.mrf.mxu0
    %v1841 = vadd.f32 %v1432, %v1840
    %1842 = vmatprep.mubr.bf16.mxu0 0
    %1843 = vmatmul.mubr.bf16.gmra.mxu0 %v1645
    %v1844 = vpop.f32.mrf.mxu0
    %v1845 = vadd.f32 %v1428, %v1844
    %v1846 = vpop.f32.mrf.mxu0
    %v1847 = vadd.f32 %v1432, %v1846
    %v1848 = vpop.f32.mrf.mxu0
    %v1849 = vpop.f32.mrf.mxu0
    %1850 = vdwg.mxu0
    %1851 = vmatprep.subr.bf16.mxu0 0
    %1852 = vmatpush1.bf16.msra.mxu0 0
    %1853 = vmatprep.subr.bf16.mxu0 0
    %1854 = vmatpush1.bf16.msra.mxu0 0
    %1855 = vmatprep.subr.bf16.mxu0 0
    %1856 = vmatpush1.bf16.msra.mxu0 0
    %1857 = vmatprep.subr.bf16.mxu0 0
    %1858 = vmatpush1.bf16.msra.mxu0 0
    %1859 = vmatprep.subr.bf16.mxu0 0
    %1860 = vmatpush1.bf16.msra.mxu0 0
    %1861 = vmatprep.subr.bf16.mxu0 0
    %1862 = vmatpush1.bf16.msra.mxu0 0
    %1863 = vmatprep.subr.bf16.mxu0 %v1602
    %1864 = vmatpush1.bf16.msra.mxu0 %v1601
    %1865 = vmatprep.subr.bf16.mxu0 %v1586
    %1866 = vmatpush1.bf16.msra.mxu0 %v1585
    %1867 = vmatprep.subr.bf16.mxu0 0
    %1868 = vmatpush2.bf16.msra.mxu0 0
    %1869 = vmatprep.subr.bf16.mxu0 0
    %1870 = vmatpush2.bf16.msra.mxu0 0
    %1871 = vmatprep.subr.bf16.mxu0 0
    %1872 = vmatpush2.bf16.msra.mxu0 0
    %1873 = vmatprep.subr.bf16.mxu0 0
    %1874 = vmatpush2.bf16.msra.mxu0 0
    %1875 = vmatprep.subr.bf16.mxu0 0
    %1876 = vmatpush2.bf16.msra.mxu0 0
    %1877 = vmatprep.subr.bf16.mxu0 0
    %1878 = vmatpush2.bf16.msra.mxu0 0
    %1879 = vmatprep.subr.bf16.mxu0 0
    %1880 = vmatpush2.bf16.msra.mxu0 0
    %1881 = vmatprep.subr.bf16.mxu0 0
    %1882 = vmatpush2.bf16.msra.mxu0 0
    %1883 = vmatprep.mubr.bf16.mxu0 0
    %1884 = vmatmul.mubr.bf16.gmra.mxu0 %v1642
    %v1885 = vpop.f32.mrf.mxu0
    %v1886 = vadd.f32 %v1436, %v1885
    %v1887 = vpop.f32.mrf.mxu0
    %v1888 = vadd.f32 %v1440, %v1887
    %v1889 = vpop.f32.mrf.mxu0
    %v1890 = vadd.f32 %v1436, %v1889
    %v1891 = vpop.f32.mrf.mxu0
    %v1892 = vadd.f32 %v1440, %v1891
    %1893 = vmatprep.mubr.bf16.mxu0 0
    %1894 = vmatmul.mubr.bf16.gmra.mxu0 %v1645
    %v1895 = vpop.f32.mrf.mxu0
    %v1896 = vadd.f32 %v1436, %v1895
    %v1897 = vpop.f32.mrf.mxu0
    %v1898 = vadd.f32 %v1440, %v1897
    %v1899 = vpop.f32.mrf.mxu0
    %v1900 = vpop.f32.mrf.mxu0
    %1901 = vdwg.mxu0
    %1902 = vmatprep.subr.bf16.mxu0 0
    %1903 = vmatpush1.bf16.msra.mxu0 0
    %1904 = vmatprep.subr.bf16.mxu0 0
    %1905 = vmatpush1.bf16.msra.mxu0 0
    %1906 = vmatprep.subr.bf16.mxu0 0
    %1907 = vmatpush1.bf16.msra.mxu0 0
    %1908 = vmatprep.subr.bf16.mxu0 0
    %1909 = vmatpush1.bf16.msra.mxu0 0
    %1910 = vmatprep.subr.bf16.mxu0 0
    %1911 = vmatpush1.bf16.msra.mxu0 0
    %1912 = vmatprep.subr.bf16.mxu0 0
    %1913 = vmatpush1.bf16.msra.mxu0 0
    %1914 = vmatprep.subr.bf16.mxu0 %v1604
    %1915 = vmatpush1.bf16.msra.mxu0 %v1603
    %1916 = vmatprep.subr.bf16.mxu0 %v1588
    %1917 = vmatpush1.bf16.msra.mxu0 %v1587
    %1918 = vmatprep.subr.bf16.mxu0 0
    %1919 = vmatpush2.bf16.msra.mxu0 0
    %1920 = vmatprep.subr.bf16.mxu0 0
    %1921 = vmatpush2.bf16.msra.mxu0 0
    %1922 = vmatprep.subr.bf16.mxu0 0
    %1923 = vmatpush2.bf16.msra.mxu0 0
    %1924 = vmatprep.subr.bf16.mxu0 0
    %1925 = vmatpush2.bf16.msra.mxu0 0
    %1926 = vmatprep.subr.bf16.mxu0 0
    %1927 = vmatpush2.bf16.msra.mxu0 0
    %1928 = vmatprep.subr.bf16.mxu0 0
    %1929 = vmatpush2.bf16.msra.mxu0 0
    %1930 = vmatprep.subr.bf16.mxu0 0
    %1931 = vmatpush2.bf16.msra.mxu0 0
    %1932 = vmatprep.subr.bf16.mxu0 0
    %1933 = vmatpush2.bf16.msra.mxu0 0
    %1934 = vmatprep.mubr.bf16.mxu0 0
    %1935 = vmatmul.mubr.bf16.gmra.mxu0 %v1642
    %v1936 = vpop.f32.mrf.mxu0
    %v1937 = vadd.f32 %v1444, %v1936
    %v1938 = vpop.f32.mrf.mxu0
    %v1939 = vadd.f32 %v1448, %v1938
    %v1940 = vpop.f32.mrf.mxu0
    %v1941 = vadd.f32 %v1444, %v1940
    %v1942 = vpop.f32.mrf.mxu0
    %v1943 = vadd.f32 %v1448, %v1942
    %1944 = vmatprep.mubr.bf16.mxu0 0
    %1945 = vmatmul.mubr.bf16.gmra.mxu0 %v1645
    %v1946 = vpop.f32.mrf.mxu0
    %v1947 = vadd.f32 %v1444, %v1946
    %v1948 = vpop.f32.mrf.mxu0
    %v1949 = vadd.f32 %v1448, %v1948
    %v1950 = vpop.f32.mrf.mxu0
    %v1951 = vpop.f32.mrf.mxu0
    %1952 = vdwg.mxu0
    %1953 = vmatprep.subr.bf16.mxu0 0
    %1954 = vmatpush1.bf16.msra.mxu0 0
    %1955 = vmatprep.subr.bf16.mxu0 0
    %1956 = vmatpush1.bf16.msra.mxu0 0
    %1957 = vmatprep.subr.bf16.mxu0 0
    %1958 = vmatpush1.bf16.msra.mxu0 0
    %1959 = vmatprep.subr.bf16.mxu0 0
    %1960 = vmatpush1.bf16.msra.mxu0 0
    %1961 = vmatprep.subr.bf16.mxu0 0
    %1962 = vmatpush1.bf16.msra.mxu0 0
    %1963 = vmatprep.subr.bf16.mxu0 0
    %1964 = vmatpush1.bf16.msra.mxu0 0
    %1965 = vmatprep.subr.bf16.mxu0 %v1606
    %1966 = vmatpush1.bf16.msra.mxu0 %v1605
    %1967 = vmatprep.subr.bf16.mxu0 %v1590
    %1968 = vmatpush1.bf16.msra.mxu0 %v1589
    %1969 = vmatprep.subr.bf16.mxu0 0
    %1970 = vmatpush2.bf16.msra.mxu0 0
    %1971 = vmatprep.subr.bf16.mxu0 0
    %1972 = vmatpush2.bf16.msra.mxu0 0
    %1973 = vmatprep.subr.bf16.mxu0 0
    %1974 = vmatpush2.bf16.msra.mxu0 0
    %1975 = vmatprep.subr.bf16.mxu0 0
    %1976 = vmatpush2.bf16.msra.mxu0 0
    %1977 = vmatprep.subr.bf16.mxu0 0
    %1978 = vmatpush2.bf16.msra.mxu0 0
    %1979 = vmatprep.subr.bf16.mxu0 0
    %1980 = vmatpush2.bf16.msra.mxu0 0
    %1981 = vmatprep.subr.bf16.mxu0 0
    %1982 = vmatpush2.bf16.msra.mxu0 0
    %1983 = vmatprep.subr.bf16.mxu0 0
    %1984 = vmatpush2.bf16.msra.mxu0 0
    %1985 = vmatprep.mubr.bf16.mxu0 0
    %1986 = vmatmul.mubr.bf16.gmra.mxu0 %v1642
    %v1987 = vpop.f32.mrf.mxu0
    %v1988 = vadd.f32 %v1452, %v1987
    %v1989 = vpop.f32.mrf.mxu0
    %v1990 = vadd.f32 %v1456, %v1989
    %v1991 = vpop.f32.mrf.mxu0
    %v1992 = vadd.f32 %v1452, %v1991
    %v1993 = vpop.f32.mrf.mxu0
    %v1994 = vadd.f32 %v1456, %v1993
    %1995 = vmatprep.mubr.bf16.mxu0 0
    %1996 = vmatmul.mubr.bf16.gmra.mxu0 %v1645
    %v1997 = vpop.f32.mrf.mxu0
    %v1998 = vadd.f32 %v1452, %v1997
    %v1999 = vpop.f32.mrf.mxu0
    %v2000 = vadd.f32 %v1456, %v1999
    %v2001 = vpop.f32.mrf.mxu0
    %v2002 = vpop.f32.mrf.mxu0
    %2003 = vdwg.mxu0
    %2004 = vmatprep.subr.bf16.mxu0 0
    %2005 = vmatpush1.bf16.msra.mxu0 0
    %2006 = vmatprep.subr.bf16.mxu0 0
    %2007 = vmatpush1.bf16.msra.mxu0 0
    %2008 = vmatprep.subr.bf16.mxu0 0
    %2009 = vmatpush1.bf16.msra.mxu0 0
    %2010 = vmatprep.subr.bf16.mxu0 0
    %2011 = vmatpush1.bf16.msra.mxu0 0
    %2012 = vmatprep.subr.bf16.mxu0 0
    %2013 = vmatpush1.bf16.msra.mxu0 0
    %2014 = vmatprep.subr.bf16.mxu0 0
    %2015 = vmatpush1.bf16.msra.mxu0 0
    %2016 = vmatprep.subr.bf16.mxu0 %v1608
    %2017 = vmatpush1.bf16.msra.mxu0 %v1607
    %2018 = vmatprep.subr.bf16.mxu0 %v1592
    %2019 = vmatpush1.bf16.msra.mxu0 %v1591
    %2020 = vmatprep.subr.bf16.mxu0 0
    %2021 = vmatpush2.bf16.msra.mxu0 0
    %2022 = vmatprep.subr.bf16.mxu0 0
    %2023 = vmatpush2.bf16.msra.mxu0 0
    %2024 = vmatprep.subr.bf16.mxu0 0
    %2025 = vmatpush2.bf16.msra.mxu0 0
    %2026 = vmatprep.subr.bf16.mxu0 0
    %2027 = vmatpush2.bf16.msra.mxu0 0
    %2028 = vmatprep.subr.bf16.mxu0 0
    %2029 = vmatpush2.bf16.msra.mxu0 0
    %2030 = vmatprep.subr.bf16.mxu0 0
    %2031 = vmatpush2.bf16.msra.mxu0 0
    %2032 = vmatprep.subr.bf16.mxu0 0
    %2033 = vmatpush2.bf16.msra.mxu0 0
    %2034 = vmatprep.subr.bf16.mxu0 0
    %2035 = vmatpush2.bf16.msra.mxu0 0
    %2036 = vmatprep.mubr.bf16.mxu0 0
    %2037 = vmatmul.mubr.bf16.gmra.mxu0 %v1642
    %v2038 = vpop.f32.mrf.mxu0
    %v2039 = vadd.f32 %v1460, %v2038
    %v2040 = vpop.f32.mrf.mxu0
    %v2041 = vadd.f32 %v1464, %v2040
    %v2042 = vpop.f32.mrf.mxu0
    %v2043 = vadd.f32 %v1460, %v2042
    %v2044 = vpop.f32.mrf.mxu0
    %v2045 = vadd.f32 %v1464, %v2044
    %2046 = vmatprep.mubr.bf16.mxu0 0
    %2047 = vmatmul.mubr.bf16.gmra.mxu0 %v1645
    %v2048 = vpop.f32.mrf.mxu0
    %v2049 = vadd.f32 %v1460, %v2048
    %v2050 = vpop.f32.mrf.mxu0
    %v2051 = vadd.f32 %v1464, %v2050
    %v2052 = vpop.f32.mrf.mxu0
    %v2053 = vpop.f32.mrf.mxu0
    %2054 = vdwg.mxu0
    %v2055 = vmax.f32 %v1682, 0.0
    %v2056 = vmax.f32 %v1684, 0.0
    %v2057 = vmax.f32 %v1733, 0.0
    %v2058 = vmax.f32 %v1735, 0.0
    %v2059 = vmax.f32 %v1784, 0.0
    %v2060 = vmax.f32 %v1786, 0.0
    %v2061 = vmax.f32 %v1835, 0.0
    %v2062 = vmax.f32 %v1837, 0.0
    %v2063 = vmax.f32 %v1886, 0.0
    %v2064 = vmax.f32 %v1888, 0.0
    %v2065 = vmax.f32 %v1937, 0.0
    %v2066 = vmax.f32 %v1939, 0.0
    %v2067 = vmax.f32 %v1988, 0.0
    %v2068 = vmax.f32 %v1990, 0.0
    %v2069 = vmax.f32 %v2039, 0.0
    %v2070 = vmax.f32 %v2041, 0.0
    %v2071 = vmax.f32 %v1686, 0.0
    %v2072 = vmax.f32 %v1688, 0.0
    %v2073 = vmax.f32 %v1737, 0.0
    %v2074 = vmax.f32 %v1739, 0.0
    %v2075 = vmax.f32 %v1788, 0.0
    %v2076 = vmax.f32 %v1790, 0.0
    %v2077 = vmax.f32 %v1839, 0.0
    %v2078 = vmax.f32 %v1841, 0.0
    %v2079 = vmax.f32 %v1890, 0.0
    %v2080 = vmax.f32 %v1892, 0.0
    %v2081 = vmax.f32 %v1941, 0.0
    %v2082 = vmax.f32 %v1943, 0.0
    %v2083 = vmax.f32 %v1992, 0.0
    %v2084 = vmax.f32 %v1994, 0.0
    %v2085 = vmax.f32 %v2043, 0.0
    %v2086 = vmax.f32 %v2045, 0.0
    %v2087 = vmax.f32 %v1692, 0.0
    %v2088 = vmax.f32 %v1694, 0.0
    %v2089 = vmax.f32 %v1743, 0.0
    %v2090 = vmax.f32 %v1745, 0.0
    %v2091 = vmax.f32 %v1794, 0.0
    %v2092 = vmax.f32 %v1796, 0.0
    %v2093 = vmax.f32 %v1845, 0.0
    %v2094 = vmax.f32 %v1847, 0.0
    %v2095 = vmax.f32 %v1896, 0.0
    %v2096 = vmax.f32 %v1898, 0.0
    %v2097 = vmax.f32 %v1947, 0.0
    %v2098 = vmax.f32 %v1949, 0.0
    %v2099 = vmax.f32 %v1998, 0.0
    %v2100 = vmax.f32 %v2000, 0.0
    %v2101 = vmax.f32 %v2049, 0.0
    %v2102 = vmax.f32 %v2051, 0.0
    %v2103 = vpack.c.bf16 %v2071, %v2055
    %v2104 = vpack.c.bf16 %v2072, %v2056
    %v2105 = vpack.c.bf16 %v2073, %v2057
    %v2106 = vpack.c.bf16 %v2074, %v2058
    %v2107 = vpack.c.bf16 %v2075, %v2059
    %v2108 = vpack.c.bf16 %v2076, %v2060
    %v2109 = vpack.c.bf16 %v2077, %v2061
    %v2110 = vpack.c.bf16 %v2078, %v2062
    %v2111 = vpack.c.bf16 %v2079, %v2063
    %v2112 = vpack.c.bf16 %v2080, %v2064
    %v2113 = vpack.c.bf16 %v2081, %v2065
    %v2114 = vpack.c.bf16 %v2082, %v2066
    %v2115 = vpack.c.bf16 %v2083, %v2067
    %v2116 = vpack.c.bf16 %v2084, %v2068
    %v2117 = vpack.c.bf16 %v2085, %v2069
    %v2118 = vpack.c.bf16 %v2086, %v2070
    %v2119 = vpack.c.bf16 %v2087, %v2087
    %v2120 = vpack.c.bf16 %v2088, %v2088
    %v2121 = vpack.c.bf16 %v2089, %v2089
    %v2122 = vpack.c.bf16 %v2090, %v2090
    %v2123 = vpack.c.bf16 %v2091, %v2091
    %v2124 = vpack.c.bf16 %v2092, %v2092
    %v2125 = vpack.c.bf16 %v2093, %v2093
    %v2126 = vpack.c.bf16 %v2094, %v2094
    %v2127 = vpack.c.bf16 %v2095, %v2095
    %v2128 = vpack.c.bf16 %v2096, %v2096
    %v2129 = vpack.c.bf16 %v2097, %v2097
    %v2130 = vpack.c.bf16 %v2098, %v2098
    %v2131 = vpack.c.bf16 %v2099, %v2099
    %v2132 = vpack.c.bf16 %v2100, %v2100
    %v2133 = vpack.c.bf16 %v2101, %v2101
    %v2134 = vpack.c.bf16 %v2102, %v2102
    %v2135 = vld [vmem:[#allocation11] sm:$0xff]
    %v2136 = vld [vmem:[#allocation11 + $0x8] sm:$0xff]
    %v2137 = vld [vmem:[#allocation11 + $0x10] sm:$0xff]
    %v2138 = vld [vmem:[#allocation11 + $0x18] sm:$0xff]
    %v2139 = vld [vmem:[#allocation11 + $0x20] sm:$0xff]
    %v2140 = vld [vmem:[#allocation11 + $0x28] sm:$0xff]
    %v2141 = vld [vmem:[#allocation11 + $0x30] sm:$0xff]
    %v2142 = vld [vmem:[#allocation11 + $0x38] sm:$0xff]
    %v2143 = vld [vmem:[#allocation11 + $0x40] sm:$0xff]
    %v2144 = vld [vmem:[#allocation11 + $0x48] sm:$0xff]
    %v2145 = vld [vmem:[#allocation11 + $0x50] sm:$0xff]
    %v2146 = vld [vmem:[#allocation11 + $0x58] sm:$0xff]
    %v2147 = vld [vmem:[#allocation11 + $0x60] sm:$0xff]
    %v2148 = vld [vmem:[#allocation11 + $0x68] sm:$0xff]
    %v2149 = vld [vmem:[#allocation11 + $0x70] sm:$0xff]
    %v2150 = vld [vmem:[#allocation11 + $0x78] sm:$0xff]
    %v2151 = vld [vmem:[#allocation11 + $0x80] sm:$0xff]
    %v2152 = vld [vmem:[#allocation11 + $0x88] sm:$0xff]
    %v2153 = vld [vmem:[#allocation11 + $0x90] sm:$0xff]
    %v2154 = vld [vmem:[#allocation11 + $0x98] sm:$0xff]
    %v2155 = vld [vmem:[#allocation11 + $0xa0] sm:$0xff]
    %v2156 = vld [vmem:[#allocation11 + $0xa8] sm:$0xff]
    %v2157 = vld [vmem:[#allocation11 + $0xb0] sm:$0xff]
    %v2158 = vld [vmem:[#allocation11 + $0xb8] sm:$0xff]
    %v2159 = vld [vmem:[#allocation11 + $0xc0] sm:$0xff]
    %v2160 = vld [vmem:[#allocation11 + $0xc8] sm:$0xff]
    %v2161 = vld [vmem:[#allocation11 + $0xd0] sm:$0xff]
    %v2162 = vld [vmem:[#allocation11 + $0xd8] sm:$0xff]
    %v2163 = vld [vmem:[#allocation11 + $0xe0] sm:$0xff]
    %v2164 = vld [vmem:[#allocation11 + $0xe8] sm:$0xff]
    %v2165 = vld [vmem:[#allocation11 + $0xf0] sm:$0xff]
    %v2166 = vld [vmem:[#allocation11 + $0xf8] sm:$0xff]
    %v2167 = vld [vmem:[%s10] sm:$0x1]
    %v2169 = vlaneseq
    %v2170 = vshrl.u32 %v2169, 7
    %v2171 = vsub.s32 0, %v2170
    %v2172 = vrot.slane %v2167, %v2171
    %v2206 = vunpack.c.l.b16 %v2135
    %v2207 = vunpack.c.h.b16 %v2135
    %v2208 = vunpack.c.l.b16 %v2136
    %v2209 = vunpack.c.h.b16 %v2136
    %v2210 = vunpack.c.l.b16 %v2137
    %v2211 = vunpack.c.h.b16 %v2137
    %v2212 = vunpack.c.l.b16 %v2138
    %v2213 = vunpack.c.h.b16 %v2138
    %v2214 = vunpack.c.l.b16 %v2139
    %v2215 = vunpack.c.h.b16 %v2139
    %v2216 = vunpack.c.l.b16 %v2140
    %v2217 = vunpack.c.h.b16 %v2140
    %v2218 = vunpack.c.l.b16 %v2141
    %v2219 = vunpack.c.h.b16 %v2141
    %v2220 = vunpack.c.l.b16 %v2142
    %v2221 = vunpack.c.h.b16 %v2142
    %v2222 = vunpack.c.l.b16 %v2143
    %v2223 = vunpack.c.h.b16 %v2143
    %v2224 = vunpack.c.l.b16 %v2144
    %v2225 = vunpack.c.h.b16 %v2144
    %v2226 = vunpack.c.l.b16 %v2145
    %v2227 = vunpack.c.h.b16 %v2145
    %v2228 = vunpack.c.l.b16 %v2146
    %v2229 = vunpack.c.h.b16 %v2146
    %v2230 = vunpack.c.l.b16 %v2147
    %v2231 = vunpack.c.h.b16 %v2147
    %v2232 = vunpack.c.l.b16 %v2148
    %v2233 = vunpack.c.h.b16 %v2148
    %v2234 = vunpack.c.l.b16 %v2149
    %v2235 = vunpack.c.h.b16 %v2149
    %v2236 = vunpack.c.l.b16 %v2150
    %v2237 = vunpack.c.h.b16 %v2150
    %v2238 = vunpack.c.l.b16 %v2151
    %v2239 = vunpack.c.h.b16 %v2151
    %v2240 = vunpack.c.l.b16 %v2152
    %v2241 = vunpack.c.h.b16 %v2152
    %v2242 = vunpack.c.l.b16 %v2153
    %v2243 = vunpack.c.h.b16 %v2153
    %v2244 = vunpack.c.l.b16 %v2154
    %v2245 = vunpack.c.h.b16 %v2154
    %v2246 = vunpack.c.l.b16 %v2155
    %v2247 = vunpack.c.h.b16 %v2155
    %v2248 = vunpack.c.l.b16 %v2156
    %v2249 = vunpack.c.h.b16 %v2156
    %v2250 = vunpack.c.l.b16 %v2157
    %v2251 = vunpack.c.h.b16 %v2157
    %v2252 = vunpack.c.l.b16 %v2158
    %v2253 = vunpack.c.h.b16 %v2158
    %v2254 = vunpack.c.l.b16 %v2159
    %v2255 = vunpack.c.h.b16 %v2159
    %v2256 = vunpack.c.l.b16 %v2160
    %v2257 = vunpack.c.h.b16 %v2160
    %v2258 = vunpack.c.l.b16 %v2161
    %v2259 = vunpack.c.h.b16 %v2161
    %v2260 = vunpack.c.l.b16 %v2162
    %v2261 = vunpack.c.h.b16 %v2162
    %v2262 = vunpack.c.l.b16 %v2163
    %v2263 = vunpack.c.h.b16 %v2163
    %v2264 = vunpack.c.l.b16 %v2164
    %v2265 = vunpack.c.h.b16 %v2164
    %v2266 = vunpack.c.l.b16 %v2165
    %v2267 = vunpack.c.h.b16 %v2165
    %v2268 = vunpack.c.l.b16 %v2166
    %v2269 = vunpack.c.h.b16 %v2166
    %v2270 = vpack.c.b16 %v2222, %v2206
    %v2271 = vpack.c.b16 %v2223, %v2207
    %v2272 = vpack.c.b16 %v2224, %v2208
    %v2273 = vpack.c.b16 %v2225, %v2209
    %v2274 = vpack.c.b16 %v2226, %v2210
    %v2275 = vpack.c.b16 %v2227, %v2211
    %v2276 = vpack.c.b16 %v2228, %v2212
    %v2277 = vpack.c.b16 %v2229, %v2213
    %v2278 = vpack.c.b16 %v2230, %v2214
    %v2279 = vpack.c.b16 %v2231, %v2215
    %v2280 = vpack.c.b16 %v2232, %v2216
    %v2281 = vpack.c.b16 %v2233, %v2217
    %v2282 = vpack.c.b16 %v2234, %v2218
    %v2283 = vpack.c.b16 %v2235, %v2219
    %v2284 = vpack.c.b16 %v2236, %v2220
    %v2285 = vpack.c.b16 %v2237, %v2221
    %v2286 = vpack.c.b16 %v2254, %v2238
    %v2287 = vpack.c.b16 %v2255, %v2239
    %v2288 = vpack.c.b16 %v2256, %v2240
    %v2289 = vpack.c.b16 %v2257, %v2241
    %v2290 = vpack.c.b16 %v2258, %v2242
    %v2291 = vpack.c.b16 %v2259, %v2243
    %v2292 = vpack.c.b16 %v2260, %v2244
    %v2293 = vpack.c.b16 %v2261, %v2245
    %v2294 = vpack.c.b16 %v2262, %v2246
    %v2295 = vpack.c.b16 %v2263, %v2247
    %v2296 = vpack.c.b16 %v2264, %v2248
    %v2297 = vpack.c.b16 %v2265, %v2249
    %v2298 = vpack.c.b16 %v2266, %v2250
    %v2299 = vpack.c.b16 %v2267, %v2251
    %v2300 = vpack.c.b16 %v2268, %v2252
    %v2301 = vpack.c.b16 %v2269, %v2253
    %2334 = vmatprep.subr.bf16.mxu0 0
    %2335 = vmatpush1.bf16.xpose.msra.mxu0 0
    %2336 = vmatprep.subr.bf16.mxu0 0
    %2337 = vmatpush1.bf16.xpose.msra.mxu0 0
    %2338 = vmatprep.subr.bf16.mxu0 0
    %2339 = vmatpush1.bf16.xpose.msra.mxu0 0
    %2340 = vmatprep.subr.bf16.mxu0 0
    %2341 = vmatpush1.bf16.xpose.msra.mxu0 0
    %2342 = vmatprep.subr.bf16.mxu0 0
    %2343 = vmatpush1.bf16.xpose.msra.mxu0 0
    %2344 = vmatprep.subr.bf16.mxu0 0
    %2345 = vmatpush1.bf16.xpose.msra.mxu0 0
    %2346 = vmatprep.subr.bf16.mxu0 %v2287
    %2347 = vmatpush1.bf16.xpose.msra.mxu0 %v2286
    %2348 = vmatprep.subr.bf16.mxu0 %v2271
    %2349 = vmatpush1.bf16.xpose.msra.mxu0 %v2270
    %2350 = vmatprep.subr.bf16.mxu0 0
    %2351 = vmatpush2.bf16.xpose.msra.mxu0 0
    %2352 = vmatprep.subr.bf16.mxu0 0
    %2353 = vmatpush2.bf16.xpose.msra.mxu0 0
    %2354 = vmatprep.subr.bf16.mxu0 0
    %2355 = vmatpush2.bf16.xpose.msra.mxu0 0
    %2356 = vmatprep.subr.bf16.mxu0 0
    %2357 = vmatpush2.bf16.xpose.msra.mxu0 0
    %2358 = vmatprep.subr.bf16.mxu0 0
    %2359 = vmatpush2.bf16.xpose.msra.mxu0 0
    %2360 = vmatprep.subr.bf16.mxu0 0
    %2361 = vmatpush2.bf16.xpose.msra.mxu0 0
    %2362 = vmatprep.subr.bf16.mxu0 0
    %2363 = vmatpush2.bf16.xpose.msra.mxu0 0
    %2364 = vmatprep.subr.bf16.mxu0 0
    %2365 = vmatpush2.bf16.xpose.msra.mxu0 0
    %2366 = vmatprep.mubr.bf16.mxu0 %v2104
    %2367 = vmatmul.mubr.bf16.gmra.mxu0 %v2103
    %v2368 = vpop.f32.mrf.mxu0
    %v2369 = vadd.f32 %v2172, %v2368
    %v2370 = vpop.f32.mrf.mxu0
    %v2371 = vpop.f32.mrf.mxu0
    %v2372 = vadd.f32 %v2172, %v2371
    %v2373 = vpop.f32.mrf.mxu0
    %2374 = vmatprep.mubr.bf16.mxu0 %v2120
    %2375 = vmatmul.mubr.bf16.gmra.mxu0 %v2119
    %v2376 = vpop.f32.mrf.mxu0
    %v2377 = vadd.f32 %v2172, %v2376
    %v2378 = vpop.f32.mrf.mxu0
    %v2379 = vpop.f32.mrf.mxu0
    %v2380 = vpop.f32.mrf.mxu0
    %2381 = vdwg.mxu0
    %2382 = vmatprep.subr.bf16.mxu0 0
    %2383 = vmatpush1.bf16.xpose.msra.mxu0 0
    %2384 = vmatprep.subr.bf16.mxu0 0
    %2385 = vmatpush1.bf16.xpose.msra.mxu0 0
    %2386 = vmatprep.subr.bf16.mxu0 0
    %2387 = vmatpush1.bf16.xpose.msra.mxu0 0
    %2388 = vmatprep.subr.bf16.mxu0 0
    %2389 = vmatpush1.bf16.xpose.msra.mxu0 0
    %2390 = vmatprep.subr.bf16.mxu0 0
    %2391 = vmatpush1.bf16.xpose.msra.mxu0 0
    %2392 = vmatprep.subr.bf16.mxu0 0
    %2393 = vmatpush1.bf16.xpose.msra.mxu0 0
    %2394 = vmatprep.subr.bf16.mxu0 %v2289
    %2395 = vmatpush1.bf16.xpose.msra.mxu0 %v2288
    %2396 = vmatprep.subr.bf16.mxu0 %v2273
    %2397 = vmatpush1.bf16.xpose.msra.mxu0 %v2272
    %2398 = vmatprep.subr.bf16.mxu0 0
    %2399 = vmatpush2.bf16.xpose.msra.mxu0 0
    %2400 = vmatprep.subr.bf16.mxu0 0
    %2401 = vmatpush2.bf16.xpose.msra.mxu0 0
    %2402 = vmatprep.subr.bf16.mxu0 0
    %2403 = vmatpush2.bf16.xpose.msra.mxu0 0
    %2404 = vmatprep.subr.bf16.mxu0 0
    %2405 = vmatpush2.bf16.xpose.msra.mxu0 0
    %2406 = vmatprep.subr.bf16.mxu0 0
    %2407 = vmatpush2.bf16.xpose.msra.mxu0 0
    %2408 = vmatprep.subr.bf16.mxu0 0
    %2409 = vmatpush2.bf16.xpose.msra.mxu0 0
    %2410 = vmatprep.subr.bf16.mxu0 0
    %2411 = vmatpush2.bf16.xpose.msra.mxu0 0
    %2412 = vmatprep.subr.bf16.mxu0 0
    %2413 = vmatpush2.bf16.xpose.msra.mxu0 0
    %2414 = vmatprep.mubr.bf16.mxu0 %v2106
    %2415 = vmatmul.mubr.bf16.gmra.mxu0 %v2105
    %v2416 = vpop.f32.mrf.mxu0
    %v2417 = vadd.f32 %v2369, %v2416
    %v2418 = vpop.f32.mrf.mxu0
    %v2419 = vpop.f32.mrf.mxu0
    %v2420 = vadd.f32 %v2372, %v2419
    %v2421 = vpop.f32.mrf.mxu0
    %2422 = vmatprep.mubr.bf16.mxu0 %v2122
    %2423 = vmatmul.mubr.bf16.gmra.mxu0 %v2121
    %v2424 = vpop.f32.mrf.mxu0
    %v2425 = vadd.f32 %v2377, %v2424
    %v2426 = vpop.f32.mrf.mxu0
    %v2427 = vpop.f32.mrf.mxu0
    %v2428 = vpop.f32.mrf.mxu0
    %2429 = vdwg.mxu0
    %2430 = vmatprep.subr.bf16.mxu0 0
    %2431 = vmatpush1.bf16.xpose.msra.mxu0 0
    %2432 = vmatprep.subr.bf16.mxu0 0
    %2433 = vmatpush1.bf16.xpose.msra.mxu0 0
    %2434 = vmatprep.subr.bf16.mxu0 0
    %2435 = vmatpush1.bf16.xpose.msra.mxu0 0
    %2436 = vmatprep.subr.bf16.mxu0 0
    %2437 = vmatpush1.bf16.xpose.msra.mxu0 0
    %2438 = vmatprep.subr.bf16.mxu0 0
    %2439 = vmatpush1.bf16.xpose.msra.mxu0 0
    %2440 = vmatprep.subr.bf16.mxu0 0
    %2441 = vmatpush1.bf16.xpose.msra.mxu0 0
    %2442 = vmatprep.subr.bf16.mxu0 %v2291
    %2443 = vmatpush1.bf16.xpose.msra.mxu0 %v2290
    %2444 = vmatprep.subr.bf16.mxu0 %v2275
    %2445 = vmatpush1.bf16.xpose.msra.mxu0 %v2274
    %2446 = vmatprep.subr.bf16.mxu0 0
    %2447 = vmatpush2.bf16.xpose.msra.mxu0 0
    %2448 = vmatprep.subr.bf16.mxu0 0
    %2449 = vmatpush2.bf16.xpose.msra.mxu0 0
    %2450 = vmatprep.subr.bf16.mxu0 0
    %2451 = vmatpush2.bf16.xpose.msra.mxu0 0
    %2452 = vmatprep.subr.bf16.mxu0 0
    %2453 = vmatpush2.bf16.xpose.msra.mxu0 0
    %2454 = vmatprep.subr.bf16.mxu0 0
    %2455 = vmatpush2.bf16.xpose.msra.mxu0 0
    %2456 = vmatprep.subr.bf16.mxu0 0
    %2457 = vmatpush2.bf16.xpose.msra.mxu0 0
    %2458 = vmatprep.subr.bf16.mxu0 0
    %2459 = vmatpush2.bf16.xpose.msra.mxu0 0
    %2460 = vmatprep.subr.bf16.mxu0 0
    %2461 = vmatpush2.bf16.xpose.msra.mxu0 0
    %2462 = vmatprep.mubr.bf16.mxu0 %v2108
    %2463 = vmatmul.mubr.bf16.gmra.mxu0 %v2107
    %v2464 = vpop.f32.mrf.mxu0
    %v2465 = vadd.f32 %v2417, %v2464
    %v2466 = vpop.f32.mrf.mxu0
    %v2467 = vpop.f32.mrf.mxu0
    %v2468 = vadd.f32 %v2420, %v2467
    %v2469 = vpop.f32.mrf.mxu0
    %2470 = vmatprep.mubr.bf16.mxu0 %v2124
    %2471 = vmatmul.mubr.bf16.gmra.mxu0 %v2123
    %v2472 = vpop.f32.mrf.mxu0
    %v2473 = vadd.f32 %v2425, %v2472
    %v2474 = vpop.f32.mrf.mxu0
    %v2475 = vpop.f32.mrf.mxu0
    %v2476 = vpop.f32.mrf.mxu0
    %2477 = vdwg.mxu0
    %2478 = vmatprep.subr.bf16.mxu0 0
    %2479 = vmatpush1.bf16.xpose.msra.mxu0 0
    %2480 = vmatprep.subr.bf16.mxu0 0
    %2481 = vmatpush1.bf16.xpose.msra.mxu0 0
    %2482 = vmatprep.subr.bf16.mxu0 0
    %2483 = vmatpush1.bf16.xpose.msra.mxu0 0
    %2484 = vmatprep.subr.bf16.mxu0 0
    %2485 = vmatpush1.bf16.xpose.msra.mxu0 0
    %2486 = vmatprep.subr.bf16.mxu0 0
    %2487 = vmatpush1.bf16.xpose.msra.mxu0 0
    %2488 = vmatprep.subr.bf16.mxu0 0
    %2489 = vmatpush1.bf16.xpose.msra.mxu0 0
    %2490 = vmatprep.subr.bf16.mxu0 %v2293
    %2491 = vmatpush1.bf16.xpose.msra.mxu0 %v2292
    %2492 = vmatprep.subr.bf16.mxu0 %v2277
    %2493 = vmatpush1.bf16.xpose.msra.mxu0 %v2276
    %2494 = vmatprep.subr.bf16.mxu0 0
    %2495 = vmatpush2.bf16.xpose.msra.mxu0 0
    %2496 = vmatprep.subr.bf16.mxu0 0
    %2497 = vmatpush2.bf16.xpose.msra.mxu0 0
    %2498 = vmatprep.subr.bf16.mxu0 0
    %2499 = vmatpush2.bf16.xpose.msra.mxu0 0
    %2500 = vmatprep.subr.bf16.mxu0 0
    %2501 = vmatpush2.bf16.xpose.msra.mxu0 0
    %2502 = vmatprep.subr.bf16.mxu0 0
    %2503 = vmatpush2.bf16.xpose.msra.mxu0 0
    %2504 = vmatprep.subr.bf16.mxu0 0
    %2505 = vmatpush2.bf16.xpose.msra.mxu0 0
    %2506 = vmatprep.subr.bf16.mxu0 0
    %2507 = vmatpush2.bf16.xpose.msra.mxu0 0
    %2508 = vmatprep.subr.bf16.mxu0 0
    %2509 = vmatpush2.bf16.xpose.msra.mxu0 0
    %2510 = vmatprep.mubr.bf16.mxu0 %v2110
    %2511 = vmatmul.mubr.bf16.gmra.mxu0 %v2109
    %v2512 = vpop.f32.mrf.mxu0
    %v2513 = vadd.f32 %v2465, %v2512
    %v2514 = vpop.f32.mrf.mxu0
    %v2515 = vpop.f32.mrf.mxu0
    %v2516 = vadd.f32 %v2468, %v2515
    %v2517 = vpop.f32.mrf.mxu0
    %2518 = vmatprep.mubr.bf16.mxu0 %v2126
    %2519 = vmatmul.mubr.bf16.gmra.mxu0 %v2125
    %v2520 = vpop.f32.mrf.mxu0
    %v2521 = vadd.f32 %v2473, %v2520
    %v2522 = vpop.f32.mrf.mxu0
    %v2523 = vpop.f32.mrf.mxu0
    %v2524 = vpop.f32.mrf.mxu0
    %2525 = vdwg.mxu0
    %2526 = vmatprep.subr.bf16.mxu0 0
    %2527 = vmatpush1.bf16.xpose.msra.mxu0 0
    %2528 = vmatprep.subr.bf16.mxu0 0
    %2529 = vmatpush1.bf16.xpose.msra.mxu0 0
    %2530 = vmatprep.subr.bf16.mxu0 0
    %2531 = vmatpush1.bf16.xpose.msra.mxu0 0
    %2532 = vmatprep.subr.bf16.mxu0 0
    %2533 = vmatpush1.bf16.xpose.msra.mxu0 0
    %2534 = vmatprep.subr.bf16.mxu0 0
    %2535 = vmatpush1.bf16.xpose.msra.mxu0 0
    %2536 = vmatprep.subr.bf16.mxu0 0
    %2537 = vmatpush1.bf16.xpose.msra.mxu0 0
    %2538 = vmatprep.subr.bf16.mxu0 %v2295
    %2539 = vmatpush1.bf16.xpose.msra.mxu0 %v2294
    %2540 = vmatprep.subr.bf16.mxu0 %v2279
    %2541 = vmatpush1.bf16.xpose.msra.mxu0 %v2278
    %2542 = vmatprep.subr.bf16.mxu0 0
    %2543 = vmatpush2.bf16.xpose.msra.mxu0 0
    %2544 = vmatprep.subr.bf16.mxu0 0
    %2545 = vmatpush2.bf16.xpose.msra.mxu0 0
    %2546 = vmatprep.subr.bf16.mxu0 0
    %2547 = vmatpush2.bf16.xpose.msra.mxu0 0
    %2548 = vmatprep.subr.bf16.mxu0 0
    %2549 = vmatpush2.bf16.xpose.msra.mxu0 0
    %2550 = vmatprep.subr.bf16.mxu0 0
    %2551 = vmatpush2.bf16.xpose.msra.mxu0 0
    %2552 = vmatprep.subr.bf16.mxu0 0
    %2553 = vmatpush2.bf16.xpose.msra.mxu0 0
    %2554 = vmatprep.subr.bf16.mxu0 0
    %2555 = vmatpush2.bf16.xpose.msra.mxu0 0
    %2556 = vmatprep.subr.bf16.mxu0 0
    %2557 = vmatpush2.bf16.xpose.msra.mxu0 0
    %2558 = vmatprep.mubr.bf16.mxu0 %v2112
    %2559 = vmatmul.mubr.bf16.gmra.mxu0 %v2111
    %v2560 = vpop.f32.mrf.mxu0
    %v2561 = vadd.f32 %v2513, %v2560
    %v2562 = vpop.f32.mrf.mxu0
    %v2563 = vpop.f32.mrf.mxu0
    %v2564 = vadd.f32 %v2516, %v2563
    %v2565 = vpop.f32.mrf.mxu0
    %2566 = vmatprep.mubr.bf16.mxu0 %v2128
    %2567 = vmatmul.mubr.bf16.gmra.mxu0 %v2127
    %v2568 = vpop.f32.mrf.mxu0
    %v2569 = vadd.f32 %v2521, %v2568
    %v2570 = vpop.f32.mrf.mxu0
    %v2571 = vpop.f32.mrf.mxu0
    %v2572 = vpop.f32.mrf.mxu0
    %2573 = vdwg.mxu0
    %2574 = vmatprep.subr.bf16.mxu0 0
    %2575 = vmatpush1.bf16.xpose.msra.mxu0 0
    %2576 = vmatprep.subr.bf16.mxu0 0
    %2577 = vmatpush1.bf16.xpose.msra.mxu0 0
    %2578 = vmatprep.subr.bf16.mxu0 0
    %2579 = vmatpush1.bf16.xpose.msra.mxu0 0
    %2580 = vmatprep.subr.bf16.mxu0 0
    %2581 = vmatpush1.bf16.xpose.msra.mxu0 0
    %2582 = vmatprep.subr.bf16.mxu0 0
    %2583 = vmatpush1.bf16.xpose.msra.mxu0 0
    %2584 = vmatprep.subr.bf16.mxu0 0
    %2585 = vmatpush1.bf16.xpose.msra.mxu0 0
    %2586 = vmatprep.subr.bf16.mxu0 %v2297
    %2587 = vmatpush1.bf16.xpose.msra.mxu0 %v2296
    %2588 = vmatprep.subr.bf16.mxu0 %v2281
    %2589 = vmatpush1.bf16.xpose.msra.mxu0 %v2280
    %2590 = vmatprep.subr.bf16.mxu0 0
    %2591 = vmatpush2.bf16.xpose.msra.mxu0 0
    %2592 = vmatprep.subr.bf16.mxu0 0
    %2593 = vmatpush2.bf16.xpose.msra.mxu0 0
    %2594 = vmatprep.subr.bf16.mxu0 0
    %2595 = vmatpush2.bf16.xpose.msra.mxu0 0
    %2596 = vmatprep.subr.bf16.mxu0 0
    %2597 = vmatpush2.bf16.xpose.msra.mxu0 0
    %2598 = vmatprep.subr.bf16.mxu0 0
    %2599 = vmatpush2.bf16.xpose.msra.mxu0 0
    %2600 = vmatprep.subr.bf16.mxu0 0
    %2601 = vmatpush2.bf16.xpose.msra.mxu0 0
    %2602 = vmatprep.subr.bf16.mxu0 0
    %2603 = vmatpush2.bf16.xpose.msra.mxu0 0
    %2604 = vmatprep.subr.bf16.mxu0 0
    %2605 = vmatpush2.bf16.xpose.msra.mxu0 0
    %2606 = vmatprep.mubr.bf16.mxu0 %v2114
    %2607 = vmatmul.mubr.bf16.gmra.mxu0 %v2113
    %v2608 = vpop.f32.mrf.mxu0
    %v2609 = vadd.f32 %v2561, %v2608
    %v2610 = vpop.f32.mrf.mxu0
    %v2611 = vpop.f32.mrf.mxu0
    %v2612 = vadd.f32 %v2564, %v2611
    %v2613 = vpop.f32.mrf.mxu0
    %2614 = vmatprep.mubr.bf16.mxu0 %v2130
    %2615 = vmatmul.mubr.bf16.gmra.mxu0 %v2129
    %v2616 = vpop.f32.mrf.mxu0
    %v2617 = vadd.f32 %v2569, %v2616
    %v2618 = vpop.f32.mrf.mxu0
    %v2619 = vpop.f32.mrf.mxu0
    %v2620 = vpop.f32.mrf.mxu0
    %2621 = vdwg.mxu0
    %2622 = vmatprep.subr.bf16.mxu0 0
    %2623 = vmatpush1.bf16.xpose.msra.mxu0 0
    %2624 = vmatprep.subr.bf16.mxu0 0
    %2625 = vmatpush1.bf16.xpose.msra.mxu0 0
    %2626 = vmatprep.subr.bf16.mxu0 0
    %2627 = vmatpush1.bf16.xpose.msra.mxu0 0
    %2628 = vmatprep.subr.bf16.mxu0 0
    %2629 = vmatpush1.bf16.xpose.msra.mxu0 0
    %2630 = vmatprep.subr.bf16.mxu0 0
    %2631 = vmatpush1.bf16.xpose.msra.mxu0 0
    %2632 = vmatprep.subr.bf16.mxu0 0
    %2633 = vmatpush1.bf16.xpose.msra.mxu0 0
    %2634 = vmatprep.subr.bf16.mxu0 %v2299
    %2635 = vmatpush1.bf16.xpose.msra.mxu0 %v2298
    %2636 = vmatprep.subr.bf16.mxu0 %v2283
    %2637 = vmatpush1.bf16.xpose.msra.mxu0 %v2282
    %2638 = vmatprep.subr.bf16.mxu0 0
    %2639 = vmatpush2.bf16.xpose.msra.mxu0 0
    %2640 = vmatprep.subr.bf16.mxu0 0
    %2641 = vmatpush2.bf16.xpose.msra.mxu0 0
    %2642 = vmatprep.subr.bf16.mxu0 0
    %2643 = vmatpush2.bf16.xpose.msra.mxu0 0
    %2644 = vmatprep.subr.bf16.mxu0 0
    %2645 = vmatpush2.bf16.xpose.msra.mxu0 0
    %2646 = vmatprep.subr.bf16.mxu0 0
    %2647 = vmatpush2.bf16.xpose.msra.mxu0 0
    %2648 = vmatprep.subr.bf16.mxu0 0
    %2649 = vmatpush2.bf16.xpose.msra.mxu0 0
    %2650 = vmatprep.subr.bf16.mxu0 0
    %2651 = vmatpush2.bf16.xpose.msra.mxu0 0
    %2652 = vmatprep.subr.bf16.mxu0 0
    %2653 = vmatpush2.bf16.xpose.msra.mxu0 0
    %2654 = vmatprep.mubr.bf16.mxu0 %v2116
    %2655 = vmatmul.mubr.bf16.gmra.mxu0 %v2115
    %v2656 = vpop.f32.mrf.mxu0
    %v2657 = vadd.f32 %v2609, %v2656
    %v2658 = vpop.f32.mrf.mxu0
    %v2659 = vpop.f32.mrf.mxu0
    %v2660 = vadd.f32 %v2612, %v2659
    %v2661 = vpop.f32.mrf.mxu0
    %2662 = vmatprep.mubr.bf16.mxu0 %v2132
    %2663 = vmatmul.mubr.bf16.gmra.mxu0 %v2131
    %v2664 = vpop.f32.mrf.mxu0
    %v2665 = vadd.f32 %v2617, %v2664
    %v2666 = vpop.f32.mrf.mxu0
    %v2667 = vpop.f32.mrf.mxu0
    %v2668 = vpop.f32.mrf.mxu0
    %2669 = vdwg.mxu0
    %2670 = vmatprep.subr.bf16.mxu0 0
    %2671 = vmatpush1.bf16.xpose.msra.mxu0 0
    %2672 = vmatprep.subr.bf16.mxu0 0
    %2673 = vmatpush1.bf16.xpose.msra.mxu0 0
    %2674 = vmatprep.subr.bf16.mxu0 0
    %2675 = vmatpush1.bf16.xpose.msra.mxu0 0
    %2676 = vmatprep.subr.bf16.mxu0 0
    %2677 = vmatpush1.bf16.xpose.msra.mxu0 0
    %2678 = vmatprep.subr.bf16.mxu0 0
    %2679 = vmatpush1.bf16.xpose.msra.mxu0 0
    %2680 = vmatprep.subr.bf16.mxu0 0
    %2681 = vmatpush1.bf16.xpose.msra.mxu0 0
    %2682 = vmatprep.subr.bf16.mxu0 %v2301
    %2683 = vmatpush1.bf16.xpose.msra.mxu0 %v2300
    %2684 = vmatprep.subr.bf16.mxu0 %v2285
    %2685 = vmatpush1.bf16.xpose.msra.mxu0 %v2284
    %2686 = vmatprep.subr.bf16.mxu0 0
    %2687 = vmatpush2.bf16.xpose.msra.mxu0 0
    %2688 = vmatprep.subr.bf16.mxu0 0
    %2689 = vmatpush2.bf16.xpose.msra.mxu0 0
    %2690 = vmatprep.subr.bf16.mxu0 0
    %2691 = vmatpush2.bf16.xpose.msra.mxu0 0
    %2692 = vmatprep.subr.bf16.mxu0 0
    %2693 = vmatpush2.bf16.xpose.msra.mxu0 0
    %2694 = vmatprep.subr.bf16.mxu0 0
    %2695 = vmatpush2.bf16.xpose.msra.mxu0 0
    %2696 = vmatprep.subr.bf16.mxu0 0
    %2697 = vmatpush2.bf16.xpose.msra.mxu0 0
    %2698 = vmatprep.subr.bf16.mxu0 0
    %2699 = vmatpush2.bf16.xpose.msra.mxu0 0
    %2700 = vmatprep.subr.bf16.mxu0 0
    %2701 = vmatpush2.bf16.xpose.msra.mxu0 0
    %2702 = vmatprep.mubr.bf16.mxu0 %v2118
    %2703 = vmatmul.mubr.bf16.gmra.mxu0 %v2117
    %v2704 = vpop.f32.mrf.mxu0
    %v2705 = vadd.f32 %v2657, %v2704
    %v2706 = vpop.f32.mrf.mxu0
    %v2707 = vpop.f32.mrf.mxu0
    %v2708 = vadd.f32 %v2660, %v2707
    %v2709 = vpop.f32.mrf.mxu0
    %2710 = vmatprep.mubr.bf16.mxu0 %v2134
    %2711 = vmatmul.mubr.bf16.gmra.mxu0 %v2133
    %v2712 = vpop.f32.mrf.mxu0
    %v2713 = vadd.f32 %v2665, %v2712
    %v2714 = vpop.f32.mrf.mxu0
    %v2715 = vpop.f32.mrf.mxu0
    %v2716 = vpop.f32.mrf.mxu0
    %2717 = vdwg.mxu0
    %v2718 = vadd.f32 %v1360, %v2705
    %v2719 = vadd.f32 %v1361, %v2708
    %v2720 = vadd.f32 %v1362, %v2713
    %v2721 = vld [vmem:[%s13] sm:$0x1]
    %v2722 = vld [vmem:[%s14] sm:$0x1]
    %v2723 = vsel %vm543, %v2718, 0.0
    %2724 = vadd.xlane.f32.xlu0 %v2723
    %v2725 = vpop.xlane.xlu0 %2724
    %v2726 = vsel %vm543, %v2719, 0.0
    %2727 = vadd.xlane.f32.xlu0 %v2726
    %v2728 = vpop.xlane.xlu0 %2727
    %v2729 = vsel %vm1310, %v2720, 0.0
    %2730 = vadd.xlane.f32.xlu0 %v2729
    %v2731 = vpop.xlane.xlu0 %2730
    %v2732 = vmul.f32 %v2725, %v1314
    %v2733 = vmul.f32 %v2728, %v1314
    %v2734 = vmul.f32 %v2731, %v1314
    %v2735 = vsub.f32 %v2718, %v2732
    %v2736 = vsub.f32 %v2719, %v2733
    %v2737 = vsub.f32 %v2720, %v2734
    %v2738 = vmul.f32 %v2735, %v2735
    %v2739 = vmul.f32 %v2736, %v2736
    %v2740 = vmul.f32 %v2737, %v2737
    %v2741 = vsel %vm543, %v2738, 0.0
    %2742 = vadd.xlane.f32.xlu0 %v2741
    %v2743 = vpop.xlane.xlu0 %2742
    %v2744 = vsel %vm543, %v2739, 0.0
    %2745 = vadd.xlane.f32.xlu0 %v2744
    %v2746 = vpop.xlane.xlu0 %2745
    %v2747 = vsel %vm1310, %v2740, 0.0
    %2748 = vadd.xlane.f32.xlu0 %v2747
    %v2749 = vpop.xlane.xlu0 %2748
    %v2750 = vmul.f32 %v2743, %v1314
    %v2751 = vmul.f32 %v2746, %v1314
    %v2752 = vmul.f32 %v2749, %v1314
    %v2753 = vadd.f32 %v2750, 1e-05
    %v2754 = vadd.f32 %v2751, 1e-05
    %v2755 = vadd.f32 %v2752, 1e-05
    %v2756 = vrsqrt.pop %v2753
    %v2757 = vrsqrt.pop %v2754
    %v2758 = vrsqrt.pop %v2755
    %v2759 = vmul.f32 %v2735, %v2756
    %v2760 = vmul.f32 %v2736, %v2757
    %v2761 = vmul.f32 %v2737, %v2758
    %v2763 = vlaneseq
    %v2764 = vshrl.u32 %v2763, 7
    %v2765 = vsub.s32 0, %v2764
    %v2766 = vrot.slane %v2721, %v2765
    %v2768 = vmul.f32 %v2759, %v2766
    %v2769 = vmul.f32 %v2760, %v2766
    %v2770 = vmul.f32 %v2761, %v2766
    %v2772 = vlaneseq
    %v2773 = vshrl.u32 %v2772, 7
    %v2774 = vsub.s32 0, %v2773
    %v2775 = vrot.slane %v2722, %v2774
    %v2777 = vadd.f32 %v2768, %v2775
    %v2778 = vadd.f32 %v2769, %v2775
    %v2779 = vadd.f32 %v2770, %v2775
    %v2780 = vpack.c.bf16 %v2778, %v2777
    %v2781 = vpack.c.bf16 %v2779, %v2779
    %s2782 = scalar_lea.vmem %s3, 16
    %v2783 = vld [vmem:[%s2782] sm:$0xf]
    %v2784 = vld [vmem:[%s2782 + $0x4] sm:$0xf]
    %v2785 = vld [vmem:[%s2782 + $0x8] sm:$0xf]
    %v2786 = vld [vmem:[%s2782 + $0xc] sm:$0xf]
    %s2787 = scalar_lea.vmem %s4, 1
    %v2788 = vld [vmem:[%s2787] sm:$0x1]
    %v2790 = vlaneseq
    %v2791 = vshrl.u32 %v2790, 7
    %v2792 = vsub.s32 0, %v2791
    %v2793 = vrot.slane %v2788, %v2792
    %v2799 = vunpack.c.l.b16 %v2783
    %v2800 = vunpack.c.l.b16 %v2784
    %v2801 = vunpack.c.l.b16 %v2785
    %v2802 = vunpack.c.l.b16 %v2786
    %v2803 = vpack.c.b16 %v2800, %v2799
    %v2804 = vpack.c.b16 %v2802, %v2801
    %v2808 = vsel %vm543, %v2780, 0
    %v2811 = vsel %vm543, %v2781, 0
    %2813 = vmatprep.subr.bf16.mxu0 0
    %2814 = vmatpush1.bf16.msra.mxu0 0
    %2815 = vmatprep.subr.bf16.mxu0 0
    %2816 = vmatpush1.bf16.msra.mxu0 0
    %2817 = vmatprep.subr.bf16.mxu0 0
    %2818 = vmatpush1.bf16.msra.mxu0 0
    %2819 = vmatprep.subr.bf16.mxu0 0
    %2820 = vmatpush1.bf16.msra.mxu0 0
    %2821 = vmatprep.subr.bf16.mxu0 0
    %2822 = vmatpush1.bf16.msra.mxu0 0
    %2823 = vmatprep.subr.bf16.mxu0 0
    %2824 = vmatpush1.bf16.msra.mxu0 0
    %2825 = vmatprep.subr.bf16.mxu0 0
    %2826 = vmatpush1.bf16.msra.mxu0 %v2804
    %2827 = vmatprep.subr.bf16.mxu0 0
    %2828 = vmatpush1.bf16.msra.mxu0 %v2803
    %2829 = vmatprep.subr.bf16.mxu0 0
    %2830 = vmatpush2.bf16.msra.mxu0 0
    %2831 = vmatprep.subr.bf16.mxu0 0
    %2832 = vmatpush2.bf16.msra.mxu0 0
    %2833 = vmatprep.subr.bf16.mxu0 0
    %2834 = vmatpush2.bf16.msra.mxu0 0
    %2835 = vmatprep.subr.bf16.mxu0 0
    %2836 = vmatpush2.bf16.msra.mxu0 0
    %2837 = vmatprep.subr.bf16.mxu0 0
    %2838 = vmatpush2.bf16.msra.mxu0 0
    %2839 = vmatprep.subr.bf16.mxu0 0
    %2840 = vmatpush2.bf16.msra.mxu0 0
    %2841 = vmatprep.subr.bf16.mxu0 0
    %2842 = vmatpush2.bf16.msra.mxu0 0
    %2843 = vmatprep.subr.bf16.mxu0 0
    %2844 = vmatpush2.bf16.msra.mxu0 0
    %2845 = vmatprep.mubr.bf16.mxu0 0
    %2846 = vmatmul.mubr.bf16.gmra.mxu0 %v2808
    %v2847 = vpop.f32.mrf.mxu0
    %v2848 = vadd.f32 %v2793, %v2847
    %v2849 = vpop.f32.mrf.mxu0
    %v2850 = vpop.f32.mrf.mxu0
    %v2851 = vadd.f32 %v2793, %v2850
    %v2852 = vpop.f32.mrf.mxu0
    %2853 = vmatprep.mubr.bf16.mxu0 0
    %2854 = vmatmul.mubr.bf16.gmra.mxu0 %v2811
    %v2855 = vpop.f32.mrf.mxu0
    %v2856 = vadd.f32 %v2793, %v2855
    %v2857 = vpop.f32.mrf.mxu0
    %v2858 = vpop.f32.mrf.mxu0
    %v2859 = vpop.f32.mrf.mxu0
    %2860 = vdwg.mxu0
    %2864 = vrot.lane.b32.xlu0 %v2848, 96
    %v2865 = vpop.permute.xlu0 %2864
    %2866 = vrot.lane.b32.xlu0 %v2851, 96
    %v2867 = vpop.permute.xlu0 %2866
    %2868 = vrot.lane.b32.xlu0 %v2856, 96
    %v2869 = vpop.permute.xlu0 %2868
    %v2872 = vsel %vm640, %v2869, 0
    %2874 = vmatprep.subr.mxu0 0.0
    %2875 = vmatpush1.msra.mxu0 0.0
    %2876 = vmatprep.subr.mxu0 0.0
    %2877 = vmatpush1.msra.mxu0 0.0
    %2878 = vmatprep.subr.mxu0 0.0
    %2879 = vmatpush1.msra.mxu0 0.0
    %2880 = vmatprep.subr.mxu0 0.0
    %2881 = vmatpush1.msra.mxu0 0.0
    %2882 = vmatprep.subr.mxu0 0.0
    %2883 = vmatpush1.msra.mxu0 0.0
    %2884 = vmatprep.subr.mxu0 0.0
    %2885 = vmatpush1.msra.mxu0 0.0
    %2886 = vmatprep.subr.mxu0 0.0
    %2887 = vmatpush1.msra.mxu0 0.0
    %2888 = vmatprep.subr.mxu0 0.0
    %2889 = vmatpush1.msra.mxu0 0.0
    %2890 = vmatprep.subr.mxu0 0.0
    %2891 = vmatpush1.msra.mxu0 0.0
    %2892 = vmatprep.subr.mxu0 0.0
    %2893 = vmatpush1.msra.mxu0 0.0
    %2894 = vmatprep.subr.mxu0 0.0
    %2895 = vmatpush1.msra.mxu0 0.0
    %2896 = vmatprep.subr.mxu0 0.0
    %2897 = vmatpush1.msra.mxu0 0.0
    %2898 = vmatprep.subr.mxu0 0.0
    %2899 = vmatpush1.msra.mxu0 0.0
    %2900 = vmatprep.subr.mxu0 0.0
    %2901 = vmatpush1.msra.mxu0 %v2872
    %2902 = vmatprep.subr.mxu0 0.0
    %2903 = vmatpush1.msra.mxu0 %v2867
    %2904 = vmatprep.subr.mxu0 0.0
    %2905 = vmatpush1.msra.mxu0 %v2865
    %2906 = vmatprep.subr.mxu0 0.0
    %2907 = vmatpush2.msra.mxu0 0.0
    %2908 = vmatprep.subr.mxu0 0.0
    %2909 = vmatpush2.msra.mxu0 0.0
    %2910 = vmatprep.subr.mxu0 0.0
    %2911 = vmatpush2.msra.mxu0 0.0
    %2912 = vmatprep.subr.mxu0 0.0
    %2913 = vmatpush2.msra.mxu0 0.0
    %2914 = vmatprep.subr.mxu0 0.0
    %2915 = vmatpush2.msra.mxu0 0.0
    %2916 = vmatprep.subr.mxu0 0.0
    %2917 = vmatpush2.msra.mxu0 0.0
    %2918 = vmatprep.subr.mxu0 0.0
    %2919 = vmatpush2.msra.mxu0 0.0
    %2920 = vmatprep.subr.mxu0 0.0
    %2921 = vmatpush2.msra.mxu0 0.0
    %2922 = vmatprep.subr.mxu0 0.0
    %2923 = vmatpush2.msra.mxu0 0.0
    %2924 = vmatprep.subr.mxu0 0.0
    %2925 = vmatpush2.msra.mxu0 0.0
    %2926 = vmatprep.subr.mxu0 0.0
    %2927 = vmatpush2.msra.mxu0 0.0
    %2928 = vmatprep.subr.mxu0 0.0
    %2929 = vmatpush2.msra.mxu0 0.0
    %2930 = vmatprep.subr.mxu0 0.0
    %2931 = vmatpush2.msra.mxu0 0.0
    %2932 = vmatprep.subr.mxu0 0.0
    %2933 = vmatpush2.msra.mxu0 0.0
    %2934 = vmatprep.subr.mxu0 0.0
    %2935 = vmatpush2.msra.mxu0 0.0
    %2936 = vmatprep.subr.mxu0 0.0
    %2937 = vmatpush2.msra.mxu0 0.0
    %2938 = vmatprep.mubr.f32.mxu0 0.0
    %2939 = vmatmul.mubr.f32.gmra.mxu0 %v611
    %v2940 = vpop.f32.mrf.mxu0
    %v2941 = vadd.f32 0.0, %v2940
    %v2942 = vpop.f32.mrf.mxu0
    %2943 = vmatprep.mubr.f32.mxu0 0.0
    %2944 = vmatmul.mubr.f32.gmra.mxu0 %v614
    %v2945 = vpop.f32.mrf.mxu0
    %v2946 = vadd.f32 0.0, %v2945
    %v2947 = vpop.f32.mrf.mxu0
    %2948 = vmatprep.mubr.f32.mxu0 0.0
    %2949 = vmatmul.mubr.f32.gmra.mxu0 %v617
    %v2950 = vpop.f32.mrf.mxu0
    %v2951 = vadd.f32 0.0, %v2950
    %v2952 = vpop.f32.mrf.mxu0
    %2953 = vmatprep.mubr.f32.mxu0 0.0
    %2954 = vmatmul.mubr.f32.gmra.mxu0 %v620
    %v2955 = vpop.f32.mrf.mxu0
    %v2956 = vadd.f32 0.0, %v2955
    %v2957 = vpop.f32.mrf.mxu0
    %2958 = vmatprep.mubr.f32.mxu0 0.0
    %2959 = vmatmul.mubr.f32.gmra.mxu0 %v623
    %v2960 = vpop.f32.mrf.mxu0
    %v2961 = vadd.f32 0.0, %v2960
    %v2962 = vpop.f32.mrf.mxu0
    %2963 = vmatprep.mubr.f32.mxu0 0.0
    %2964 = vmatmul.mubr.f32.gmra.mxu0 %v626
    %v2965 = vpop.f32.mrf.mxu0
    %v2966 = vadd.f32 0.0, %v2965
    %v2967 = vpop.f32.mrf.mxu0
    %2968 = vmatprep.mubr.f32.mxu0 0.0
    %2969 = vmatmul.mubr.f32.gmra.mxu0 %v629
    %v2970 = vpop.f32.mrf.mxu0
    %v2971 = vadd.f32 0.0, %v2970
    %v2972 = vpop.f32.mrf.mxu0
    %2973 = vmatprep.mubr.f32.mxu0 0.0
    %2974 = vmatmul.mubr.f32.gmra.mxu0 %v632
    %v2975 = vpop.f32.mrf.mxu0
    %v2976 = vadd.f32 0.0, %v2975
    %v2977 = vpop.f32.mrf.mxu0
    %2978 = vmatprep.mubr.f32.mxu0 0.0
    %2979 = vmatmul.mubr.f32.gmra.mxu0 %v635
    %v2980 = vpop.f32.mrf.mxu0
    %v2981 = vadd.f32 0.0, %v2980
    %v2982 = vpop.f32.mrf.mxu0
    %2983 = vmatprep.mubr.f32.mxu0 0.0
    %2984 = vmatmul.mubr.f32.gmra.mxu0 %v638
    %v2985 = vpop.f32.mrf.mxu0
    %v2986 = vadd.f32 0.0, %v2985
    %v2987 = vpop.f32.mrf.mxu0
    %2988 = vdwg.mxu0
    %v2989 = vmul.f32 %v2941, %v270
    %v2990 = vmul.f32 %v2946, %v271
    %v2991 = vmul.f32 %v2951, %v272
    %v2992 = vmul.f32 %v2956, %v273
    %v2993 = vmul.f32 %v2961, %v274
    %v2994 = vmul.f32 %v2966, %v275
    %v2995 = vmul.f32 %v2971, %v276
    %v2996 = vmul.f32 %v2976, %v277
    %v2997 = vmul.f32 %v2981, %v278
    %v2998 = vmul.f32 %v2986, %v279
    %2999 = vrot.lane.b32.xlu0 %v2848, 64
    %v3000 = vpop.permute.xlu0 %2999
    %3001 = vrot.lane.b32.xlu0 %v2851, 64
    %v3002 = vpop.permute.xlu0 %3001
    %3003 = vrot.lane.b32.xlu0 %v2856, 64
    %v3004 = vpop.permute.xlu0 %3003
    %v3007 = vsel %vm640, %v3004, 0
    %3009 = vmatprep.subr.mxu0 0.0
    %3010 = vmatpush1.msra.mxu0 0.0
    %3011 = vmatprep.subr.mxu0 0.0
    %3012 = vmatpush1.msra.mxu0 0.0
    %3013 = vmatprep.subr.mxu0 0.0
    %3014 = vmatpush1.msra.mxu0 0.0
    %3015 = vmatprep.subr.mxu0 0.0
    %3016 = vmatpush1.msra.mxu0 0.0
    %3017 = vmatprep.subr.mxu0 0.0
    %3018 = vmatpush1.msra.mxu0 0.0
    %3019 = vmatprep.subr.mxu0 0.0
    %3020 = vmatpush1.msra.mxu0 0.0
    %3021 = vmatprep.subr.mxu0 0.0
    %3022 = vmatpush1.msra.mxu0 0.0
    %3023 = vmatprep.subr.mxu0 0.0
    %3024 = vmatpush1.msra.mxu0 0.0
    %3025 = vmatprep.subr.mxu0 0.0
    %3026 = vmatpush1.msra.mxu0 0.0
    %3027 = vmatprep.subr.mxu0 0.0
    %3028 = vmatpush1.msra.mxu0 0.0
    %3029 = vmatprep.subr.mxu0 0.0
    %3030 = vmatpush1.msra.mxu0 0.0
    %3031 = vmatprep.subr.mxu0 0.0
    %3032 = vmatpush1.msra.mxu0 0.0
    %3033 = vmatprep.subr.mxu0 0.0
    %3034 = vmatpush1.msra.mxu0 0.0
    %3035 = vmatprep.subr.mxu0 0.0
    %3036 = vmatpush1.msra.mxu0 %v3007
    %3037 = vmatprep.subr.mxu0 0.0
    %3038 = vmatpush1.msra.mxu0 %v3002
    %3039 = vmatprep.subr.mxu0 0.0
    %3040 = vmatpush1.msra.mxu0 %v3000
    %3041 = vmatprep.subr.mxu0 0.0
    %3042 = vmatpush2.msra.mxu0 0.0
    %3043 = vmatprep.subr.mxu0 0.0
    %3044 = vmatpush2.msra.mxu0 0.0
    %3045 = vmatprep.subr.mxu0 0.0
    %3046 = vmatpush2.msra.mxu0 0.0
    %3047 = vmatprep.subr.mxu0 0.0
    %3048 = vmatpush2.msra.mxu0 0.0
    %3049 = vmatprep.subr.mxu0 0.0
    %3050 = vmatpush2.msra.mxu0 0.0
    %3051 = vmatprep.subr.mxu0 0.0
    %3052 = vmatpush2.msra.mxu0 0.0
    %3053 = vmatprep.subr.mxu0 0.0
    %3054 = vmatpush2.msra.mxu0 0.0
    %3055 = vmatprep.subr.mxu0 0.0
    %3056 = vmatpush2.msra.mxu0 0.0
    %3057 = vmatprep.subr.mxu0 0.0
    %3058 = vmatpush2.msra.mxu0 0.0
    %3059 = vmatprep.subr.mxu0 0.0
    %3060 = vmatpush2.msra.mxu0 0.0
    %3061 = vmatprep.subr.mxu0 0.0
    %3062 = vmatpush2.msra.mxu0 0.0
    %3063 = vmatprep.subr.mxu0 0.0
    %3064 = vmatpush2.msra.mxu0 0.0
    %3065 = vmatprep.subr.mxu0 0.0
    %3066 = vmatpush2.msra.mxu0 0.0
    %3067 = vmatprep.subr.mxu0 0.0
    %3068 = vmatpush2.msra.mxu0 0.0
    %3069 = vmatprep.subr.mxu0 0.0
    %3070 = vmatpush2.msra.mxu0 0.0
    %3071 = vmatprep.subr.mxu0 0.0
    %3072 = vmatpush2.msra.mxu0 0.0
    %3073 = vmatprep.mubr.f32.mxu0 0.0
    %3074 = vmatmul.mubr.f32.gmra.mxu0 %v611
    %v3075 = vpop.f32.mrf.mxu0
    %v3076 = vadd.f32 0.0, %v3075
    %v3077 = vpop.f32.mrf.mxu0
    %3078 = vmatprep.mubr.f32.mxu0 0.0
    %3079 = vmatmul.mubr.f32.gmra.mxu0 %v614
    %v3080 = vpop.f32.mrf.mxu0
    %v3081 = vadd.f32 0.0, %v3080
    %v3082 = vpop.f32.mrf.mxu0
    %3083 = vmatprep.mubr.f32.mxu0 0.0
    %3084 = vmatmul.mubr.f32.gmra.mxu0 %v617
    %v3085 = vpop.f32.mrf.mxu0
    %v3086 = vadd.f32 0.0, %v3085
    %v3087 = vpop.f32.mrf.mxu0
    %3088 = vmatprep.mubr.f32.mxu0 0.0
    %3089 = vmatmul.mubr.f32.gmra.mxu0 %v620
    %v3090 = vpop.f32.mrf.mxu0
    %v3091 = vadd.f32 0.0, %v3090
    %v3092 = vpop.f32.mrf.mxu0
    %3093 = vmatprep.mubr.f32.mxu0 0.0
    %3094 = vmatmul.mubr.f32.gmra.mxu0 %v623
    %v3095 = vpop.f32.mrf.mxu0
    %v3096 = vadd.f32 0.0, %v3095
    %v3097 = vpop.f32.mrf.mxu0
    %3098 = vmatprep.mubr.f32.mxu0 0.0
    %3099 = vmatmul.mubr.f32.gmra.mxu0 %v626
    %v3100 = vpop.f32.mrf.mxu0
    %v3101 = vadd.f32 0.0, %v3100
    %v3102 = vpop.f32.mrf.mxu0
    %3103 = vmatprep.mubr.f32.mxu0 0.0
    %3104 = vmatmul.mubr.f32.gmra.mxu0 %v629
    %v3105 = vpop.f32.mrf.mxu0
    %v3106 = vadd.f32 0.0, %v3105
    %v3107 = vpop.f32.mrf.mxu0
    %3108 = vmatprep.mubr.f32.mxu0 0.0
    %3109 = vmatmul.mubr.f32.gmra.mxu0 %v632
    %v3110 = vpop.f32.mrf.mxu0
    %v3111 = vadd.f32 0.0, %v3110
    %v3112 = vpop.f32.mrf.mxu0
    %3113 = vmatprep.mubr.f32.mxu0 0.0
    %3114 = vmatmul.mubr.f32.gmra.mxu0 %v635
    %v3115 = vpop.f32.mrf.mxu0
    %v3116 = vadd.f32 0.0, %v3115
    %v3117 = vpop.f32.mrf.mxu0
    %3118 = vmatprep.mubr.f32.mxu0 0.0
    %3119 = vmatmul.mubr.f32.gmra.mxu0 %v638
    %v3120 = vpop.f32.mrf.mxu0
    %v3121 = vadd.f32 0.0, %v3120
    %v3122 = vpop.f32.mrf.mxu0
    %3123 = vdwg.mxu0
    %v3124 = vmul.f32 %v3076, %v270
    %v3125 = vmul.f32 %v3081, %v271
    %v3126 = vmul.f32 %v3086, %v272
    %v3127 = vmul.f32 %v3091, %v273
    %v3128 = vmul.f32 %v3096, %v274
    %v3129 = vmul.f32 %v3101, %v275
    %v3130 = vmul.f32 %v3106, %v276
    %v3131 = vmul.f32 %v3111, %v277
    %v3132 = vmul.f32 %v3116, %v278
    %v3133 = vmul.f32 %v3121, %v279
    %v3134 = vmul.f32 %v2848, 0.35355338
    %v3135 = vmul.f32 %v2851, 0.35355338
    %v3136 = vmul.f32 %v2856, 0.35355338
    %v3138 = vsel %vm543, %v3134, 0
    %v3141 = vsel %vm543, %v3135, 0
    %v3144 = vsel %vm543, %v3136, 0
    %v3147 = vsel %vm543, %v2989, 0
    %v3150 = vsel %vm543, %v2990, 0
    %v3153 = vsel %vm543, %v2991, 0
    %v3156 = vsel %vm543, %v2992, 0
    %v3159 = vsel %vm543, %v2993, 0
    %v3162 = vsel %vm543, %v2994, 0
    %v3165 = vsel %vm543, %v2995, 0
    %v3168 = vsel %vm543, %v2996, 0
    %v3171 = vsel %vm543, %v2997, 0
    %v3174 = vsel %vm543, %v2998, 0
    %3176 = vmatprep.subr.mxu0 0.0
    %3177 = vmatpush1.xpose.msra.mxu0 0.0
    %3178 = vmatprep.subr.mxu0 0.0
    %3179 = vmatpush1.xpose.msra.mxu0 0.0
    %3180 = vmatprep.subr.mxu0 0.0
    %3181 = vmatpush1.xpose.msra.mxu0 0.0
    %3182 = vmatprep.subr.mxu0 0.0
    %3183 = vmatpush1.xpose.msra.mxu0 0.0
    %3184 = vmatprep.subr.mxu0 0.0
    %3185 = vmatpush1.xpose.msra.mxu0 0.0
    %3186 = vmatprep.subr.mxu0 0.0
    %3187 = vmatpush1.xpose.msra.mxu0 0.0
    %3188 = vmatprep.subr.mxu0 0.0
    %3189 = vmatpush1.xpose.msra.mxu0 %v3174
    %3190 = vmatprep.subr.mxu0 0.0
    %3191 = vmatpush1.xpose.msra.mxu0 %v3171
    %3192 = vmatprep.subr.mxu0 0.0
    %3193 = vmatpush1.xpose.msra.mxu0 %v3168
    %3194 = vmatprep.subr.mxu0 0.0
    %3195 = vmatpush1.xpose.msra.mxu0 %v3165
    %3196 = vmatprep.subr.mxu0 0.0
    %3197 = vmatpush1.xpose.msra.mxu0 %v3162
    %3198 = vmatprep.subr.mxu0 0.0
    %3199 = vmatpush1.xpose.msra.mxu0 %v3159
    %3200 = vmatprep.subr.mxu0 0.0
    %3201 = vmatpush1.xpose.msra.mxu0 %v3156
    %3202 = vmatprep.subr.mxu0 0.0
    %3203 = vmatpush1.xpose.msra.mxu0 %v3153
    %3204 = vmatprep.subr.mxu0 0.0
    %3205 = vmatpush1.xpose.msra.mxu0 %v3150
    %3206 = vmatprep.subr.mxu0 0.0
    %3207 = vmatpush1.xpose.msra.mxu0 %v3147
    %3208 = vmatprep.subr.mxu0 0.0
    %3209 = vmatpush2.xpose.msra.mxu0 0.0
    %3210 = vmatprep.subr.mxu0 0.0
    %3211 = vmatpush2.xpose.msra.mxu0 0.0
    %3212 = vmatprep.subr.mxu0 0.0
    %3213 = vmatpush2.xpose.msra.mxu0 0.0
    %3214 = vmatprep.subr.mxu0 0.0
    %3215 = vmatpush2.xpose.msra.mxu0 0.0
    %3216 = vmatprep.subr.mxu0 0.0
    %3217 = vmatpush2.xpose.msra.mxu0 0.0
    %3218 = vmatprep.subr.mxu0 0.0
    %3219 = vmatpush2.xpose.msra.mxu0 0.0
    %3220 = vmatprep.subr.mxu0 0.0
    %3221 = vmatpush2.xpose.msra.mxu0 0.0
    %3222 = vmatprep.subr.mxu0 0.0
    %3223 = vmatpush2.xpose.msra.mxu0 0.0
    %3224 = vmatprep.subr.mxu0 0.0
    %3225 = vmatpush2.xpose.msra.mxu0 0.0
    %3226 = vmatprep.subr.mxu0 0.0
    %3227 = vmatpush2.xpose.msra.mxu0 0.0
    %3228 = vmatprep.subr.mxu0 0.0
    %3229 = vmatpush2.xpose.msra.mxu0 0.0
    %3230 = vmatprep.subr.mxu0 0.0
    %3231 = vmatpush2.xpose.msra.mxu0 0.0
    %3232 = vmatprep.subr.mxu0 0.0
    %3233 = vmatpush2.xpose.msra.mxu0 0.0
    %3234 = vmatprep.subr.mxu0 0.0
    %3235 = vmatpush2.xpose.msra.mxu0 0.0
    %3236 = vmatprep.subr.mxu0 0.0
    %3237 = vmatpush2.xpose.msra.mxu0 0.0
    %3238 = vmatprep.subr.mxu0 0.0
    %3239 = vmatpush2.xpose.msra.mxu0 0.0
    %3240 = vmatprep.mubr.f32.mxu0 0.0
    %3241 = vmatmul.mubr.f32.gmra.mxu0 %v3138
    %v3242 = vpop.f32.mrf.mxu0
    %v3243 = vadd.f32 %v405, %v3242
    %v3244 = vpop.f32.mrf.mxu0
    %3245 = vmatprep.mubr.f32.mxu0 0.0
    %3246 = vmatmul.mubr.f32.gmra.mxu0 %v3141
    %v3247 = vpop.f32.mrf.mxu0
    %v3248 = vadd.f32 %v406, %v3247
    %v3249 = vpop.f32.mrf.mxu0
    %3250 = vmatprep.mubr.f32.mxu0 0.0
    %3251 = vmatmul.mubr.f32.gmra.mxu0 %v3144
    %v3252 = vpop.f32.mrf.mxu0
    %v3253 = vadd.f32 %v407, %v3252
    %v3254 = vpop.f32.mrf.mxu0
    %3255 = vdwg.mxu0
    %v3256 = vsel %vm1025, %v3243, -inf
    %3257 = vmax.xlane.f32.xlu0 %v3256
    %v3258 = vpop.xlane.xlu0 %3257
    %v3259 = vsel %vm1025, %v3248, -inf
    %3260 = vmax.xlane.f32.xlu0 %v3259
    %v3261 = vpop.xlane.xlu0 %3260
    %v3262 = vsel %vm1032, %v3253, -inf
    %3263 = vmax.xlane.f32.xlu0 %v3262
    %v3264 = vpop.xlane.xlu0 %3263
    %v3265 = vsub.f32 %v3243, %v3258
    %v3266 = vsub.f32 %v3248, %v3261
    %v3267 = vsub.f32 %v3253, %v3264
    %v3268 = vmul.f32 %v3265, 1.442695
    %v3269 = vpow.pop %v3268
    %v3270 = vmul.f32 %v3266, 1.442695
    %v3271 = vpow.pop %v3270
    %v3272 = vmul.f32 %v3267, 1.442695
    %v3273 = vpow.pop %v3272
    %v3275 = vsel %vm1025, %v3269, 0
    %v3278 = vsel %vm1025, %v3271, 0
    %v3281 = vsel %vm1025, %v3273, 0
    %3283 = vmatprep.subr.mxu0 0.0
    %3284 = vmatpush1.msra.mxu0 0.0
    %3285 = vmatprep.subr.mxu0 0.0
    %3286 = vmatpush1.msra.mxu0 0.0
    %3287 = vmatprep.subr.mxu0 0.0
    %3288 = vmatpush1.msra.mxu0 0.0
    %3289 = vmatprep.subr.mxu0 0.0
    %3290 = vmatpush1.msra.mxu0 0.0
    %3291 = vmatprep.subr.mxu0 0.0
    %3292 = vmatpush1.msra.mxu0 0.0
    %3293 = vmatprep.subr.mxu0 0.0
    %3294 = vmatpush1.msra.mxu0 0.0
    %3295 = vmatprep.subr.mxu0 0.0
    %3296 = vmatpush1.msra.mxu0 %v279
    %3297 = vmatprep.subr.mxu0 0.0
    %3298 = vmatpush1.msra.mxu0 %v278
    %3299 = vmatprep.subr.mxu0 0.0
    %3300 = vmatpush1.msra.mxu0 %v277
    %3301 = vmatprep.subr.mxu0 0.0
    %3302 = vmatpush1.msra.mxu0 %v276
    %3303 = vmatprep.subr.mxu0 0.0
    %3304 = vmatpush1.msra.mxu0 %v275
    %3305 = vmatprep.subr.mxu0 0.0
    %3306 = vmatpush1.msra.mxu0 %v274
    %3307 = vmatprep.subr.mxu0 0.0
    %3308 = vmatpush1.msra.mxu0 %v273
    %3309 = vmatprep.subr.mxu0 0.0
    %3310 = vmatpush1.msra.mxu0 %v272
    %3311 = vmatprep.subr.mxu0 0.0
    %3312 = vmatpush1.msra.mxu0 %v271
    %3313 = vmatprep.subr.mxu0 0.0
    %3314 = vmatpush1.msra.mxu0 %v270
    %3315 = vmatprep.subr.mxu0 0.0
    %3316 = vmatpush2.msra.mxu0 0.0
    %3317 = vmatprep.subr.mxu0 0.0
    %3318 = vmatpush2.msra.mxu0 0.0
    %3319 = vmatprep.subr.mxu0 0.0
    %3320 = vmatpush2.msra.mxu0 0.0
    %3321 = vmatprep.subr.mxu0 0.0
    %3322 = vmatpush2.msra.mxu0 0.0
    %3323 = vmatprep.subr.mxu0 0.0
    %3324 = vmatpush2.msra.mxu0 0.0
    %3325 = vmatprep.subr.mxu0 0.0
    %3326 = vmatpush2.msra.mxu0 0.0
    %3327 = vmatprep.subr.mxu0 0.0
    %3328 = vmatpush2.msra.mxu0 0.0
    %3329 = vmatprep.subr.mxu0 0.0
    %3330 = vmatpush2.msra.mxu0 0.0
    %3331 = vmatprep.subr.mxu0 0.0
    %3332 = vmatpush2.msra.mxu0 0.0
    %3333 = vmatprep.subr.mxu0 0.0
    %3334 = vmatpush2.msra.mxu0 0.0
    %3335 = vmatprep.subr.mxu0 0.0
    %3336 = vmatpush2.msra.mxu0 0.0
    %3337 = vmatprep.subr.mxu0 0.0
    %3338 = vmatpush2.msra.mxu0 0.0
    %3339 = vmatprep.subr.mxu0 0.0
    %3340 = vmatpush2.msra.mxu0 0.0
    %3341 = vmatprep.subr.mxu0 0.0
    %3342 = vmatpush2.msra.mxu0 0.0
    %3343 = vmatprep.subr.mxu0 0.0
    %3344 = vmatpush2.msra.mxu0 0.0
    %3345 = vmatprep.subr.mxu0 0.0
    %3346 = vmatpush2.msra.mxu0 0.0
    %3347 = vmatprep.mubr.f32.mxu0 0.0
    %3348 = vmatmul.mubr.f32.gmra.mxu0 %v3275
    %v3349 = vpop.f32.mrf.mxu0
    %v3350 = vadd.f32 0.0, %v3349
    %v3351 = vpop.f32.mrf.mxu0
    %3352 = vmatprep.mubr.f32.mxu0 0.0
    %3353 = vmatmul.mubr.f32.gmra.mxu0 %v3278
    %v3354 = vpop.f32.mrf.mxu0
    %v3355 = vadd.f32 0.0, %v3354
    %v3356 = vpop.f32.mrf.mxu0
    %3357 = vmatprep.mubr.f32.mxu0 0.0
    %3358 = vmatmul.mubr.f32.gmra.mxu0 %v3281
    %v3359 = vpop.f32.mrf.mxu0
    %v3360 = vadd.f32 0.0, %v3359
    %v3361 = vpop.f32.mrf.mxu0
    %3362 = vdwg.mxu0
    %3363 = vmatprep.subr.mxu0 0.0
    %3364 = vmatpush1.msra.mxu0 0.0
    %3365 = vmatprep.subr.mxu0 0.0
    %3366 = vmatpush1.msra.mxu0 0.0
    %3367 = vmatprep.subr.mxu0 0.0
    %3368 = vmatpush1.msra.mxu0 0.0
    %3369 = vmatprep.subr.mxu0 0.0
    %3370 = vmatpush1.msra.mxu0 0.0
    %3371 = vmatprep.subr.mxu0 0.0
    %3372 = vmatpush1.msra.mxu0 0.0
    %3373 = vmatprep.subr.mxu0 0.0
    %3374 = vmatpush1.msra.mxu0 0.0
    %3375 = vmatprep.subr.mxu0 0.0
    %3376 = vmatpush1.msra.mxu0 %v3133
    %3377 = vmatprep.subr.mxu0 0.0
    %3378 = vmatpush1.msra.mxu0 %v3132
    %3379 = vmatprep.subr.mxu0 0.0
    %3380 = vmatpush1.msra.mxu0 %v3131
    %3381 = vmatprep.subr.mxu0 0.0
    %3382 = vmatpush1.msra.mxu0 %v3130
    %3383 = vmatprep.subr.mxu0 0.0
    %3384 = vmatpush1.msra.mxu0 %v3129
    %3385 = vmatprep.subr.mxu0 0.0
    %3386 = vmatpush1.msra.mxu0 %v3128
    %3387 = vmatprep.subr.mxu0 0.0
    %3388 = vmatpush1.msra.mxu0 %v3127
    %3389 = vmatprep.subr.mxu0 0.0
    %3390 = vmatpush1.msra.mxu0 %v3126
    %3391 = vmatprep.subr.mxu0 0.0
    %3392 = vmatpush1.msra.mxu0 %v3125
    %3393 = vmatprep.subr.mxu0 0.0
    %3394 = vmatpush1.msra.mxu0 %v3124
    %3395 = vmatprep.subr.mxu0 0.0
    %3396 = vmatpush2.msra.mxu0 0.0
    %3397 = vmatprep.subr.mxu0 0.0
    %3398 = vmatpush2.msra.mxu0 0.0
    %3399 = vmatprep.subr.mxu0 0.0
    %3400 = vmatpush2.msra.mxu0 0.0
    %3401 = vmatprep.subr.mxu0 0.0
    %3402 = vmatpush2.msra.mxu0 0.0
    %3403 = vmatprep.subr.mxu0 0.0
    %3404 = vmatpush2.msra.mxu0 0.0
    %3405 = vmatprep.subr.mxu0 0.0
    %3406 = vmatpush2.msra.mxu0 0.0
    %3407 = vmatprep.subr.mxu0 0.0
    %3408 = vmatpush2.msra.mxu0 0.0
    %3409 = vmatprep.subr.mxu0 0.0
    %3410 = vmatpush2.msra.mxu0 0.0
    %3411 = vmatprep.subr.mxu0 0.0
    %3412 = vmatpush2.msra.mxu0 0.0
    %3413 = vmatprep.subr.mxu0 0.0
    %3414 = vmatpush2.msra.mxu0 0.0
    %3415 = vmatprep.subr.mxu0 0.0
    %3416 = vmatpush2.msra.mxu0 0.0
    %3417 = vmatprep.subr.mxu0 0.0
    %3418 = vmatpush2.msra.mxu0 0.0
    %3419 = vmatprep.subr.mxu0 0.0
    %3420 = vmatpush2.msra.mxu0 0.0
    %3421 = vmatprep.subr.mxu0 0.0
    %3422 = vmatpush2.msra.mxu0 0.0
    %3423 = vmatprep.subr.mxu0 0.0
    %3424 = vmatpush2.msra.mxu0 0.0
    %3425 = vmatprep.subr.mxu0 0.0
    %3426 = vmatpush2.msra.mxu0 0.0
    %3427 = vmatprep.mubr.f32.mxu0 0.0
    %3428 = vmatmul.mubr.f32.gmra.mxu0 %v3275
    %v3429 = vpop.f32.mrf.mxu0
    %v3430 = vadd.f32 0.0, %v3429
    %v3431 = vpop.f32.mrf.mxu0
    %3432 = vmatprep.mubr.f32.mxu0 0.0
    %3433 = vmatmul.mubr.f32.gmra.mxu0 %v3278
    %v3434 = vpop.f32.mrf.mxu0
    %v3435 = vadd.f32 0.0, %v3434
    %v3436 = vpop.f32.mrf.mxu0
    %3437 = vmatprep.mubr.f32.mxu0 0.0
    %3438 = vmatmul.mubr.f32.gmra.mxu0 %v3281
    %v3439 = vpop.f32.mrf.mxu0
    %v3440 = vadd.f32 0.0, %v3439
    %v3441 = vpop.f32.mrf.mxu0
    %3442 = vdwg.mxu0
    %v3443 = vrcp.pop %v3350
    %v3444 = vrcp.pop %v3355
    %v3445 = vrcp.pop %v3360
    %v3446 = vmul.f32 %v3430, %v3443
    %v3447 = vmul.f32 %v3435, %v3444
    %v3448 = vmul.f32 %v3440, %v3445
    %v3449 = vpack.c.bf16 %v3447, %v3446
    %v3450 = vpack.c.bf16 %v3448, %v3448
    %s3451 = scalar_lea.vmem [#allocation7], 16
    %v3452 = vld [vmem:[%s3451] sm:$0xf]
    %v3453 = vld [vmem:[%s3451 + $0x4] sm:$0xf]
    %v3454 = vld [vmem:[%s3451 + $0x8] sm:$0xf]
    %v3455 = vld [vmem:[%s3451 + $0xc] sm:$0xf]
    %s3456 = scalar_lea.vmem %s6, 1
    %v3457 = vld [vmem:[%s3456] sm:$0x1]
    %v3459 = vlaneseq
    %v3460 = vshrl.u32 %v3459, 7
    %v3461 = vsub.s32 0, %v3460
    %v3462 = vrot.slane %v3457, %v3461
    %v3468 = vunpack.c.l.b16 %v3452
    %v3469 = vunpack.c.l.b16 %v3453
    %v3470 = vunpack.c.l.b16 %v3454
    %v3471 = vunpack.c.l.b16 %v3455
    %v3472 = vpack.c.b16 %v3469, %v3468
    %v3473 = vpack.c.b16 %v3471, %v3470
    %v3477 = vsel %vm543, %v3449, 0
    %v3480 = vsel %vm543, %v3450, 0
    %3482 = vmatprep.subr.bf16.mxu0 0
    %3483 = vmatpush1.bf16.msra.mxu0 0
    %3484 = vmatprep.subr.bf16.mxu0 0
    %3485 = vmatpush1.bf16.msra.mxu0 0
    %3486 = vmatprep.subr.bf16.mxu0 0
    %3487 = vmatpush1.bf16.msra.mxu0 0
    %3488 = vmatprep.subr.bf16.mxu0 0
    %3489 = vmatpush1.bf16.msra.mxu0 0
    %3490 = vmatprep.subr.bf16.mxu0 0
    %3491 = vmatpush1.bf16.msra.mxu0 0
    %3492 = vmatprep.subr.bf16.mxu0 0
    %3493 = vmatpush1.bf16.msra.mxu0 0
    %3494 = vmatprep.subr.bf16.mxu0 0
    %3495 = vmatpush1.bf16.msra.mxu0 %v3473
    %3496 = vmatprep.subr.bf16.mxu0 0
    %3497 = vmatpush1.bf16.msra.mxu0 %v3472
    %3498 = vmatprep.subr.bf16.mxu0 0
    %3499 = vmatpush2.bf16.msra.mxu0 0
    %3500 = vmatprep.subr.bf16.mxu0 0
    %3501 = vmatpush2.bf16.msra.mxu0 0
    %3502 = vmatprep.subr.bf16.mxu0 0
    %3503 = vmatpush2.bf16.msra.mxu0 0
    %3504 = vmatprep.subr.bf16.mxu0 0
    %3505 = vmatpush2.bf16.msra.mxu0 0
    %3506 = vmatprep.subr.bf16.mxu0 0
    %3507 = vmatpush2.bf16.msra.mxu0 0
    %3508 = vmatprep.subr.bf16.mxu0 0
    %3509 = vmatpush2.bf16.msra.mxu0 0
    %3510 = vmatprep.subr.bf16.mxu0 0
    %3511 = vmatpush2.bf16.msra.mxu0 0
    %3512 = vmatprep.subr.bf16.mxu0 0
    %3513 = vmatpush2.bf16.msra.mxu0 0
    %3514 = vmatprep.mubr.bf16.mxu0 0
    %3515 = vmatmul.mubr.bf16.gmra.mxu0 %v3477
    %v3516 = vpop.f32.mrf.mxu0
    %v3517 = vadd.f32 %v3462, %v3516
    %v3518 = vpop.f32.mrf.mxu0
    %v3519 = vpop.f32.mrf.mxu0
    %v3520 = vadd.f32 %v3462, %v3519
    %v3521 = vpop.f32.mrf.mxu0
    %3522 = vmatprep.mubr.bf16.mxu0 0
    %3523 = vmatmul.mubr.bf16.gmra.mxu0 %v3480
    %v3524 = vpop.f32.mrf.mxu0
    %v3525 = vadd.f32 %v3462, %v3524
    %v3526 = vpop.f32.mrf.mxu0
    %v3527 = vpop.f32.mrf.mxu0
    %v3528 = vpop.f32.mrf.mxu0
    %3529 = vdwg.mxu0
    %v3530 = vadd.f32 %v2777, %v3517
    %v3531 = vadd.f32 %v2778, %v3520
    %v3532 = vadd.f32 %v2779, %v3525
    %s3533 = scalar_lea.vmem %s11, 1
    %v3534 = vld [vmem:[%s3533] sm:$0x1]
    %s3535 = scalar_lea.vmem %s12, 1
    %v3536 = vld [vmem:[%s3535] sm:$0x1]
    %v3537 = vsel %vm543, %v3530, 0.0
    %3538 = vadd.xlane.f32.xlu0 %v3537
    %v3539 = vpop.xlane.xlu0 %3538
    %v3540 = vsel %vm543, %v3531, 0.0
    %3541 = vadd.xlane.f32.xlu0 %v3540
    %v3542 = vpop.xlane.xlu0 %3541
    %v3543 = vsel %vm1310, %v3532, 0.0
    %3544 = vadd.xlane.f32.xlu0 %v3543
    %v3545 = vpop.xlane.xlu0 %3544
    %v3546 = vmul.f32 %v3539, %v1314
    %v3547 = vmul.f32 %v3542, %v1314
    %v3548 = vmul.f32 %v3545, %v1314
    %v3549 = vsub.f32 %v3530, %v3546
    %v3550 = vsub.f32 %v3531, %v3547
    %v3551 = vsub.f32 %v3532, %v3548
    %v3552 = vmul.f32 %v3549, %v3549
    %v3553 = vmul.f32 %v3550, %v3550
    %v3554 = vmul.f32 %v3551, %v3551
    %v3555 = vsel %vm543, %v3552, 0.0
    %3556 = vadd.xlane.f32.xlu0 %v3555
    %v3557 = vpop.xlane.xlu0 %3556
    %v3558 = vsel %vm543, %v3553, 0.0
    %3559 = vadd.xlane.f32.xlu0 %v3558
    %v3560 = vpop.xlane.xlu0 %3559
    %v3561 = vsel %vm1310, %v3554, 0.0
    %3562 = vadd.xlane.f32.xlu0 %v3561
    %v3563 = vpop.xlane.xlu0 %3562
    %v3564 = vmul.f32 %v3557, %v1314
    %v3565 = vmul.f32 %v3560, %v1314
    %v3566 = vmul.f32 %v3563, %v1314
    %v3567 = vadd.f32 %v3564, 1e-05
    %v3568 = vadd.f32 %v3565, 1e-05
    %v3569 = vadd.f32 %v3566, 1e-05
    %v3570 = vrsqrt.pop %v3567
    %v3571 = vrsqrt.pop %v3568
    %v3572 = vrsqrt.pop %v3569
    %v3573 = vmul.f32 %v3549, %v3570
    %v3574 = vmul.f32 %v3550, %v3571
    %v3575 = vmul.f32 %v3551, %v3572
    %v3577 = vlaneseq
    %v3578 = vshrl.u32 %v3577, 7
    %v3579 = vsub.s32 0, %v3578
    %v3580 = vrot.slane %v3534, %v3579
    %v3582 = vmul.f32 %v3573, %v3580
    %v3583 = vmul.f32 %v3574, %v3580
    %v3584 = vmul.f32 %v3575, %v3580
    %v3586 = vlaneseq
    %v3587 = vshrl.u32 %v3586, 7
    %v3588 = vsub.s32 0, %v3587
    %v3589 = vrot.slane %v3536, %v3588
    %v3591 = vadd.f32 %v3582, %v3589
    %v3592 = vadd.f32 %v3583, %v3589
    %v3593 = vadd.f32 %v3584, %v3589
    %v3594 = vpack.c.bf16 %v3592, %v3591
    %v3595 = vpack.c.bf16 %v3593, %v3593
    %s3596 = scalar_lea.vmem [#allocation8], 256
    %v3597 = vld [vmem:[%s3596] sm:$0xff]
    %v3598 = vld [vmem:[%s3596 + $0x8] sm:$0xff]
    %v3599 = vld [vmem:[%s3596 + $0x10] sm:$0xff]
    %v3600 = vld [vmem:[%s3596 + $0x18] sm:$0xff]
    %v3601 = vld [vmem:[%s3596 + $0x20] sm:$0xff]
    %v3602 = vld [vmem:[%s3596 + $0x28] sm:$0xff]
    %v3603 = vld [vmem:[%s3596 + $0x30] sm:$0xff]
    %v3604 = vld [vmem:[%s3596 + $0x38] sm:$0xff]
    %v3605 = vld [vmem:[%s3596 + $0x40] sm:$0xff]
    %v3606 = vld [vmem:[%s3596 + $0x48] sm:$0xff]
    %v3607 = vld [vmem:[%s3596 + $0x50] sm:$0xff]
    %v3608 = vld [vmem:[%s3596 + $0x58] sm:$0xff]
    %v3609 = vld [vmem:[%s3596 + $0x60] sm:$0xff]
    %v3610 = vld [vmem:[%s3596 + $0x68] sm:$0xff]
    %v3611 = vld [vmem:[%s3596 + $0x70] sm:$0xff]
    %v3612 = vld [vmem:[%s3596 + $0x78] sm:$0xff]
    %v3613 = vld [vmem:[%s3596 + $0x80] sm:$0xff]
    %v3614 = vld [vmem:[%s3596 + $0x88] sm:$0xff]
    %v3615 = vld [vmem:[%s3596 + $0x90] sm:$0xff]
    %v3616 = vld [vmem:[%s3596 + $0x98] sm:$0xff]
    %v3617 = vld [vmem:[%s3596 + $0xa0] sm:$0xff]
    %v3618 = vld [vmem:[%s3596 + $0xa8] sm:$0xff]
    %v3619 = vld [vmem:[%s3596 + $0xb0] sm:$0xff]
    %v3620 = vld [vmem:[%s3596 + $0xb8] sm:$0xff]
    %v3621 = vld [vmem:[%s3596 + $0xc0] sm:$0xff]
    %v3622 = vld [vmem:[%s3596 + $0xc8] sm:$0xff]
    %v3623 = vld [vmem:[%s3596 + $0xd0] sm:$0xff]
    %v3624 = vld [vmem:[%s3596 + $0xd8] sm:$0xff]
    %v3625 = vld [vmem:[%s3596 + $0xe0] sm:$0xff]
    %v3626 = vld [vmem:[%s3596 + $0xe8] sm:$0xff]
    %v3627 = vld [vmem:[%s3596 + $0xf0] sm:$0xff]
    %v3628 = vld [vmem:[%s3596 + $0xf8] sm:$0xff]
    %s3629 = scalar_lea.vmem [#allocation10], 16
    %v3630 = vld [vmem:[%s3629] sm:$0xff]
    %v3631 = vld [vmem:[%s3629 + $0x8] sm:$0xff]
    %v3634 = vlaneseq
    %v3635 = vshrl.u32 %v3634, 7
    %v3636 = vsub.s32 0, %v3635
    %v3637 = vrot.slane %v3630, %v3636
    %v3638 = vlaneseq
    %v3639 = vshrl.u32 %v3638, 7
    %v3640 = vsub.s32 1, %v3639
    %v3641 = vrot.slane %v3630, %v3640
    %v3642 = vlaneseq
    %v3643 = vshrl.u32 %v3642, 7
    %v3644 = vsub.s32 2, %v3643
    %v3645 = vrot.slane %v3630, %v3644
    %v3646 = vlaneseq
    %v3647 = vshrl.u32 %v3646, 7
    %v3648 = vsub.s32 3, %v3647
    %v3649 = vrot.slane %v3630, %v3648
    %v3650 = vlaneseq
    %v3651 = vshrl.u32 %v3650, 7
    %v3652 = vsub.s32 4, %v3651
    %v3653 = vrot.slane %v3630, %v3652
    %v3654 = vlaneseq
    %v3655 = vshrl.u32 %v3654, 7
    %v3656 = vsub.s32 5, %v3655
    %v3657 = vrot.slane %v3630, %v3656
    %v3658 = vlaneseq
    %v3659 = vshrl.u32 %v3658, 7
    %v3660 = vsub.s32 6, %v3659
    %v3661 = vrot.slane %v3630, %v3660
    %v3662 = vlaneseq
    %v3663 = vshrl.u32 %v3662, 7
    %v3664 = vsub.s32 7, %v3663
    %v3665 = vrot.slane %v3630, %v3664
    %v3666 = vlaneseq
    %v3667 = vshrl.u32 %v3666, 7
    %v3668 = vsub.s32 0, %v3667
    %v3669 = vrot.slane %v3631, %v3668
    %v3670 = vlaneseq
    %v3671 = vshrl.u32 %v3670, 7
    %v3672 = vsub.s32 1, %v3671
    %v3673 = vrot.slane %v3631, %v3672
    %v3674 = vlaneseq
    %v3675 = vshrl.u32 %v3674, 7
    %v3676 = vsub.s32 2, %v3675
    %v3677 = vrot.slane %v3631, %v3676
    %v3678 = vlaneseq
    %v3679 = vshrl.u32 %v3678, 7
    %v3680 = vsub.s32 3, %v3679
    %v3681 = vrot.slane %v3631, %v3680
    %v3682 = vlaneseq
    %v3683 = vshrl.u32 %v3682, 7
    %v3684 = vsub.s32 4, %v3683
    %v3685 = vrot.slane %v3631, %v3684
    %v3686 = vlaneseq
    %v3687 = vshrl.u32 %v3686, 7
    %v3688 = vsub.s32 5, %v3687
    %v3689 = vrot.slane %v3631, %v3688
    %v3690 = vlaneseq
    %v3691 = vshrl.u32 %v3690, 7
    %v3692 = vsub.s32 6, %v3691
    %v3693 = vrot.slane %v3631, %v3692
    %v3694 = vlaneseq
    %v3695 = vshrl.u32 %v3694, 7
    %v3696 = vsub.s32 7, %v3695
    %v3697 = vrot.slane %v3631, %v3696
    %v3746 = vunpack.c.l.b16 %v3597
    %v3747 = vunpack.c.h.b16 %v3597
    %v3748 = vunpack.c.l.b16 %v3598
    %v3749 = vunpack.c.h.b16 %v3598
    %v3750 = vunpack.c.l.b16 %v3599
    %v3751 = vunpack.c.h.b16 %v3599
    %v3752 = vunpack.c.l.b16 %v3600
    %v3753 = vunpack.c.h.b16 %v3600
    %v3754 = vunpack.c.l.b16 %v3601
    %v3755 = vunpack.c.h.b16 %v3601
    %v3756 = vunpack.c.l.b16 %v3602
    %v3757 = vunpack.c.h.b16 %v3602
    %v3758 = vunpack.c.l.b16 %v3603
    %v3759 = vunpack.c.h.b16 %v3603
    %v3760 = vunpack.c.l.b16 %v3604
    %v3761 = vunpack.c.h.b16 %v3604
    %v3762 = vunpack.c.l.b16 %v3605
    %v3763 = vunpack.c.h.b16 %v3605
    %v3764 = vunpack.c.l.b16 %v3606
    %v3765 = vunpack.c.h.b16 %v3606
    %v3766 = vunpack.c.l.b16 %v3607
    %v3767 = vunpack.c.h.b16 %v3607
    %v3768 = vunpack.c.l.b16 %v3608
    %v3769 = vunpack.c.h.b16 %v3608
    %v3770 = vunpack.c.l.b16 %v3609
    %v3771 = vunpack.c.h.b16 %v3609
    %v3772 = vunpack.c.l.b16 %v3610
    %v3773 = vunpack.c.h.b16 %v3610
    %v3774 = vunpack.c.l.b16 %v3611
    %v3775 = vunpack.c.h.b16 %v3611
    %v3776 = vunpack.c.l.b16 %v3612
    %v3777 = vunpack.c.h.b16 %v3612
    %v3778 = vunpack.c.l.b16 %v3613
    %v3779 = vunpack.c.h.b16 %v3613
    %v3780 = vunpack.c.l.b16 %v3614
    %v3781 = vunpack.c.h.b16 %v3614
    %v3782 = vunpack.c.l.b16 %v3615
    %v3783 = vunpack.c.h.b16 %v3615
    %v3784 = vunpack.c.l.b16 %v3616
    %v3785 = vunpack.c.h.b16 %v3616
    %v3786 = vunpack.c.l.b16 %v3617
    %v3787 = vunpack.c.h.b16 %v3617
    %v3788 = vunpack.c.l.b16 %v3618
    %v3789 = vunpack.c.h.b16 %v3618
    %v3790 = vunpack.c.l.b16 %v3619
    %v3791 = vunpack.c.h.b16 %v3619
    %v3792 = vunpack.c.l.b16 %v3620
    %v3793 = vunpack.c.h.b16 %v3620
    %v3794 = vunpack.c.l.b16 %v3621
    %v3795 = vunpack.c.h.b16 %v3621
    %v3796 = vunpack.c.l.b16 %v3622
    %v3797 = vunpack.c.h.b16 %v3622
    %v3798 = vunpack.c.l.b16 %v3623
    %v3799 = vunpack.c.h.b16 %v3623
    %v3800 = vunpack.c.l.b16 %v3624
    %v3801 = vunpack.c.h.b16 %v3624
    %v3802 = vunpack.c.l.b16 %v3625
    %v3803 = vunpack.c.h.b16 %v3625
    %v3804 = vunpack.c.l.b16 %v3626
    %v3805 = vunpack.c.h.b16 %v3626
    %v3806 = vunpack.c.l.b16 %v3627
    %v3807 = vunpack.c.h.b16 %v3627
    %v3808 = vunpack.c.l.b16 %v3628
    %v3809 = vunpack.c.h.b16 %v3628
    %v3810 = vpack.c.b16 %v3762, %v3746
    %v3811 = vpack.c.b16 %v3763, %v3747
    %v3812 = vpack.c.b16 %v3764, %v3748
    %v3813 = vpack.c.b16 %v3765, %v3749
    %v3814 = vpack.c.b16 %v3766, %v3750
    %v3815 = vpack.c.b16 %v3767, %v3751
    %v3816 = vpack.c.b16 %v3768, %v3752
    %v3817 = vpack.c.b16 %v3769, %v3753
    %v3818 = vpack.c.b16 %v3770, %v3754
    %v3819 = vpack.c.b16 %v3771, %v3755
    %v3820 = vpack.c.b16 %v3772, %v3756
    %v3821 = vpack.c.b16 %v3773, %v3757
    %v3822 = vpack.c.b16 %v3774, %v3758
    %v3823 = vpack.c.b16 %v3775, %v3759
    %v3824 = vpack.c.b16 %v3776, %v3760
    %v3825 = vpack.c.b16 %v3777, %v3761
    %v3826 = vpack.c.b16 %v3794, %v3778
    %v3827 = vpack.c.b16 %v3795, %v3779
    %v3828 = vpack.c.b16 %v3796, %v3780
    %v3829 = vpack.c.b16 %v3797, %v3781
    %v3830 = vpack.c.b16 %v3798, %v3782
    %v3831 = vpack.c.b16 %v3799, %v3783
    %v3832 = vpack.c.b16 %v3800, %v3784
    %v3833 = vpack.c.b16 %v3801, %v3785
    %v3834 = vpack.c.b16 %v3802, %v3786
    %v3835 = vpack.c.b16 %v3803, %v3787
    %v3836 = vpack.c.b16 %v3804, %v3788
    %v3837 = vpack.c.b16 %v3805, %v3789
    %v3838 = vpack.c.b16 %v3806, %v3790
    %v3839 = vpack.c.b16 %v3807, %v3791
    %v3840 = vpack.c.b16 %v3808, %v3792
    %v3841 = vpack.c.b16 %v3809, %v3793
    %v3875 = vsel %vm543, %v3594, 0
    %v3878 = vsel %vm543, %v3595, 0
    %3880 = vmatprep.subr.bf16.mxu0 0
    %3881 = vmatpush1.bf16.msra.mxu0 0
    %3882 = vmatprep.subr.bf16.mxu0 0
    %3883 = vmatpush1.bf16.msra.mxu0 0
    %3884 = vmatprep.subr.bf16.mxu0 0
    %3885 = vmatpush1.bf16.msra.mxu0 0
    %3886 = vmatprep.subr.bf16.mxu0 0
    %3887 = vmatpush1.bf16.msra.mxu0 0
    %3888 = vmatprep.subr.bf16.mxu0 0
    %3889 = vmatpush1.bf16.msra.mxu0 0
    %3890 = vmatprep.subr.bf16.mxu0 0
    %3891 = vmatpush1.bf16.msra.mxu0 0
    %3892 = vmatprep.subr.bf16.mxu0 %v3827
    %3893 = vmatpush1.bf16.msra.mxu0 %v3826
    %3894 = vmatprep.subr.bf16.mxu0 %v3811
    %3895 = vmatpush1.bf16.msra.mxu0 %v3810
    %3896 = vmatprep.subr.bf16.mxu0 0
    %3897 = vmatpush2.bf16.msra.mxu0 0
    %3898 = vmatprep.subr.bf16.mxu0 0
    %3899 = vmatpush2.bf16.msra.mxu0 0
    %3900 = vmatprep.subr.bf16.mxu0 0
    %3901 = vmatpush2.bf16.msra.mxu0 0
    %3902 = vmatprep.subr.bf16.mxu0 0
    %3903 = vmatpush2.bf16.msra.mxu0 0
    %3904 = vmatprep.subr.bf16.mxu0 0
    %3905 = vmatpush2.bf16.msra.mxu0 0
    %3906 = vmatprep.subr.bf16.mxu0 0
    %3907 = vmatpush2.bf16.msra.mxu0 0
    %3908 = vmatprep.subr.bf16.mxu0 0
    %3909 = vmatpush2.bf16.msra.mxu0 0
    %3910 = vmatprep.subr.bf16.mxu0 0
    %3911 = vmatpush2.bf16.msra.mxu0 0
    %3912 = vmatprep.mubr.bf16.mxu0 0
    %3913 = vmatmul.mubr.bf16.gmra.mxu0 %v3875
    %v3914 = vpop.f32.mrf.mxu0
    %v3915 = vadd.f32 %v3637, %v3914
    %v3916 = vpop.f32.mrf.mxu0
    %v3917 = vadd.f32 %v3641, %v3916
    %v3918 = vpop.f32.mrf.mxu0
    %v3919 = vadd.f32 %v3637, %v3918
    %v3920 = vpop.f32.mrf.mxu0
    %v3921 = vadd.f32 %v3641, %v3920
    %3922 = vmatprep.mubr.bf16.mxu0 0
    %3923 = vmatmul.mubr.bf16.gmra.mxu0 %v3878
    %v3924 = vpop.f32.mrf.mxu0
    %v3925 = vadd.f32 %v3637, %v3924
    %v3926 = vpop.f32.mrf.mxu0
    %v3927 = vadd.f32 %v3641, %v3926
    %v3928 = vpop.f32.mrf.mxu0
    %v3929 = vpop.f32.mrf.mxu0
    %3930 = vdwg.mxu0
    %3931 = vmatprep.subr.bf16.mxu0 0
    %3932 = vmatpush1.bf16.msra.mxu0 0
    %3933 = vmatprep.subr.bf16.mxu0 0
    %3934 = vmatpush1.bf16.msra.mxu0 0
    %3935 = vmatprep.subr.bf16.mxu0 0
    %3936 = vmatpush1.bf16.msra.mxu0 0
    %3937 = vmatprep.subr.bf16.mxu0 0
    %3938 = vmatpush1.bf16.msra.mxu0 0
    %3939 = vmatprep.subr.bf16.mxu0 0
    %3940 = vmatpush1.bf16.msra.mxu0 0
    %3941 = vmatprep.subr.bf16.mxu0 0
    %3942 = vmatpush1.bf16.msra.mxu0 0
    %3943 = vmatprep.subr.bf16.mxu0 %v3829
    %3944 = vmatpush1.bf16.msra.mxu0 %v3828
    %3945 = vmatprep.subr.bf16.mxu0 %v3813
    %3946 = vmatpush1.bf16.msra.mxu0 %v3812
    %3947 = vmatprep.subr.bf16.mxu0 0
    %3948 = vmatpush2.bf16.msra.mxu0 0
    %3949 = vmatprep.subr.bf16.mxu0 0
    %3950 = vmatpush2.bf16.msra.mxu0 0
    %3951 = vmatprep.subr.bf16.mxu0 0
    %3952 = vmatpush2.bf16.msra.mxu0 0
    %3953 = vmatprep.subr.bf16.mxu0 0
    %3954 = vmatpush2.bf16.msra.mxu0 0
    %3955 = vmatprep.subr.bf16.mxu0 0
    %3956 = vmatpush2.bf16.msra.mxu0 0
    %3957 = vmatprep.subr.bf16.mxu0 0
    %3958 = vmatpush2.bf16.msra.mxu0 0
    %3959 = vmatprep.subr.bf16.mxu0 0
    %3960 = vmatpush2.bf16.msra.mxu0 0
    %3961 = vmatprep.subr.bf16.mxu0 0
    %3962 = vmatpush2.bf16.msra.mxu0 0
    %3963 = vmatprep.mubr.bf16.mxu0 0
    %3964 = vmatmul.mubr.bf16.gmra.mxu0 %v3875
    %v3965 = vpop.f32.mrf.mxu0
    %v3966 = vadd.f32 %v3645, %v3965
    %v3967 = vpop.f32.mrf.mxu0
    %v3968 = vadd.f32 %v3649, %v3967
    %v3969 = vpop.f32.mrf.mxu0
    %v3970 = vadd.f32 %v3645, %v3969
    %v3971 = vpop.f32.mrf.mxu0
    %v3972 = vadd.f32 %v3649, %v3971
    %3973 = vmatprep.mubr.bf16.mxu0 0
    %3974 = vmatmul.mubr.bf16.gmra.mxu0 %v3878
    %v3975 = vpop.f32.mrf.mxu0
    %v3976 = vadd.f32 %v3645, %v3975
    %v3977 = vpop.f32.mrf.mxu0
    %v3978 = vadd.f32 %v3649, %v3977
    %v3979 = vpop.f32.mrf.mxu0
    %v3980 = vpop.f32.mrf.mxu0
    %3981 = vdwg.mxu0
    %3982 = vmatprep.subr.bf16.mxu0 0
    %3983 = vmatpush1.bf16.msra.mxu0 0
    %3984 = vmatprep.subr.bf16.mxu0 0
    %3985 = vmatpush1.bf16.msra.mxu0 0
    %3986 = vmatprep.subr.bf16.mxu0 0
    %3987 = vmatpush1.bf16.msra.mxu0 0
    %3988 = vmatprep.subr.bf16.mxu0 0
    %3989 = vmatpush1.bf16.msra.mxu0 0
    %3990 = vmatprep.subr.bf16.mxu0 0
    %3991 = vmatpush1.bf16.msra.mxu0 0
    %3992 = vmatprep.subr.bf16.mxu0 0
    %3993 = vmatpush1.bf16.msra.mxu0 0
    %3994 = vmatprep.subr.bf16.mxu0 %v3831
    %3995 = vmatpush1.bf16.msra.mxu0 %v3830
    %3996 = vmatprep.subr.bf16.mxu0 %v3815
    %3997 = vmatpush1.bf16.msra.mxu0 %v3814
    %3998 = vmatprep.subr.bf16.mxu0 0
    %3999 = vmatpush2.bf16.msra.mxu0 0
    %4000 = vmatprep.subr.bf16.mxu0 0
    %4001 = vmatpush2.bf16.msra.mxu0 0
    %4002 = vmatprep.subr.bf16.mxu0 0
    %4003 = vmatpush2.bf16.msra.mxu0 0
    %4004 = vmatprep.subr.bf16.mxu0 0
    %4005 = vmatpush2.bf16.msra.mxu0 0
    %4006 = vmatprep.subr.bf16.mxu0 0
    %4007 = vmatpush2.bf16.msra.mxu0 0
    %4008 = vmatprep.subr.bf16.mxu0 0
    %4009 = vmatpush2.bf16.msra.mxu0 0
    %4010 = vmatprep.subr.bf16.mxu0 0
    %4011 = vmatpush2.bf16.msra.mxu0 0
    %4012 = vmatprep.subr.bf16.mxu0 0
    %4013 = vmatpush2.bf16.msra.mxu0 0
    %4014 = vmatprep.mubr.bf16.mxu0 0
    %4015 = vmatmul.mubr.bf16.gmra.mxu0 %v3875
    %v4016 = vpop.f32.mrf.mxu0
    %v4017 = vadd.f32 %v3653, %v4016
    %v4018 = vpop.f32.mrf.mxu0
    %v4019 = vadd.f32 %v3657, %v4018
    %v4020 = vpop.f32.mrf.mxu0
    %v4021 = vadd.f32 %v3653, %v4020
    %v4022 = vpop.f32.mrf.mxu0
    %v4023 = vadd.f32 %v3657, %v4022
    %4024 = vmatprep.mubr.bf16.mxu0 0
    %4025 = vmatmul.mubr.bf16.gmra.mxu0 %v3878
    %v4026 = vpop.f32.mrf.mxu0
    %v4027 = vadd.f32 %v3653, %v4026
    %v4028 = vpop.f32.mrf.mxu0
    %v4029 = vadd.f32 %v3657, %v4028
    %v4030 = vpop.f32.mrf.mxu0
    %v4031 = vpop.f32.mrf.mxu0
    %4032 = vdwg.mxu0
    %4033 = vmatprep.subr.bf16.mxu0 0
    %4034 = vmatpush1.bf16.msra.mxu0 0
    %4035 = vmatprep.subr.bf16.mxu0 0
    %4036 = vmatpush1.bf16.msra.mxu0 0
    %4037 = vmatprep.subr.bf16.mxu0 0
    %4038 = vmatpush1.bf16.msra.mxu0 0
    %4039 = vmatprep.subr.bf16.mxu0 0
    %4040 = vmatpush1.bf16.msra.mxu0 0
    %4041 = vmatprep.subr.bf16.mxu0 0
    %4042 = vmatpush1.bf16.msra.mxu0 0
    %4043 = vmatprep.subr.bf16.mxu0 0
    %4044 = vmatpush1.bf16.msra.mxu0 0
    %4045 = vmatprep.subr.bf16.mxu0 %v3833
    %4046 = vmatpush1.bf16.msra.mxu0 %v3832
    %4047 = vmatprep.subr.bf16.mxu0 %v3817
    %4048 = vmatpush1.bf16.msra.mxu0 %v3816
    %4049 = vmatprep.subr.bf16.mxu0 0
    %4050 = vmatpush2.bf16.msra.mxu0 0
    %4051 = vmatprep.subr.bf16.mxu0 0
    %4052 = vmatpush2.bf16.msra.mxu0 0
    %4053 = vmatprep.subr.bf16.mxu0 0
    %4054 = vmatpush2.bf16.msra.mxu0 0
    %4055 = vmatprep.subr.bf16.mxu0 0
    %4056 = vmatpush2.bf16.msra.mxu0 0
    %4057 = vmatprep.subr.bf16.mxu0 0
    %4058 = vmatpush2.bf16.msra.mxu0 0
    %4059 = vmatprep.subr.bf16.mxu0 0
    %4060 = vmatpush2.bf16.msra.mxu0 0
    %4061 = vmatprep.subr.bf16.mxu0 0
    %4062 = vmatpush2.bf16.msra.mxu0 0
    %4063 = vmatprep.subr.bf16.mxu0 0
    %4064 = vmatpush2.bf16.msra.mxu0 0
    %4065 = vmatprep.mubr.bf16.mxu0 0
    %4066 = vmatmul.mubr.bf16.gmra.mxu0 %v3875
    %v4067 = vpop.f32.mrf.mxu0
    %v4068 = vadd.f32 %v3661, %v4067
    %v4069 = vpop.f32.mrf.mxu0
    %v4070 = vadd.f32 %v3665, %v4069
    %v4071 = vpop.f32.mrf.mxu0
    %v4072 = vadd.f32 %v3661, %v4071
    %v4073 = vpop.f32.mrf.mxu0
    %v4074 = vadd.f32 %v3665, %v4073
    %4075 = vmatprep.mubr.bf16.mxu0 0
    %4076 = vmatmul.mubr.bf16.gmra.mxu0 %v3878
    %v4077 = vpop.f32.mrf.mxu0
    %v4078 = vadd.f32 %v3661, %v4077
    %v4079 = vpop.f32.mrf.mxu0
    %v4080 = vadd.f32 %v3665, %v4079
    %v4081 = vpop.f32.mrf.mxu0
    %v4082 = vpop.f32.mrf.mxu0
    %4083 = vdwg.mxu0
    %4084 = vmatprep.subr.bf16.mxu0 0
    %4085 = vmatpush1.bf16.msra.mxu0 0
    %4086 = vmatprep.subr.bf16.mxu0 0
    %4087 = vmatpush1.bf16.msra.mxu0 0
    %4088 = vmatprep.subr.bf16.mxu0 0
    %4089 = vmatpush1.bf16.msra.mxu0 0
    %4090 = vmatprep.subr.bf16.mxu0 0
    %4091 = vmatpush1.bf16.msra.mxu0 0
    %4092 = vmatprep.subr.bf16.mxu0 0
    %4093 = vmatpush1.bf16.msra.mxu0 0
    %4094 = vmatprep.subr.bf16.mxu0 0
    %4095 = vmatpush1.bf16.msra.mxu0 0
    %4096 = vmatprep.subr.bf16.mxu0 %v3835
    %4097 = vmatpush1.bf16.msra.mxu0 %v3834
    %4098 = vmatprep.subr.bf16.mxu0 %v3819
    %4099 = vmatpush1.bf16.msra.mxu0 %v3818
    %4100 = vmatprep.subr.bf16.mxu0 0
    %4101 = vmatpush2.bf16.msra.mxu0 0
    %4102 = vmatprep.subr.bf16.mxu0 0
    %4103 = vmatpush2.bf16.msra.mxu0 0
    %4104 = vmatprep.subr.bf16.mxu0 0
    %4105 = vmatpush2.bf16.msra.mxu0 0
    %4106 = vmatprep.subr.bf16.mxu0 0
    %4107 = vmatpush2.bf16.msra.mxu0 0
    %4108 = vmatprep.subr.bf16.mxu0 0
    %4109 = vmatpush2.bf16.msra.mxu0 0
    %4110 = vmatprep.subr.bf16.mxu0 0
    %4111 = vmatpush2.bf16.msra.mxu0 0
    %4112 = vmatprep.subr.bf16.mxu0 0
    %4113 = vmatpush2.bf16.msra.mxu0 0
    %4114 = vmatprep.subr.bf16.mxu0 0
    %4115 = vmatpush2.bf16.msra.mxu0 0
    %4116 = vmatprep.mubr.bf16.mxu0 0
    %4117 = vmatmul.mubr.bf16.gmra.mxu0 %v3875
    %v4118 = vpop.f32.mrf.mxu0
    %v4119 = vadd.f32 %v3669, %v4118
    %v4120 = vpop.f32.mrf.mxu0
    %v4121 = vadd.f32 %v3673, %v4120
    %v4122 = vpop.f32.mrf.mxu0
    %v4123 = vadd.f32 %v3669, %v4122
    %v4124 = vpop.f32.mrf.mxu0
    %v4125 = vadd.f32 %v3673, %v4124
    %4126 = vmatprep.mubr.bf16.mxu0 0
    %4127 = vmatmul.mubr.bf16.gmra.mxu0 %v3878
    %v4128 = vpop.f32.mrf.mxu0
    %v4129 = vadd.f32 %v3669, %v4128
    %v4130 = vpop.f32.mrf.mxu0
    %v4131 = vadd.f32 %v3673, %v4130
    %v4132 = vpop.f32.mrf.mxu0
    %v4133 = vpop.f32.mrf.mxu0
    %4134 = vdwg.mxu0
    %4135 = vmatprep.subr.bf16.mxu0 0
    %4136 = vmatpush1.bf16.msra.mxu0 0
    %4137 = vmatprep.subr.bf16.mxu0 0
    %4138 = vmatpush1.bf16.msra.mxu0 0
    %4139 = vmatprep.subr.bf16.mxu0 0
    %4140 = vmatpush1.bf16.msra.mxu0 0
    %4141 = vmatprep.subr.bf16.mxu0 0
    %4142 = vmatpush1.bf16.msra.mxu0 0
    %4143 = vmatprep.subr.bf16.mxu0 0
    %4144 = vmatpush1.bf16.msra.mxu0 0
    %4145 = vmatprep.subr.bf16.mxu0 0
    %4146 = vmatpush1.bf16.msra.mxu0 0
    %4147 = vmatprep.subr.bf16.mxu0 %v3837
    %4148 = vmatpush1.bf16.msra.mxu0 %v3836
    %4149 = vmatprep.subr.bf16.mxu0 %v3821
    %4150 = vmatpush1.bf16.msra.mxu0 %v3820
    %4151 = vmatprep.subr.bf16.mxu0 0
    %4152 = vmatpush2.bf16.msra.mxu0 0
    %4153 = vmatprep.subr.bf16.mxu0 0
    %4154 = vmatpush2.bf16.msra.mxu0 0
    %4155 = vmatprep.subr.bf16.mxu0 0
    %4156 = vmatpush2.bf16.msra.mxu0 0
    %4157 = vmatprep.subr.bf16.mxu0 0
    %4158 = vmatpush2.bf16.msra.mxu0 0
    %4159 = vmatprep.subr.bf16.mxu0 0
    %4160 = vmatpush2.bf16.msra.mxu0 0
    %4161 = vmatprep.subr.bf16.mxu0 0
    %4162 = vmatpush2.bf16.msra.mxu0 0
    %4163 = vmatprep.subr.bf16.mxu0 0
    %4164 = vmatpush2.bf16.msra.mxu0 0
    %4165 = vmatprep.subr.bf16.mxu0 0
    %4166 = vmatpush2.bf16.msra.mxu0 0
    %4167 = vmatprep.mubr.bf16.mxu0 0
    %4168 = vmatmul.mubr.bf16.gmra.mxu0 %v3875
    %v4169 = vpop.f32.mrf.mxu0
    %v4170 = vadd.f32 %v3677, %v4169
    %v4171 = vpop.f32.mrf.mxu0
    %v4172 = vadd.f32 %v3681, %v4171
    %v4173 = vpop.f32.mrf.mxu0
    %v4174 = vadd.f32 %v3677, %v4173
    %v4175 = vpop.f32.mrf.mxu0
    %v4176 = vadd.f32 %v3681, %v4175
    %4177 = vmatprep.mubr.bf16.mxu0 0
    %4178 = vmatmul.mubr.bf16.gmra.mxu0 %v3878
    %v4179 = vpop.f32.mrf.mxu0
    %v4180 = vadd.f32 %v3677, %v4179
    %v4181 = vpop.f32.mrf.mxu0
    %v4182 = vadd.f32 %v3681, %v4181
    %v4183 = vpop.f32.mrf.mxu0
    %v4184 = vpop.f32.mrf.mxu0
    %4185 = vdwg.mxu0
    %4186 = vmatprep.subr.bf16.mxu0 0
    %4187 = vmatpush1.bf16.msra.mxu0 0
    %4188 = vmatprep.subr.bf16.mxu0 0
    %4189 = vmatpush1.bf16.msra.mxu0 0
    %4190 = vmatprep.subr.bf16.mxu0 0
    %4191 = vmatpush1.bf16.msra.mxu0 0
    %4192 = vmatprep.subr.bf16.mxu0 0
    %4193 = vmatpush1.bf16.msra.mxu0 0
    %4194 = vmatprep.subr.bf16.mxu0 0
    %4195 = vmatpush1.bf16.msra.mxu0 0
    %4196 = vmatprep.subr.bf16.mxu0 0
    %4197 = vmatpush1.bf16.msra.mxu0 0
    %4198 = vmatprep.subr.bf16.mxu0 %v3839
    %4199 = vmatpush1.bf16.msra.mxu0 %v3838
    %4200 = vmatprep.subr.bf16.mxu0 %v3823
    %4201 = vmatpush1.bf16.msra.mxu0 %v3822
    %4202 = vmatprep.subr.bf16.mxu0 0
    %4203 = vmatpush2.bf16.msra.mxu0 0
    %4204 = vmatprep.subr.bf16.mxu0 0
    %4205 = vmatpush2.bf16.msra.mxu0 0
    %4206 = vmatprep.subr.bf16.mxu0 0
    %4207 = vmatpush2.bf16.msra.mxu0 0
    %4208 = vmatprep.subr.bf16.mxu0 0
    %4209 = vmatpush2.bf16.msra.mxu0 0
    %4210 = vmatprep.subr.bf16.mxu0 0
    %4211 = vmatpush2.bf16.msra.mxu0 0
    %4212 = vmatprep.subr.bf16.mxu0 0
    %4213 = vmatpush2.bf16.msra.mxu0 0
    %4214 = vmatprep.subr.bf16.mxu0 0
    %4215 = vmatpush2.bf16.msra.mxu0 0
    %4216 = vmatprep.subr.bf16.mxu0 0
    %4217 = vmatpush2.bf16.msra.mxu0 0
    %4218 = vmatprep.mubr.bf16.mxu0 0
    %4219 = vmatmul.mubr.bf16.gmra.mxu0 %v3875
    %v4220 = vpop.f32.mrf.mxu0
    %v4221 = vadd.f32 %v3685, %v4220
    %v4222 = vpop.f32.mrf.mxu0
    %v4223 = vadd.f32 %v3689, %v4222
    %v4224 = vpop.f32.mrf.mxu0
    %v4225 = vadd.f32 %v3685, %v4224
    %v4226 = vpop.f32.mrf.mxu0
    %v4227 = vadd.f32 %v3689, %v4226
    %4228 = vmatprep.mubr.bf16.mxu0 0
    %4229 = vmatmul.mubr.bf16.gmra.mxu0 %v3878
    %v4230 = vpop.f32.mrf.mxu0
    %v4231 = vadd.f32 %v3685, %v4230
    %v4232 = vpop.f32.mrf.mxu0
    %v4233 = vadd.f32 %v3689, %v4232
    %v4234 = vpop.f32.mrf.mxu0
    %v4235 = vpop.f32.mrf.mxu0
    %4236 = vdwg.mxu0
    %4237 = vmatprep.subr.bf16.mxu0 0
    %4238 = vmatpush1.bf16.msra.mxu0 0
    %4239 = vmatprep.subr.bf16.mxu0 0
    %4240 = vmatpush1.bf16.msra.mxu0 0
    %4241 = vmatprep.subr.bf16.mxu0 0
    %4242 = vmatpush1.bf16.msra.mxu0 0
    %4243 = vmatprep.subr.bf16.mxu0 0
    %4244 = vmatpush1.bf16.msra.mxu0 0
    %4245 = vmatprep.subr.bf16.mxu0 0
    %4246 = vmatpush1.bf16.msra.mxu0 0
    %4247 = vmatprep.subr.bf16.mxu0 0
    %4248 = vmatpush1.bf16.msra.mxu0 0
    %4249 = vmatprep.subr.bf16.mxu0 %v3841
    %4250 = vmatpush1.bf16.msra.mxu0 %v3840
    %4251 = vmatprep.subr.bf16.mxu0 %v3825
    %4252 = vmatpush1.bf16.msra.mxu0 %v3824
    %4253 = vmatprep.subr.bf16.mxu0 0
    %4254 = vmatpush2.bf16.msra.mxu0 0
    %4255 = vmatprep.subr.bf16.mxu0 0
    %4256 = vmatpush2.bf16.msra.mxu0 0
    %4257 = vmatprep.subr.bf16.mxu0 0
    %4258 = vmatpush2.bf16.msra.mxu0 0
    %4259 = vmatprep.subr.bf16.mxu0 0
    %4260 = vmatpush2.bf16.msra.mxu0 0
    %4261 = vmatprep.subr.bf16.mxu0 0
    %4262 = vmatpush2.bf16.msra.mxu0 0
    %4263 = vmatprep.subr.bf16.mxu0 0
    %4264 = vmatpush2.bf16.msra.mxu0 0
    %4265 = vmatprep.subr.bf16.mxu0 0
    %4266 = vmatpush2.bf16.msra.mxu0 0
    %4267 = vmatprep.subr.bf16.mxu0 0
    %4268 = vmatpush2.bf16.msra.mxu0 0
    %4269 = vmatprep.mubr.bf16.mxu0 0
    %4270 = vmatmul.mubr.bf16.gmra.mxu0 %v3875
    %v4271 = vpop.f32.mrf.mxu0
    %v4272 = vadd.f32 %v3693, %v4271
    %v4273 = vpop.f32.mrf.mxu0
    %v4274 = vadd.f32 %v3697, %v4273
    %v4275 = vpop.f32.mrf.mxu0
    %v4276 = vadd.f32 %v3693, %v4275
    %v4277 = vpop.f32.mrf.mxu0
    %v4278 = vadd.f32 %v3697, %v4277
    %4279 = vmatprep.mubr.bf16.mxu0 0
    %4280 = vmatmul.mubr.bf16.gmra.mxu0 %v3878
    %v4281 = vpop.f32.mrf.mxu0
    %v4282 = vadd.f32 %v3693, %v4281
    %v4283 = vpop.f32.mrf.mxu0
    %v4284 = vadd.f32 %v3697, %v4283
    %v4285 = vpop.f32.mrf.mxu0
    %v4286 = vpop.f32.mrf.mxu0
    %4287 = vdwg.mxu0
    %v4288 = vmax.f32 %v3915, 0.0
    %v4289 = vmax.f32 %v3917, 0.0
    %v4290 = vmax.f32 %v3966, 0.0
    %v4291 = vmax.f32 %v3968, 0.0
    %v4292 = vmax.f32 %v4017, 0.0
    %v4293 = vmax.f32 %v4019, 0.0
    %v4294 = vmax.f32 %v4068, 0.0
    %v4295 = vmax.f32 %v4070, 0.0
    %v4296 = vmax.f32 %v4119, 0.0
    %v4297 = vmax.f32 %v4121, 0.0
    %v4298 = vmax.f32 %v4170, 0.0
    %v4299 = vmax.f32 %v4172, 0.0
    %v4300 = vmax.f32 %v4221, 0.0
    %v4301 = vmax.f32 %v4223, 0.0
    %v4302 = vmax.f32 %v4272, 0.0
    %v4303 = vmax.f32 %v4274, 0.0
    %v4304 = vmax.f32 %v3919, 0.0
    %v4305 = vmax.f32 %v3921, 0.0
    %v4306 = vmax.f32 %v3970, 0.0
    %v4307 = vmax.f32 %v3972, 0.0
    %v4308 = vmax.f32 %v4021, 0.0
    %v4309 = vmax.f32 %v4023, 0.0
    %v4310 = vmax.f32 %v4072, 0.0
    %v4311 = vmax.f32 %v4074, 0.0
    %v4312 = vmax.f32 %v4123, 0.0
    %v4313 = vmax.f32 %v4125, 0.0
    %v4314 = vmax.f32 %v4174, 0.0
    %v4315 = vmax.f32 %v4176, 0.0
    %v4316 = vmax.f32 %v4225, 0.0
    %v4317 = vmax.f32 %v4227, 0.0
    %v4318 = vmax.f32 %v4276, 0.0
    %v4319 = vmax.f32 %v4278, 0.0
    %v4320 = vmax.f32 %v3925, 0.0
    %v4321 = vmax.f32 %v3927, 0.0
    %v4322 = vmax.f32 %v3976, 0.0
    %v4323 = vmax.f32 %v3978, 0.0
    %v4324 = vmax.f32 %v4027, 0.0
    %v4325 = vmax.f32 %v4029, 0.0
    %v4326 = vmax.f32 %v4078, 0.0
    %v4327 = vmax.f32 %v4080, 0.0
    %v4328 = vmax.f32 %v4129, 0.0
    %v4329 = vmax.f32 %v4131, 0.0
    %v4330 = vmax.f32 %v4180, 0.0
    %v4331 = vmax.f32 %v4182, 0.0
    %v4332 = vmax.f32 %v4231, 0.0
    %v4333 = vmax.f32 %v4233, 0.0
    %v4334 = vmax.f32 %v4282, 0.0
    %v4335 = vmax.f32 %v4284, 0.0
    %v4336 = vpack.c.bf16 %v4304, %v4288
    %v4337 = vpack.c.bf16 %v4305, %v4289
    %v4338 = vpack.c.bf16 %v4306, %v4290
    %v4339 = vpack.c.bf16 %v4307, %v4291
    %v4340 = vpack.c.bf16 %v4308, %v4292
    %v4341 = vpack.c.bf16 %v4309, %v4293
    %v4342 = vpack.c.bf16 %v4310, %v4294
    %v4343 = vpack.c.bf16 %v4311, %v4295
    %v4344 = vpack.c.bf16 %v4312, %v4296
    %v4345 = vpack.c.bf16 %v4313, %v4297
    %v4346 = vpack.c.bf16 %v4314, %v4298
    %v4347 = vpack.c.bf16 %v4315, %v4299
    %v4348 = vpack.c.bf16 %v4316, %v4300
    %v4349 = vpack.c.bf16 %v4317, %v4301
    %v4350 = vpack.c.bf16 %v4318, %v4302
    %v4351 = vpack.c.bf16 %v4319, %v4303
    %v4352 = vpack.c.bf16 %v4320, %v4320
    %v4353 = vpack.c.bf16 %v4321, %v4321
    %v4354 = vpack.c.bf16 %v4322, %v4322
    %v4355 = vpack.c.bf16 %v4323, %v4323
    %v4356 = vpack.c.bf16 %v4324, %v4324
    %v4357 = vpack.c.bf16 %v4325, %v4325
    %v4358 = vpack.c.bf16 %v4326, %v4326
    %v4359 = vpack.c.bf16 %v4327, %v4327
    %v4360 = vpack.c.bf16 %v4328, %v4328
    %v4361 = vpack.c.bf16 %v4329, %v4329
    %v4362 = vpack.c.bf16 %v4330, %v4330
    %v4363 = vpack.c.bf16 %v4331, %v4331
    %v4364 = vpack.c.bf16 %v4332, %v4332
    %v4365 = vpack.c.bf16 %v4333, %v4333
    %v4366 = vpack.c.bf16 %v4334, %v4334
    %v4367 = vpack.c.bf16 %v4335, %v4335
    %s4368 = scalar_lea.vmem [#allocation11], 256
    %v4369 = vld [vmem:[%s4368] sm:$0xff]
    %v4370 = vld [vmem:[%s4368 + $0x8] sm:$0xff]
    %v4371 = vld [vmem:[%s4368 + $0x10] sm:$0xff]
    %v4372 = vld [vmem:[%s4368 + $0x18] sm:$0xff]
    %v4373 = vld [vmem:[%s4368 + $0x20] sm:$0xff]
    %v4374 = vld [vmem:[%s4368 + $0x28] sm:$0xff]
    %v4375 = vld [vmem:[%s4368 + $0x30] sm:$0xff]
    %v4376 = vld [vmem:[%s4368 + $0x38] sm:$0xff]
    %v4377 = vld [vmem:[%s4368 + $0x40] sm:$0xff]
    %v4378 = vld [vmem:[%s4368 + $0x48] sm:$0xff]
    %v4379 = vld [vmem:[%s4368 + $0x50] sm:$0xff]
    %v4380 = vld [vmem:[%s4368 + $0x58] sm:$0xff]
    %v4381 = vld [vmem:[%s4368 + $0x60] sm:$0xff]
    %v4382 = vld [vmem:[%s4368 + $0x68] sm:$0xff]
    %v4383 = vld [vmem:[%s4368 + $0x70] sm:$0xff]
    %v4384 = vld [vmem:[%s4368 + $0x78] sm:$0xff]
    %v4385 = vld [vmem:[%s4368 + $0x80] sm:$0xff]
    %v4386 = vld [vmem:[%s4368 + $0x88] sm:$0xff]
    %v4387 = vld [vmem:[%s4368 + $0x90] sm:$0xff]
    %v4388 = vld [vmem:[%s4368 + $0x98] sm:$0xff]
    %v4389 = vld [vmem:[%s4368 + $0xa0] sm:$0xff]
    %v4390 = vld [vmem:[%s4368 + $0xa8] sm:$0xff]
    %v4391 = vld [vmem:[%s4368 + $0xb0] sm:$0xff]
    %v4392 = vld [vmem:[%s4368 + $0xb8] sm:$0xff]
    %v4393 = vld [vmem:[%s4368 + $0xc0] sm:$0xff]
    %v4394 = vld [vmem:[%s4368 + $0xc8] sm:$0xff]
    %v4395 = vld [vmem:[%s4368 + $0xd0] sm:$0xff]
    %v4396 = vld [vmem:[%s4368 + $0xd8] sm:$0xff]
    %v4397 = vld [vmem:[%s4368 + $0xe0] sm:$0xff]
    %v4398 = vld [vmem:[%s4368 + $0xe8] sm:$0xff]
    %v4399 = vld [vmem:[%s4368 + $0xf0] sm:$0xff]
    %v4400 = vld [vmem:[%s4368 + $0xf8] sm:$0xff]
    %s4401 = scalar_lea.vmem %s10, 1
    %v4402 = vld [vmem:[%s4401] sm:$0x1]
    %v4404 = vlaneseq
    %v4405 = vshrl.u32 %v4404, 7
    %v4406 = vsub.s32 0, %v4405
    %v4407 = vrot.slane %v4402, %v4406
    %v4441 = vunpack.c.l.b16 %v4369
    %v4442 = vunpack.c.h.b16 %v4369
    %v4443 = vunpack.c.l.b16 %v4370
    %v4444 = vunpack.c.h.b16 %v4370
    %v4445 = vunpack.c.l.b16 %v4371
    %v4446 = vunpack.c.h.b16 %v4371
    %v4447 = vunpack.c.l.b16 %v4372
    %v4448 = vunpack.c.h.b16 %v4372
    %v4449 = vunpack.c.l.b16 %v4373
    %v4450 = vunpack.c.h.b16 %v4373
    %v4451 = vunpack.c.l.b16 %v4374
    %v4452 = vunpack.c.h.b16 %v4374
    %v4453 = vunpack.c.l.b16 %v4375
    %v4454 = vunpack.c.h.b16 %v4375
    %v4455 = vunpack.c.l.b16 %v4376
    %v4456 = vunpack.c.h.b16 %v4376
    %v4457 = vunpack.c.l.b16 %v4377
    %v4458 = vunpack.c.h.b16 %v4377
    %v4459 = vunpack.c.l.b16 %v4378
    %v4460 = vunpack.c.h.b16 %v4378
    %v4461 = vunpack.c.l.b16 %v4379
    %v4462 = vunpack.c.h.b16 %v4379
    %v4463 = vunpack.c.l.b16 %v4380
    %v4464 = vunpack.c.h.b16 %v4380
    %v4465 = vunpack.c.l.b16 %v4381
    %v4466 = vunpack.c.h.b16 %v4381
    %v4467 = vunpack.c.l.b16 %v4382
    %v4468 = vunpack.c.h.b16 %v4382
    %v4469 = vunpack.c.l.b16 %v4383
    %v4470 = vunpack.c.h.b16 %v4383
    %v4471 = vunpack.c.l.b16 %v4384
    %v4472 = vunpack.c.h.b16 %v4384
    %v4473 = vunpack.c.l.b16 %v4385
    %v4474 = vunpack.c.h.b16 %v4385
    %v4475 = vunpack.c.l.b16 %v4386
    %v4476 = vunpack.c.h.b16 %v4386
    %v4477 = vunpack.c.l.b16 %v4387
    %v4478 = vunpack.c.h.b16 %v4387
    %v4479 = vunpack.c.l.b16 %v4388
    %v4480 = vunpack.c.h.b16 %v4388
    %v4481 = vunpack.c.l.b16 %v4389
    %v4482 = vunpack.c.h.b16 %v4389
    %v4483 = vunpack.c.l.b16 %v4390
    %v4484 = vunpack.c.h.b16 %v4390
    %v4485 = vunpack.c.l.b16 %v4391
    %v4486 = vunpack.c.h.b16 %v4391
    %v4487 = vunpack.c.l.b16 %v4392
    %v4488 = vunpack.c.h.b16 %v4392
    %v4489 = vunpack.c.l.b16 %v4393
    %v4490 = vunpack.c.h.b16 %v4393
    %v4491 = vunpack.c.l.b16 %v4394
    %v4492 = vunpack.c.h.b16 %v4394
    %v4493 = vunpack.c.l.b16 %v4395
    %v4494 = vunpack.c.h.b16 %v4395
    %v4495 = vunpack.c.l.b16 %v4396
    %v4496 = vunpack.c.h.b16 %v4396
    %v4497 = vunpack.c.l.b16 %v4397
    %v4498 = vunpack.c.h.b16 %v4397
    %v4499 = vunpack.c.l.b16 %v4398
    %v4500 = vunpack.c.h.b16 %v4398
    %v4501 = vunpack.c.l.b16 %v4399
    %v4502 = vunpack.c.h.b16 %v4399
    %v4503 = vunpack.c.l.b16 %v4400
    %v4504 = vunpack.c.h.b16 %v4400
    %v4505 = vpack.c.b16 %v4457, %v4441
    %v4506 = vpack.c.b16 %v4458, %v4442
    %v4507 = vpack.c.b16 %v4459, %v4443
    %v4508 = vpack.c.b16 %v4460, %v4444
    %v4509 = vpack.c.b16 %v4461, %v4445
    %v4510 = vpack.c.b16 %v4462, %v4446
    %v4511 = vpack.c.b16 %v4463, %v4447
    %v4512 = vpack.c.b16 %v4464, %v4448
    %v4513 = vpack.c.b16 %v4465, %v4449
    %v4514 = vpack.c.b16 %v4466, %v4450
    %v4515 = vpack.c.b16 %v4467, %v4451
    %v4516 = vpack.c.b16 %v4468, %v4452
    %v4517 = vpack.c.b16 %v4469, %v4453
    %v4518 = vpack.c.b16 %v4470, %v4454
    %v4519 = vpack.c.b16 %v4471, %v4455
    %v4520 = vpack.c.b16 %v4472, %v4456
    %v4521 = vpack.c.b16 %v4489, %v4473
    %v4522 = vpack.c.b16 %v4490, %v4474
    %v4523 = vpack.c.b16 %v4491, %v4475
    %v4524 = vpack.c.b16 %v4492, %v4476
    %v4525 = vpack.c.b16 %v4493, %v4477
    %v4526 = vpack.c.b16 %v4494, %v4478
    %v4527 = vpack.c.b16 %v4495, %v4479
    %v4528 = vpack.c.b16 %v4496, %v4480
    %v4529 = vpack.c.b16 %v4497, %v4481
    %v4530 = vpack.c.b16 %v4498, %v4482
    %v4531 = vpack.c.b16 %v4499, %v4483
    %v4532 = vpack.c.b16 %v4500, %v4484
    %v4533 = vpack.c.b16 %v4501, %v4485
    %v4534 = vpack.c.b16 %v4502, %v4486
    %v4535 = vpack.c.b16 %v4503, %v4487
    %v4536 = vpack.c.b16 %v4504, %v4488
    %4569 = vmatprep.subr.bf16.mxu0 0
    %4570 = vmatpush1.bf16.xpose.msra.mxu0 0
    %4571 = vmatprep.subr.bf16.mxu0 0
    %4572 = vmatpush1.bf16.xpose.msra.mxu0 0
    %4573 = vmatprep.subr.bf16.mxu0 0
    %4574 = vmatpush1.bf16.xpose.msra.mxu0 0
    %4575 = vmatprep.subr.bf16.mxu0 0
    %4576 = vmatpush1.bf16.xpose.msra.mxu0 0
    %4577 = vmatprep.subr.bf16.mxu0 0
    %4578 = vmatpush1.bf16.xpose.msra.mxu0 0
    %4579 = vmatprep.subr.bf16.mxu0 0
    %4580 = vmatpush1.bf16.xpose.msra.mxu0 0
    %4581 = vmatprep.subr.bf16.mxu0 %v4522
    %4582 = vmatpush1.bf16.xpose.msra.mxu0 %v4521
    %4583 = vmatprep.subr.bf16.mxu0 %v4506
    %4584 = vmatpush1.bf16.xpose.msra.mxu0 %v4505
    %4585 = vmatprep.subr.bf16.mxu0 0
    %4586 = vmatpush2.bf16.xpose.msra.mxu0 0
    %4587 = vmatprep.subr.bf16.mxu0 0
    %4588 = vmatpush2.bf16.xpose.msra.mxu0 0
    %4589 = vmatprep.subr.bf16.mxu0 0
    %4590 = vmatpush2.bf16.xpose.msra.mxu0 0
    %4591 = vmatprep.subr.bf16.mxu0 0
    %4592 = vmatpush2.bf16.xpose.msra.mxu0 0
    %4593 = vmatprep.subr.bf16.mxu0 0
    %4594 = vmatpush2.bf16.xpose.msra.mxu0 0
    %4595 = vmatprep.subr.bf16.mxu0 0
    %4596 = vmatpush2.bf16.xpose.msra.mxu0 0
    %4597 = vmatprep.subr.bf16.mxu0 0
    %4598 = vmatpush2.bf16.xpose.msra.mxu0 0
    %4599 = vmatprep.subr.bf16.mxu0 0
    %4600 = vmatpush2.bf16.xpose.msra.mxu0 0
    %4601 = vmatprep.mubr.bf16.mxu0 %v4337
    %4602 = vmatmul.mubr.bf16.gmra.mxu0 %v4336
    %v4603 = vpop.f32.mrf.mxu0
    %v4604 = vadd.f32 %v4407, %v4603
    %v4605 = vpop.f32.mrf.mxu0
    %v4606 = vpop.f32.mrf.mxu0
    %v4607 = vadd.f32 %v4407, %v4606
    %v4608 = vpop.f32.mrf.mxu0
    %4609 = vmatprep.mubr.bf16.mxu0 %v4353
    %4610 = vmatmul.mubr.bf16.gmra.mxu0 %v4352
    %v4611 = vpop.f32.mrf.mxu0
    %v4612 = vadd.f32 %v4407, %v4611
    %v4613 = vpop.f32.mrf.mxu0
    %v4614 = vpop.f32.mrf.mxu0
    %v4615 = vpop.f32.mrf.mxu0
    %4616 = vdwg.mxu0
    %4617 = vmatprep.subr.bf16.mxu0 0
    %4618 = vmatpush1.bf16.xpose.msra.mxu0 0
    %4619 = vmatprep.subr.bf16.mxu0 0
    %4620 = vmatpush1.bf16.xpose.msra.mxu0 0
    %4621 = vmatprep.subr.bf16.mxu0 0
    %4622 = vmatpush1.bf16.xpose.msra.mxu0 0
    %4623 = vmatprep.subr.bf16.mxu0 0
    %4624 = vmatpush1.bf16.xpose.msra.mxu0 0
    %4625 = vmatprep.subr.bf16.mxu0 0
    %4626 = vmatpush1.bf16.xpose.msra.mxu0 0
    %4627 = vmatprep.subr.bf16.mxu0 0
    %4628 = vmatpush1.bf16.xpose.msra.mxu0 0
    %4629 = vmatprep.subr.bf16.mxu0 %v4524
    %4630 = vmatpush1.bf16.xpose.msra.mxu0 %v4523
    %4631 = vmatprep.subr.bf16.mxu0 %v4508
    %4632 = vmatpush1.bf16.xpose.msra.mxu0 %v4507
    %4633 = vmatprep.subr.bf16.mxu0 0
    %4634 = vmatpush2.bf16.xpose.msra.mxu0 0
    %4635 = vmatprep.subr.bf16.mxu0 0
    %4636 = vmatpush2.bf16.xpose.msra.mxu0 0
    %4637 = vmatprep.subr.bf16.mxu0 0
    %4638 = vmatpush2.bf16.xpose.msra.mxu0 0
    %4639 = vmatprep.subr.bf16.mxu0 0
    %4640 = vmatpush2.bf16.xpose.msra.mxu0 0
    %4641 = vmatprep.subr.bf16.mxu0 0
    %4642 = vmatpush2.bf16.xpose.msra.mxu0 0
    %4643 = vmatprep.subr.bf16.mxu0 0
    %4644 = vmatpush2.bf16.xpose.msra.mxu0 0
    %4645 = vmatprep.subr.bf16.mxu0 0
    %4646 = vmatpush2.bf16.xpose.msra.mxu0 0
    %4647 = vmatprep.subr.bf16.mxu0 0
    %4648 = vmatpush2.bf16.xpose.msra.mxu0 0
    %4649 = vmatprep.mubr.bf16.mxu0 %v4339
    %4650 = vmatmul.mubr.bf16.gmra.mxu0 %v4338
    %v4651 = vpop.f32.mrf.mxu0
    %v4652 = vadd.f32 %v4604, %v4651
    %v4653 = vpop.f32.mrf.mxu0
    %v4654 = vpop.f32.mrf.mxu0
    %v4655 = vadd.f32 %v4607, %v4654
    %v4656 = vpop.f32.mrf.mxu0
    %4657 = vmatprep.mubr.bf16.mxu0 %v4355
    %4658 = vmatmul.mubr.bf16.gmra.mxu0 %v4354
    %v4659 = vpop.f32.mrf.mxu0
    %v4660 = vadd.f32 %v4612, %v4659
    %v4661 = vpop.f32.mrf.mxu0
    %v4662 = vpop.f32.mrf.mxu0
    %v4663 = vpop.f32.mrf.mxu0
    %4664 = vdwg.mxu0
    %4665 = vmatprep.subr.bf16.mxu0 0
    %4666 = vmatpush1.bf16.xpose.msra.mxu0 0
    %4667 = vmatprep.subr.bf16.mxu0 0
    %4668 = vmatpush1.bf16.xpose.msra.mxu0 0
    %4669 = vmatprep.subr.bf16.mxu0 0
    %4670 = vmatpush1.bf16.xpose.msra.mxu0 0
    %4671 = vmatprep.subr.bf16.mxu0 0
    %4672 = vmatpush1.bf16.xpose.msra.mxu0 0
    %4673 = vmatprep.subr.bf16.mxu0 0
    %4674 = vmatpush1.bf16.xpose.msra.mxu0 0
    %4675 = vmatprep.subr.bf16.mxu0 0
    %4676 = vmatpush1.bf16.xpose.msra.mxu0 0
    %4677 = vmatprep.subr.bf16.mxu0 %v4526
    %4678 = vmatpush1.bf16.xpose.msra.mxu0 %v4525
    %4679 = vmatprep.subr.bf16.mxu0 %v4510
    %4680 = vmatpush1.bf16.xpose.msra.mxu0 %v4509
    %4681 = vmatprep.subr.bf16.mxu0 0
    %4682 = vmatpush2.bf16.xpose.msra.mxu0 0
    %4683 = vmatprep.subr.bf16.mxu0 0
    %4684 = vmatpush2.bf16.xpose.msra.mxu0 0
    %4685 = vmatprep.subr.bf16.mxu0 0
    %4686 = vmatpush2.bf16.xpose.msra.mxu0 0
    %4687 = vmatprep.subr.bf16.mxu0 0
    %4688 = vmatpush2.bf16.xpose.msra.mxu0 0
    %4689 = vmatprep.subr.bf16.mxu0 0
    %4690 = vmatpush2.bf16.xpose.msra.mxu0 0
    %4691 = vmatprep.subr.bf16.mxu0 0
    %4692 = vmatpush2.bf16.xpose.msra.mxu0 0
    %4693 = vmatprep.subr.bf16.mxu0 0
    %4694 = vmatpush2.bf16.xpose.msra.mxu0 0
    %4695 = vmatprep.subr.bf16.mxu0 0
    %4696 = vmatpush2.bf16.xpose.msra.mxu0 0
    %4697 = vmatprep.mubr.bf16.mxu0 %v4341
    %4698 = vmatmul.mubr.bf16.gmra.mxu0 %v4340
    %v4699 = vpop.f32.mrf.mxu0
    %v4700 = vadd.f32 %v4652, %v4699
    %v4701 = vpop.f32.mrf.mxu0
    %v4702 = vpop.f32.mrf.mxu0
    %v4703 = vadd.f32 %v4655, %v4702
    %v4704 = vpop.f32.mrf.mxu0
    %4705 = vmatprep.mubr.bf16.mxu0 %v4357
    %4706 = vmatmul.mubr.bf16.gmra.mxu0 %v4356
    %v4707 = vpop.f32.mrf.mxu0
    %v4708 = vadd.f32 %v4660, %v4707
    %v4709 = vpop.f32.mrf.mxu0
    %v4710 = vpop.f32.mrf.mxu0
    %v4711 = vpop.f32.mrf.mxu0
    %4712 = vdwg.mxu0
    %4713 = vmatprep.subr.bf16.mxu0 0
    %4714 = vmatpush1.bf16.xpose.msra.mxu0 0
    %4715 = vmatprep.subr.bf16.mxu0 0
    %4716 = vmatpush1.bf16.xpose.msra.mxu0 0
    %4717 = vmatprep.subr.bf16.mxu0 0
    %4718 = vmatpush1.bf16.xpose.msra.mxu0 0
    %4719 = vmatprep.subr.bf16.mxu0 0
    %4720 = vmatpush1.bf16.xpose.msra.mxu0 0
    %4721 = vmatprep.subr.bf16.mxu0 0
    %4722 = vmatpush1.bf16.xpose.msra.mxu0 0
    %4723 = vmatprep.subr.bf16.mxu0 0
    %4724 = vmatpush1.bf16.xpose.msra.mxu0 0
    %4725 = vmatprep.subr.bf16.mxu0 %v4528
    %4726 = vmatpush1.bf16.xpose.msra.mxu0 %v4527
    %4727 = vmatprep.subr.bf16.mxu0 %v4512
    %4728 = vmatpush1.bf16.xpose.msra.mxu0 %v4511
    %4729 = vmatprep.subr.bf16.mxu0 0
    %4730 = vmatpush2.bf16.xpose.msra.mxu0 0
    %4731 = vmatprep.subr.bf16.mxu0 0
    %4732 = vmatpush2.bf16.xpose.msra.mxu0 0
    %4733 = vmatprep.subr.bf16.mxu0 0
    %4734 = vmatpush2.bf16.xpose.msra.mxu0 0
    %4735 = vmatprep.subr.bf16.mxu0 0
    %4736 = vmatpush2.bf16.xpose.msra.mxu0 0
    %4737 = vmatprep.subr.bf16.mxu0 0
    %4738 = vmatpush2.bf16.xpose.msra.mxu0 0
    %4739 = vmatprep.subr.bf16.mxu0 0
    %4740 = vmatpush2.bf16.xpose.msra.mxu0 0
    %4741 = vmatprep.subr.bf16.mxu0 0
    %4742 = vmatpush2.bf16.xpose.msra.mxu0 0
    %4743 = vmatprep.subr.bf16.mxu0 0
    %4744 = vmatpush2.bf16.xpose.msra.mxu0 0
    %4745 = vmatprep.mubr.bf16.mxu0 %v4343
    %4746 = vmatmul.mubr.bf16.gmra.mxu0 %v4342
    %v4747 = vpop.f32.mrf.mxu0
    %v4748 = vadd.f32 %v4700, %v4747
    %v4749 = vpop.f32.mrf.mxu0
    %v4750 = vpop.f32.mrf.mxu0
    %v4751 = vadd.f32 %v4703, %v4750
    %v4752 = vpop.f32.mrf.mxu0
    %4753 = vmatprep.mubr.bf16.mxu0 %v4359
    %4754 = vmatmul.mubr.bf16.gmra.mxu0 %v4358
    %v4755 = vpop.f32.mrf.mxu0
    %v4756 = vadd.f32 %v4708, %v4755
    %v4757 = vpop.f32.mrf.mxu0
    %v4758 = vpop.f32.mrf.mxu0
    %v4759 = vpop.f32.mrf.mxu0
    %4760 = vdwg.mxu0
    %4761 = vmatprep.subr.bf16.mxu0 0
    %4762 = vmatpush1.bf16.xpose.msra.mxu0 0
    %4763 = vmatprep.subr.bf16.mxu0 0
    %4764 = vmatpush1.bf16.xpose.msra.mxu0 0
    %4765 = vmatprep.subr.bf16.mxu0 0
    %4766 = vmatpush1.bf16.xpose.msra.mxu0 0
    %4767 = vmatprep.subr.bf16.mxu0 0
    %4768 = vmatpush1.bf16.xpose.msra.mxu0 0
    %4769 = vmatprep.subr.bf16.mxu0 0
    %4770 = vmatpush1.bf16.xpose.msra.mxu0 0
    %4771 = vmatprep.subr.bf16.mxu0 0
    %4772 = vmatpush1.bf16.xpose.msra.mxu0 0
    %4773 = vmatprep.subr.bf16.mxu0 %v4530
    %4774 = vmatpush1.bf16.xpose.msra.mxu0 %v4529
    %4775 = vmatprep.subr.bf16.mxu0 %v4514
    %4776 = vmatpush1.bf16.xpose.msra.mxu0 %v4513
    %4777 = vmatprep.subr.bf16.mxu0 0
    %4778 = vmatpush2.bf16.xpose.msra.mxu0 0
    %4779 = vmatprep.subr.bf16.mxu0 0
    %4780 = vmatpush2.bf16.xpose.msra.mxu0 0
    %4781 = vmatprep.subr.bf16.mxu0 0
    %4782 = vmatpush2.bf16.xpose.msra.mxu0 0
    %4783 = vmatprep.subr.bf16.mxu0 0
    %4784 = vmatpush2.bf16.xpose.msra.mxu0 0
    %4785 = vmatprep.subr.bf16.mxu0 0
    %4786 = vmatpush2.bf16.xpose.msra.mxu0 0
    %4787 = vmatprep.subr.bf16.mxu0 0
    %4788 = vmatpush2.bf16.xpose.msra.mxu0 0
    %4789 = vmatprep.subr.bf16.mxu0 0
    %4790 = vmatpush2.bf16.xpose.msra.mxu0 0
    %4791 = vmatprep.subr.bf16.mxu0 0
    %4792 = vmatpush2.bf16.xpose.msra.mxu0 0
    %4793 = vmatprep.mubr.bf16.mxu0 %v4345
    %4794 = vmatmul.mubr.bf16.gmra.mxu0 %v4344
    %v4795 = vpop.f32.mrf.mxu0
    %v4796 = vadd.f32 %v4748, %v4795
    %v4797 = vpop.f32.mrf.mxu0
    %v4798 = vpop.f32.mrf.mxu0
    %v4799 = vadd.f32 %v4751, %v4798
    %v4800 = vpop.f32.mrf.mxu0
    %4801 = vmatprep.mubr.bf16.mxu0 %v4361
    %4802 = vmatmul.mubr.bf16.gmra.mxu0 %v4360
    %v4803 = vpop.f32.mrf.mxu0
    %v4804 = vadd.f32 %v4756, %v4803
    %v4805 = vpop.f32.mrf.mxu0
    %v4806 = vpop.f32.mrf.mxu0
    %v4807 = vpop.f32.mrf.mxu0
    %4808 = vdwg.mxu0
    %4809 = vmatprep.subr.bf16.mxu0 0
    %4810 = vmatpush1.bf16.xpose.msra.mxu0 0
    %4811 = vmatprep.subr.bf16.mxu0 0
    %4812 = vmatpush1.bf16.xpose.msra.mxu0 0
    %4813 = vmatprep.subr.bf16.mxu0 0
    %4814 = vmatpush1.bf16.xpose.msra.mxu0 0
    %4815 = vmatprep.subr.bf16.mxu0 0
    %4816 = vmatpush1.bf16.xpose.msra.mxu0 0
    %4817 = vmatprep.subr.bf16.mxu0 0
    %4818 = vmatpush1.bf16.xpose.msra.mxu0 0
    %4819 = vmatprep.subr.bf16.mxu0 0
    %4820 = vmatpush1.bf16.xpose.msra.mxu0 0
    %4821 = vmatprep.subr.bf16.mxu0 %v4532
    %4822 = vmatpush1.bf16.xpose.msra.mxu0 %v4531
    %4823 = vmatprep.subr.bf16.mxu0 %v4516
    %4824 = vmatpush1.bf16.xpose.msra.mxu0 %v4515
    %4825 = vmatprep.subr.bf16.mxu0 0
    %4826 = vmatpush2.bf16.xpose.msra.mxu0 0
    %4827 = vmatprep.subr.bf16.mxu0 0
    %4828 = vmatpush2.bf16.xpose.msra.mxu0 0
    %4829 = vmatprep.subr.bf16.mxu0 0
    %4830 = vmatpush2.bf16.xpose.msra.mxu0 0
    %4831 = vmatprep.subr.bf16.mxu0 0
    %4832 = vmatpush2.bf16.xpose.msra.mxu0 0
    %4833 = vmatprep.subr.bf16.mxu0 0
    %4834 = vmatpush2.bf16.xpose.msra.mxu0 0
    %4835 = vmatprep.subr.bf16.mxu0 0
    %4836 = vmatpush2.bf16.xpose.msra.mxu0 0
    %4837 = vmatprep.subr.bf16.mxu0 0
    %4838 = vmatpush2.bf16.xpose.msra.mxu0 0
    %4839 = vmatprep.subr.bf16.mxu0 0
    %4840 = vmatpush2.bf16.xpose.msra.mxu0 0
    %4841 = vmatprep.mubr.bf16.mxu0 %v4347
    %4842 = vmatmul.mubr.bf16.gmra.mxu0 %v4346
    %v4843 = vpop.f32.mrf.mxu0
    %v4844 = vadd.f32 %v4796, %v4843
    %v4845 = vpop.f32.mrf.mxu0
    %v4846 = vpop.f32.mrf.mxu0
    %v4847 = vadd.f32 %v4799, %v4846
    %v4848 = vpop.f32.mrf.mxu0
    %4849 = vmatprep.mubr.bf16.mxu0 %v4363
    %4850 = vmatmul.mubr.bf16.gmra.mxu0 %v4362
    %v4851 = vpop.f32.mrf.mxu0
    %v4852 = vadd.f32 %v4804, %v4851
    %v4853 = vpop.f32.mrf.mxu0
    %v4854 = vpop.f32.mrf.mxu0
    %v4855 = vpop.f32.mrf.mxu0
    %4856 = vdwg.mxu0
    %4857 = vmatprep.subr.bf16.mxu0 0
    %4858 = vmatpush1.bf16.xpose.msra.mxu0 0
    %4859 = vmatprep.subr.bf16.mxu0 0
    %4860 = vmatpush1.bf16.xpose.msra.mxu0 0
    %4861 = vmatprep.subr.bf16.mxu0 0
    %4862 = vmatpush1.bf16.xpose.msra.mxu0 0
    %4863 = vmatprep.subr.bf16.mxu0 0
    %4864 = vmatpush1.bf16.xpose.msra.mxu0 0
    %4865 = vmatprep.subr.bf16.mxu0 0
    %4866 = vmatpush1.bf16.xpose.msra.mxu0 0
    %4867 = vmatprep.subr.bf16.mxu0 0
    %4868 = vmatpush1.bf16.xpose.msra.mxu0 0
    %4869 = vmatprep.subr.bf16.mxu0 %v4534
    %4870 = vmatpush1.bf16.xpose.msra.mxu0 %v4533
    %4871 = vmatprep.subr.bf16.mxu0 %v4518
    %4872 = vmatpush1.bf16.xpose.msra.mxu0 %v4517
    %4873 = vmatprep.subr.bf16.mxu0 0
    %4874 = vmatpush2.bf16.xpose.msra.mxu0 0
    %4875 = vmatprep.subr.bf16.mxu0 0
    %4876 = vmatpush2.bf16.xpose.msra.mxu0 0
    %4877 = vmatprep.subr.bf16.mxu0 0
    %4878 = vmatpush2.bf16.xpose.msra.mxu0 0
    %4879 = vmatprep.subr.bf16.mxu0 0
    %4880 = vmatpush2.bf16.xpose.msra.mxu0 0
    %4881 = vmatprep.subr.bf16.mxu0 0
    %4882 = vmatpush2.bf16.xpose.msra.mxu0 0
    %4883 = vmatprep.subr.bf16.mxu0 0
    %4884 = vmatpush2.bf16.xpose.msra.mxu0 0
    %4885 = vmatprep.subr.bf16.mxu0 0
    %4886 = vmatpush2.bf16.xpose.msra.mxu0 0
    %4887 = vmatprep.subr.bf16.mxu0 0
    %4888 = vmatpush2.bf16.xpose.msra.mxu0 0
    %4889 = vmatprep.mubr.bf16.mxu0 %v4349
    %4890 = vmatmul.mubr.bf16.gmra.mxu0 %v4348
    %v4891 = vpop.f32.mrf.mxu0
    %v4892 = vadd.f32 %v4844, %v4891
    %v4893 = vpop.f32.mrf.mxu0
    %v4894 = vpop.f32.mrf.mxu0
    %v4895 = vadd.f32 %v4847, %v4894
    %v4896 = vpop.f32.mrf.mxu0
    %4897 = vmatprep.mubr.bf16.mxu0 %v4365
    %4898 = vmatmul.mubr.bf16.gmra.mxu0 %v4364
    %v4899 = vpop.f32.mrf.mxu0
    %v4900 = vadd.f32 %v4852, %v4899
    %v4901 = vpop.f32.mrf.mxu0
    %v4902 = vpop.f32.mrf.mxu0
    %v4903 = vpop.f32.mrf.mxu0
    %4904 = vdwg.mxu0
    %4905 = vmatprep.subr.bf16.mxu0 0
    %4906 = vmatpush1.bf16.xpose.msra.mxu0 0
    %4907 = vmatprep.subr.bf16.mxu0 0
    %4908 = vmatpush1.bf16.xpose.msra.mxu0 0
    %4909 = vmatprep.subr.bf16.mxu0 0
    %4910 = vmatpush1.bf16.xpose.msra.mxu0 0
    %4911 = vmatprep.subr.bf16.mxu0 0
    %4912 = vmatpush1.bf16.xpose.msra.mxu0 0
    %4913 = vmatprep.subr.bf16.mxu0 0
    %4914 = vmatpush1.bf16.xpose.msra.mxu0 0
    %4915 = vmatprep.subr.bf16.mxu0 0
    %4916 = vmatpush1.bf16.xpose.msra.mxu0 0
    %4917 = vmatprep.subr.bf16.mxu0 %v4536
    %4918 = vmatpush1.bf16.xpose.msra.mxu0 %v4535
    %4919 = vmatprep.subr.bf16.mxu0 %v4520
    %4920 = vmatpush1.bf16.xpose.msra.mxu0 %v4519
    %4921 = vmatprep.subr.bf16.mxu0 0
    %4922 = vmatpush2.bf16.xpose.msra.mxu0 0
    %4923 = vmatprep.subr.bf16.mxu0 0
    %4924 = vmatpush2.bf16.xpose.msra.mxu0 0
    %4925 = vmatprep.subr.bf16.mxu0 0
    %4926 = vmatpush2.bf16.xpose.msra.mxu0 0
    %4927 = vmatprep.subr.bf16.mxu0 0
    %4928 = vmatpush2.bf16.xpose.msra.mxu0 0
    %4929 = vmatprep.subr.bf16.mxu0 0
    %4930 = vmatpush2.bf16.xpose.msra.mxu0 0
    %4931 = vmatprep.subr.bf16.mxu0 0
    %4932 = vmatpush2.bf16.xpose.msra.mxu0 0
    %4933 = vmatprep.subr.bf16.mxu0 0
    %4934 = vmatpush2.bf16.xpose.msra.mxu0 0
    %4935 = vmatprep.subr.bf16.mxu0 0
    %4936 = vmatpush2.bf16.xpose.msra.mxu0 0
    %4937 = vmatprep.mubr.bf16.mxu0 %v4351
    %4938 = vmatmul.mubr.bf16.gmra.mxu0 %v4350
    %v4939 = vpop.f32.mrf.mxu0
    %v4940 = vadd.f32 %v4892, %v4939
    %v4941 = vpop.f32.mrf.mxu0
    %v4942 = vpop.f32.mrf.mxu0
    %v4943 = vadd.f32 %v4895, %v4942
    %v4944 = vpop.f32.mrf.mxu0
    %4945 = vmatprep.mubr.bf16.mxu0 %v4367
    %4946 = vmatmul.mubr.bf16.gmra.mxu0 %v4366
    %v4947 = vpop.f32.mrf.mxu0
    %v4948 = vadd.f32 %v4900, %v4947
    %v4949 = vpop.f32.mrf.mxu0
    %v4950 = vpop.f32.mrf.mxu0
    %v4951 = vpop.f32.mrf.mxu0
    %4952 = vdwg.mxu0
    %v4953 = vadd.f32 %v3591, %v4940
    %v4954 = vadd.f32 %v3592, %v4943
    %v4955 = vadd.f32 %v3593, %v4948
    %s4956 = scalar_lea.vmem %s13, 1
    %v4957 = vld [vmem:[%s4956] sm:$0x1]
    %s4958 = scalar_lea.vmem %s14, 1
    %v4959 = vld [vmem:[%s4958] sm:$0x1]
    %v4960 = vsel %vm543, %v4953, 0.0
    %4961 = vadd.xlane.f32.xlu0 %v4960
    %v4962 = vpop.xlane.xlu0 %4961
    %v4963 = vsel %vm543, %v4954, 0.0
    %4964 = vadd.xlane.f32.xlu0 %v4963
    %v4965 = vpop.xlane.xlu0 %4964
    %v4966 = vsel %vm1310, %v4955, 0.0
    %4967 = vadd.xlane.f32.xlu0 %v4966
    %v4968 = vpop.xlane.xlu0 %4967
    %v4969 = vmul.f32 %v4962, %v1314
    %v4970 = vmul.f32 %v4965, %v1314
    %v4971 = vmul.f32 %v4968, %v1314
    %v4972 = vsub.f32 %v4953, %v4969
    %v4973 = vsub.f32 %v4954, %v4970
    %v4974 = vsub.f32 %v4955, %v4971
    %v4975 = vmul.f32 %v4972, %v4972
    %v4976 = vmul.f32 %v4973, %v4973
    %v4977 = vmul.f32 %v4974, %v4974
    %v4978 = vsel %vm543, %v4975, 0.0
    %4979 = vadd.xlane.f32.xlu0 %v4978
    %v4980 = vpop.xlane.xlu0 %4979
    %v4981 = vsel %vm543, %v4976, 0.0
    %4982 = vadd.xlane.f32.xlu0 %v4981
    %v4983 = vpop.xlane.xlu0 %4982
    %v4984 = vsel %vm1310, %v4977, 0.0
    %4985 = vadd.xlane.f32.xlu0 %v4984
    %v4986 = vpop.xlane.xlu0 %4985
    %v4987 = vmul.f32 %v4980, %v1314
    %v4988 = vmul.f32 %v4983, %v1314
    %v4989 = vmul.f32 %v4986, %v1314
    %v4990 = vadd.f32 %v4987, 1e-05
    %v4991 = vadd.f32 %v4988, 1e-05
    %v4992 = vadd.f32 %v4989, 1e-05
    %v4993 = vrsqrt.pop %v4990
    %v4994 = vrsqrt.pop %v4991
    %v4995 = vrsqrt.pop %v4992
    %v4996 = vmul.f32 %v4972, %v4993
    %v4997 = vmul.f32 %v4973, %v4994
    %v4998 = vmul.f32 %v4974, %v4995
    %v5000 = vlaneseq
    %v5001 = vshrl.u32 %v5000, 7
    %v5002 = vsub.s32 0, %v5001
    %v5003 = vrot.slane %v4957, %v5002
    %v5005 = vmul.f32 %v4996, %v5003
    %v5006 = vmul.f32 %v4997, %v5003
    %v5007 = vmul.f32 %v4998, %v5003
    %v5009 = vlaneseq
    %v5010 = vshrl.u32 %v5009, 7
    %v5011 = vsub.s32 0, %v5010
    %v5012 = vrot.slane %v4959, %v5011
    %v5014 = vadd.f32 %v5005, %v5012
    %v5015 = vadd.f32 %v5006, %v5012
    %v5016 = vadd.f32 %v5007, %v5012
    %v5018 = vsel %vm609, %v412, 0
    %v5021 = vsel %vm640, %v5016, 0
    %5023 = vmatprep.subr.mxu0 0.0
    %5024 = vmatpush1.msra.mxu0 0.0
    %5025 = vmatprep.subr.mxu0 0.0
    %5026 = vmatpush1.msra.mxu0 0.0
    %5027 = vmatprep.subr.mxu0 0.0
    %5028 = vmatpush1.msra.mxu0 0.0
    %5029 = vmatprep.subr.mxu0 0.0
    %5030 = vmatpush1.msra.mxu0 0.0
    %5031 = vmatprep.subr.mxu0 0.0
    %5032 = vmatpush1.msra.mxu0 0.0
    %5033 = vmatprep.subr.mxu0 0.0
    %5034 = vmatpush1.msra.mxu0 0.0
    %5035 = vmatprep.subr.mxu0 0.0
    %5036 = vmatpush1.msra.mxu0 0.0
    %5037 = vmatprep.subr.mxu0 0.0
    %5038 = vmatpush1.msra.mxu0 0.0
    %5039 = vmatprep.subr.mxu0 0.0
    %5040 = vmatpush1.msra.mxu0 0.0
    %5041 = vmatprep.subr.mxu0 0.0
    %5042 = vmatpush1.msra.mxu0 0.0
    %5043 = vmatprep.subr.mxu0 0.0
    %5044 = vmatpush1.msra.mxu0 0.0
    %5045 = vmatprep.subr.mxu0 0.0
    %5046 = vmatpush1.msra.mxu0 0.0
    %5047 = vmatprep.subr.mxu0 0.0
    %5048 = vmatpush1.msra.mxu0 0.0
    %5049 = vmatprep.subr.mxu0 0.0
    %5050 = vmatpush1.msra.mxu0 %v5021
    %5051 = vmatprep.subr.mxu0 0.0
    %5052 = vmatpush1.msra.mxu0 %v5015
    %5053 = vmatprep.subr.mxu0 0.0
    %5054 = vmatpush1.msra.mxu0 %v5014
    %5055 = vmatprep.subr.mxu0 0.0
    %5056 = vmatpush2.msra.mxu0 0.0
    %5057 = vmatprep.subr.mxu0 0.0
    %5058 = vmatpush2.msra.mxu0 0.0
    %5059 = vmatprep.subr.mxu0 0.0
    %5060 = vmatpush2.msra.mxu0 0.0
    %5061 = vmatprep.subr.mxu0 0.0
    %5062 = vmatpush2.msra.mxu0 0.0
    %5063 = vmatprep.subr.mxu0 0.0
    %5064 = vmatpush2.msra.mxu0 0.0
    %5065 = vmatprep.subr.mxu0 0.0
    %5066 = vmatpush2.msra.mxu0 0.0
    %5067 = vmatprep.subr.mxu0 0.0
    %5068 = vmatpush2.msra.mxu0 0.0
    %5069 = vmatprep.subr.mxu0 0.0
    %5070 = vmatpush2.msra.mxu0 0.0
    %5071 = vmatprep.subr.mxu0 0.0
    %5072 = vmatpush2.msra.mxu0 0.0
    %5073 = vmatprep.subr.mxu0 0.0
    %5074 = vmatpush2.msra.mxu0 0.0
    %5075 = vmatprep.subr.mxu0 0.0
    %5076 = vmatpush2.msra.mxu0 0.0
    %5077 = vmatprep.subr.mxu0 0.0
    %5078 = vmatpush2.msra.mxu0 0.0
    %5079 = vmatprep.subr.mxu0 0.0
    %5080 = vmatpush2.msra.mxu0 0.0
    %5081 = vmatprep.subr.mxu0 0.0
    %5082 = vmatpush2.msra.mxu0 0.0
    %5083 = vmatprep.subr.mxu0 0.0
    %5084 = vmatpush2.msra.mxu0 0.0
    %5085 = vmatprep.subr.mxu0 0.0
    %5086 = vmatpush2.msra.mxu0 0.0
    %5087 = vmatprep.mubr.f32.mxu0 0.0
    %5088 = vmatmul.mubr.f32.gmra.mxu0 %v5018
    %v5089 = vpop.f32.mrf.mxu0
    %v5090 = vadd.f32 0.0, %v5089
    %v5091 = vpop.f32.mrf.mxu0
    %5092 = vdwg.mxu0
    %v5093 = vld [vmem:[#allocation13] sm:$0xff]
    %v5094 = vld [vmem:[#allocation13 + $0x8] sm:$0xff]
    %v5095 = vld [vmem:[#allocation13 + $0x10] sm:$0xff]
    %v5096 = vld [vmem:[#allocation13 + $0x18] sm:$0xff]
    %v5097 = vld [vmem:[%s16] sm:$0x1]
    %v5099 = vlaneseq
    %v5100 = vshrl.u32 %v5099, 7
    %v5101 = vsub.s32 0, %v5100
    %v5102 = vrot.slane %v5097, %v5101
    %v5105 = vsel %vm543, %v5090, 0
    %5107 = vmatprep.subr.mxu0 0.0
    %5108 = vmatpush1.msra.mxu0 0.0
    %5109 = vmatprep.subr.mxu0 0.0
    %5110 = vmatpush1.msra.mxu0 0.0
    %5111 = vmatprep.subr.mxu0 0.0
    %5112 = vmatpush1.msra.mxu0 0.0
    %5113 = vmatprep.subr.mxu0 0.0
    %5114 = vmatpush1.msra.mxu0 0.0
    %5115 = vmatprep.subr.mxu0 0.0
    %5116 = vmatpush1.msra.mxu0 0.0
    %5117 = vmatprep.subr.mxu0 0.0
    %5118 = vmatpush1.msra.mxu0 0.0
    %5119 = vmatprep.subr.mxu0 0.0
    %5120 = vmatpush1.msra.mxu0 0.0
    %5121 = vmatprep.subr.mxu0 0.0
    %5122 = vmatpush1.msra.mxu0 0.0
    %5123 = vmatprep.subr.mxu0 0.0
    %5124 = vmatpush1.msra.mxu0 0.0
    %5125 = vmatprep.subr.mxu0 0.0
    %5126 = vmatpush1.msra.mxu0 0.0
    %5127 = vmatprep.subr.mxu0 0.0
    %5128 = vmatpush1.msra.mxu0 0.0
    %5129 = vmatprep.subr.mxu0 0.0
    %5130 = vmatpush1.msra.mxu0 0.0
    %5131 = vmatprep.subr.mxu0 0.0
    %5132 = vmatpush1.msra.mxu0 %v5096
    %5133 = vmatprep.subr.mxu0 0.0
    %5134 = vmatpush1.msra.mxu0 %v5095
    %5135 = vmatprep.subr.mxu0 0.0
    %5136 = vmatpush1.msra.mxu0 %v5094
    %5137 = vmatprep.subr.mxu0 0.0
    %5138 = vmatpush1.msra.mxu0 %v5093
    %5139 = vmatprep.subr.mxu0 0.0
    %5140 = vmatpush2.msra.mxu0 0.0
    %5141 = vmatprep.subr.mxu0 0.0
    %5142 = vmatpush2.msra.mxu0 0.0
    %5143 = vmatprep.subr.mxu0 0.0
    %5144 = vmatpush2.msra.mxu0 0.0
    %5145 = vmatprep.subr.mxu0 0.0
    %5146 = vmatpush2.msra.mxu0 0.0
    %5147 = vmatprep.subr.mxu0 0.0
    %5148 = vmatpush2.msra.mxu0 0.0
    %5149 = vmatprep.subr.mxu0 0.0
    %5150 = vmatpush2.msra.mxu0 0.0
    %5151 = vmatprep.subr.mxu0 0.0
    %5152 = vmatpush2.msra.mxu0 0.0
    %5153 = vmatprep.subr.mxu0 0.0
    %5154 = vmatpush2.msra.mxu0 0.0
    %5155 = vmatprep.subr.mxu0 0.0
    %5156 = vmatpush2.msra.mxu0 0.0
    %5157 = vmatprep.subr.mxu0 0.0
    %5158 = vmatpush2.msra.mxu0 0.0
    %5159 = vmatprep.subr.mxu0 0.0
    %5160 = vmatpush2.msra.mxu0 0.0
    %5161 = vmatprep.subr.mxu0 0.0
    %5162 = vmatpush2.msra.mxu0 0.0
    %5163 = vmatprep.subr.mxu0 0.0
    %5164 = vmatpush2.msra.mxu0 0.0
    %5165 = vmatprep.subr.mxu0 0.0
    %5166 = vmatpush2.msra.mxu0 0.0
    %5167 = vmatprep.subr.mxu0 0.0
    %5168 = vmatpush2.msra.mxu0 0.0
    %5169 = vmatprep.subr.mxu0 0.0
    %5170 = vmatpush2.msra.mxu0 0.0
    %5171 = vmatprep.mubr.f32.mxu0 0.0
    %5172 = vmatmul.mubr.f32.gmra.mxu0 %v5105
    %v5173 = vpop.f32.mrf.mxu0
    %v5174 = vadd.f32 %v5102, %v5173
    %v5175 = vpop.f32.mrf.mxu0
    %5176 = vdwg.mxu0
    %5177 = vst [vmem:[#allocation14] sm:$0xf] %v5174
    // Predicated region
    $region98: #{tpu_custom_call.1} parent=1 // pred_check
      _
    $region99: #{tpu_custom_call.1} parent=1 // pred_check_branch
      %5179 = sbr.rel (0) target = $region101
    $region100: #{tpu_custom_call.1} parent=1 // pred_region
      %s5181 = ssub.s32 64, 64
      %5182 = vsyncadd [#allocation4], %s5181
      %s5184 = sshll.u32 [#allocation14], 4
      %s5185 = int_to_ptr.vmem [resolvable:$true] %s5184
      %5187 = dma.vmem_to_hbm [thread:$0]  %s5185, 64, %s17, [#allocation4]
    $region101: #{tpu_custom_call.1} parent=1 // pred_fallthru
      _
    // Predicated region
    $region102: #{tpu_custom_call.1} parent=1 // pred_check
      _
    $region103: #{tpu_custom_call.1} parent=1 // pred_check_branch
      %5189 = sbr.rel (0) target = $region105
    $region104: #{tpu_custom_call.1} parent=1 // pred_region
      %5190 = dma.done [#allocation4], 64
    $region105: #{tpu_custom_call.1} parent=1 // pred_fallthru
      _
    %5191 = vsyncpa [#allocation3], 1
    %5192 = vsyncpa [#allocation6], 1
    %5193 = vsyncpa [#allocation9], 1
    %5194 = vsyncpa [#allocation12], 1
    %5195 = vsyncpa [#allocation4], 1

</llo_original>
